<compile_context>
chip_gen: v5e
topology: v5e:2x2
jax: 0.10.0
libtpu: 0.0.40
codegen_flags: <defaults>
</compile_context>

<pallas_src>
import math
import functools

import jax
import jax.numpy as jnp
from jax.experimental import pallas as pl
from jax.experimental.pallas import tpu as pltpu


C_PAD = 128          # lane-dense channel padding for conv1/conv2 outputs
HEAD_HIDDEN = 512    # NoisyLinear hidden width (value / advantage branch each)


def _round_up(x, m):
    return ((x + m - 1) // m) * m


# ----------------------------------------------------------------------------
# Pallas kernels
# ----------------------------------------------------------------------------
def _conv_mm_kernel(p_ref, wt_ref, b_ref, o_ref):
    """One M-tile of: out = relu(patches @ Wt + b). f32 accumulate, bf16 out."""
    y = jnp.dot(p_ref[...], wt_ref[...], preferred_element_type=jnp.float32)
    o_ref[...] = jnp.maximum(y + b_ref[...], 0.0).astype(o_ref.dtype)


def pallas_conv_mm(patches, w_t, b, tm):
    """patches:(M,K) bf16, w_t:(K,N) bf16, b:(N,) f32 -> (M,N) bf16, fused ReLU.

    Grid over M rows ("parallel" -> megacore split), full K and N per block.
    M need not divide the tile: the boundary block is masked by Pallas (no
    explicit pad / slice copies).
    """
    M, K = patches.shape
    K2, N = w_t.shape
    assert K == K2
    tm = min(tm, _round_up(M, 16))        # bf16 => sublane tile multiple of 16
    return pl.pallas_call(
        _conv_mm_kernel,
        out_shape=jax.ShapeDtypeStruct((M, N), jnp.bfloat16),
        grid_spec=pltpu.PrefetchScalarGridSpec(
            num_scalar_prefetch=0,
            grid=(pl.cdiv(M, tm),),
            in_specs=[pl.BlockSpec((tm, K), lambda i: (i, 0)),
                      pl.BlockSpec((K, N), lambda i: (0, 0)),
                      pl.BlockSpec((1, N), lambda i: (0, 0))],
            out_specs=pl.BlockSpec((tm, N), lambda i: (i, 0))),
        compiler_params=pltpu.CompilerParams(
            dimension_semantics=("parallel",)),
    )(patches, w_t, b.reshape(1, -1))


def _conv3_duel_head_kernel(p_ref, w3_ref, b3_ref, w1_ref, b1_ref, w2_ref,
                            b2_ref, o_ref, acc_ref, *, num_actions,
                            pos_per_step):
    """Fused conv3 + flatten + dueling head.

    Per grid step (batch tile b, position group k), for each of the
    `pos_per_step` conv3 output positions p in the group:
        c3   = relu(patches3[p] @ W3t + b3)            (tb, 64)   f32->bf16
        acc += c3 @ W1h[p]                             (tb, 1024) f32
    On the last position group:
        h   = relu(acc + b1h)                          f32
        y2  = h @ W2h + b2h        (cols 0..A-1 = advantage, col A = value)
        q   = a + v - (rowsum(y2) - v) / A
    """
    k = pl.program_id(1)

    @pl.when(k == 0)
    def _():
        acc_ref[...] = jnp.zeros_like(acc_ref)

    for pp in range(pos_per_step):        # short static unroll (7)
        c3 = jnp.dot(p_ref[pp], w3_ref[...],
                     preferred_element_type=jnp.float32)
        c3 = jnp.maximum(c3 + b3_ref[...], 0.0).astype(jnp.bfloat16)
        acc_ref[...] += jnp.dot(c3, w1_ref[pp],
                                preferred_element_type=jnp.float32)

    @pl.when(k == pl.num_programs(1) - 1)
    def _():
        h = jnp.maximum(acc_ref[...] + b1_ref[...], 0.0)            # f32
        y2 = jnp.dot(h, w2_ref[...],
                     preferred_element_type=jnp.float32) + b2_ref[...]
        a = y2[:, :num_actions]
        v = y2[:, num_actions:num_actions + 1]
        sum_a = jnp.sum(y2, axis=1, keepdims=True) - v   # padded cols are zero
        o_ref[...] = (a + v - sum_a * (1.0 / num_actions)).astype(o_ref.dtype)


def pallas_conv3_duel_head(patches3, w3t, b3, w1h, b1h, w2h, b2h,
                           num_actions, tb=256):
    """patches3: (49, B, 576) bf16 conv3 im2col patches (position-major).

    Grid: (batch tiles ["parallel"], 7 position groups of 7 ["arbitrary"]).
    """
    P, B, K3 = patches3.shape
    P2, C3, H2 = w1h.shape                 # (49, 64, 1024)
    assert P == P2 and w3t.shape == (K3, C3)
    g = 7                                  # conv3 positions folded per step
    assert P % g == 0
    tb = min(tb, _round_up(B, 16))
    n2 = w2h.shape[1]
    return pl.pallas_call(
        functools.partial(_conv3_duel_head_kernel,
                          num_actions=num_actions, pos_per_step=g),
        out_shape=jax.ShapeDtypeStruct((B, num_actions), jnp.float32),
        grid_spec=pltpu.PrefetchScalarGridSpec(
            num_scalar_prefetch=0,
            grid=(pl.cdiv(B, tb), P // g),
            in_specs=[
                pl.BlockSpec((g, tb, K3), lambda b, k: (k, b, 0)),   # patches3
                pl.BlockSpec((K3, C3), lambda b, k: (0, 0)),         # W3t
                pl.BlockSpec((1, C3), lambda b, k: (0, 0)),          # b3
                pl.BlockSpec((g, C3, H2), lambda b, k: (k, 0, 0)),   # W1h
                pl.BlockSpec((1, H2), lambda b, k: (0, 0)),          # b1h
                pl.BlockSpec((2 * HEAD_HIDDEN, n2), lambda b, k: (0, 0)),  # W2h
                pl.BlockSpec((1, n2), lambda b, k: (0, 0)),          # b2h
            ],
            out_specs=pl.BlockSpec((tb, num_actions), lambda b, k: (b, 0)),
            scratch_shapes=[pltpu.VMEM((tb, H2), jnp.float32)]),
        compiler_params=pltpu.CompilerParams(
            dimension_semantics=("parallel", "arbitrary")),
    )(patches3, w3t, b3.reshape(1, -1), w1h, b1h.reshape(1, -1),
      w2h, b2h.reshape(1, -1))


# ----------------------------------------------------------------------------
# JAX glue: NHWC im2col (layout plumbing, not the hot loop)
# ----------------------------------------------------------------------------
def im2col_nhwc(x, kh, kw, stride, flatten=True):
    """x: (B, H, W, C) -> (B*OH*OW, KH*KW*C) [or (B,OH,OW,KH*KW*C)], order (kh,kw,c)."""
    B, H, W, C = x.shape
    OH = (H - kh) // stride + 1
    OW = (W - kw) // stride + 1
    cols = []
    for i in range(kh):
        for j in range(kw):
            cols.append(x[:, i:i + stride * OH:stride, j:j + stride * OW:stride, :])
    p = jnp.concatenate(cols, axis=-1)                 # (B, OH, OW, KH*KW*C)
    if flatten:
        return p.reshape(B * OH * OW, kh * kw * C), OH, OW
    return p, OH, OW


# ----------------------------------------------------------------------------
# Parameter construction (deterministic; training-mode NoisyLinear semantics)
# ----------------------------------------------------------------------------
def _scale_noise(key, size):
    x = jax.random.normal(key, (size,), dtype=jnp.float32)
    return jnp.sign(x) * jnp.sqrt(jnp.abs(x))


def make_noisy_linear(key, in_f, out_f, sigma_init=0.017):
    """Effective (training-mode) weight/bias of a NoisyLinear layer."""
    k1, k2, k3, k4 = jax.random.split(key, 4)
    r = 1.0 / math.sqrt(in_f)
    w_mu = jax.random.uniform(k1, (out_f, in_f), jnp.float32, -r, r)
    b_mu = jax.random.uniform(k2, (out_f,), jnp.float32, -r, r)
    eps_in = _scale_noise(k3, in_f)
    eps_out = _scale_noise(k4, out_f)
    w = w_mu + sigma_init * (eps_out[:, None] * eps_in[None, :])
    b = b_mu + sigma_init * eps_out
    return w, b


def make_conv(key, out_c, in_c, kh, kw):
    k1, k2 = jax.random.split(key)
    fan_in = in_c * kh * kw
    r = 1.0 / math.sqrt(fan_in)
    w = jax.random.uniform(k1, (out_c, in_c, kh, kw), jnp.float32, -r, r)
    b = jax.random.uniform(k2, (out_c,), jnp.float32, -r, r)
    return w, b


def conv_weight_nhwc(w, b, in_c_pad, out_c_pad):
    """(OC, IC, KH, KW) conv weight -> (KH*KW*IC_pad, OC_pad) bf16 matmul weight.

    Padded rows/columns are zero, so padded activation channels stay zero.
    """
    oc, ic, kh, kw = w.shape
    if in_c_pad > ic:
        w = jnp.pad(w, ((0, 0), (0, in_c_pad - ic), (0, 0), (0, 0)))
    wt = jnp.transpose(w, (2, 3, 1, 0)).reshape(kh * kw * in_c_pad, oc)
    if out_c_pad > oc:
        wt = jnp.pad(wt, ((0, 0), (0, out_c_pad - oc)))
        b = jnp.pad(b, (0, out_c_pad - oc))
    return wt.astype(jnp.bfloat16), b.astype(jnp.float32)


def build_params(key, in_channels, output_dim, sigma_init=0.017):
    keys = jax.random.split(key, 7)
    W1, b1 = make_conv(keys[0], 32, in_channels, 8, 8)
    W2, b2 = make_conv(keys[1], 64, 32, 4, 4)
    W3, b3 = make_conv(keys[2], 64, 64, 3, 3)
    n_flatten = 64 * 7 * 7  # 3136 for 84x84 input (flattened in (H, W, C) order)
    Wv1, bv1 = make_noisy_linear(keys[3], n_flatten, HEAD_HIDDEN, sigma_init)
    Wv2, bv2 = make_noisy_linear(keys[4], HEAD_HIDDEN, 1, sigma_init)
    Wa1, ba1 = make_noisy_linear(keys[5], n_flatten, HEAD_HIDDEN, sigma_init)
    Wa2, ba2 = make_noisy_linear(keys[6], HEAD_HIDDEN, output_dim, sigma_init)

    # conv GEMM weights: only REAL input channels in K, lane-dense outputs
    W1t, b1p = conv_weight_nhwc(W1, b1, in_c_pad=in_channels, out_c_pad=C_PAD)  # K=256
    W2t, b2p = conv_weight_nhwc(W2, b2, in_c_pad=32, out_c_pad=C_PAD)           # K=512
    W3t, b3p = conv_weight_nhwc(W3, b3, in_c_pad=64, out_c_pad=64)              # K=576

    # fused head layer 1: columns [value-hidden | advantage-hidden],
    # rows indexed by (conv3 position p = oh*7+ow, channel c) -> (49, 64, 1024)
    W1h = jnp.concatenate([Wv1, Wa1], axis=0).T          # (3136, 1024)
    W1h = W1h.reshape(7 * 7, 64, 2 * HEAD_HIDDEN)
    b1h = jnp.concatenate([bv1, ba1])
    # head layer 2 (kept f32): cols 0..A-1 = advantage, col A = value, rest 0
    A = output_dim
    n2_pad = _round_up(A + 1, 128)
    W2h = jnp.zeros((2 * HEAD_HIDDEN, n2_pad), jnp.float32)
    W2h = W2h.at[HEAD_HIDDEN:, 0:A].set(Wa2.T)
    W2h = W2h.at[:HEAD_HIDDEN, A].set(Wv2[0])
    b2h = jnp.zeros((n2_pad,), jnp.float32)
    b2h = b2h.at[0:A].set(ba2)
    b2h = b2h.at[A].set(bv2[0])

    params = dict(
        W1t=W1t, b1=b1p, W2t=W2t, b2=b2p, W3t=W3t, b3=b3p,
        W1h=W1h.astype(jnp.bfloat16), b1h=b1h.astype(jnp.float32),
        W2h=W2h, b2h=b2h,
    )
    raw = dict(W1=W1, b1=b1, W2=W2, b2=b2, W3=W3, b3=b3,
               Wv1=Wv1, bv1=bv1, Wv2=Wv2, bv2=bv2,
               Wa1=Wa1, ba1=ba1, Wa2=Wa2, ba2=ba2)
    return params, raw


# ----------------------------------------------------------------------------
# Forward pass (online branch, training-mode NoisyLinear)
# ----------------------------------------------------------------------------
@functools.partial(jax.jit, static_argnames=("num_actions",))
def noisy_duel_forward(x, params, num_actions):
    B = x.shape[0]  # expects (B, C, 84, 84)
    x = jnp.transpose(x, (0, 2, 3, 1)).astype(jnp.bfloat16)   # NCHW -> NHWC once
    # conv1: 8x8 s4 -> (B, 20, 20, 32 real ch, stored lane-dense 128) + ReLU
    p, oh, ow = im2col_nhwc(x, 8, 8, 4)                        # (B*400, 256)
    y = pallas_conv_mm(p, params['W1t'], params['b1'], tm=2048).reshape(B, oh, ow, -1)
    # conv2: 4x4 s2 on the 32 real channels -> (B, 9, 9, 64 real ch) + ReLU
    p, oh, ow = im2col_nhwc(y[..., :32], 4, 4, 2)              # (B*81, 512)
    y = pallas_conv_mm(p, params['W2t'], params['b2'], tm=1024).reshape(B, oh, ow, -1)
    # conv3 (3x3 s1, 64->64), flatten and dueling head fused in one kernel.
    p3, oh, ow = im2col_nhwc(y[..., :64], 3, 3, 1, flatten=False)   # (B,7,7,576)
    p3 = jnp.transpose(p3, (1, 2, 0, 3)).reshape(oh * ow, B, p3.shape[-1])
    return pallas_conv3_duel_head(p3, params['W3t'], params['b3'],
                                  params['W1h'], params['b1h'],
                                  params['W2h'], params['b2h'], num_actions)


# ----------------------------------------------------------------------------
# Pure-JAX f32 reference (loose sanity check against the bf16 kernels)
# ----------------------------------------------------------------------------
def reference_forward(x, raw):
    B = x.shape[0]
    y = jnp.transpose(x, (0, 2, 3, 1)).astype(jnp.float32)

    def conv(z, w, b, kh, kw, s):
        p, oh, ow = im2col_nhwc(z, kh, kw, s)
        wt = jnp.transpose(w, (2, 3, 1, 0)).reshape(kh * kw * w.shape[1], w.shape[0])
        return jnp.maximum(p @ wt + b, 0.0).reshape(B, oh, ow, -1)

    y = conv(y, raw['W1'], raw['b1'], 8, 8, 4)
    y = conv(y, raw['W2'], raw['b2'], 4, 4, 2)
    y = conv(y, raw['W3'], raw['b3'], 3, 3, 1)
    f = y.reshape(B, -1)                      # (H, W, C)-order flatten
    hv = jnp.maximum(f @ raw['Wv1'].T + raw['bv1'], 0.0)
    v = hv @ raw['Wv2'].T + raw['bv2']
    ha = jnp.maximum(f @ raw['Wa1'].T + raw['ba1'], 0.0)
    a = ha @ raw['Wa2'].T + raw['ba2']
    return v + a - jnp.mean(a, axis=1, keepdims=True)


if __name__ == "__main__":
    key = jax.random.PRNGKey(0)
    k_x, k_p = jax.random.split(key)

    B, C, H, W = 2, 4, 84, 84        # 84x84 is required by the module
    num_actions = 6                  # e.g. Atari action space

    x = jax.random.uniform(k_x, (B, C, H, W), jnp.float32)
    params, raw = build_params(k_p, C, num_actions)

    q = noisy_duel_forward(x, params, num_actions)
    q = jax.block_until_ready(q)

    assert q.shape == (B, num_actions)
    assert bool(jnp.all(jnp.isfinite(q)))
    q_ref = reference_forward(x, raw)
    assert bool(jnp.allclose(q, q_ref, atol=1e-1, rtol=1e-1))
    print("KERNEL_OK")
</pallas_src>

<mosaic_0001>
module attributes {stable_mosaic.version = 11 : i64} {
  func.func @_conv_mm_kernel(%arg0: i32, %arg1: memref<800x256xbf16, #tpu.memory_space<vmem>>, %arg2: memref<256x128xbf16, #tpu.memory_space<vmem>>, %arg3: memref<1x128xf32, #tpu.memory_space<vmem>>, %arg4: memref<800x128xbf16, #tpu.memory_space<vmem>>) attributes {dimension_semantics = [#tpu.dimension_semantics<parallel>], iteration_bounds = array<i64: 1>, scalar_prefetch = 0 : i64, scratch_operands = 0 : i64, tpu.core_type = #tpu.core_type<tc>, window_params = [{transform_indices = @transform_0, window_bounds = array<i64: 800, 256>}, {pipeline_mode = #tpu.pipeline_mode<synchronous>, transform_indices = @transform_1, window_bounds = array<i64: 256, 128>}, {pipeline_mode = #tpu.pipeline_mode<synchronous>, transform_indices = @transform_2, window_bounds = array<i64: 1, 128>}, {transform_indices = @transform_3, window_bounds = array<i64: 800, 128>}]} {
    %c0 = arith.constant 0 : index
    %c0_0 = arith.constant 0 : index
    %0 = vector.load %arg1[%c0, %c0_0] : memref<800x256xbf16, #tpu.memory_space<vmem>>, vector<800x256xbf16>
    %c0_1 = arith.constant 0 : index
    %c0_2 = arith.constant 0 : index
    %1 = vector.load %arg2[%c0_1, %c0_2] : memref<256x128xbf16, #tpu.memory_space<vmem>>, vector<256x128xbf16>
    %cst = arith.constant dense<0.000000e+00> : vector<800x128xf32>
    %2 = tpu.matmul %0, %1, %cst {dimension_numbers = #tpu.dot_dimension_numbers<[1], [0], [0], [1], [0, 0, 1, 1], [], []>} : vector<800x256xbf16>, vector<256x128xbf16>, vector<800x128xf32> -> vector<800x128xf32>
    %c0_3 = arith.constant 0 : index
    %c0_4 = arith.constant 0 : index
    %3 = vector.load %arg3[%c0_3, %c0_4] : memref<1x128xf32, #tpu.memory_space<vmem>>, vector<1x128xf32>
    %4 = vector.broadcast %3 : vector<1x128xf32> to vector<800x128xf32>
    %5 = arith.addf %2, %4 : vector<800x128xf32>
    %cst_5 = arith.constant 0.000000e+00 : f32
    %6 = vector.broadcast %cst_5 : f32 to vector<800x128xf32>
    %7 = arith.maximumf %5, %6 : vector<800x128xf32>
    %8 = arith.truncf %7 : vector<800x128xf32> to vector<800x128xbf16>
    %c0_6 = arith.constant 0 : index
    %c0_7 = arith.constant 0 : index
    %9 = vector.load %arg4[%c0_6, %c0_7] : memref<800x128xbf16, #tpu.memory_space<vmem>>, vector<800x128xbf16>
    tpu.vector_store %arg4[%c0_6, %c0_7], %8 {strides = array<i32>} : memref<800x128xbf16, #tpu.memory_space<vmem>>, vector<800x128xbf16>,
    return
  }
  func.func @transform_0(%arg0: i32) -> (i32, i32) {
    %c0_i32 = arith.constant 0 : i32
    %c0_i32_0 = arith.constant 0 : i32
    return %arg0, %c0_i32 : i32, i32
  }
  func.func @transform_1(%arg0: i32) -> (i32, i32) {
    %c0_i32 = arith.constant 0 : i32
    %c0_i32_0 = arith.constant 0 : i32
    %c0_i32_1 = arith.constant 0 : i32
    return %c0_i32, %c0_i32_0 : i32, i32
  }
  func.func @transform_2(%arg0: i32) -> (i32, i32) {
    %c0_i32 = arith.constant 0 : i32
    %c0_i32_0 = arith.constant 0 : i32
    %c0_i32_1 = arith.constant 0 : i32
    return %c0_i32, %c0_i32_0 : i32, i32
  }
  func.func @transform_3(%arg0: i32) -> (i32, i32) {
    %c0_i32 = arith.constant 0 : i32
    %c0_i32_0 = arith.constant 0 : i32
    return %arg0, %c0_i32 : i32, i32
  }
}

module attributes {stable_mosaic.version = 11 : i64} {
  func.func @_conv_mm_kernel(%arg0: i32, %arg1: memref<176x512xbf16, #tpu.memory_space<vmem>>, %arg2: memref<512x128xbf16, #tpu.memory_space<vmem>>, %arg3: memref<1x128xf32, #tpu.memory_space<vmem>>, %arg4: memref<176x128xbf16, #tpu.memory_space<vmem>>) attributes {dimension_semantics = [#tpu.dimension_semantics<parallel>], iteration_bounds = array<i64: 1>, scalar_prefetch = 0 : i64, scratch_operands = 0 : i64, tpu.core_type = #tpu.core_type<tc>, window_params = [{transform_indices = @transform_0, window_bounds = array<i64: 176, 512>}, {pipeline_mode = #tpu.pipeline_mode<synchronous>, transform_indices = @transform_1, window_bounds = array<i64: 512, 128>}, {pipeline_mode = #tpu.pipeline_mode<synchronous>, transform_indices = @transform_2, window_bounds = array<i64: 1, 128>}, {transform_indices = @transform_3, window_bounds = array<i64: 176, 128>}]} {
    %c0 = arith.constant 0 : index
    %c0_0 = arith.constant 0 : index
    %0 = vector.load %arg1[%c0, %c0_0] : memref<176x512xbf16, #tpu.memory_space<vmem>>, vector<176x512xbf16>
    %c0_1 = arith.constant 0 : index
    %c0_2 = arith.constant 0 : index
    %1 = vector.load %arg2[%c0_1, %c0_2] : memref<512x128xbf16, #tpu.memory_space<vmem>>, vector<512x128xbf16>
    %cst = arith.constant dense<0.000000e+00> : vector<176x128xf32>
    %2 = tpu.matmul %0, %1, %cst {dimension_numbers = #tpu.dot_dimension_numbers<[1], [0], [0], [1], [0, 0, 1, 1], [], []>} : vector<176x512xbf16>, vector<512x128xbf16>, vector<176x128xf32> -> vector<176x128xf32>
    %c0_3 = arith.constant 0 : index
    %c0_4 = arith.constant 0 : index
    %3 = vector.load %arg3[%c0_3, %c0_4] : memref<1x128xf32, #tpu.memory_space<vmem>>, vector<1x128xf32>
    %4 = vector.broadcast %3 : vector<1x128xf32> to vector<176x128xf32>
    %5 = arith.addf %2, %4 : vector<176x128xf32>
    %cst_5 = arith.constant 0.000000e+00 : f32
    %6 = vector.broadcast %cst_5 : f32 to vector<176x128xf32>
    %7 = arith.maximumf %5, %6 : vector<176x128xf32>
    %8 = arith.truncf %7 : vector<176x128xf32> to vector<176x128xbf16>
    %c0_6 = arith.constant 0 : index
    %c0_7 = arith.constant 0 : index
    %9 = vector.load %arg4[%c0_6, %c0_7] : memref<176x128xbf16, #tpu.memory_space<vmem>>, vector<176x128xbf16>
    tpu.vector_store %arg4[%c0_6, %c0_7], %8 {strides = array<i32>} : memref<176x128xbf16, #tpu.memory_space<vmem>>, vector<176x128xbf16>,
    return
  }
  func.func @transform_0(%arg0: i32) -> (i32, i32) {
    %c0_i32 = arith.constant 0 : i32
    %c0_i32_0 = arith.constant 0 : i32
    return %arg0, %c0_i32 : i32, i32
  }
  func.func @transform_1(%arg0: i32) -> (i32, i32) {
    %c0_i32 = arith.constant 0 : i32
    %c0_i32_0 = arith.constant 0 : i32
    %c0_i32_1 = arith.constant 0 : i32
    return %c0_i32, %c0_i32_0 : i32, i32
  }
  func.func @transform_2(%arg0: i32) -> (i32, i32) {
    %c0_i32 = arith.constant 0 : i32
    %c0_i32_0 = arith.constant 0 : i32
    %c0_i32_1 = arith.constant 0 : i32
    return %c0_i32, %c0_i32_0 : i32, i32
  }
  func.func @transform_3(%arg0: i32) -> (i32, i32) {
    %c0_i32 = arith.constant 0 : i32
    %c0_i32_0 = arith.constant 0 : i32
    return %arg0, %c0_i32 : i32, i32
  }
}

module attributes {stable_mosaic.version = 11 : i64} {
  func.func @_conv3_duel_head_kernel(%arg0: i32, %arg1: i32, %arg2: memref<7x16x576xbf16, #tpu.memory_space<vmem>>, %arg3: memref<576x64xbf16, #tpu.memory_space<vmem>>, %arg4: memref<1x64xf32, #tpu.memory_space<vmem>>, %arg5: memref<7x64x1024xbf16, #tpu.memory_space<vmem>>, %arg6: memref<1x1024xf32, #tpu.memory_space<vmem>>, %arg7: memref<1024x128xf32, #tpu.memory_space<vmem>>, %arg8: memref<1x128xf32, #tpu.memory_space<vmem>>, %arg9: memref<16x6xf32, #tpu.memory_space<vmem>>, %arg10: memref<16x1024xf32, #tpu.memory_space<vmem>>) attributes {dimension_semantics = [#tpu.dimension_semantics<parallel>, #tpu.dimension_semantics<arbitrary>], iteration_bounds = array<i64: 1, 7>, scalar_prefetch = 0 : i64, scratch_operands = 1 : i64, tpu.core_type = #tpu.core_type<tc>, window_params = [{transform_indices = @transform_0, window_bounds = array<i64: 7, 16, 576>}, {pipeline_mode = #tpu.pipeline_mode<synchronous>, transform_indices = @transform_1, window_bounds = array<i64: 576, 64>}, {pipeline_mode = #tpu.pipeline_mode<synchronous>, transform_indices = @transform_2, window_bounds = array<i64: 1, 64>}, {transform_indices = @transform_3, window_bounds = array<i64: 7, 64, 1024>}, {pipeline_mode = #tpu.pipeline_mode<synchronous>, transform_indices = @transform_4, window_bounds = array<i64: 1, 1024>}, {pipeline_mode = #tpu.pipeline_mode<synchronous>, transform_indices = @transform_5, window_bounds = array<i64: 1024, 128>}, {pipeline_mode = #tpu.pipeline_mode<synchronous>, transform_indices = @transform_6, window_bounds = array<i64: 1, 128>}, {transform_indices = @transform_7, window_bounds = array<i64: 16, 6>}]} {
    %c0_i32 = arith.constant 0 : i32
    %0 = arith.cmpi eq, %arg1, %c0_i32 : i32
    %1 = arith.extui %0 : i1 to i32
    %c0_i32_0 = arith.constant 0 : i32
    %2 = arith.cmpi ne, %1, %c0_i32_0 : i32
    scf.if %2 {
      %cst_113 = arith.constant 0.000000e+00 : f32
      %118 = vector.broadcast %cst_113 : f32 to vector<16x1024xf32>
      %c0_114 = arith.constant 0 : index
      %c0_115 = arith.constant 0 : index
      %119 = vector.load %arg10[%c0_114, %c0_115] : memref<16x1024xf32, #tpu.memory_space<vmem>>, vector<16x1024xf32>
      tpu.vector_store %arg10[%c0_114, %c0_115], %118 {strides = array<i32>} : memref<16x1024xf32, #tpu.memory_space<vmem>>, vector<16x1024xf32>,
    } else {
    }
    %c0 = arith.constant 0 : index
    %c0_1 = arith.constant 0 : index
    %c0_2 = arith.constant 0 : index
    %3 = vector.load %arg2[%c0, %c0_1, %c0_2] : memref<7x16x576xbf16, #tpu.memory_space<vmem>>, vector<1x16x576xbf16>
    %4 = vector.shape_cast %3 : vector<1x16x576xbf16> to vector<16x576xbf16>
    %c0_3 = arith.constant 0 : index
    %c0_4 = arith.constant 0 : index
    %5 = vector.load %arg3[%c0_3, %c0_4] : memref<576x64xbf16, #tpu.memory_space<vmem>>, vector<576x64xbf16>
    %cst = arith.constant dense<0.000000e+00> : vector<16x64xf32>
    %6 = tpu.matmul %4, %5, %cst {dimension_numbers = #tpu.dot_dimension_numbers<[1], [0], [0], [1], [0, 0, 1, 1], [], []>} : vector<16x576xbf16>, vector<576x64xbf16>, vector<16x64xf32> -> vector<16x64xf32>
    %c0_5 = arith.constant 0 : index
    %c0_6 = arith.constant 0 : index
    %7 = vector.load %arg4[%c0_5, %c0_6] : memref<1x64xf32, #tpu.memory_space<vmem>>, vector<1x64xf32>
    %8 = vector.broadcast %7 : vector<1x64xf32> to vector<16x64xf32>
    %9 = arith.addf %6, %8 : vector<16x64xf32>
    %cst_7 = arith.constant 0.000000e+00 : f32
    %10 = vector.broadcast %cst_7 : f32 to vector<16x64xf32>
    %11 = arith.maximumf %9, %10 : vector<16x64xf32>
    %12 = arith.truncf %11 : vector<16x64xf32> to vector<16x64xbf16>
    %c0_8 = arith.constant 0 : index
    %c0_9 = arith.constant 0 : index
    %13 = vector.load %arg10[%c0_8, %c0_9] : memref<16x1024xf32, #tpu.memory_space<vmem>>, vector<16x1024xf32>
    %c0_10 = arith.constant 0 : index
    %c0_11 = arith.constant 0 : index
    %c0_12 = arith.constant 0 : index
    %14 = vector.load %arg5[%c0_10, %c0_11, %c0_12] : memref<7x64x1024xbf16, #tpu.memory_space<vmem>>, vector<1x64x1024xbf16>
    %15 = vector.shape_cast %14 : vector<1x64x1024xbf16> to vector<64x1024xbf16>
    %cst_13 = arith.constant dense<0.000000e+00> : vector<16x1024xf32>
    %16 = tpu.matmul %12, %15, %cst_13 {dimension_numbers = #tpu.dot_dimension_numbers<[1], [0], [0], [1], [0, 0, 1, 1], [], []>} : vector<16x64xbf16>, vector<64x1024xbf16>, vector<16x1024xf32> -> vector<16x1024xf32>
    %17 = arith.addf %13, %16 : vector<16x1024xf32>
    %c0_14 = arith.constant 0 : index
    %c0_15 = arith.constant 0 : index
    %18 = vector.load %arg10[%c0_14, %c0_15] : memref<16x1024xf32, #tpu.memory_space<vmem>>, vector<16x1024xf32>
    tpu.vector_store %arg10[%c0_14, %c0_15], %17 {strides = array<i32>} : memref<16x1024xf32, #tpu.memory_space<vmem>>, vector<16x1024xf32>,
    %c1 = arith.constant 1 : index
    %c0_16 = arith.constant 0 : index
    %c0_17 = arith.constant 0 : index
    %19 = vector.load %arg2[%c1, %c0_16, %c0_17] : memref<7x16x576xbf16, #tpu.memory_space<vmem>>, vector<1x16x576xbf16>
    %20 = vector.shape_cast %19 : vector<1x16x576xbf16> to vector<16x576xbf16>
    %c0_18 = arith.constant 0 : index
    %c0_19 = arith.constant 0 : index
    %21 = vector.load %arg3[%c0_18, %c0_19] : memref<576x64xbf16, #tpu.memory_space<vmem>>, vector<576x64xbf16>
    %cst_20 = arith.constant dense<0.000000e+00> : vector<16x64xf32>
    %22 = tpu.matmul %20, %21, %cst_20 {dimension_numbers = #tpu.dot_dimension_numbers<[1], [0], [0], [1], [0, 0, 1, 1], [], []>} : vector<16x576xbf16>, vector<576x64xbf16>, vector<16x64xf32> -> vector<16x64xf32>
    %c0_21 = arith.constant 0 : index
    %c0_22 = arith.constant 0 : index
    %23 = vector.load %arg4[%c0_21, %c0_22] : memref<1x64xf32, #tpu.memory_space<vmem>>, vector<1x64xf32>
    %24 = vector.broadcast %23 : vector<1x64xf32> to vector<16x64xf32>
    %25 = arith.addf %22, %24 : vector<16x64xf32>
    %cst_23 = arith.constant 0.000000e+00 : f32
    %26 = vector.broadcast %cst_23 : f32 to vector<16x64xf32>
    %27 = arith.maximumf %25, %26 : vector<16x64xf32>
    %28 = arith.truncf %27 : vector<16x64xf32> to vector<16x64xbf16>
    %c0_24 = arith.constant 0 : index
    %c0_25 = arith.constant 0 : index
    %29 = vector.load %arg10[%c0_24, %c0_25] : memref<16x1024xf32, #tpu.memory_space<vmem>>, vector<16x1024xf32>
    %c1_26 = arith.constant 1 : index
    %c0_27 = arith.constant 0 : index
    %c0_28 = arith.constant 0 : index
    %30 = vector.load %arg5[%c1_26, %c0_27, %c0_28] : memref<7x64x1024xbf16, #tpu.memory_space<vmem>>, vector<1x64x1024xbf16>
    %31 = vector.shape_cast %30 : vector<1x64x1024xbf16> to vector<64x1024xbf16>
    %cst_29 = arith.constant dense<0.000000e+00> : vector<16x1024xf32>
    %32 = tpu.matmul %28, %31, %cst_29 {dimension_numbers = #tpu.dot_dimension_numbers<[1], [0], [0], [1], [0, 0, 1, 1], [], []>} : vector<16x64xbf16>, vector<64x1024xbf16>, vector<16x1024xf32> -> vector<16x1024xf32>
    %33 = arith.addf %29, %32 : vector<16x1024xf32>
    %c0_30 = arith.constant 0 : index
    %c0_31 = arith.constant 0 : index
    %34 = vector.load %arg10[%c0_30, %c0_31] : memref<16x1024xf32, #tpu.memory_space<vmem>>, vector<16x1024xf32>
    tpu.vector_store %arg10[%c0_30, %c0_31], %33 {strides = array<i32>} : memref<16x1024xf32, #tpu.memory_space<vmem>>, vector<16x1024xf32>,
    %c2 = arith.constant 2 : index
    %c0_32 = arith.constant 0 : index
    %c0_33 = arith.constant 0 : index
    %35 = vector.load %arg2[%c2, %c0_32, %c0_33] : memref<7x16x576xbf16, #tpu.memory_space<vmem>>, vector<1x16x576xbf16>
    %36 = vector.shape_cast %35 : vector<1x16x576xbf16> to vector<16x576xbf16>
    %c0_34 = arith.constant 0 : index
    %c0_35 = arith.constant 0 : index
    %37 = vector.load %arg3[%c0_34, %c0_35] : memref<576x64xbf16, #tpu.memory_space<vmem>>, vector<576x64xbf16>
    %cst_36 = arith.constant dense<0.000000e+00> : vector<16x64xf32>
    %38 = tpu.matmul %36, %37, %cst_36 {dimension_numbers = #tpu.dot_dimension_numbers<[1], [0], [0], [1], [0, 0, 1, 1], [], []>} : vector<16x576xbf16>, vector<576x64xbf16>, vector<16x64xf32> -> vector<16x64xf32>
    %c0_37 = arith.constant 0 : index
    %c0_38 = arith.constant 0 : index
    %39 = vector.load %arg4[%c0_37, %c0_38] : memref<1x64xf32, #tpu.memory_space<vmem>>, vector<1x64xf32>
    %40 = vector.broadcast %39 : vector<1x64xf32> to vector<16x64xf32>
    %41 = arith.addf %38, %40 : vector<16x64xf32>
    %cst_39 = arith.constant 0.000000e+00 : f32
    %42 = vector.broadcast %cst_39 : f32 to vector<16x64xf32>
    %43 = arith.maximumf %41, %42 : vector<16x64xf32>
    %44 = arith.truncf %43 : vector<16x64xf32> to vector<16x64xbf16>
    %c0_40 = arith.constant 0 : index
    %c0_41 = arith.constant 0 : index
    %45 = vector.load %arg10[%c0_40, %c0_41] : memref<16x1024xf32, #tpu.memory_space<vmem>>, vector<16x1024xf32>
    %c2_42 = arith.constant 2 : index
    %c0_43 = arith.constant 0 : index
    %c0_44 = arith.constant 0 : index
    %46 = vector.load %arg5[%c2_42, %c0_43, %c0_44] : memref<7x64x1024xbf16, #tpu.memory_space<vmem>>, vector<1x64x1024xbf16>
    %47 = vector.shape_cast %46 : vector<1x64x1024xbf16> to vector<64x1024xbf16>
    %cst_45 = arith.constant dense<0.000000e+00> : vector<16x1024xf32>
    %48 = tpu.matmul %44, %47, %cst_45 {dimension_numbers = #tpu.dot_dimension_numbers<[1], [0], [0], [1], [0, 0, 1, 1], [], []>} : vector<16x64xbf16>, vector<64x1024xbf16>, vector<16x1024xf32> -> vector<16x1024xf32>
    %49 = arith.addf %45, %48 : vector<16x1024xf32>
    %c0_46 = arith.constant 0 : index
    %c0_47 = arith.constant 0 : index
    %50 = vector.load %arg10[%c0_46, %c0_47] : memref<16x1024xf32, #tpu.memory_space<vmem>>, vector<16x1024xf32>
    tpu.vector_store %arg10[%c0_46, %c0_47], %49 {strides = array<i32>} : memref<16x1024xf32, #tpu.memory_space<vmem>>, vector<16x1024xf32>,
    %c3 = arith.constant 3 : index
    %c0_48 = arith.constant 0 : index
    %c0_49 = arith.constant 0 : index
    %51 = vector.load %arg2[%c3, %c0_48, %c0_49] : memref<7x16x576xbf16, #tpu.memory_space<vmem>>, vector<1x16x576xbf16>
    %52 = vector.shape_cast %51 : vector<1x16x576xbf16> to vector<16x576xbf16>
    %c0_50 = arith.constant 0 : index
    %c0_51 = arith.constant 0 : index
    %53 = vector.load %arg3[%c0_50, %c0_51] : memref<576x64xbf16, #tpu.memory_space<vmem>>, vector<576x64xbf16>
    %cst_52 = arith.constant dense<0.000000e+00> : vector<16x64xf32>
    %54 = tpu.matmul %52, %53, %cst_52 {dimension_numbers = #tpu.dot_dimension_numbers<[1], [0], [0], [1], [0, 0, 1, 1], [], []>} : vector<16x576xbf16>, vector<576x64xbf16>, vector<16x64xf32> -> vector<16x64xf32>
    %c0_53 = arith.constant 0 : index
    %c0_54 = arith.constant 0 : index
    %55 = vector.load %arg4[%c0_53, %c0_54] : memref<1x64xf32, #tpu.memory_space<vmem>>, vector<1x64xf32>
    %56 = vector.broadcast %55 : vector<1x64xf32> to vector<16x64xf32>
    %57 = arith.addf %54, %56 : vector<16x64xf32>
    %cst_55 = arith.constant 0.000000e+00 : f32
    %58 = vector.broadcast %cst_55 : f32 to vector<16x64xf32>
    %59 = arith.maximumf %57, %58 : vector<16x64xf32>
    %60 = arith.truncf %59 : vector<16x64xf32> to vector<16x64xbf16>
    %c0_56 = arith.constant 0 : index
    %c0_57 = arith.constant 0 : index
    %61 = vector.load %arg10[%c0_56, %c0_57] : memref<16x1024xf32, #tpu.memory_space<vmem>>, vector<16x1024xf32>
    %c3_58 = arith.constant 3 : index
    %c0_59 = arith.constant 0 : index
    %c0_60 = arith.constant 0 : index
    %62 = vector.load %arg5[%c3_58, %c0_59, %c0_60] : memref<7x64x1024xbf16, #tpu.memory_space<vmem>>, vector<1x64x1024xbf16>
    %63 = vector.shape_cast %62 : vector<1x64x1024xbf16> to vector<64x1024xbf16>
    %cst_61 = arith.constant dense<0.000000e+00> : vector<16x1024xf32>
    %64 = tpu.matmul %60, %63, %cst_61 {dimension_numbers = #tpu.dot_dimension_numbers<[1], [0], [0], [1], [0, 0, 1, 1], [], []>} : vector<16x64xbf16>, vector<64x1024xbf16>, vector<16x1024xf32> -> vector<16x1024xf32>
    %65 = arith.addf %61, %64 : vector<16x1024xf32>
    %c0_62 = arith.constant 0 : index
    %c0_63 = arith.constant 0 : index
    %66 = vector.load %arg10[%c0_62, %c0_63] : memref<16x1024xf32, #tpu.memory_space<vmem>>, vector<16x1024xf32>
    tpu.vector_store %arg10[%c0_62, %c0_63], %65 {strides = array<i32>} : memref<16x1024xf32, #tpu.memory_space<vmem>>, vector<16x1024xf32>,
    %c4 = arith.constant 4 : index
    %c0_64 = arith.constant 0 : index
    %c0_65 = arith.constant 0 : index
    %67 = vector.load %arg2[%c4, %c0_64, %c0_65] : memref<7x16x576xbf16, #tpu.memory_space<vmem>>, vector<1x16x576xbf16>
    %68 = vector.shape_cast %67 : vector<1x16x576xbf16> to vector<16x576xbf16>
    %c0_66 = arith.constant 0 : index
    %c0_67 = arith.constant 0 : index
    %69 = vector.load %arg3[%c0_66, %c0_67] : memref<576x64xbf16, #tpu.memory_space<vmem>>, vector<576x64xbf16>
    %cst_68 = arith.constant dense<0.000000e+00> : vector<16x64xf32>
    %70 = tpu.matmul %68, %69, %cst_68 {dimension_numbers = #tpu.dot_dimension_numbers<[1], [0], [0], [1], [0, 0, 1, 1], [], []>} : vector<16x576xbf16>, vector<576x64xbf16>, vector<16x64xf32> -> vector<16x64xf32>
    %c0_69 = arith.constant 0 : index
    %c0_70 = arith.constant 0 : index
    %71 = vector.load %arg4[%c0_69, %c0_70] : memref<1x64xf32, #tpu.memory_space<vmem>>, vector<1x64xf32>
    %72 = vector.broadcast %71 : vector<1x64xf32> to vector<16x64xf32>
    %73 = arith.addf %70, %72 : vector<16x64xf32>
    %cst_71 = arith.constant 0.000000e+00 : f32
    %74 = vector.broadcast %cst_71 : f32 to vector<16x64xf32>
    %75 = arith.maximumf %73, %74 : vector<16x64xf32>
    %76 = arith.truncf %75 : vector<16x64xf32> to vector<16x64xbf16>
    %c0_72 = arith.constant 0 : index
    %c0_73 = arith.constant 0 : index
    %77 = vector.load %arg10[%c0_72, %c0_73] : memref<16x1024xf32, #tpu.memory_space<vmem>>, vector<16x1024xf32>
    %c4_74 = arith.constant 4 : index
    %c0_75 = arith.constant 0 : index
    %c0_76 = arith.constant 0 : index
    %78 = vector.load %arg5[%c4_74, %c0_75, %c0_76] : memref<7x64x1024xbf16, #tpu.memory_space<vmem>>, vector<1x64x1024xbf16>
    %79 = vector.shape_cast %78 : vector<1x64x1024xbf16> to vector<64x1024xbf16>
    %cst_77 = arith.constant dense<0.000000e+00> : vector<16x1024xf32>
    %80 = tpu.matmul %76, %79, %cst_77 {dimension_numbers = #tpu.dot_dimension_numbers<[1], [0], [0], [1], [0, 0, 1, 1], [], []>} : vector<16x64xbf16>, vector<64x1024xbf16>, vector<16x1024xf32> -> vector<16x1024xf32>
    %81 = arith.addf %77, %80 : vector<16x1024xf32>
    %c0_78 = arith.constant 0 : index
    %c0_79 = arith.constant 0 : index
    %82 = vector.load %arg10[%c0_78, %c0_79] : memref<16x1024xf32, #tpu.memory_space<vmem>>, vector<16x1024xf32>
    tpu.vector_store %arg10[%c0_78, %c0_79], %81 {strides = array<i32>} : memref<16x1024xf32, #tpu.memory_space<vmem>>, vector<16x1024xf32>,
    %c5 = arith.constant 5 : index
    %c0_80 = arith.constant 0 : index
    %c0_81 = arith.constant 0 : index
    %83 = vector.load %arg2[%c5, %c0_80, %c0_81] : memref<7x16x576xbf16, #tpu.memory_space<vmem>>, vector<1x16x576xbf16>
    %84 = vector.shape_cast %83 : vector<1x16x576xbf16> to vector<16x576xbf16>
    %c0_82 = arith.constant 0 : index
    %c0_83 = arith.constant 0 : index
    %85 = vector.load %arg3[%c0_82, %c0_83] : memref<576x64xbf16, #tpu.memory_space<vmem>>, vector<576x64xbf16>
    %cst_84 = arith.constant dense<0.000000e+00> : vector<16x64xf32>
    %86 = tpu.matmul %84, %85, %cst_84 {dimension_numbers = #tpu.dot_dimension_numbers<[1], [0], [0], [1], [0, 0, 1, 1], [], []>} : vector<16x576xbf16>, vector<576x64xbf16>, vector<16x64xf32> -> vector<16x64xf32>
    %c0_85 = arith.constant 0 : index
    %c0_86 = arith.constant 0 : index
    %87 = vector.load %arg4[%c0_85, %c0_86] : memref<1x64xf32, #tpu.memory_space<vmem>>, vector<1x64xf32>
    %88 = vector.broadcast %87 : vector<1x64xf32> to vector<16x64xf32>
    %89 = arith.addf %86, %88 : vector<16x64xf32>
    %cst_87 = arith.constant 0.000000e+00 : f32
    %90 = vector.broadcast %cst_87 : f32 to vector<16x64xf32>
    %91 = arith.maximumf %89, %90 : vector<16x64xf32>
    %92 = arith.truncf %91 : vector<16x64xf32> to vector<16x64xbf16>
    %c0_88 = arith.constant 0 : index
    %c0_89 = arith.constant 0 : index
    %93 = vector.load %arg10[%c0_88, %c0_89] : memref<16x1024xf32, #tpu.memory_space<vmem>>, vector<16x1024xf32>
    %c5_90 = arith.constant 5 : index
    %c0_91 = arith.constant 0 : index
    %c0_92 = arith.constant 0 : index
    %94 = vector.load %arg5[%c5_90, %c0_91, %c0_92] : memref<7x64x1024xbf16, #tpu.memory_space<vmem>>, vector<1x64x1024xbf16>
    %95 = vector.shape_cast %94 : vector<1x64x1024xbf16> to vector<64x1024xbf16>
    %cst_93 = arith.constant dense<0.000000e+00> : vector<16x1024xf32>
    %96 = tpu.matmul %92, %95, %cst_93 {dimension_numbers = #tpu.dot_dimension_numbers<[1], [0], [0], [1], [0, 0, 1, 1], [], []>} : vector<16x64xbf16>, vector<64x1024xbf16>, vector<16x1024xf32> -> vector<16x1024xf32>
    %97 = arith.addf %93, %96 : vector<16x1024xf32>
    %c0_94 = arith.constant 0 : index
    %c0_95 = arith.constant 0 : index
    %98 = vector.load %arg10[%c0_94, %c0_95] : memref<16x1024xf32, #tpu.memory_space<vmem>>, vector<16x1024xf32>
    tpu.vector_store %arg10[%c0_94, %c0_95], %97 {strides = array<i32>} : memref<16x1024xf32, #tpu.memory_space<vmem>>, vector<16x1024xf32>,
    %c6 = arith.constant 6 : index
    %c0_96 = arith.constant 0 : index
    %c0_97 = arith.constant 0 : index
    %99 = vector.load %arg2[%c6, %c0_96, %c0_97] : memref<7x16x576xbf16, #tpu.memory_space<vmem>>, vector<1x16x576xbf16>
    %100 = vector.shape_cast %99 : vector<1x16x576xbf16> to vector<16x576xbf16>
    %c0_98 = arith.constant 0 : index
    %c0_99 = arith.constant 0 : index
    %101 = vector.load %arg3[%c0_98, %c0_99] : memref<576x64xbf16, #tpu.memory_space<vmem>>, vector<576x64xbf16>
    %cst_100 = arith.constant dense<0.000000e+00> : vector<16x64xf32>
    %102 = tpu.matmul %100, %101, %cst_100 {dimension_numbers = #tpu.dot_dimension_numbers<[1], [0], [0], [1], [0, 0, 1, 1], [], []>} : vector<16x576xbf16>, vector<576x64xbf16>, vector<16x64xf32> -> vector<16x64xf32>
    %c0_101 = arith.constant 0 : index
    %c0_102 = arith.constant 0 : index
    %103 = vector.load %arg4[%c0_101, %c0_102] : memref<1x64xf32, #tpu.memory_space<vmem>>, vector<1x64xf32>
    %104 = vector.broadcast %103 : vector<1x64xf32> to vector<16x64xf32>
    %105 = arith.addf %102, %104 : vector<16x64xf32>
    %cst_103 = arith.constant 0.000000e+00 : f32
    %106 = vector.broadcast %cst_103 : f32 to vector<16x64xf32>
    %107 = arith.maximumf %105, %106 : vector<16x64xf32>
    %108 = arith.truncf %107 : vector<16x64xf32> to vector<16x64xbf16>
    %c0_104 = arith.constant 0 : index
    %c0_105 = arith.constant 0 : index
    %109 = vector.load %arg10[%c0_104, %c0_105] : memref<16x1024xf32, #tpu.memory_space<vmem>>, vector<16x1024xf32>
    %c6_106 = arith.constant 6 : index
    %c0_107 = arith.constant 0 : index
    %c0_108 = arith.constant 0 : index
    %110 = vector.load %arg5[%c6_106, %c0_107, %c0_108] : memref<7x64x1024xbf16, #tpu.memory_space<vmem>>, vector<1x64x1024xbf16>
    %111 = vector.shape_cast %110 : vector<1x64x1024xbf16> to vector<64x1024xbf16>
    %cst_109 = arith.constant dense<0.000000e+00> : vector<16x1024xf32>
    %112 = tpu.matmul %108, %111, %cst_109 {dimension_numbers = #tpu.dot_dimension_numbers<[1], [0], [0], [1], [0, 0, 1, 1], [], []>} : vector<16x64xbf16>, vector<64x1024xbf16>, vector<16x1024xf32> -> vector<16x1024xf32>
    %113 = arith.addf %109, %112 : vector<16x1024xf32>
    %c0_110 = arith.constant 0 : index
    %c0_111 = arith.constant 0 : index
    %114 = vector.load %arg10[%c0_110, %c0_111] : memref<16x1024xf32, #tpu.memory_space<vmem>>, vector<16x1024xf32>
    tpu.vector_store %arg10[%c0_110, %c0_111], %113 {strides = array<i32>} : memref<16x1024xf32, #tpu.memory_space<vmem>>, vector<16x1024xf32>,
    %c6_i32 = arith.constant 6 : i32
    %115 = arith.cmpi eq, %arg1, %c6_i32 : i32
    %116 = arith.extui %115 : i1 to i32
    %c0_i32_112 = arith.constant 0 : i32
    %117 = arith.cmpi ne, %116, %c0_i32_112 : i32
    scf.if %117 {
      %c0_113 = arith.constant 0 : index
      %c0_114 = arith.constant 0 : index
      %118 = vector.load %arg10[%c0_113, %c0_114] : memref<16x1024xf32, #tpu.memory_space<vmem>>, vector<16x1024xf32>
      %c0_115 = arith.constant 0 : index
      %c0_116 = arith.constant 0 : index
      %119 = vector.load %arg6[%c0_115, %c0_116] : memref<1x1024xf32, #tpu.memory_space<vmem>>, vector<1x1024xf32>
      %120 = vector.broadcast %119 : vector<1x1024xf32> to vector<16x1024xf32>
      %121 = arith.addf %118, %120 : vector<16x1024xf32>
      %cst_117 = arith.constant 0.000000e+00 : f32
      %122 = vector.broadcast %cst_117 : f32 to vector<16x1024xf32>
      %123 = arith.maximumf %121, %122 : vector<16x1024xf32>
      %c0_118 = arith.constant 0 : index
      %c0_119 = arith.constant 0 : index
      %124 = vector.load %arg7[%c0_118, %c0_119] : memref<1024x128xf32, #tpu.memory_space<vmem>>, vector<1024x128xf32>
      %cst_120 = arith.constant dense<0.000000e+00> : vector<16x128xf32>
      %125 = tpu.matmul %123, %124, %cst_120 {dimension_numbers = #tpu.dot_dimension_numbers<[1], [0], [0], [1], [0, 0, 1, 1], [], []>} : vector<16x1024xf32>, vector<1024x128xf32>, vector<16x128xf32> -> vector<16x128xf32>
      %c0_121 = arith.constant 0 : index
      %c0_122 = arith.constant 0 : index
      %126 = vector.load %arg8[%c0_121, %c0_122] : memref<1x128xf32, #tpu.memory_space<vmem>>, vector<1x128xf32>
      %127 = vector.broadcast %126 : vector<1x128xf32> to vector<16x128xf32>
      %128 = arith.addf %125, %127 : vector<16x128xf32>
      %129 = vector.extract_strided_slice %128 {offsets = [0, 0], sizes = [16, 6], strides = [1, 1]} : vector<16x128xf32> to vector<16x6xf32>
      %130 = vector.extract_strided_slice %128 {offsets = [0, 6], sizes = [16, 1], strides = [1, 1]} : vector<16x128xf32> to vector<16x1xf32>
      %cst_123 = arith.constant dense<0.000000e+00> : vector<16xf32>
      %131 = vector.multi_reduction <add>, %128, %cst_123 [1] : vector<16x128xf32> to vector<16xf32>
      %132 = vector.shape_cast %131 : vector<16xf32> to vector<16x1xf32>
      %133 = arith.subf %132, %130 : vector<16x1xf32>
      %134 = vector.broadcast %130 : vector<16x1xf32> to vector<16x6xf32>
      %135 = arith.addf %129, %134 : vector<16x6xf32>
      %cst_124 = arith.constant 0.166666672 : f32
      %136 = vector.broadcast %cst_124 : f32 to vector<16x1xf32>
      %137 = arith.mulf %133, %136 : vector<16x1xf32>
      %138 = vector.broadcast %137 : vector<16x1xf32> to vector<16x6xf32>
      %139 = arith.subf %135, %138 : vector<16x6xf32>
      %c0_125 = arith.constant 0 : index
      %c0_126 = arith.constant 0 : index
      %140 = vector.load %arg9[%c0_125, %c0_126] : memref<16x6xf32, #tpu.memory_space<vmem>>, vector<16x6xf32>
      tpu.vector_store %arg9[%c0_125, %c0_126], %139 {strides = array<i32>} : memref<16x6xf32, #tpu.memory_space<vmem>>, vector<16x6xf32>,
    } else {
    }
    return
  }
  func.func @transform_0(%arg0: i32, %arg1: i32) -> (i32, i32, i32) {
    %c0_i32 = arith.constant 0 : i32
    %c0_i32_0 = arith.constant 0 : i32
    return %arg1, %arg0, %c0_i32 : i32, i32, i32
  }
  func.func @transform_1(%arg0: i32, %arg1: i32) -> (i32, i32) {
    %c0_i32 = arith.constant 0 : i32
    %c0_i32_0 = arith.constant 0 : i32
    %c0_i32_1 = arith.constant 0 : i32
    return %c0_i32, %c0_i32_0 : i32, i32
  }
  func.func @transform_2(%arg0: i32, %arg1: i32) -> (i32, i32) {
    %c0_i32 = arith.constant 0 : i32
    %c0_i32_0 = arith.constant 0 : i32
    %c0_i32_1 = arith.constant 0 : i32
    return %c0_i32, %c0_i32_0 : i32, i32
  }
  func.func @transform_3(%arg0: i32, %arg1: i32) -> (i32, i32, i32) {
    %c0_i32 = arith.constant 0 : i32
    %c0_i32_0 = arith.constant 0 : i32
    %c0_i32_1 = arith.constant 0 : i32
    return %arg1, %c0_i32, %c0_i32_0 : i32, i32, i32
  }
  func.func @transform_4(%arg0: i32, %arg1: i32) -> (i32, i32) {
    %c0_i32 = arith.constant 0 : i32
    %c0_i32_0 = arith.constant 0 : i32
    %c0_i32_1 = arith.constant 0 : i32
    return %c0_i32, %c0_i32_0 : i32, i32
  }
  func.func @transform_5(%arg0: i32, %arg1: i32) -> (i32, i32) {
    %c0_i32 = arith.constant 0 : i32
    %c0_i32_0 = arith.constant 0 : i32
    %c0_i32_1 = arith.constant 0 : i32
    return %c0_i32, %c0_i32_0 : i32, i32
  }
  func.func @transform_6(%arg0: i32, %arg1: i32) -> (i32, i32) {
    %c0_i32 = arith.constant 0 : i32
    %c0_i32_0 = arith.constant 0 : i32
    %c0_i32_1 = arith.constant 0 : i32
    return %c0_i32, %c0_i32_0 : i32, i32
  }
  func.func @transform_7(%arg0: i32, %arg1: i32) -> (i32, i32) {
    %c0_i32 = arith.constant 0 : i32
    %c0_i32_0 = arith.constant 0 : i32
    return %arg0, %c0_i32 : i32, i32
  }
}

</mosaic_0001>

<llo_original>
// kernel: noisy_duel_forward.3
$region0: #{noisy_duel_forward.3}
  #allocation0 [shape = 'u32[]', space=smem, size = 0x4, offset = 0x4, fixed_abs, tag = 'smem constant byte address 0x4 - core index']
  #allocation1 [shape = 'u32[72,128]{1,0:T(1,128)}', space=vmem, size = 0x9000, scoped, tag = 'internal scratch']
  %s0 = inlined_call_operand.vmem [shape: bf16[800,256], index: 0, kind: input, shape index: {}]
  %s1 = inlined_call_operand.vmem [shape: bf16[256,128], index: 1, kind: input, shape index: {}]
  %s2 = inlined_call_operand.vmem [shape: f32[1,128], index: 2, kind: input, shape index: {}]
  %s3 = inlined_call_operand.vmem [shape: bf16[800,128], index: 3, kind: output, shape index: {}]
  %s4 = sld [smem:[#allocation0]]
  $region22: #{noisy_duel_forward.3} parent=0
    _
  %s6 = ssub.s32 1, %s4
  %s7 = scalar_select 0, %s6, %s4
  // Predicated region
  $region2: #{noisy_duel_forward.3} parent=0 // pred_check
    _
  $region3: #{noisy_duel_forward.3} parent=0 // pred_check_branch
    %9 = sbr.rel (0) target = $region5
  $region4: #{noisy_duel_forward.3} parent=0 // pred_region
    _
  $region5: #{noisy_duel_forward.3} parent=0 // pred_fallthru
    _
  // Predicated region
  $region6: #{noisy_duel_forward.3} parent=0 // pred_check
    _
  $region7: #{noisy_duel_forward.3} parent=0 // pred_check_branch
    %11 = sbr.rel (0) target = $region9
  $region8: #{noisy_duel_forward.3} parent=0 // pred_region
    _
  $region9: #{noisy_duel_forward.3} parent=0 // pred_fallthru
    _
  // Predicated region
  $region10: #{noisy_duel_forward.3} parent=0 // pred_check
    _
  $region11: #{noisy_duel_forward.3} parent=0 // pred_check_branch
    %13 = sbr.rel (0) target = $region13
  $region12: #{noisy_duel_forward.3} parent=0 // pred_region
    _
  $region13: #{noisy_duel_forward.3} parent=0 // pred_fallthru
    _
  %v14 = vld [vmem:[%s0] sm:$0xff]
  %v15 = vld [vmem:[%s0 + $0x8] sm:$0xff]
  %v16 = vld [vmem:[%s0 + $0x10] sm:$0xff]
  %v17 = vld [vmem:[%s0 + $0x18] sm:$0xff]
  %v18 = vld [vmem:[%s0 + $0x20] sm:$0xff]
  %v19 = vld [vmem:[%s0 + $0x28] sm:$0xff]
  %v20 = vld [vmem:[%s0 + $0x30] sm:$0xff]
  %v21 = vld [vmem:[%s0 + $0x38] sm:$0xff]
  %v22 = vld [vmem:[%s0 + $0x40] sm:$0xff]
  %v23 = vld [vmem:[%s0 + $0x48] sm:$0xff]
  %v24 = vld [vmem:[%s0 + $0x50] sm:$0xff]
  %v25 = vld [vmem:[%s0 + $0x58] sm:$0xff]
  %v26 = vld [vmem:[%s0 + $0x60] sm:$0xff]
  %v27 = vld [vmem:[%s0 + $0x68] sm:$0xff]
  %v28 = vld [vmem:[%s0 + $0x70] sm:$0xff]
  %v29 = vld [vmem:[%s0 + $0x78] sm:$0xff]
  %v30 = vld [vmem:[%s0 + $0x80] sm:$0xff]
  %v31 = vld [vmem:[%s0 + $0x88] sm:$0xff]
  %v32 = vld [vmem:[%s0 + $0x90] sm:$0xff]
  %v33 = vld [vmem:[%s0 + $0x98] sm:$0xff]
  %v34 = vld [vmem:[%s0 + $0xa0] sm:$0xff]
  %v35 = vld [vmem:[%s0 + $0xa8] sm:$0xff]
  %v36 = vld [vmem:[%s0 + $0xb0] sm:$0xff]
  %v37 = vld [vmem:[%s0 + $0xb8] sm:$0xff]
  %v38 = vld [vmem:[%s0 + $0xc0] sm:$0xff]
  %v39 = vld [vmem:[%s0 + $0xc8] sm:$0xff]
  %v40 = vld [vmem:[%s0 + $0xd0] sm:$0xff]
  %v41 = vld [vmem:[%s0 + $0xd8] sm:$0xff]
  %v42 = vld [vmem:[%s0 + $0xe0] sm:$0xff]
  %v43 = vld [vmem:[%s0 + $0xe8] sm:$0xff]
  %v44 = vld [vmem:[%s0 + $0xf0] sm:$0xff]
  %v45 = vld [vmem:[%s0 + $0xf8] sm:$0xff]
  %v46 = vld [vmem:[%s0 + $0x100] sm:$0xff]
  %v47 = vld [vmem:[%s0 + $0x108] sm:$0xff]
  %v48 = vld [vmem:[%s0 + $0x110] sm:$0xff]
  %v49 = vld [vmem:[%s0 + $0x118] sm:$0xff]
  %v50 = vld [vmem:[%s0 + $0x120] sm:$0xff]
  %v51 = vld [vmem:[%s0 + $0x128] sm:$0xff]
  %v52 = vld [vmem:[%s0 + $0x130] sm:$0xff]
  %v53 = vld [vmem:[%s0 + $0x138] sm:$0xff]
  %v54 = vld [vmem:[%s0 + $0x140] sm:$0xff]
  %v55 = vld [vmem:[%s0 + $0x148] sm:$0xff]
  %v56 = vld [vmem:[%s0 + $0x150] sm:$0xff]
  %v57 = vld [vmem:[%s0 + $0x158] sm:$0xff]
  %v58 = vld [vmem:[%s0 + $0x160] sm:$0xff]
  %v59 = vld [vmem:[%s0 + $0x168] sm:$0xff]
  %v60 = vld [vmem:[%s0 + $0x170] sm:$0xff]
  %v61 = vld [vmem:[%s0 + $0x178] sm:$0xff]
  %v62 = vld [vmem:[%s0 + $0x180] sm:$0xff]
  %v63 = vld [vmem:[%s0 + $0x188] sm:$0xff]
  %v64 = vld [vmem:[%s0 + $0x190] sm:$0xff]
  %v65 = vld [vmem:[%s0 + $0x198] sm:$0xff]
  %v66 = vld [vmem:[%s0 + $0x1a0] sm:$0xff]
  %v67 = vld [vmem:[%s0 + $0x1a8] sm:$0xff]
  %v68 = vld [vmem:[%s0 + $0x1b0] sm:$0xff]
  %v69 = vld [vmem:[%s0 + $0x1b8] sm:$0xff]
  %v70 = vld [vmem:[%s0 + $0x1c0] sm:$0xff]
  %v71 = vld [vmem:[%s0 + $0x1c8] sm:$0xff]
  %v72 = vld [vmem:[%s0 + $0x1d0] sm:$0xff]
  %v73 = vld [vmem:[%s0 + $0x1d8] sm:$0xff]
  %v74 = vld [vmem:[%s0 + $0x1e0] sm:$0xff]
  %v75 = vld [vmem:[%s0 + $0x1e8] sm:$0xff]
  %v76 = vld [vmem:[%s0 + $0x1f0] sm:$0xff]
  %v77 = vld [vmem:[%s0 + $0x1f8] sm:$0xff]
  %v78 = vld [vmem:[%s0 + $0x200] sm:$0xff]
  %v79 = vld [vmem:[%s0 + $0x208] sm:$0xff]
  %v80 = vld [vmem:[%s0 + $0x210] sm:$0xff]
  %v81 = vld [vmem:[%s0 + $0x218] sm:$0xff]
  %v82 = vld [vmem:[%s0 + $0x220] sm:$0xff]
  %v83 = vld [vmem:[%s0 + $0x228] sm:$0xff]
  %v84 = vld [vmem:[%s0 + $0x230] sm:$0xff]
  %v85 = vld [vmem:[%s0 + $0x238] sm:$0xff]
  %v86 = vld [vmem:[%s0 + $0x240] sm:$0xff]
  %v87 = vld [vmem:[%s0 + $0x248] sm:$0xff]
  %v88 = vld [vmem:[%s0 + $0x250] sm:$0xff]
  %v89 = vld [vmem:[%s0 + $0x258] sm:$0xff]
  %v90 = vld [vmem:[%s0 + $0x260] sm:$0xff]
  %v91 = vld [vmem:[%s0 + $0x268] sm:$0xff]
  %v92 = vld [vmem:[%s0 + $0x270] sm:$0xff]
  %v93 = vld [vmem:[%s0 + $0x278] sm:$0xff]
  %v94 = vld [vmem:[%s0 + $0x280] sm:$0xff]
  %v95 = vld [vmem:[%s0 + $0x288] sm:$0xff]
  %v96 = vld [vmem:[%s0 + $0x290] sm:$0xff]
  %v97 = vld [vmem:[%s0 + $0x298] sm:$0xff]
  %v98 = vld [vmem:[%s0 + $0x2a0] sm:$0xff]
  %v99 = vld [vmem:[%s0 + $0x2a8] sm:$0xff]
  %v100 = vld [vmem:[%s0 + $0x2b0] sm:$0xff]
  %v101 = vld [vmem:[%s0 + $0x2b8] sm:$0xff]
  %v102 = vld [vmem:[%s0 + $0x2c0] sm:$0xff]
  %v103 = vld [vmem:[%s0 + $0x2c8] sm:$0xff]
  %v104 = vld [vmem:[%s0 + $0x2d0] sm:$0xff]
  %v105 = vld [vmem:[%s0 + $0x2d8] sm:$0xff]
  %v106 = vld [vmem:[%s0 + $0x2e0] sm:$0xff]
  %v107 = vld [vmem:[%s0 + $0x2e8] sm:$0xff]
  %v108 = vld [vmem:[%s0 + $0x2f0] sm:$0xff]
  %v109 = vld [vmem:[%s0 + $0x2f8] sm:$0xff]
  %v110 = vld [vmem:[%s0 + $0x300] sm:$0xff]
  %v111 = vld [vmem:[%s0 + $0x308] sm:$0xff]
  %v112 = vld [vmem:[%s0 + $0x310] sm:$0xff]
  %v113 = vld [vmem:[%s0 + $0x318] sm:$0xff]
  %v114 = vld [vmem:[%s1] sm:$0xf]
  %v115 = vld [vmem:[%s1 + $0x4] sm:$0xf]
  %v116 = vld [vmem:[%s1 + $0x8] sm:$0xf]
  %v117 = vld [vmem:[%s1 + $0xc] sm:$0xf]
  %v118 = vld [vmem:[%s1 + $0x10] sm:$0xf]
  %v119 = vld [vmem:[%s1 + $0x14] sm:$0xf]
  %v120 = vld [vmem:[%s1 + $0x18] sm:$0xf]
  %v121 = vld [vmem:[%s1 + $0x1c] sm:$0xf]
  %v122 = vld [vmem:[%s1 + $0x20] sm:$0xf]
  %v123 = vld [vmem:[%s1 + $0x24] sm:$0xf]
  %v124 = vld [vmem:[%s1 + $0x28] sm:$0xf]
  %v125 = vld [vmem:[%s1 + $0x2c] sm:$0xf]
  %v126 = vld [vmem:[%s1 + $0x30] sm:$0xf]
  %v127 = vld [vmem:[%s1 + $0x34] sm:$0xf]
  %v128 = vld [vmem:[%s1 + $0x38] sm:$0xf]
  %v129 = vld [vmem:[%s1 + $0x3c] sm:$0xf]
  %v130 = vld [vmem:[%s1 + $0x40] sm:$0xf]
  %v131 = vld [vmem:[%s1 + $0x44] sm:$0xf]
  %v132 = vld [vmem:[%s1 + $0x48] sm:$0xf]
  %v133 = vld [vmem:[%s1 + $0x4c] sm:$0xf]
  %v134 = vld [vmem:[%s1 + $0x50] sm:$0xf]
  %v135 = vld [vmem:[%s1 + $0x54] sm:$0xf]
  %v136 = vld [vmem:[%s1 + $0x58] sm:$0xf]
  %v137 = vld [vmem:[%s1 + $0x5c] sm:$0xf]
  %v138 = vld [vmem:[%s1 + $0x60] sm:$0xf]
  %v139 = vld [vmem:[%s1 + $0x64] sm:$0xf]
  %v140 = vld [vmem:[%s1 + $0x68] sm:$0xf]
  %v141 = vld [vmem:[%s1 + $0x6c] sm:$0xf]
  %v142 = vld [vmem:[%s1 + $0x70] sm:$0xf]
  %v143 = vld [vmem:[%s1 + $0x74] sm:$0xf]
  %v144 = vld [vmem:[%s1 + $0x78] sm:$0xf]
  %v145 = vld [vmem:[%s1 + $0x7c] sm:$0xf]
  %v146 = vld [vmem:[%s2] sm:$0x1]
  %v148 = vperm.slane %v146, 0
  %v250 = vunpack.c.l.b16 %v14
  %v251 = vunpack.c.h.b16 %v14
  %v252 = vunpack.c.l.b16 %v15
  %v253 = vunpack.c.h.b16 %v15
  %v254 = vunpack.c.l.b16 %v16
  %v255 = vunpack.c.h.b16 %v16
  %v256 = vunpack.c.l.b16 %v17
  %v257 = vunpack.c.h.b16 %v17
  %v258 = vunpack.c.l.b16 %v18
  %v259 = vunpack.c.h.b16 %v18
  %v260 = vunpack.c.l.b16 %v19
  %v261 = vunpack.c.h.b16 %v19
  %v262 = vunpack.c.l.b16 %v20
  %v263 = vunpack.c.h.b16 %v20
  %v264 = vunpack.c.l.b16 %v21
  %v265 = vunpack.c.h.b16 %v21
  %v266 = vunpack.c.l.b16 %v22
  %v267 = vunpack.c.h.b16 %v22
  %v268 = vunpack.c.l.b16 %v23
  %v269 = vunpack.c.h.b16 %v23
  %v270 = vunpack.c.l.b16 %v24
  %v271 = vunpack.c.h.b16 %v24
  %v272 = vunpack.c.l.b16 %v25
  %v273 = vunpack.c.h.b16 %v25
  %v274 = vunpack.c.l.b16 %v26
  %v275 = vunpack.c.h.b16 %v26
  %v276 = vunpack.c.l.b16 %v27
  %v277 = vunpack.c.h.b16 %v27
  %v278 = vunpack.c.l.b16 %v28
  %v279 = vunpack.c.h.b16 %v28
  %v280 = vunpack.c.l.b16 %v29
  %v281 = vunpack.c.h.b16 %v29
  %v282 = vunpack.c.l.b16 %v30
  %v283 = vunpack.c.h.b16 %v30
  %v284 = vunpack.c.l.b16 %v31
  %v285 = vunpack.c.h.b16 %v31
  %v286 = vunpack.c.l.b16 %v32
  %v287 = vunpack.c.h.b16 %v32
  %v288 = vunpack.c.l.b16 %v33
  %v289 = vunpack.c.h.b16 %v33
  %v290 = vunpack.c.l.b16 %v34
  %v291 = vunpack.c.h.b16 %v34
  %v292 = vunpack.c.l.b16 %v35
  %v293 = vunpack.c.h.b16 %v35
  %v294 = vunpack.c.l.b16 %v36
  %v295 = vunpack.c.h.b16 %v36
  %v296 = vunpack.c.l.b16 %v37
  %v297 = vunpack.c.h.b16 %v37
  %v298 = vunpack.c.l.b16 %v38
  %v299 = vunpack.c.h.b16 %v38
  %v300 = vunpack.c.l.b16 %v39
  %v301 = vunpack.c.h.b16 %v39
  %v302 = vunpack.c.l.b16 %v40
  %v303 = vunpack.c.h.b16 %v40
  %v304 = vunpack.c.l.b16 %v41
  %v305 = vunpack.c.h.b16 %v41
  %v306 = vunpack.c.l.b16 %v42
  %v307 = vunpack.c.h.b16 %v42
  %v308 = vunpack.c.l.b16 %v43
  %v309 = vunpack.c.h.b16 %v43
  %v310 = vunpack.c.l.b16 %v44
  %v311 = vunpack.c.h.b16 %v44
  %v312 = vunpack.c.l.b16 %v45
  %v313 = vunpack.c.h.b16 %v45
  %v314 = vunpack.c.l.b16 %v46
  %v315 = vunpack.c.h.b16 %v46
  %v316 = vunpack.c.l.b16 %v47
  %v317 = vunpack.c.h.b16 %v47
  %v318 = vunpack.c.l.b16 %v48
  %v319 = vunpack.c.h.b16 %v48
  %v320 = vunpack.c.l.b16 %v49
  %v321 = vunpack.c.h.b16 %v49
  %v322 = vunpack.c.l.b16 %v50
  %v323 = vunpack.c.h.b16 %v50
  %v324 = vunpack.c.l.b16 %v51
  %v325 = vunpack.c.h.b16 %v51
  %v326 = vunpack.c.l.b16 %v52
  %v327 = vunpack.c.h.b16 %v52
  %v328 = vunpack.c.l.b16 %v53
  %v329 = vunpack.c.h.b16 %v53
  %v330 = vunpack.c.l.b16 %v54
  %v331 = vunpack.c.h.b16 %v54
  %v332 = vunpack.c.l.b16 %v55
  %v333 = vunpack.c.h.b16 %v55
  %v334 = vunpack.c.l.b16 %v56
  %v335 = vunpack.c.h.b16 %v56
  %v336 = vunpack.c.l.b16 %v57
  %v337 = vunpack.c.h.b16 %v57
  %v338 = vunpack.c.l.b16 %v58
  %v339 = vunpack.c.h.b16 %v58
  %v340 = vunpack.c.l.b16 %v59
  %v341 = vunpack.c.h.b16 %v59
  %v342 = vunpack.c.l.b16 %v60
  %v343 = vunpack.c.h.b16 %v60
  %v344 = vunpack.c.l.b16 %v61
  %v345 = vunpack.c.h.b16 %v61
  %v346 = vunpack.c.l.b16 %v62
  %v347 = vunpack.c.h.b16 %v62
  %v348 = vunpack.c.l.b16 %v63
  %v349 = vunpack.c.h.b16 %v63
  %v350 = vunpack.c.l.b16 %v64
  %v351 = vunpack.c.h.b16 %v64
  %v352 = vunpack.c.l.b16 %v65
  %v353 = vunpack.c.h.b16 %v65
  %v354 = vunpack.c.l.b16 %v66
  %v355 = vunpack.c.h.b16 %v66
  %v356 = vunpack.c.l.b16 %v67
  %v357 = vunpack.c.h.b16 %v67
  %v358 = vunpack.c.l.b16 %v68
  %v359 = vunpack.c.h.b16 %v68
  %v360 = vunpack.c.l.b16 %v69
  %v361 = vunpack.c.h.b16 %v69
  %v362 = vunpack.c.l.b16 %v70
  %v363 = vunpack.c.h.b16 %v70
  %v364 = vunpack.c.l.b16 %v71
  %v365 = vunpack.c.h.b16 %v71
  %v366 = vunpack.c.l.b16 %v72
  %v367 = vunpack.c.h.b16 %v72
  %v368 = vunpack.c.l.b16 %v73
  %v369 = vunpack.c.h.b16 %v73
  %v370 = vunpack.c.l.b16 %v74
  %v371 = vunpack.c.h.b16 %v74
  %v372 = vunpack.c.l.b16 %v75
  %v373 = vunpack.c.h.b16 %v75
  %v374 = vunpack.c.l.b16 %v76
  %v375 = vunpack.c.h.b16 %v76
  %v376 = vunpack.c.l.b16 %v77
  %v377 = vunpack.c.h.b16 %v77
  %v378 = vunpack.c.l.b16 %v78
  %v379 = vunpack.c.h.b16 %v78
  %v380 = vunpack.c.l.b16 %v79
  %v381 = vunpack.c.h.b16 %v79
  %v382 = vunpack.c.l.b16 %v80
  %v383 = vunpack.c.h.b16 %v80
  %v384 = vunpack.c.l.b16 %v81
  %v385 = vunpack.c.h.b16 %v81
  %v386 = vunpack.c.l.b16 %v82
  %v387 = vunpack.c.h.b16 %v82
  %v388 = vunpack.c.l.b16 %v83
  %v389 = vunpack.c.h.b16 %v83
  %v390 = vunpack.c.l.b16 %v84
  %v391 = vunpack.c.h.b16 %v84
  %v392 = vunpack.c.l.b16 %v85
  %v393 = vunpack.c.h.b16 %v85
  %v394 = vunpack.c.l.b16 %v86
  %v395 = vunpack.c.h.b16 %v86
  %v396 = vunpack.c.l.b16 %v87
  %v397 = vunpack.c.h.b16 %v87
  %v398 = vunpack.c.l.b16 %v88
  %v399 = vunpack.c.h.b16 %v88
  %v400 = vunpack.c.l.b16 %v89
  %v401 = vunpack.c.h.b16 %v89
  %v402 = vunpack.c.l.b16 %v90
  %v403 = vunpack.c.h.b16 %v90
  %v404 = vunpack.c.l.b16 %v91
  %v405 = vunpack.c.h.b16 %v91
  %v406 = vunpack.c.l.b16 %v92
  %v407 = vunpack.c.h.b16 %v92
  %v408 = vunpack.c.l.b16 %v93
  %v409 = vunpack.c.h.b16 %v93
  %v410 = vunpack.c.l.b16 %v94
  %v411 = vunpack.c.h.b16 %v94
  %v412 = vunpack.c.l.b16 %v95
  %v413 = vunpack.c.h.b16 %v95
  %v414 = vunpack.c.l.b16 %v96
  %v415 = vunpack.c.h.b16 %v96
  %v416 = vunpack.c.l.b16 %v97
  %v417 = vunpack.c.h.b16 %v97
  %v418 = vunpack.c.l.b16 %v98
  %v419 = vunpack.c.h.b16 %v98
  %v420 = vunpack.c.l.b16 %v99
  %v421 = vunpack.c.h.b16 %v99
  %v422 = vunpack.c.l.b16 %v100
  %v423 = vunpack.c.h.b16 %v100
  %v424 = vunpack.c.l.b16 %v101
  %v425 = vunpack.c.h.b16 %v101
  %v426 = vunpack.c.l.b16 %v102
  %v427 = vunpack.c.h.b16 %v102
  %v428 = vunpack.c.l.b16 %v103
  %v429 = vunpack.c.h.b16 %v103
  %v430 = vunpack.c.l.b16 %v104
  %v431 = vunpack.c.h.b16 %v104
  %v432 = vunpack.c.l.b16 %v105
  %v433 = vunpack.c.h.b16 %v105
  %v434 = vunpack.c.l.b16 %v106
  %v435 = vunpack.c.h.b16 %v106
  %v436 = vunpack.c.l.b16 %v107
  %v437 = vunpack.c.h.b16 %v107
  %v438 = vunpack.c.l.b16 %v108
  %v439 = vunpack.c.h.b16 %v108
  %v440 = vunpack.c.l.b16 %v109
  %v441 = vunpack.c.h.b16 %v109
  %v442 = vunpack.c.l.b16 %v110
  %v443 = vunpack.c.h.b16 %v110
  %v444 = vunpack.c.l.b16 %v111
  %v445 = vunpack.c.h.b16 %v111
  %v446 = vunpack.c.l.b16 %v112
  %v447 = vunpack.c.h.b16 %v112
  %v448 = vunpack.c.l.b16 %v113
  %v449 = vunpack.c.h.b16 %v113
  %v450 = vpack.c.b16 %v252, %v250
  %v451 = vpack.c.b16 %v253, %v251
  %v452 = vpack.c.b16 %v256, %v254
  %v453 = vpack.c.b16 %v257, %v255
  %v454 = vpack.c.b16 %v260, %v258
  %v455 = vpack.c.b16 %v261, %v259
  %v456 = vpack.c.b16 %v264, %v262
  %v457 = vpack.c.b16 %v265, %v263
  %v458 = vpack.c.b16 %v268, %v266
  %v459 = vpack.c.b16 %v269, %v267
  %v460 = vpack.c.b16 %v272, %v270
  %v461 = vpack.c.b16 %v273, %v271
  %v462 = vpack.c.b16 %v276, %v274
  %v463 = vpack.c.b16 %v277, %v275
  %v464 = vpack.c.b16 %v280, %v278
  %v465 = vpack.c.b16 %v281, %v279
  %v466 = vpack.c.b16 %v284, %v282
  %v467 = vpack.c.b16 %v285, %v283
  %v468 = vpack.c.b16 %v288, %v286
  %v469 = vpack.c.b16 %v289, %v287
  %v470 = vpack.c.b16 %v292, %v290
  %v471 = vpack.c.b16 %v293, %v291
  %v472 = vpack.c.b16 %v296, %v294
  %v473 = vpack.c.b16 %v297, %v295
  %v474 = vpack.c.b16 %v300, %v298
  %v475 = vpack.c.b16 %v301, %v299
  %v476 = vpack.c.b16 %v304, %v302
  %v477 = vpack.c.b16 %v305, %v303
  %v478 = vpack.c.b16 %v308, %v306
  %v479 = vpack.c.b16 %v309, %v307
  %v480 = vpack.c.b16 %v312, %v310
  %v481 = vpack.c.b16 %v313, %v311
  %v482 = vpack.c.b16 %v316, %v314
  %v483 = vpack.c.b16 %v317, %v315
  %v484 = vpack.c.b16 %v320, %v318
  %v485 = vpack.c.b16 %v321, %v319
  %v486 = vpack.c.b16 %v324, %v322
  %v487 = vpack.c.b16 %v325, %v323
  %v488 = vpack.c.b16 %v328, %v326
  %v489 = vpack.c.b16 %v329, %v327
  %v490 = vpack.c.b16 %v332, %v330
  %v491 = vpack.c.b16 %v333, %v331
  %v492 = vpack.c.b16 %v336, %v334
  %v493 = vpack.c.b16 %v337, %v335
  %v494 = vpack.c.b16 %v340, %v338
  %v495 = vpack.c.b16 %v341, %v339
  %v496 = vpack.c.b16 %v344, %v342
  %v497 = vpack.c.b16 %v345, %v343
  %v498 = vpack.c.b16 %v348, %v346
  %v499 = vpack.c.b16 %v349, %v347
  %v500 = vpack.c.b16 %v352, %v350
  %v501 = vpack.c.b16 %v353, %v351
  %v502 = vpack.c.b16 %v356, %v354
  %v503 = vpack.c.b16 %v357, %v355
  %v504 = vpack.c.b16 %v360, %v358
  %v505 = vpack.c.b16 %v361, %v359
  %v506 = vpack.c.b16 %v364, %v362
  %v507 = vpack.c.b16 %v365, %v363
  %v508 = vpack.c.b16 %v368, %v366
  %v509 = vpack.c.b16 %v369, %v367
  %v510 = vpack.c.b16 %v372, %v370
  %v511 = vpack.c.b16 %v373, %v371
  %v512 = vpack.c.b16 %v376, %v374
  %v513 = vpack.c.b16 %v377, %v375
  %v514 = vpack.c.b16 %v380, %v378
  %v515 = vpack.c.b16 %v381, %v379
  %v516 = vpack.c.b16 %v384, %v382
  %v517 = vpack.c.b16 %v385, %v383
  %v518 = vpack.c.b16 %v388, %v386
  %v519 = vpack.c.b16 %v389, %v387
  %v520 = vpack.c.b16 %v392, %v390
  %v521 = vpack.c.b16 %v393, %v391
  %v522 = vpack.c.b16 %v396, %v394
  %v523 = vpack.c.b16 %v397, %v395
  %v524 = vpack.c.b16 %v400, %v398
  %v525 = vpack.c.b16 %v401, %v399
  %v526 = vpack.c.b16 %v404, %v402
  %v527 = vpack.c.b16 %v405, %v403
  %v528 = vpack.c.b16 %v408, %v406
  %v529 = vpack.c.b16 %v409, %v407
  %v530 = vpack.c.b16 %v412, %v410
  %v531 = vpack.c.b16 %v413, %v411
  %v532 = vpack.c.b16 %v416, %v414
  %v533 = vpack.c.b16 %v417, %v415
  %v534 = vpack.c.b16 %v420, %v418
  %v535 = vpack.c.b16 %v421, %v419
  %v536 = vpack.c.b16 %v424, %v422
  %v537 = vpack.c.b16 %v425, %v423
  %v538 = vpack.c.b16 %v428, %v426
  %v539 = vpack.c.b16 %v429, %v427
  %v540 = vpack.c.b16 %v432, %v430
  %v541 = vpack.c.b16 %v433, %v431
  %v542 = vpack.c.b16 %v436, %v434
  %v543 = vpack.c.b16 %v437, %v435
  %v544 = vpack.c.b16 %v440, %v438
  %v545 = vpack.c.b16 %v441, %v439
  %v546 = vpack.c.b16 %v444, %v442
  %v547 = vpack.c.b16 %v445, %v443
  %v548 = vpack.c.b16 %v448, %v446
  %v549 = vpack.c.b16 %v449, %v447
  %v682 = vunpack.c.l.b16 %v114
  %v683 = vunpack.c.l.b16 %v115
  %v684 = vunpack.c.l.b16 %v116
  %v685 = vunpack.c.l.b16 %v117
  %v686 = vunpack.c.l.b16 %v118
  %v687 = vunpack.c.l.b16 %v119
  %v688 = vunpack.c.l.b16 %v120
  %v689 = vunpack.c.l.b16 %v121
  %v690 = vunpack.c.l.b16 %v122
  %v691 = vunpack.c.l.b16 %v123
  %v692 = vunpack.c.l.b16 %v124
  %v693 = vunpack.c.l.b16 %v125
  %v694 = vunpack.c.l.b16 %v126
  %v695 = vunpack.c.l.b16 %v127
  %v696 = vunpack.c.l.b16 %v128
  %v697 = vunpack.c.l.b16 %v129
  %v698 = vunpack.c.l.b16 %v130
  %v699 = vunpack.c.l.b16 %v131
  %v700 = vunpack.c.l.b16 %v132
  %v701 = vunpack.c.l.b16 %v133
  %v702 = vunpack.c.l.b16 %v134
  %v703 = vunpack.c.l.b16 %v135
  %v704 = vunpack.c.l.b16 %v136
  %v705 = vunpack.c.l.b16 %v137
  %v706 = vunpack.c.l.b16 %v138
  %v707 = vunpack.c.l.b16 %v139
  %v708 = vunpack.c.l.b16 %v140
  %v709 = vunpack.c.l.b16 %v141
  %v710 = vunpack.c.l.b16 %v142
  %v711 = vunpack.c.l.b16 %v143
  %v712 = vunpack.c.l.b16 %v144
  %v713 = vunpack.c.l.b16 %v145
  %v714 = vpack.c.b16 %v683, %v682
  %v715 = vpack.c.b16 %v685, %v684
  %v716 = vpack.c.b16 %v687, %v686
  %v717 = vpack.c.b16 %v689, %v688
  %v718 = vpack.c.b16 %v691, %v690
  %v719 = vpack.c.b16 %v693, %v692
  %v720 = vpack.c.b16 %v695, %v694
  %v721 = vpack.c.b16 %v697, %v696
  %v722 = vpack.c.b16 %v699, %v698
  %v723 = vpack.c.b16 %v701, %v700
  %v724 = vpack.c.b16 %v703, %v702
  %v725 = vpack.c.b16 %v705, %v704
  %v726 = vpack.c.b16 %v707, %v706
  %v727 = vpack.c.b16 %v709, %v708
  %v728 = vpack.c.b16 %v711, %v710
  %v729 = vpack.c.b16 %v713, %v712
  %746 = vmatpush.bf16.msra.mxu0 %v721
  %747 = vmatpush.bf16.msra.mxu0 %v720
  %748 = vmatpush.bf16.msra.mxu0 %v719
  %749 = vmatpush.bf16.msra.mxu0 %v718
  %750 = vmatpush.bf16.msra.mxu0 %v717
  %751 = vmatpush.bf16.msra.mxu0 %v716
  %752 = vmatpush.bf16.msra.mxu0 %v715
  %753 = vmatpush.bf16.msra.mxu0 %v714
  %754 = vmatmul.bf16.gmra.mxu0 %v450
  %v755 = vpop.f32.mrf.mxu0
  %v756 = vadd.f32 %v148, %v755
  %v757 = vpop.f32.mrf.mxu0
  %v758 = vadd.f32 %v148, %v757
  %759 = vmatmul.bf16.gmra.mxu0 %v452
  %v760 = vpop.f32.mrf.mxu0
  %v761 = vadd.f32 %v148, %v760
  %v762 = vpop.f32.mrf.mxu0
  %v763 = vadd.f32 %v148, %v762
  %764 = vmatmul.bf16.gmra.mxu0 %v454
  %v765 = vpop.f32.mrf.mxu0
  %v766 = vadd.f32 %v148, %v765
  %v767 = vpop.f32.mrf.mxu0
  %v768 = vadd.f32 %v148, %v767
  %769 = vmatmul.bf16.gmra.mxu0 %v456
  %v770 = vpop.f32.mrf.mxu0
  %v771 = vadd.f32 %v148, %v770
  %v772 = vpop.f32.mrf.mxu0
  %v773 = vadd.f32 %v148, %v772
  %774 = vmatmul.bf16.gmra.mxu0 %v458
  %v775 = vpop.f32.mrf.mxu0
  %v776 = vadd.f32 %v148, %v775
  %v777 = vpop.f32.mrf.mxu0
  %v778 = vadd.f32 %v148, %v777
  %779 = vmatmul.bf16.gmra.mxu0 %v460
  %v780 = vpop.f32.mrf.mxu0
  %v781 = vadd.f32 %v148, %v780
  %v782 = vpop.f32.mrf.mxu0
  %v783 = vadd.f32 %v148, %v782
  %784 = vmatmul.bf16.gmra.mxu0 %v462
  %v785 = vpop.f32.mrf.mxu0
  %v786 = vadd.f32 %v148, %v785
  %v787 = vpop.f32.mrf.mxu0
  %v788 = vadd.f32 %v148, %v787
  %789 = vmatmul.bf16.gmra.mxu0 %v464
  %v790 = vpop.f32.mrf.mxu0
  %v791 = vadd.f32 %v148, %v790
  %v792 = vpop.f32.mrf.mxu0
  %v793 = vadd.f32 %v148, %v792
  %794 = vmatmul.bf16.gmra.mxu0 %v466
  %v795 = vpop.f32.mrf.mxu0
  %v796 = vadd.f32 %v148, %v795
  %v797 = vpop.f32.mrf.mxu0
  %v798 = vadd.f32 %v148, %v797
  %799 = vmatmul.bf16.gmra.mxu0 %v468
  %v800 = vpop.f32.mrf.mxu0
  %v801 = vadd.f32 %v148, %v800
  %v802 = vpop.f32.mrf.mxu0
  %v803 = vadd.f32 %v148, %v802
  %804 = vmatmul.bf16.gmra.mxu0 %v470
  %v805 = vpop.f32.mrf.mxu0
  %v806 = vadd.f32 %v148, %v805
  %v807 = vpop.f32.mrf.mxu0
  %v808 = vadd.f32 %v148, %v807
  %809 = vmatmul.bf16.gmra.mxu0 %v472
  %v810 = vpop.f32.mrf.mxu0
  %v811 = vadd.f32 %v148, %v810
  %v812 = vpop.f32.mrf.mxu0
  %v813 = vadd.f32 %v148, %v812
  %814 = vmatmul.bf16.gmra.mxu0 %v474
  %v815 = vpop.f32.mrf.mxu0
  %v816 = vadd.f32 %v148, %v815
  %v817 = vpop.f32.mrf.mxu0
  %v818 = vadd.f32 %v148, %v817
  %819 = vmatmul.bf16.gmra.mxu0 %v476
  %v820 = vpop.f32.mrf.mxu0
  %v821 = vadd.f32 %v148, %v820
  %v822 = vpop.f32.mrf.mxu0
  %v823 = vadd.f32 %v148, %v822
  %824 = vmatmul.bf16.gmra.mxu0 %v478
  %v825 = vpop.f32.mrf.mxu0
  %v826 = vadd.f32 %v148, %v825
  %v827 = vpop.f32.mrf.mxu0
  %v828 = vadd.f32 %v148, %v827
  %829 = vmatmul.bf16.gmra.mxu0 %v480
  %v830 = vpop.f32.mrf.mxu0
  %v831 = vadd.f32 %v148, %v830
  %v832 = vpop.f32.mrf.mxu0
  %v833 = vadd.f32 %v148, %v832
  %834 = vmatmul.bf16.gmra.mxu0 %v482
  %v835 = vpop.f32.mrf.mxu0
  %v836 = vadd.f32 %v148, %v835
  %v837 = vpop.f32.mrf.mxu0
  %v838 = vadd.f32 %v148, %v837
  %839 = vmatmul.bf16.gmra.mxu0 %v484
  %v840 = vpop.f32.mrf.mxu0
  %v841 = vadd.f32 %v148, %v840
  %v842 = vpop.f32.mrf.mxu0
  %v843 = vadd.f32 %v148, %v842
  %844 = vmatmul.bf16.gmra.mxu0 %v486
  %v845 = vpop.f32.mrf.mxu0
  %v846 = vadd.f32 %v148, %v845
  %v847 = vpop.f32.mrf.mxu0
  %v848 = vadd.f32 %v148, %v847
  %849 = vmatmul.bf16.gmra.mxu0 %v488
  %v850 = vpop.f32.mrf.mxu0
  %v851 = vadd.f32 %v148, %v850
  %v852 = vpop.f32.mrf.mxu0
  %v853 = vadd.f32 %v148, %v852
  %854 = vmatmul.bf16.gmra.mxu0 %v490
  %v855 = vpop.f32.mrf.mxu0
  %v856 = vadd.f32 %v148, %v855
  %v857 = vpop.f32.mrf.mxu0
  %v858 = vadd.f32 %v148, %v857
  %859 = vmatmul.bf16.gmra.mxu0 %v492
  %v860 = vpop.f32.mrf.mxu0
  %v861 = vadd.f32 %v148, %v860
  %v862 = vpop.f32.mrf.mxu0
  %v863 = vadd.f32 %v148, %v862
  %864 = vmatmul.bf16.gmra.mxu0 %v494
  %v865 = vpop.f32.mrf.mxu0
  %v866 = vadd.f32 %v148, %v865
  %v867 = vpop.f32.mrf.mxu0
  %v868 = vadd.f32 %v148, %v867
  %869 = vmatmul.bf16.gmra.mxu0 %v496
  %v870 = vpop.f32.mrf.mxu0
  %v871 = vadd.f32 %v148, %v870
  %v872 = vpop.f32.mrf.mxu0
  %v873 = vadd.f32 %v148, %v872
  %874 = vmatmul.bf16.gmra.mxu0 %v498
  %v875 = vpop.f32.mrf.mxu0
  %v876 = vadd.f32 %v148, %v875
  %v877 = vpop.f32.mrf.mxu0
  %v878 = vadd.f32 %v148, %v877
  %879 = vmatmul.bf16.gmra.mxu0 %v500
  %v880 = vpop.f32.mrf.mxu0
  %v881 = vadd.f32 %v148, %v880
  %v882 = vpop.f32.mrf.mxu0
  %v883 = vadd.f32 %v148, %v882
  %884 = vmatmul.bf16.gmra.mxu0 %v502
  %v885 = vpop.f32.mrf.mxu0
  %v886 = vadd.f32 %v148, %v885
  %v887 = vpop.f32.mrf.mxu0
  %v888 = vadd.f32 %v148, %v887
  %889 = vmatmul.bf16.gmra.mxu0 %v504
  %v890 = vpop.f32.mrf.mxu0
  %v891 = vadd.f32 %v148, %v890
  %v892 = vpop.f32.mrf.mxu0
  %v893 = vadd.f32 %v148, %v892
  %894 = vmatmul.bf16.gmra.mxu0 %v506
  %v895 = vpop.f32.mrf.mxu0
  %v896 = vadd.f32 %v148, %v895
  %v897 = vpop.f32.mrf.mxu0
  %v898 = vadd.f32 %v148, %v897
  %899 = vmatmul.bf16.gmra.mxu0 %v508
  %v900 = vpop.f32.mrf.mxu0
  %v901 = vadd.f32 %v148, %v900
  %v902 = vpop.f32.mrf.mxu0
  %v903 = vadd.f32 %v148, %v902
  %904 = vmatmul.bf16.gmra.mxu0 %v510
  %v905 = vpop.f32.mrf.mxu0
  %v906 = vadd.f32 %v148, %v905
  %v907 = vpop.f32.mrf.mxu0
  %v908 = vadd.f32 %v148, %v907
  %909 = vmatmul.bf16.gmra.mxu0 %v512
  %v910 = vpop.f32.mrf.mxu0
  %v911 = vadd.f32 %v148, %v910
  %v912 = vpop.f32.mrf.mxu0
  %v913 = vadd.f32 %v148, %v912
  %914 = vmatmul.bf16.gmra.mxu0 %v514
  %v915 = vpop.f32.mrf.mxu0
  %v916 = vadd.f32 %v148, %v915
  %v917 = vpop.f32.mrf.mxu0
  %v918 = vadd.f32 %v148, %v917
  %919 = vmatmul.bf16.gmra.mxu0 %v516
  %v920 = vpop.f32.mrf.mxu0
  %v921 = vadd.f32 %v148, %v920
  %v922 = vpop.f32.mrf.mxu0
  %v923 = vadd.f32 %v148, %v922
  %924 = vmatmul.bf16.gmra.mxu0 %v518
  %v925 = vpop.f32.mrf.mxu0
  %v926 = vadd.f32 %v148, %v925
  %v927 = vpop.f32.mrf.mxu0
  %v928 = vadd.f32 %v148, %v927
  %929 = vmatmul.bf16.gmra.mxu0 %v520
  %v930 = vpop.f32.mrf.mxu0
  %v931 = vadd.f32 %v148, %v930
  %v932 = vpop.f32.mrf.mxu0
  %v933 = vadd.f32 %v148, %v932
  %934 = vmatmul.bf16.gmra.mxu0 %v522
  %v935 = vpop.f32.mrf.mxu0
  %v936 = vadd.f32 %v148, %v935
  %v937 = vpop.f32.mrf.mxu0
  %v938 = vadd.f32 %v148, %v937
  %939 = vmatmul.bf16.gmra.mxu0 %v524
  %v940 = vpop.f32.mrf.mxu0
  %v941 = vadd.f32 %v148, %v940
  %v942 = vpop.f32.mrf.mxu0
  %v943 = vadd.f32 %v148, %v942
  %944 = vmatmul.bf16.gmra.mxu0 %v526
  %v945 = vpop.f32.mrf.mxu0
  %v946 = vadd.f32 %v148, %v945
  %v947 = vpop.f32.mrf.mxu0
  %v948 = vadd.f32 %v148, %v947
  %949 = vmatmul.bf16.gmra.mxu0 %v528
  %v950 = vpop.f32.mrf.mxu0
  %v951 = vadd.f32 %v148, %v950
  %v952 = vpop.f32.mrf.mxu0
  %v953 = vadd.f32 %v148, %v952
  %954 = vmatmul.bf16.gmra.mxu0 %v530
  %v955 = vpop.f32.mrf.mxu0
  %v956 = vadd.f32 %v148, %v955
  %v957 = vpop.f32.mrf.mxu0
  %v958 = vadd.f32 %v148, %v957
  %959 = vmatmul.bf16.gmra.mxu0 %v532
  %v960 = vpop.f32.mrf.mxu0
  %v961 = vadd.f32 %v148, %v960
  %v962 = vpop.f32.mrf.mxu0
  %v963 = vadd.f32 %v148, %v962
  %964 = vmatmul.bf16.gmra.mxu0 %v534
  %v965 = vpop.f32.mrf.mxu0
  %v966 = vadd.f32 %v148, %v965
  %v967 = vpop.f32.mrf.mxu0
  %v968 = vadd.f32 %v148, %v967
  %969 = vmatmul.bf16.gmra.mxu0 %v536
  %v970 = vpop.f32.mrf.mxu0
  %v971 = vadd.f32 %v148, %v970
  %v972 = vpop.f32.mrf.mxu0
  %v973 = vadd.f32 %v148, %v972
  %974 = vmatmul.bf16.gmra.mxu0 %v538
  %v975 = vpop.f32.mrf.mxu0
  %v976 = vadd.f32 %v148, %v975
  %v977 = vpop.f32.mrf.mxu0
  %v978 = vadd.f32 %v148, %v977
  %979 = vmatmul.bf16.gmra.mxu0 %v540
  %v980 = vpop.f32.mrf.mxu0
  %v981 = vadd.f32 %v148, %v980
  %v982 = vpop.f32.mrf.mxu0
  %v983 = vadd.f32 %v148, %v982
  %984 = vmatmul.bf16.gmra.mxu0 %v542
  %v985 = vpop.f32.mrf.mxu0
  %v986 = vadd.f32 %v148, %v985
  %v987 = vpop.f32.mrf.mxu0
  %v988 = vadd.f32 %v148, %v987
  %989 = vmatmul.bf16.gmra.mxu0 %v544
  %v990 = vpop.f32.mrf.mxu0
  %v991 = vadd.f32 %v148, %v990
  %v992 = vpop.f32.mrf.mxu0
  %v993 = vadd.f32 %v148, %v992
  %994 = vmatmul.bf16.gmra.mxu0 %v546
  %v995 = vpop.f32.mrf.mxu0
  %v996 = vadd.f32 %v148, %v995
  %v997 = vpop.f32.mrf.mxu0
  %v998 = vadd.f32 %v148, %v997
  %999 = vmatmul.bf16.gmra.mxu0 %v548
  %v1000 = vpop.f32.mrf.mxu0
  %v1001 = vadd.f32 %v148, %v1000
  %v1002 = vpop.f32.mrf.mxu0
  %v1003 = vadd.f32 %v148, %v1002
  %1004 = vdwg.mxu0
  %1005 = vmatpush.bf16.msra.mxu0 %v729
  %1006 = vmatpush.bf16.msra.mxu0 %v728
  %1007 = vmatpush.bf16.msra.mxu0 %v727
  %1008 = vmatpush.bf16.msra.mxu0 %v726
  %1009 = vmatpush.bf16.msra.mxu0 %v725
  %1010 = vmatpush.bf16.msra.mxu0 %v724
  %1011 = vmatpush.bf16.msra.mxu0 %v723
  %1012 = vmatpush.bf16.msra.mxu0 %v722
  %1013 = vmatmul.bf16.gmra.mxu0 %v451
  %v1014 = vpop.f32.mrf.mxu0
  %v1015 = vadd.f32 %v756, %v1014
  %v1016 = vpop.f32.mrf.mxu0
  %v1017 = vadd.f32 %v758, %v1016
  %1018 = vmatmul.bf16.gmra.mxu0 %v453
  %v1019 = vpop.f32.mrf.mxu0
  %v1020 = vadd.f32 %v761, %v1019
  %v1021 = vpop.f32.mrf.mxu0
  %v1022 = vadd.f32 %v763, %v1021
  %1023 = vmatmul.bf16.gmra.mxu0 %v455
  %v1024 = vpop.f32.mrf.mxu0
  %v1025 = vadd.f32 %v766, %v1024
  %v1026 = vpop.f32.mrf.mxu0
  %v1027 = vadd.f32 %v768, %v1026
  %1028 = vmatmul.bf16.gmra.mxu0 %v457
  %v1029 = vpop.f32.mrf.mxu0
  %v1030 = vadd.f32 %v771, %v1029
  %v1031 = vpop.f32.mrf.mxu0
  %v1032 = vadd.f32 %v773, %v1031
  %1033 = vmatmul.bf16.gmra.mxu0 %v459
  %v1034 = vpop.f32.mrf.mxu0
  %v1035 = vadd.f32 %v776, %v1034
  %v1036 = vpop.f32.mrf.mxu0
  %v1037 = vadd.f32 %v778, %v1036
  %1038 = vmatmul.bf16.gmra.mxu0 %v461
  %v1039 = vpop.f32.mrf.mxu0
  %v1040 = vadd.f32 %v781, %v1039
  %v1041 = vpop.f32.mrf.mxu0
  %v1042 = vadd.f32 %v783, %v1041
  %1043 = vmatmul.bf16.gmra.mxu0 %v463
  %v1044 = vpop.f32.mrf.mxu0
  %v1045 = vadd.f32 %v786, %v1044
  %v1046 = vpop.f32.mrf.mxu0
  %v1047 = vadd.f32 %v788, %v1046
  %1048 = vmatmul.bf16.gmra.mxu0 %v465
  %v1049 = vpop.f32.mrf.mxu0
  %v1050 = vadd.f32 %v791, %v1049
  %v1051 = vpop.f32.mrf.mxu0
  %v1052 = vadd.f32 %v793, %v1051
  %1053 = vmatmul.bf16.gmra.mxu0 %v467
  %v1054 = vpop.f32.mrf.mxu0
  %v1055 = vadd.f32 %v796, %v1054
  %v1056 = vpop.f32.mrf.mxu0
  %v1057 = vadd.f32 %v798, %v1056
  %1058 = vmatmul.bf16.gmra.mxu0 %v469
  %v1059 = vpop.f32.mrf.mxu0
  %v1060 = vadd.f32 %v801, %v1059
  %v1061 = vpop.f32.mrf.mxu0
  %v1062 = vadd.f32 %v803, %v1061
  %1063 = vmatmul.bf16.gmra.mxu0 %v471
  %v1064 = vpop.f32.mrf.mxu0
  %v1065 = vadd.f32 %v806, %v1064
  %v1066 = vpop.f32.mrf.mxu0
  %v1067 = vadd.f32 %v808, %v1066
  %1068 = vmatmul.bf16.gmra.mxu0 %v473
  %v1069 = vpop.f32.mrf.mxu0
  %v1070 = vadd.f32 %v811, %v1069
  %v1071 = vpop.f32.mrf.mxu0
  %v1072 = vadd.f32 %v813, %v1071
  %1073 = vmatmul.bf16.gmra.mxu0 %v475
  %v1074 = vpop.f32.mrf.mxu0
  %v1075 = vadd.f32 %v816, %v1074
  %v1076 = vpop.f32.mrf.mxu0
  %v1077 = vadd.f32 %v818, %v1076
  %1078 = vmatmul.bf16.gmra.mxu0 %v477
  %v1079 = vpop.f32.mrf.mxu0
  %v1080 = vadd.f32 %v821, %v1079
  %v1081 = vpop.f32.mrf.mxu0
  %v1082 = vadd.f32 %v823, %v1081
  %1083 = vmatmul.bf16.gmra.mxu0 %v479
  %v1084 = vpop.f32.mrf.mxu0
  %v1085 = vadd.f32 %v826, %v1084
  %v1086 = vpop.f32.mrf.mxu0
  %v1087 = vadd.f32 %v828, %v1086
  %1088 = vmatmul.bf16.gmra.mxu0 %v481
  %v1089 = vpop.f32.mrf.mxu0
  %v1090 = vadd.f32 %v831, %v1089
  %v1091 = vpop.f32.mrf.mxu0
  %v1092 = vadd.f32 %v833, %v1091
  %1093 = vmatmul.bf16.gmra.mxu0 %v483
  %v1094 = vpop.f32.mrf.mxu0
  %v1095 = vadd.f32 %v836, %v1094
  %v1096 = vpop.f32.mrf.mxu0
  %v1097 = vadd.f32 %v838, %v1096
  %1098 = vmatmul.bf16.gmra.mxu0 %v485
  %v1099 = vpop.f32.mrf.mxu0
  %v1100 = vadd.f32 %v841, %v1099
  %v1101 = vpop.f32.mrf.mxu0
  %v1102 = vadd.f32 %v843, %v1101
  %1103 = vmatmul.bf16.gmra.mxu0 %v487
  %v1104 = vpop.f32.mrf.mxu0
  %v1105 = vadd.f32 %v846, %v1104
  %v1106 = vpop.f32.mrf.mxu0
  %v1107 = vadd.f32 %v848, %v1106
  %1108 = vmatmul.bf16.gmra.mxu0 %v489
  %v1109 = vpop.f32.mrf.mxu0
  %v1110 = vadd.f32 %v851, %v1109
  %v1111 = vpop.f32.mrf.mxu0
  %v1112 = vadd.f32 %v853, %v1111
  %1113 = vmatmul.bf16.gmra.mxu0 %v491
  %v1114 = vpop.f32.mrf.mxu0
  %v1115 = vadd.f32 %v856, %v1114
  %v1116 = vpop.f32.mrf.mxu0
  %v1117 = vadd.f32 %v858, %v1116
  %1118 = vmatmul.bf16.gmra.mxu0 %v493
  %v1119 = vpop.f32.mrf.mxu0
  %v1120 = vadd.f32 %v861, %v1119
  %v1121 = vpop.f32.mrf.mxu0
  %v1122 = vadd.f32 %v863, %v1121
  %1123 = vmatmul.bf16.gmra.mxu0 %v495
  %v1124 = vpop.f32.mrf.mxu0
  %v1125 = vadd.f32 %v866, %v1124
  %v1126 = vpop.f32.mrf.mxu0
  %v1127 = vadd.f32 %v868, %v1126
  %1128 = vmatmul.bf16.gmra.mxu0 %v497
  %v1129 = vpop.f32.mrf.mxu0
  %v1130 = vadd.f32 %v871, %v1129
  %v1131 = vpop.f32.mrf.mxu0
  %v1132 = vadd.f32 %v873, %v1131
  %1133 = vmatmul.bf16.gmra.mxu0 %v499
  %v1134 = vpop.f32.mrf.mxu0
  %v1135 = vadd.f32 %v876, %v1134
  %v1136 = vpop.f32.mrf.mxu0
  %v1137 = vadd.f32 %v878, %v1136
  %1138 = vmatmul.bf16.gmra.mxu0 %v501
  %v1139 = vpop.f32.mrf.mxu0
  %v1140 = vadd.f32 %v881, %v1139
  %v1141 = vpop.f32.mrf.mxu0
  %v1142 = vadd.f32 %v883, %v1141
  %1143 = vmatmul.bf16.gmra.mxu0 %v503
  %v1144 = vpop.f32.mrf.mxu0
  %v1145 = vadd.f32 %v886, %v1144
  %v1146 = vpop.f32.mrf.mxu0
  %v1147 = vadd.f32 %v888, %v1146
  %1148 = vmatmul.bf16.gmra.mxu0 %v505
  %v1149 = vpop.f32.mrf.mxu0
  %v1150 = vadd.f32 %v891, %v1149
  %v1151 = vpop.f32.mrf.mxu0
  %v1152 = vadd.f32 %v893, %v1151
  %1153 = vmatmul.bf16.gmra.mxu0 %v507
  %v1154 = vpop.f32.mrf.mxu0
  %v1155 = vadd.f32 %v896, %v1154
  %v1156 = vpop.f32.mrf.mxu0
  %v1157 = vadd.f32 %v898, %v1156
  %1158 = vmatmul.bf16.gmra.mxu0 %v509
  %v1159 = vpop.f32.mrf.mxu0
  %v1160 = vadd.f32 %v901, %v1159
  %v1161 = vpop.f32.mrf.mxu0
  %v1162 = vadd.f32 %v903, %v1161
  %1163 = vmatmul.bf16.gmra.mxu0 %v511
  %v1164 = vpop.f32.mrf.mxu0
  %v1165 = vadd.f32 %v906, %v1164
  %v1166 = vpop.f32.mrf.mxu0
  %v1167 = vadd.f32 %v908, %v1166
  %1168 = vmatmul.bf16.gmra.mxu0 %v513
  %v1169 = vpop.f32.mrf.mxu0
  %v1170 = vadd.f32 %v911, %v1169
  %v1171 = vpop.f32.mrf.mxu0
  %v1172 = vadd.f32 %v913, %v1171
  %1173 = vmatmul.bf16.gmra.mxu0 %v515
  %v1174 = vpop.f32.mrf.mxu0
  %v1175 = vadd.f32 %v916, %v1174
  %v1176 = vpop.f32.mrf.mxu0
  %v1177 = vadd.f32 %v918, %v1176
  %1178 = vmatmul.bf16.gmra.mxu0 %v517
  %v1179 = vpop.f32.mrf.mxu0
  %v1180 = vadd.f32 %v921, %v1179
  %v1181 = vpop.f32.mrf.mxu0
  %v1182 = vadd.f32 %v923, %v1181
  %1183 = vmatmul.bf16.gmra.mxu0 %v519
  %v1184 = vpop.f32.mrf.mxu0
  %v1185 = vadd.f32 %v926, %v1184
  %v1186 = vpop.f32.mrf.mxu0
  %v1187 = vadd.f32 %v928, %v1186
  %1188 = vmatmul.bf16.gmra.mxu0 %v521
  %v1189 = vpop.f32.mrf.mxu0
  %v1190 = vadd.f32 %v931, %v1189
  %v1191 = vpop.f32.mrf.mxu0
  %v1192 = vadd.f32 %v933, %v1191
  %1193 = vmatmul.bf16.gmra.mxu0 %v523
  %v1194 = vpop.f32.mrf.mxu0
  %v1195 = vadd.f32 %v936, %v1194
  %v1196 = vpop.f32.mrf.mxu0
  %v1197 = vadd.f32 %v938, %v1196
  %1198 = vmatmul.bf16.gmra.mxu0 %v525
  %v1199 = vpop.f32.mrf.mxu0
  %v1200 = vadd.f32 %v941, %v1199
  %v1201 = vpop.f32.mrf.mxu0
  %v1202 = vadd.f32 %v943, %v1201
  %1203 = vmatmul.bf16.gmra.mxu0 %v527
  %v1204 = vpop.f32.mrf.mxu0
  %v1205 = vadd.f32 %v946, %v1204
  %v1206 = vpop.f32.mrf.mxu0
  %v1207 = vadd.f32 %v948, %v1206
  %1208 = vmatmul.bf16.gmra.mxu0 %v529
  %v1209 = vpop.f32.mrf.mxu0
  %v1210 = vadd.f32 %v951, %v1209
  %v1211 = vpop.f32.mrf.mxu0
  %v1212 = vadd.f32 %v953, %v1211
  %1213 = vmatmul.bf16.gmra.mxu0 %v531
  %v1214 = vpop.f32.mrf.mxu0
  %v1215 = vadd.f32 %v956, %v1214
  %v1216 = vpop.f32.mrf.mxu0
  %v1217 = vadd.f32 %v958, %v1216
  %1218 = vmatmul.bf16.gmra.mxu0 %v533
  %v1219 = vpop.f32.mrf.mxu0
  %v1220 = vadd.f32 %v961, %v1219
  %v1221 = vpop.f32.mrf.mxu0
  %v1222 = vadd.f32 %v963, %v1221
  %1223 = vmatmul.bf16.gmra.mxu0 %v535
  %v1224 = vpop.f32.mrf.mxu0
  %v1225 = vadd.f32 %v966, %v1224
  %v1226 = vpop.f32.mrf.mxu0
  %v1227 = vadd.f32 %v968, %v1226
  %1228 = vmatmul.bf16.gmra.mxu0 %v537
  %v1229 = vpop.f32.mrf.mxu0
  %v1230 = vadd.f32 %v971, %v1229
  %v1231 = vpop.f32.mrf.mxu0
  %v1232 = vadd.f32 %v973, %v1231
  %1233 = vmatmul.bf16.gmra.mxu0 %v539
  %v1234 = vpop.f32.mrf.mxu0
  %v1235 = vadd.f32 %v976, %v1234
  %v1236 = vpop.f32.mrf.mxu0
  %v1237 = vadd.f32 %v978, %v1236
  %1238 = vmatmul.bf16.gmra.mxu0 %v541
  %v1239 = vpop.f32.mrf.mxu0
  %v1240 = vadd.f32 %v981, %v1239
  %v1241 = vpop.f32.mrf.mxu0
  %v1242 = vadd.f32 %v983, %v1241
  %1243 = vmatmul.bf16.gmra.mxu0 %v543
  %v1244 = vpop.f32.mrf.mxu0
  %v1245 = vadd.f32 %v986, %v1244
  %v1246 = vpop.f32.mrf.mxu0
  %v1247 = vadd.f32 %v988, %v1246
  %1248 = vmatmul.bf16.gmra.mxu0 %v545
  %v1249 = vpop.f32.mrf.mxu0
  %v1250 = vadd.f32 %v991, %v1249
  %v1251 = vpop.f32.mrf.mxu0
  %v1252 = vadd.f32 %v993, %v1251
  %1253 = vmatmul.bf16.gmra.mxu0 %v547
  %v1254 = vpop.f32.mrf.mxu0
  %v1255 = vadd.f32 %v996, %v1254
  %v1256 = vpop.f32.mrf.mxu0
  %v1257 = vadd.f32 %v998, %v1256
  %1258 = vmatmul.bf16.gmra.mxu0 %v549
  %v1259 = vpop.f32.mrf.mxu0
  %v1260 = vadd.f32 %v1001, %v1259
  %v1261 = vpop.f32.mrf.mxu0
  %v1262 = vadd.f32 %v1003, %v1261
  %1263 = vdwg.mxu0
  %v1264 = vmax.f32 %v1015, 0.0
  %v1265 = vmax.f32 %v1017, 0.0
  %v1266 = vmax.f32 %v1020, 0.0
  %v1267 = vmax.f32 %v1022, 0.0
  %v1268 = vmax.f32 %v1025, 0.0
  %v1269 = vmax.f32 %v1027, 0.0
  %v1270 = vmax.f32 %v1030, 0.0
  %v1271 = vmax.f32 %v1032, 0.0
  %v1272 = vmax.f32 %v1035, 0.0
  %v1273 = vmax.f32 %v1037, 0.0
  %v1274 = vmax.f32 %v1040, 0.0
  %v1275 = vmax.f32 %v1042, 0.0
  %v1276 = vmax.f32 %v1045, 0.0
  %v1277 = vmax.f32 %v1047, 0.0
  %v1278 = vmax.f32 %v1050, 0.0
  %v1279 = vmax.f32 %v1052, 0.0
  %v1280 = vmax.f32 %v1055, 0.0
  %v1281 = vmax.f32 %v1057, 0.0
  %v1282 = vmax.f32 %v1060, 0.0
  %v1283 = vmax.f32 %v1062, 0.0
  %v1284 = vmax.f32 %v1065, 0.0
  %v1285 = vmax.f32 %v1067, 0.0
  %v1286 = vmax.f32 %v1070, 0.0
  %v1287 = vmax.f32 %v1072, 0.0
  %v1288 = vmax.f32 %v1075, 0.0
  %v1289 = vmax.f32 %v1077, 0.0
  %v1290 = vmax.f32 %v1080, 0.0
  %v1291 = vmax.f32 %v1082, 0.0
  %v1292 = vmax.f32 %v1085, 0.0
  %v1293 = vmax.f32 %v1087, 0.0
  %v1294 = vmax.f32 %v1090, 0.0
  %v1295 = vmax.f32 %v1092, 0.0
  %v1296 = vmax.f32 %v1095, 0.0
  %v1297 = vmax.f32 %v1097, 0.0
  %v1298 = vmax.f32 %v1100, 0.0
  %v1299 = vmax.f32 %v1102, 0.0
  %v1300 = vmax.f32 %v1105, 0.0
  %v1301 = vmax.f32 %v1107, 0.0
  %v1302 = vmax.f32 %v1110, 0.0
  %v1303 = vmax.f32 %v1112, 0.0
  %v1304 = vmax.f32 %v1115, 0.0
  %v1305 = vmax.f32 %v1117, 0.0
  %v1306 = vmax.f32 %v1120, 0.0
  %v1307 = vmax.f32 %v1122, 0.0
  %v1308 = vmax.f32 %v1125, 0.0
  %v1309 = vmax.f32 %v1127, 0.0
  %v1310 = vmax.f32 %v1130, 0.0
  %v1311 = vmax.f32 %v1132, 0.0
  %v1312 = vmax.f32 %v1135, 0.0
  %v1313 = vmax.f32 %v1137, 0.0
  %v1314 = vmax.f32 %v1140, 0.0
  %v1315 = vmax.f32 %v1142, 0.0
  %v1316 = vmax.f32 %v1145, 0.0
  %v1317 = vmax.f32 %v1147, 0.0
  %v1318 = vmax.f32 %v1150, 0.0
  %v1319 = vmax.f32 %v1152, 0.0
  %v1320 = vmax.f32 %v1155, 0.0
  %v1321 = vmax.f32 %v1157, 0.0
  %v1322 = vmax.f32 %v1160, 0.0
  %v1323 = vmax.f32 %v1162, 0.0
  %v1324 = vmax.f32 %v1165, 0.0
  %v1325 = vmax.f32 %v1167, 0.0
  %v1326 = vmax.f32 %v1170, 0.0
  %v1327 = vmax.f32 %v1172, 0.0
  %v1328 = vmax.f32 %v1175, 0.0
  %v1329 = vmax.f32 %v1177, 0.0
  %v1330 = vmax.f32 %v1180, 0.0
  %v1331 = vmax.f32 %v1182, 0.0
  %v1332 = vmax.f32 %v1185, 0.0
  %v1333 = vmax.f32 %v1187, 0.0
  %v1334 = vmax.f32 %v1190, 0.0
  %v1335 = vmax.f32 %v1192, 0.0
  %v1336 = vmax.f32 %v1195, 0.0
  %v1337 = vmax.f32 %v1197, 0.0
  %v1338 = vmax.f32 %v1200, 0.0
  %v1339 = vmax.f32 %v1202, 0.0
  %v1340 = vmax.f32 %v1205, 0.0
  %v1341 = vmax.f32 %v1207, 0.0
  %v1342 = vmax.f32 %v1210, 0.0
  %v1343 = vmax.f32 %v1212, 0.0
  %v1344 = vmax.f32 %v1215, 0.0
  %v1345 = vmax.f32 %v1217, 0.0
  %v1346 = vmax.f32 %v1220, 0.0
  %v1347 = vmax.f32 %v1222, 0.0
  %v1348 = vmax.f32 %v1225, 0.0
  %v1349 = vmax.f32 %v1227, 0.0
  %v1350 = vmax.f32 %v1230, 0.0
  %v1351 = vmax.f32 %v1232, 0.0
  %v1352 = vmax.f32 %v1235, 0.0
  %v1353 = vmax.f32 %v1237, 0.0
  %v1354 = vmax.f32 %v1240, 0.0
  %v1355 = vmax.f32 %v1242, 0.0
  %v1356 = vmax.f32 %v1245, 0.0
  %v1357 = vmax.f32 %v1247, 0.0
  %v1358 = vmax.f32 %v1250, 0.0
  %v1359 = vmax.f32 %v1252, 0.0
  %v1360 = vmax.f32 %v1255, 0.0
  %v1361 = vmax.f32 %v1257, 0.0
  %v1362 = vmax.f32 %v1260, 0.0
  %v1363 = vmax.f32 %v1262, 0.0
  %v1364 = vpack.c.bf16 %v1264, %v1264
  %v1365 = vpack.c.bf16 %v1265, %v1265
  %v1366 = vpack.c.bf16 %v1266, %v1266
  %v1367 = vpack.c.bf16 %v1267, %v1267
  %v1368 = vpack.c.bf16 %v1268, %v1268
  %v1369 = vpack.c.bf16 %v1269, %v1269
  %v1370 = vpack.c.bf16 %v1270, %v1270
  %v1371 = vpack.c.bf16 %v1271, %v1271
  %v1372 = vpack.c.bf16 %v1272, %v1272
  %v1373 = vpack.c.bf16 %v1273, %v1273
  %v1374 = vpack.c.bf16 %v1274, %v1274
  %v1375 = vpack.c.bf16 %v1275, %v1275
  %v1376 = vpack.c.bf16 %v1276, %v1276
  %v1377 = vpack.c.bf16 %v1277, %v1277
  %v1378 = vpack.c.bf16 %v1278, %v1278
  %v1379 = vpack.c.bf16 %v1279, %v1279
  %v1380 = vpack.c.bf16 %v1280, %v1280
  %v1381 = vpack.c.bf16 %v1281, %v1281
  %v1382 = vpack.c.bf16 %v1282, %v1282
  %v1383 = vpack.c.bf16 %v1283, %v1283
  %v1384 = vpack.c.bf16 %v1284, %v1284
  %v1385 = vpack.c.bf16 %v1285, %v1285
  %v1386 = vpack.c.bf16 %v1286, %v1286
  %v1387 = vpack.c.bf16 %v1287, %v1287
  %v1388 = vpack.c.bf16 %v1288, %v1288
  %v1389 = vpack.c.bf16 %v1289, %v1289
  %v1390 = vpack.c.bf16 %v1290, %v1290
  %v1391 = vpack.c.bf16 %v1291, %v1291
  %v1392 = vpack.c.bf16 %v1292, %v1292
  %v1393 = vpack.c.bf16 %v1293, %v1293
  %v1394 = vpack.c.bf16 %v1294, %v1294
  %v1395 = vpack.c.bf16 %v1295, %v1295
  %v1396 = vpack.c.bf16 %v1296, %v1296
  %v1397 = vpack.c.bf16 %v1297, %v1297
  %v1398 = vpack.c.bf16 %v1298, %v1298
  %v1399 = vpack.c.bf16 %v1299, %v1299
  %v1400 = vpack.c.bf16 %v1300, %v1300
  %v1401 = vpack.c.bf16 %v1301, %v1301
  %v1402 = vpack.c.bf16 %v1302, %v1302
  %v1403 = vpack.c.bf16 %v1303, %v1303
  %v1404 = vpack.c.bf16 %v1304, %v1304
  %v1405 = vpack.c.bf16 %v1305, %v1305
  %v1406 = vpack.c.bf16 %v1306, %v1306
  %v1407 = vpack.c.bf16 %v1307, %v1307
  %v1408 = vpack.c.bf16 %v1308, %v1308
  %v1409 = vpack.c.bf16 %v1309, %v1309
  %v1410 = vpack.c.bf16 %v1310, %v1310
  %v1411 = vpack.c.bf16 %v1311, %v1311
  %v1412 = vpack.c.bf16 %v1312, %v1312
  %v1413 = vpack.c.bf16 %v1313, %v1313
  %v1414 = vpack.c.bf16 %v1314, %v1314
  %v1415 = vpack.c.bf16 %v1315, %v1315
  %v1416 = vpack.c.bf16 %v1316, %v1316
  %v1417 = vpack.c.bf16 %v1317, %v1317
  %v1418 = vpack.c.bf16 %v1318, %v1318
  %v1419 = vpack.c.bf16 %v1319, %v1319
  %v1420 = vpack.c.bf16 %v1320, %v1320
  %v1421 = vpack.c.bf16 %v1321, %v1321
  %v1422 = vpack.c.bf16 %v1322, %v1322
  %v1423 = vpack.c.bf16 %v1323, %v1323
  %v1424 = vpack.c.bf16 %v1324, %v1324
  %v1425 = vpack.c.bf16 %v1325, %v1325
  %v1426 = vpack.c.bf16 %v1326, %v1326
  %v1427 = vpack.c.bf16 %v1327, %v1327
  %v1428 = vpack.c.bf16 %v1328, %v1328
  %v1429 = vpack.c.bf16 %v1329, %v1329
  %v1430 = vpack.c.bf16 %v1330, %v1330
  %v1431 = vpack.c.bf16 %v1331, %v1331
  %v1432 = vpack.c.bf16 %v1332, %v1332
  %v1433 = vpack.c.bf16 %v1333, %v1333
  %v1434 = vpack.c.bf16 %v1334, %v1334
  %v1435 = vpack.c.bf16 %v1335, %v1335
  %v1436 = vpack.c.bf16 %v1336, %v1336
  %v1437 = vpack.c.bf16 %v1337, %v1337
  %v1438 = vpack.c.bf16 %v1338, %v1338
  %v1439 = vpack.c.bf16 %v1339, %v1339
  %v1440 = vpack.c.bf16 %v1340, %v1340
  %v1441 = vpack.c.bf16 %v1341, %v1341
  %v1442 = vpack.c.bf16 %v1342, %v1342
  %v1443 = vpack.c.bf16 %v1343, %v1343
  %v1444 = vpack.c.bf16 %v1344, %v1344
  %v1445 = vpack.c.bf16 %v1345, %v1345
  %v1446 = vpack.c.bf16 %v1346, %v1346
  %v1447 = vpack.c.bf16 %v1347, %v1347
  %v1448 = vpack.c.bf16 %v1348, %v1348
  %v1449 = vpack.c.bf16 %v1349, %v1349
  %v1450 = vpack.c.bf16 %v1350, %v1350
  %v1451 = vpack.c.bf16 %v1351, %v1351
  %v1452 = vpack.c.bf16 %v1352, %v1352
  %v1453 = vpack.c.bf16 %v1353, %v1353
  %v1454 = vpack.c.bf16 %v1354, %v1354
  %v1455 = vpack.c.bf16 %v1355, %v1355
  %v1456 = vpack.c.bf16 %v1356, %v1356
  %v1457 = vpack.c.bf16 %v1357, %v1357
  %v1458 = vpack.c.bf16 %v1358, %v1358
  %v1459 = vpack.c.bf16 %v1359, %v1359
  %v1460 = vpack.c.bf16 %v1360, %v1360
  %v1461 = vpack.c.bf16 %v1361, %v1361
  %v1462 = vpack.c.bf16 %v1362, %v1362
  %v1463 = vpack.c.bf16 %v1363, %v1363
  %1464 = vst [vmem:[%s3] sm:$0xf] %v1364
  %1465 = vst [vmem:[%s3 + $0x4] sm:$0xf] %v1365
  %1466 = vst [vmem:[%s3 + $0x8] sm:$0xf] %v1366
  %1467 = vst [vmem:[%s3 + $0xc] sm:$0xf] %v1367
  %1468 = vst [vmem:[%s3 + $0x10] sm:$0xf] %v1368
  %1469 = vst [vmem:[%s3 + $0x14] sm:$0xf] %v1369
  %1470 = vst [vmem:[%s3 + $0x18] sm:$0xf] %v1370
  %1471 = vst [vmem:[%s3 + $0x1c] sm:$0xf] %v1371
  %1472 = vst [vmem:[%s3 + $0x20] sm:$0xf] %v1372
  %1473 = vst [vmem:[%s3 + $0x24] sm:$0xf] %v1373
  %1474 = vst [vmem:[%s3 + $0x28] sm:$0xf] %v1374
  %1475 = vst [vmem:[%s3 + $0x2c] sm:$0xf] %v1375
  %1476 = vst [vmem:[%s3 + $0x30] sm:$0xf] %v1376
  %1477 = vst [vmem:[%s3 + $0x34] sm:$0xf] %v1377
  %1478 = vst [vmem:[%s3 + $0x38] sm:$0xf] %v1378
  %1479 = vst [vmem:[%s3 + $0x3c] sm:$0xf] %v1379
  %1480 = vst [vmem:[%s3 + $0x40] sm:$0xf] %v1380
  %1481 = vst [vmem:[%s3 + $0x44] sm:$0xf] %v1381
  %1482 = vst [vmem:[%s3 + $0x48] sm:$0xf] %v1382
  %1483 = vst [vmem:[%s3 + $0x4c] sm:$0xf] %v1383
  %1484 = vst [vmem:[%s3 + $0x50] sm:$0xf] %v1384
  %1485 = vst [vmem:[%s3 + $0x54] sm:$0xf] %v1385
  %1486 = vst [vmem:[%s3 + $0x58] sm:$0xf] %v1386
  %1487 = vst [vmem:[%s3 + $0x5c] sm:$0xf] %v1387
  %1488 = vst [vmem:[%s3 + $0x60] sm:$0xf] %v1388
  %1489 = vst [vmem:[%s3 + $0x64] sm:$0xf] %v1389
  %1490 = vst [vmem:[%s3 + $0x68] sm:$0xf] %v1390
  %1491 = vst [vmem:[%s3 + $0x6c] sm:$0xf] %v1391
  %1492 = vst [vmem:[%s3 + $0x70] sm:$0xf] %v1392
  %1493 = vst [vmem:[%s3 + $0x74] sm:$0xf] %v1393
  %1494 = vst [vmem:[%s3 + $0x78] sm:$0xf] %v1394
  %1495 = vst [vmem:[%s3 + $0x7c] sm:$0xf] %v1395
  %1496 = vst [vmem:[%s3 + $0x80] sm:$0xf] %v1396
  %1497 = vst [vmem:[%s3 + $0x84] sm:$0xf] %v1397
  %1498 = vst [vmem:[%s3 + $0x88] sm:$0xf] %v1398
  %1499 = vst [vmem:[%s3 + $0x8c] sm:$0xf] %v1399
  %1500 = vst [vmem:[%s3 + $0x90] sm:$0xf] %v1400
  %1501 = vst [vmem:[%s3 + $0x94] sm:$0xf] %v1401
  %1502 = vst [vmem:[%s3 + $0x98] sm:$0xf] %v1402
  %1503 = vst [vmem:[%s3 + $0x9c] sm:$0xf] %v1403
  %1504 = vst [vmem:[%s3 + $0xa0] sm:$0xf] %v1404
  %1505 = vst [vmem:[%s3 + $0xa4] sm:$0xf] %v1405
  %1506 = vst [vmem:[%s3 + $0xa8] sm:$0xf] %v1406
  %1507 = vst [vmem:[%s3 + $0xac] sm:$0xf] %v1407
  %1508 = vst [vmem:[%s3 + $0xb0] sm:$0xf] %v1408
  %1509 = vst [vmem:[%s3 + $0xb4] sm:$0xf] %v1409
  %1510 = vst [vmem:[%s3 + $0xb8] sm:$0xf] %v1410
  %1511 = vst [vmem:[%s3 + $0xbc] sm:$0xf] %v1411
  %1512 = vst [vmem:[%s3 + $0xc0] sm:$0xf] %v1412
  %1513 = vst [vmem:[%s3 + $0xc4] sm:$0xf] %v1413
  %1514 = vst [vmem:[%s3 + $0xc8] sm:$0xf] %v1414
  %1515 = vst [vmem:[%s3 + $0xcc] sm:$0xf] %v1415
  %1516 = vst [vmem:[%s3 + $0xd0] sm:$0xf] %v1416
  %1517 = vst [vmem:[%s3 + $0xd4] sm:$0xf] %v1417
  %1518 = vst [vmem:[%s3 + $0xd8] sm:$0xf] %v1418
  %1519 = vst [vmem:[%s3 + $0xdc] sm:$0xf] %v1419
  %1520 = vst [vmem:[%s3 + $0xe0] sm:$0xf] %v1420
  %1521 = vst [vmem:[%s3 + $0xe4] sm:$0xf] %v1421
  %1522 = vst [vmem:[%s3 + $0xe8] sm:$0xf] %v1422
  %1523 = vst [vmem:[%s3 + $0xec] sm:$0xf] %v1423
  %1524 = vst [vmem:[%s3 + $0xf0] sm:$0xf] %v1424
  %1525 = vst [vmem:[%s3 + $0xf4] sm:$0xf] %v1425
  %1526 = vst [vmem:[%s3 + $0xf8] sm:$0xf] %v1426
  %1527 = vst [vmem:[%s3 + $0xfc] sm:$0xf] %v1427
  %1528 = vst [vmem:[%s3 + $0x100] sm:$0xf] %v1428
  %1529 = vst [vmem:[%s3 + $0x104] sm:$0xf] %v1429
  %1530 = vst [vmem:[%s3 + $0x108] sm:$0xf] %v1430
  %1531 = vst [vmem:[%s3 + $0x10c] sm:$0xf] %v1431
  %1532 = vst [vmem:[%s3 + $0x110] sm:$0xf] %v1432
  %1533 = vst [vmem:[%s3 + $0x114] sm:$0xf] %v1433
  %1534 = vst [vmem:[%s3 + $0x118] sm:$0xf] %v1434
  %1535 = vst [vmem:[%s3 + $0x11c] sm:$0xf] %v1435
  %1536 = vst [vmem:[%s3 + $0x120] sm:$0xf] %v1436
  %1537 = vst [vmem:[%s3 + $0x124] sm:$0xf] %v1437
  %1538 = vst [vmem:[%s3 + $0x128] sm:$0xf] %v1438
  %1539 = vst [vmem:[%s3 + $0x12c] sm:$0xf] %v1439
  %1540 = vst [vmem:[%s3 + $0x130] sm:$0xf] %v1440
  %1541 = vst [vmem:[%s3 + $0x134] sm:$0xf] %v1441
  %1542 = vst [vmem:[%s3 + $0x138] sm:$0xf] %v1442
  %1543 = vst [vmem:[%s3 + $0x13c] sm:$0xf] %v1443
  %1544 = vst [vmem:[%s3 + $0x140] sm:$0xf] %v1444
  %1545 = vst [vmem:[%s3 + $0x144] sm:$0xf] %v1445
  %1546 = vst [vmem:[%s3 + $0x148] sm:$0xf] %v1446
  %1547 = vst [vmem:[%s3 + $0x14c] sm:$0xf] %v1447
  %1548 = vst [vmem:[%s3 + $0x150] sm:$0xf] %v1448
  %1549 = vst [vmem:[%s3 + $0x154] sm:$0xf] %v1449
  %1550 = vst [vmem:[%s3 + $0x158] sm:$0xf] %v1450
  %1551 = vst [vmem:[%s3 + $0x15c] sm:$0xf] %v1451
  %1552 = vst [vmem:[%s3 + $0x160] sm:$0xf] %v1452
  %1553 = vst [vmem:[%s3 + $0x164] sm:$0xf] %v1453
  %1554 = vst [vmem:[%s3 + $0x168] sm:$0xf] %v1454
  %1555 = vst [vmem:[%s3 + $0x16c] sm:$0xf] %v1455
  %1556 = vst [vmem:[%s3 + $0x170] sm:$0xf] %v1456
  %1557 = vst [vmem:[%s3 + $0x174] sm:$0xf] %v1457
  %1558 = vst [vmem:[%s3 + $0x178] sm:$0xf] %v1458
  %1559 = vst [vmem:[%s3 + $0x17c] sm:$0xf] %v1459
  %1560 = vst [vmem:[%s3 + $0x180] sm:$0xf] %v1460
  %1561 = vst [vmem:[%s3 + $0x184] sm:$0xf] %v1461
  %1562 = vst [vmem:[%s3 + $0x188] sm:$0xf] %v1462
  %1563 = vst [vmem:[%s3 + $0x18c] sm:$0xf] %v1463
  // Predicated region
  $region14: #{noisy_duel_forward.3} parent=0 // pred_check
    _
  $region15: #{noisy_duel_forward.3} parent=0 // pred_check_branch
    %1565 = sbr.rel (0) target = $region17
  $region16: #{noisy_duel_forward.3} parent=0 // pred_region
    _
  $region17: #{noisy_duel_forward.3} parent=0 // pred_fallthru
    _
  // Predicated region
  $region18: #{noisy_duel_forward.3} parent=0 // pred_check
    _
  $region19: #{noisy_duel_forward.3} parent=0 // pred_check_branch
    %1567 = sbr.rel (0) target = $region21
  $region20: #{noisy_duel_forward.3} parent=0 // pred_region
    _
  $region21: #{noisy_duel_forward.3} parent=0 // pred_fallthru
    _

// kernel: noisy_duel_forward.4
$region0: #{noisy_duel_forward.4}
  #allocation0 [shape = 'u32[]', space=smem, size = 0x4, offset = 0x4, fixed_abs, tag = 'smem constant byte address 0x4 - core index']
  #allocation1 [shape = 'u32[72,128]{1,0:T(1,128)}', space=vmem, size = 0x9000, scoped, tag = 'internal scratch']
  %s0 = inlined_call_operand.vmem [shape: bf16[162,512], index: 0, kind: input, shape index: {}]
  %s1 = inlined_call_operand.vmem [shape: bf16[512,128], index: 1, kind: input, shape index: {}]
  %s2 = inlined_call_operand.vmem [shape: f32[1,128], index: 2, kind: input, shape index: {}]
  %s3 = inlined_call_operand.vmem [shape: bf16[162,128], index: 3, kind: output, shape index: {}]
  %s4 = sld [smem:[#allocation0]]
  $region59: #{noisy_duel_forward.4} parent=0
    _
  %s6 = ssub.s32 1, %s4
  %s7 = scalar_select 0, %s6, %s4
  $region1: #{noisy_duel_forward.4} parent=0
    #allocation2 [shape = 'u8[45056]{0}', space=vmem, size = 0xb000, scoped, tag = 'output window, operand 0, single buffered']
    // Predicated region
    $region2: #{noisy_duel_forward.4} parent=1 // pred_check
      _
    $region3: #{noisy_duel_forward.4} parent=1 // pred_check_branch
      %9 = sbr.rel (0) target = $region5
    $region4: #{noisy_duel_forward.4} parent=1 // pred_region
      _
    $region5: #{noisy_duel_forward.4} parent=1 // pred_fallthru
      _
    // Predicated region
    $region6: #{noisy_duel_forward.4} parent=1 // pred_check
      _
    $region7: #{noisy_duel_forward.4} parent=1 // pred_check_branch
      %11 = sbr.rel (0) target = $region9
    $region8: #{noisy_duel_forward.4} parent=1 // pred_region
      _
    $region9: #{noisy_duel_forward.4} parent=1 // pred_fallthru
      _
    // Predicated region
    $region10: #{noisy_duel_forward.4} parent=1 // pred_check
      _
    $region11: #{noisy_duel_forward.4} parent=1 // pred_check_branch
      %13 = sbr.rel (0) target = $region13
    $region12: #{noisy_duel_forward.4} parent=1 // pred_region
      _
    $region13: #{noisy_duel_forward.4} parent=1 // pred_fallthru
      _
    %v14 = vld [vmem:[%s0] sm:$0xff]
    %v15 = vld [vmem:[%s0 + $0x8] sm:$0xff]
    %v16 = vld [vmem:[%s0 + $0x10] sm:$0xff]
    %v17 = vld [vmem:[%s0 + $0x18] sm:$0xff]
    %v18 = vld [vmem:[%s0 + $0x20] sm:$0xff]
    %v19 = vld [vmem:[%s0 + $0x28] sm:$0xff]
    %v20 = vld [vmem:[%s0 + $0x30] sm:$0xff]
    %v21 = vld [vmem:[%s0 + $0x38] sm:$0xff]
    %v22 = vld [vmem:[%s0 + $0x40] sm:$0xff]
    %v23 = vld [vmem:[%s0 + $0x48] sm:$0xff]
    %v24 = vld [vmem:[%s0 + $0x50] sm:$0xff]
    %v25 = vld [vmem:[%s0 + $0x58] sm:$0xff]
    %v26 = vld [vmem:[%s0 + $0x60] sm:$0xff]
    %v27 = vld [vmem:[%s0 + $0x68] sm:$0xff]
    %v28 = vld [vmem:[%s0 + $0x70] sm:$0xff]
    %v29 = vld [vmem:[%s0 + $0x78] sm:$0xff]
    %v30 = vld [vmem:[%s0 + $0x80] sm:$0xff]
    %v31 = vld [vmem:[%s0 + $0x88] sm:$0xff]
    %v32 = vld [vmem:[%s0 + $0x90] sm:$0xff]
    %v33 = vld [vmem:[%s0 + $0x98] sm:$0xff]
    %v34 = vld [vmem:[%s0 + $0xa0] sm:$0xff]
    %v35 = vld [vmem:[%s0 + $0xa8] sm:$0xff]
    %v36 = vld [vmem:[%s0 + $0xb0] sm:$0xff]
    %v37 = vld [vmem:[%s0 + $0xb8] sm:$0xff]
    %v38 = vld [vmem:[%s0 + $0xc0] sm:$0xff]
    %v39 = vld [vmem:[%s0 + $0xc8] sm:$0xff]
    %v40 = vld [vmem:[%s0 + $0xd0] sm:$0xff]
    %v41 = vld [vmem:[%s0 + $0xd8] sm:$0xff]
    %v42 = vld [vmem:[%s0 + $0xe0] sm:$0xff]
    %v43 = vld [vmem:[%s0 + $0xe8] sm:$0xff]
    %v44 = vld [vmem:[%s0 + $0xf0] sm:$0xff]
    %v45 = vld [vmem:[%s0 + $0xf8] sm:$0xff]
    %v46 = vld [vmem:[%s0 + $0x100] sm:$0xff]
    %v47 = vld [vmem:[%s0 + $0x108] sm:$0xff]
    %v48 = vld [vmem:[%s0 + $0x110] sm:$0xff]
    %v49 = vld [vmem:[%s0 + $0x118] sm:$0xff]
    %v50 = vld [vmem:[%s0 + $0x120] sm:$0xff]
    %v51 = vld [vmem:[%s0 + $0x128] sm:$0xff]
    %v52 = vld [vmem:[%s0 + $0x130] sm:$0xff]
    %v53 = vld [vmem:[%s0 + $0x138] sm:$0xff]
    %v54 = vld [vmem:[%s0 + $0x140] sm:$0xff]
    %v55 = vld [vmem:[%s0 + $0x148] sm:$0xff]
    %v56 = vld [vmem:[%s0 + $0x150] sm:$0xff]
    %v57 = vld [vmem:[%s0 + $0x158] sm:$0xff]
    %v58 = vld [vmem:[%s1] sm:$0xf]
    %v59 = vld [vmem:[%s1 + $0x4] sm:$0xf]
    %v60 = vld [vmem:[%s1 + $0x8] sm:$0xf]
    %v61 = vld [vmem:[%s1 + $0xc] sm:$0xf]
    %v62 = vld [vmem:[%s1 + $0x10] sm:$0xf]
    %v63 = vld [vmem:[%s1 + $0x14] sm:$0xf]
    %v64 = vld [vmem:[%s1 + $0x18] sm:$0xf]
    %v65 = vld [vmem:[%s1 + $0x1c] sm:$0xf]
    %v66 = vld [vmem:[%s1 + $0x20] sm:$0xf]
    %v67 = vld [vmem:[%s1 + $0x24] sm:$0xf]
    %v68 = vld [vmem:[%s1 + $0x28] sm:$0xf]
    %v69 = vld [vmem:[%s1 + $0x2c] sm:$0xf]
    %v70 = vld [vmem:[%s1 + $0x30] sm:$0xf]
    %v71 = vld [vmem:[%s1 + $0x34] sm:$0xf]
    %v72 = vld [vmem:[%s1 + $0x38] sm:$0xf]
    %v73 = vld [vmem:[%s1 + $0x3c] sm:$0xf]
    %v74 = vld [vmem:[%s1 + $0x40] sm:$0xf]
    %v75 = vld [vmem:[%s1 + $0x44] sm:$0xf]
    %v76 = vld [vmem:[%s1 + $0x48] sm:$0xf]
    %v77 = vld [vmem:[%s1 + $0x4c] sm:$0xf]
    %v78 = vld [vmem:[%s1 + $0x50] sm:$0xf]
    %v79 = vld [vmem:[%s1 + $0x54] sm:$0xf]
    %v80 = vld [vmem:[%s1 + $0x58] sm:$0xf]
    %v81 = vld [vmem:[%s1 + $0x5c] sm:$0xf]
    %v82 = vld [vmem:[%s1 + $0x60] sm:$0xf]
    %v83 = vld [vmem:[%s1 + $0x64] sm:$0xf]
    %v84 = vld [vmem:[%s1 + $0x68] sm:$0xf]
    %v85 = vld [vmem:[%s1 + $0x6c] sm:$0xf]
    %v86 = vld [vmem:[%s1 + $0x70] sm:$0xf]
    %v87 = vld [vmem:[%s1 + $0x74] sm:$0xf]
    %v88 = vld [vmem:[%s1 + $0x78] sm:$0xf]
    %v89 = vld [vmem:[%s1 + $0x7c] sm:$0xf]
    %v90 = vld [vmem:[%s1 + $0x80] sm:$0xf]
    %v91 = vld [vmem:[%s1 + $0x84] sm:$0xf]
    %v92 = vld [vmem:[%s1 + $0x88] sm:$0xf]
    %v93 = vld [vmem:[%s1 + $0x8c] sm:$0xf]
    %v94 = vld [vmem:[%s1 + $0x90] sm:$0xf]
    %v95 = vld [vmem:[%s1 + $0x94] sm:$0xf]
    %v96 = vld [vmem:[%s1 + $0x98] sm:$0xf]
    %v97 = vld [vmem:[%s1 + $0x9c] sm:$0xf]
    %v98 = vld [vmem:[%s1 + $0xa0] sm:$0xf]
    %v99 = vld [vmem:[%s1 + $0xa4] sm:$0xf]
    %v100 = vld [vmem:[%s1 + $0xa8] sm:$0xf]
    %v101 = vld [vmem:[%s1 + $0xac] sm:$0xf]
    %v102 = vld [vmem:[%s1 + $0xb0] sm:$0xf]
    %v103 = vld [vmem:[%s1 + $0xb4] sm:$0xf]
    %v104 = vld [vmem:[%s1 + $0xb8] sm:$0xf]
    %v105 = vld [vmem:[%s1 + $0xbc] sm:$0xf]
    %v106 = vld [vmem:[%s1 + $0xc0] sm:$0xf]
    %v107 = vld [vmem:[%s1 + $0xc4] sm:$0xf]
    %v108 = vld [vmem:[%s1 + $0xc8] sm:$0xf]
    %v109 = vld [vmem:[%s1 + $0xcc] sm:$0xf]
    %v110 = vld [vmem:[%s1 + $0xd0] sm:$0xf]
    %v111 = vld [vmem:[%s1 + $0xd4] sm:$0xf]
    %v112 = vld [vmem:[%s1 + $0xd8] sm:$0xf]
    %v113 = vld [vmem:[%s1 + $0xdc] sm:$0xf]
    %v114 = vld [vmem:[%s1 + $0xe0] sm:$0xf]
    %v115 = vld [vmem:[%s1 + $0xe4] sm:$0xf]
    %v116 = vld [vmem:[%s1 + $0xe8] sm:$0xf]
    %v117 = vld [vmem:[%s1 + $0xec] sm:$0xf]
    %v118 = vld [vmem:[%s1 + $0xf0] sm:$0xf]
    %v119 = vld [vmem:[%s1 + $0xf4] sm:$0xf]
    %v120 = vld [vmem:[%s1 + $0xf8] sm:$0xf]
    %v121 = vld [vmem:[%s1 + $0xfc] sm:$0xf]
    %v122 = vld [vmem:[%s2] sm:$0x1]
    %v124 = vperm.slane %v122, 0
    %v170 = vunpack.c.l.b16 %v14
    %v171 = vunpack.c.h.b16 %v14
    %v172 = vunpack.c.l.b16 %v15
    %v173 = vunpack.c.h.b16 %v15
    %v174 = vunpack.c.l.b16 %v16
    %v175 = vunpack.c.h.b16 %v16
    %v176 = vunpack.c.l.b16 %v17
    %v177 = vunpack.c.h.b16 %v17
    %v178 = vunpack.c.l.b16 %v18
    %v179 = vunpack.c.h.b16 %v18
    %v180 = vunpack.c.l.b16 %v19
    %v181 = vunpack.c.h.b16 %v19
    %v182 = vunpack.c.l.b16 %v20
    %v183 = vunpack.c.h.b16 %v20
    %v184 = vunpack.c.l.b16 %v21
    %v185 = vunpack.c.h.b16 %v21
    %v186 = vunpack.c.l.b16 %v22
    %v187 = vunpack.c.h.b16 %v22
    %v188 = vunpack.c.l.b16 %v23
    %v189 = vunpack.c.h.b16 %v23
    %v190 = vunpack.c.l.b16 %v24
    %v191 = vunpack.c.h.b16 %v24
    %v192 = vunpack.c.l.b16 %v25
    %v193 = vunpack.c.h.b16 %v25
    %v194 = vunpack.c.l.b16 %v26
    %v195 = vunpack.c.h.b16 %v26
    %v196 = vunpack.c.l.b16 %v27
    %v197 = vunpack.c.h.b16 %v27
    %v198 = vunpack.c.l.b16 %v28
    %v199 = vunpack.c.h.b16 %v28
    %v200 = vunpack.c.l.b16 %v29
    %v201 = vunpack.c.h.b16 %v29
    %v202 = vunpack.c.l.b16 %v30
    %v203 = vunpack.c.h.b16 %v30
    %v204 = vunpack.c.l.b16 %v31
    %v205 = vunpack.c.h.b16 %v31
    %v206 = vunpack.c.l.b16 %v32
    %v207 = vunpack.c.h.b16 %v32
    %v208 = vunpack.c.l.b16 %v33
    %v209 = vunpack.c.h.b16 %v33
    %v210 = vunpack.c.l.b16 %v34
    %v211 = vunpack.c.h.b16 %v34
    %v212 = vunpack.c.l.b16 %v35
    %v213 = vunpack.c.h.b16 %v35
    %v214 = vunpack.c.l.b16 %v36
    %v215 = vunpack.c.h.b16 %v36
    %v216 = vunpack.c.l.b16 %v37
    %v217 = vunpack.c.h.b16 %v37
    %v218 = vunpack.c.l.b16 %v38
    %v219 = vunpack.c.h.b16 %v38
    %v220 = vunpack.c.l.b16 %v39
    %v221 = vunpack.c.h.b16 %v39
    %v222 = vunpack.c.l.b16 %v40
    %v223 = vunpack.c.h.b16 %v40
    %v224 = vunpack.c.l.b16 %v41
    %v225 = vunpack.c.h.b16 %v41
    %v226 = vunpack.c.l.b16 %v42
    %v227 = vunpack.c.h.b16 %v42
    %v228 = vunpack.c.l.b16 %v43
    %v229 = vunpack.c.h.b16 %v43
    %v230 = vunpack.c.l.b16 %v44
    %v231 = vunpack.c.h.b16 %v44
    %v232 = vunpack.c.l.b16 %v45
    %v233 = vunpack.c.h.b16 %v45
    %v234 = vunpack.c.l.b16 %v46
    %v235 = vunpack.c.h.b16 %v46
    %v236 = vunpack.c.l.b16 %v47
    %v237 = vunpack.c.h.b16 %v47
    %v238 = vunpack.c.l.b16 %v48
    %v239 = vunpack.c.h.b16 %v48
    %v240 = vunpack.c.l.b16 %v49
    %v241 = vunpack.c.h.b16 %v49
    %v242 = vunpack.c.l.b16 %v50
    %v243 = vunpack.c.h.b16 %v50
    %v244 = vunpack.c.l.b16 %v51
    %v245 = vunpack.c.h.b16 %v51
    %v246 = vunpack.c.l.b16 %v52
    %v247 = vunpack.c.h.b16 %v52
    %v248 = vunpack.c.l.b16 %v53
    %v249 = vunpack.c.h.b16 %v53
    %v250 = vunpack.c.l.b16 %v54
    %v251 = vunpack.c.h.b16 %v54
    %v252 = vunpack.c.l.b16 %v55
    %v253 = vunpack.c.h.b16 %v55
    %v254 = vunpack.c.l.b16 %v56
    %v255 = vunpack.c.h.b16 %v56
    %v256 = vunpack.c.l.b16 %v57
    %v257 = vunpack.c.h.b16 %v57
    %v258 = vpack.c.b16 %v174, %v170
    %v259 = vpack.c.b16 %v175, %v171
    %v260 = vpack.c.b16 %v176, %v172
    %v261 = vpack.c.b16 %v177, %v173
    %v262 = vpack.c.b16 %v182, %v178
    %v263 = vpack.c.b16 %v183, %v179
    %v264 = vpack.c.b16 %v184, %v180
    %v265 = vpack.c.b16 %v185, %v181
    %v266 = vpack.c.b16 %v190, %v186
    %v267 = vpack.c.b16 %v191, %v187
    %v268 = vpack.c.b16 %v192, %v188
    %v269 = vpack.c.b16 %v193, %v189
    %v270 = vpack.c.b16 %v198, %v194
    %v271 = vpack.c.b16 %v199, %v195
    %v272 = vpack.c.b16 %v200, %v196
    %v273 = vpack.c.b16 %v201, %v197
    %v274 = vpack.c.b16 %v206, %v202
    %v275 = vpack.c.b16 %v207, %v203
    %v276 = vpack.c.b16 %v208, %v204
    %v277 = vpack.c.b16 %v209, %v205
    %v278 = vpack.c.b16 %v214, %v210
    %v279 = vpack.c.b16 %v215, %v211
    %v280 = vpack.c.b16 %v216, %v212
    %v281 = vpack.c.b16 %v217, %v213
    %v282 = vpack.c.b16 %v222, %v218
    %v283 = vpack.c.b16 %v223, %v219
    %v284 = vpack.c.b16 %v224, %v220
    %v285 = vpack.c.b16 %v225, %v221
    %v286 = vpack.c.b16 %v230, %v226
    %v287 = vpack.c.b16 %v231, %v227
    %v288 = vpack.c.b16 %v232, %v228
    %v289 = vpack.c.b16 %v233, %v229
    %v290 = vpack.c.b16 %v238, %v234
    %v291 = vpack.c.b16 %v239, %v235
    %v292 = vpack.c.b16 %v240, %v236
    %v293 = vpack.c.b16 %v241, %v237
    %v294 = vpack.c.b16 %v246, %v242
    %v295 = vpack.c.b16 %v247, %v243
    %v296 = vpack.c.b16 %v248, %v244
    %v297 = vpack.c.b16 %v249, %v245
    %v298 = vpack.c.b16 %v254, %v250
    %v299 = vpack.c.b16 %v255, %v251
    %v300 = vpack.c.b16 %v256, %v252
    %v301 = vpack.c.b16 %v257, %v253
    %v410 = vunpack.c.l.b16 %v58
    %v411 = vunpack.c.l.b16 %v59
    %v412 = vunpack.c.l.b16 %v60
    %v413 = vunpack.c.l.b16 %v61
    %v414 = vunpack.c.l.b16 %v62
    %v415 = vunpack.c.l.b16 %v63
    %v416 = vunpack.c.l.b16 %v64
    %v417 = vunpack.c.l.b16 %v65
    %v418 = vunpack.c.l.b16 %v66
    %v419 = vunpack.c.l.b16 %v67
    %v420 = vunpack.c.l.b16 %v68
    %v421 = vunpack.c.l.b16 %v69
    %v422 = vunpack.c.l.b16 %v70
    %v423 = vunpack.c.l.b16 %v71
    %v424 = vunpack.c.l.b16 %v72
    %v425 = vunpack.c.l.b16 %v73
    %v426 = vunpack.c.l.b16 %v74
    %v427 = vunpack.c.l.b16 %v75
    %v428 = vunpack.c.l.b16 %v76
    %v429 = vunpack.c.l.b16 %v77
    %v430 = vunpack.c.l.b16 %v78
    %v431 = vunpack.c.l.b16 %v79
    %v432 = vunpack.c.l.b16 %v80
    %v433 = vunpack.c.l.b16 %v81
    %v434 = vunpack.c.l.b16 %v82
    %v435 = vunpack.c.l.b16 %v83
    %v436 = vunpack.c.l.b16 %v84
    %v437 = vunpack.c.l.b16 %v85
    %v438 = vunpack.c.l.b16 %v86
    %v439 = vunpack.c.l.b16 %v87
    %v440 = vunpack.c.l.b16 %v88
    %v441 = vunpack.c.l.b16 %v89
    %v442 = vunpack.c.l.b16 %v90
    %v443 = vunpack.c.l.b16 %v91
    %v444 = vunpack.c.l.b16 %v92
    %v445 = vunpack.c.l.b16 %v93
    %v446 = vunpack.c.l.b16 %v94
    %v447 = vunpack.c.l.b16 %v95
    %v448 = vunpack.c.l.b16 %v96
    %v449 = vunpack.c.l.b16 %v97
    %v450 = vunpack.c.l.b16 %v98
    %v451 = vunpack.c.l.b16 %v99
    %v452 = vunpack.c.l.b16 %v100
    %v453 = vunpack.c.l.b16 %v101
    %v454 = vunpack.c.l.b16 %v102
    %v455 = vunpack.c.l.b16 %v103
    %v456 = vunpack.c.l.b16 %v104
    %v457 = vunpack.c.l.b16 %v105
    %v458 = vunpack.c.l.b16 %v106
    %v459 = vunpack.c.l.b16 %v107
    %v460 = vunpack.c.l.b16 %v108
    %v461 = vunpack.c.l.b16 %v109
    %v462 = vunpack.c.l.b16 %v110
    %v463 = vunpack.c.l.b16 %v111
    %v464 = vunpack.c.l.b16 %v112
    %v465 = vunpack.c.l.b16 %v113
    %v466 = vunpack.c.l.b16 %v114
    %v467 = vunpack.c.l.b16 %v115
    %v468 = vunpack.c.l.b16 %v116
    %v469 = vunpack.c.l.b16 %v117
    %v470 = vunpack.c.l.b16 %v118
    %v471 = vunpack.c.l.b16 %v119
    %v472 = vunpack.c.l.b16 %v120
    %v473 = vunpack.c.l.b16 %v121
    %v474 = vpack.c.b16 %v411, %v410
    %v475 = vpack.c.b16 %v413, %v412
    %v476 = vpack.c.b16 %v415, %v414
    %v477 = vpack.c.b16 %v417, %v416
    %v478 = vpack.c.b16 %v419, %v418
    %v479 = vpack.c.b16 %v421, %v420
    %v480 = vpack.c.b16 %v423, %v422
    %v481 = vpack.c.b16 %v425, %v424
    %v482 = vpack.c.b16 %v427, %v426
    %v483 = vpack.c.b16 %v429, %v428
    %v484 = vpack.c.b16 %v431, %v430
    %v485 = vpack.c.b16 %v433, %v432
    %v486 = vpack.c.b16 %v435, %v434
    %v487 = vpack.c.b16 %v437, %v436
    %v488 = vpack.c.b16 %v439, %v438
    %v489 = vpack.c.b16 %v441, %v440
    %v490 = vpack.c.b16 %v443, %v442
    %v491 = vpack.c.b16 %v445, %v444
    %v492 = vpack.c.b16 %v447, %v446
    %v493 = vpack.c.b16 %v449, %v448
    %v494 = vpack.c.b16 %v451, %v450
    %v495 = vpack.c.b16 %v453, %v452
    %v496 = vpack.c.b16 %v455, %v454
    %v497 = vpack.c.b16 %v457, %v456
    %v498 = vpack.c.b16 %v459, %v458
    %v499 = vpack.c.b16 %v461, %v460
    %v500 = vpack.c.b16 %v463, %v462
    %v501 = vpack.c.b16 %v465, %v464
    %v502 = vpack.c.b16 %v467, %v466
    %v503 = vpack.c.b16 %v469, %v468
    %v504 = vpack.c.b16 %v471, %v470
    %v505 = vpack.c.b16 %v473, %v472
    %538 = vmatpush.bf16.msra.mxu0 %v481
    %539 = vmatpush.bf16.msra.mxu0 %v480
    %540 = vmatpush.bf16.msra.mxu0 %v479
    %541 = vmatpush.bf16.msra.mxu0 %v478
    %542 = vmatpush.bf16.msra.mxu0 %v477
    %543 = vmatpush.bf16.msra.mxu0 %v476
    %544 = vmatpush.bf16.msra.mxu0 %v475
    %545 = vmatpush.bf16.msra.mxu0 %v474
    %546 = vmatmul.bf16.gmra.mxu0 %v258
    %v547 = vpop.f32.mrf.mxu0
    %v548 = vadd.f32 %v124, %v547
    %v549 = vpop.f32.mrf.mxu0
    %v550 = vadd.f32 %v124, %v549
    %551 = vmatmul.bf16.gmra.mxu0 %v262
    %v552 = vpop.f32.mrf.mxu0
    %v553 = vadd.f32 %v124, %v552
    %v554 = vpop.f32.mrf.mxu0
    %v555 = vadd.f32 %v124, %v554
    %556 = vmatmul.bf16.gmra.mxu0 %v266
    %v557 = vpop.f32.mrf.mxu0
    %v558 = vadd.f32 %v124, %v557
    %v559 = vpop.f32.mrf.mxu0
    %v560 = vadd.f32 %v124, %v559
    %561 = vmatmul.bf16.gmra.mxu0 %v270
    %v562 = vpop.f32.mrf.mxu0
    %v563 = vadd.f32 %v124, %v562
    %v564 = vpop.f32.mrf.mxu0
    %v565 = vadd.f32 %v124, %v564
    %566 = vmatmul.bf16.gmra.mxu0 %v274
    %v567 = vpop.f32.mrf.mxu0
    %v568 = vadd.f32 %v124, %v567
    %v569 = vpop.f32.mrf.mxu0
    %v570 = vadd.f32 %v124, %v569
    %571 = vmatmul.bf16.gmra.mxu0 %v278
    %v572 = vpop.f32.mrf.mxu0
    %v573 = vadd.f32 %v124, %v572
    %v574 = vpop.f32.mrf.mxu0
    %v575 = vadd.f32 %v124, %v574
    %576 = vmatmul.bf16.gmra.mxu0 %v282
    %v577 = vpop.f32.mrf.mxu0
    %v578 = vadd.f32 %v124, %v577
    %v579 = vpop.f32.mrf.mxu0
    %v580 = vadd.f32 %v124, %v579
    %581 = vmatmul.bf16.gmra.mxu0 %v286
    %v582 = vpop.f32.mrf.mxu0
    %v583 = vadd.f32 %v124, %v582
    %v584 = vpop.f32.mrf.mxu0
    %v585 = vadd.f32 %v124, %v584
    %586 = vmatmul.bf16.gmra.mxu0 %v290
    %v587 = vpop.f32.mrf.mxu0
    %v588 = vadd.f32 %v124, %v587
    %v589 = vpop.f32.mrf.mxu0
    %v590 = vadd.f32 %v124, %v589
    %591 = vmatmul.bf16.gmra.mxu0 %v294
    %v592 = vpop.f32.mrf.mxu0
    %v593 = vadd.f32 %v124, %v592
    %v594 = vpop.f32.mrf.mxu0
    %v595 = vadd.f32 %v124, %v594
    %596 = vmatmul.bf16.gmra.mxu0 %v298
    %v597 = vpop.f32.mrf.mxu0
    %v598 = vadd.f32 %v124, %v597
    %v599 = vpop.f32.mrf.mxu0
    %v600 = vadd.f32 %v124, %v599
    %601 = vdwg.mxu0
    %602 = vmatpush.bf16.msra.mxu0 %v489
    %603 = vmatpush.bf16.msra.mxu0 %v488
    %604 = vmatpush.bf16.msra.mxu0 %v487
    %605 = vmatpush.bf16.msra.mxu0 %v486
    %606 = vmatpush.bf16.msra.mxu0 %v485
    %607 = vmatpush.bf16.msra.mxu0 %v484
    %608 = vmatpush.bf16.msra.mxu0 %v483
    %609 = vmatpush.bf16.msra.mxu0 %v482
    %610 = vmatmul.bf16.gmra.mxu0 %v259
    %v611 = vpop.f32.mrf.mxu0
    %v612 = vadd.f32 %v548, %v611
    %v613 = vpop.f32.mrf.mxu0
    %v614 = vadd.f32 %v550, %v613
    %615 = vmatmul.bf16.gmra.mxu0 %v263
    %v616 = vpop.f32.mrf.mxu0
    %v617 = vadd.f32 %v553, %v616
    %v618 = vpop.f32.mrf.mxu0
    %v619 = vadd.f32 %v555, %v618
    %620 = vmatmul.bf16.gmra.mxu0 %v267
    %v621 = vpop.f32.mrf.mxu0
    %v622 = vadd.f32 %v558, %v621
    %v623 = vpop.f32.mrf.mxu0
    %v624 = vadd.f32 %v560, %v623
    %625 = vmatmul.bf16.gmra.mxu0 %v271
    %v626 = vpop.f32.mrf.mxu0
    %v627 = vadd.f32 %v563, %v626
    %v628 = vpop.f32.mrf.mxu0
    %v629 = vadd.f32 %v565, %v628
    %630 = vmatmul.bf16.gmra.mxu0 %v275
    %v631 = vpop.f32.mrf.mxu0
    %v632 = vadd.f32 %v568, %v631
    %v633 = vpop.f32.mrf.mxu0
    %v634 = vadd.f32 %v570, %v633
    %635 = vmatmul.bf16.gmra.mxu0 %v279
    %v636 = vpop.f32.mrf.mxu0
    %v637 = vadd.f32 %v573, %v636
    %v638 = vpop.f32.mrf.mxu0
    %v639 = vadd.f32 %v575, %v638
    %640 = vmatmul.bf16.gmra.mxu0 %v283
    %v641 = vpop.f32.mrf.mxu0
    %v642 = vadd.f32 %v578, %v641
    %v643 = vpop.f32.mrf.mxu0
    %v644 = vadd.f32 %v580, %v643
    %645 = vmatmul.bf16.gmra.mxu0 %v287
    %v646 = vpop.f32.mrf.mxu0
    %v647 = vadd.f32 %v583, %v646
    %v648 = vpop.f32.mrf.mxu0
    %v649 = vadd.f32 %v585, %v648
    %650 = vmatmul.bf16.gmra.mxu0 %v291
    %v651 = vpop.f32.mrf.mxu0
    %v652 = vadd.f32 %v588, %v651
    %v653 = vpop.f32.mrf.mxu0
    %v654 = vadd.f32 %v590, %v653
    %655 = vmatmul.bf16.gmra.mxu0 %v295
    %v656 = vpop.f32.mrf.mxu0
    %v657 = vadd.f32 %v593, %v656
    %v658 = vpop.f32.mrf.mxu0
    %v659 = vadd.f32 %v595, %v658
    %660 = vmatmul.bf16.gmra.mxu0 %v299
    %v661 = vpop.f32.mrf.mxu0
    %v662 = vadd.f32 %v598, %v661
    %v663 = vpop.f32.mrf.mxu0
    %v664 = vadd.f32 %v600, %v663
    %665 = vdwg.mxu0
    %666 = vmatpush.bf16.msra.mxu0 %v497
    %667 = vmatpush.bf16.msra.mxu0 %v496
    %668 = vmatpush.bf16.msra.mxu0 %v495
    %669 = vmatpush.bf16.msra.mxu0 %v494
    %670 = vmatpush.bf16.msra.mxu0 %v493
    %671 = vmatpush.bf16.msra.mxu0 %v492
    %672 = vmatpush.bf16.msra.mxu0 %v491
    %673 = vmatpush.bf16.msra.mxu0 %v490
    %674 = vmatmul.bf16.gmra.mxu0 %v260
    %v675 = vpop.f32.mrf.mxu0
    %v676 = vadd.f32 %v612, %v675
    %v677 = vpop.f32.mrf.mxu0
    %v678 = vadd.f32 %v614, %v677
    %679 = vmatmul.bf16.gmra.mxu0 %v264
    %v680 = vpop.f32.mrf.mxu0
    %v681 = vadd.f32 %v617, %v680
    %v682 = vpop.f32.mrf.mxu0
    %v683 = vadd.f32 %v619, %v682
    %684 = vmatmul.bf16.gmra.mxu0 %v268
    %v685 = vpop.f32.mrf.mxu0
    %v686 = vadd.f32 %v622, %v685
    %v687 = vpop.f32.mrf.mxu0
    %v688 = vadd.f32 %v624, %v687
    %689 = vmatmul.bf16.gmra.mxu0 %v272
    %v690 = vpop.f32.mrf.mxu0
    %v691 = vadd.f32 %v627, %v690
    %v692 = vpop.f32.mrf.mxu0
    %v693 = vadd.f32 %v629, %v692
    %694 = vmatmul.bf16.gmra.mxu0 %v276
    %v695 = vpop.f32.mrf.mxu0
    %v696 = vadd.f32 %v632, %v695
    %v697 = vpop.f32.mrf.mxu0
    %v698 = vadd.f32 %v634, %v697
    %699 = vmatmul.bf16.gmra.mxu0 %v280
    %v700 = vpop.f32.mrf.mxu0
    %v701 = vadd.f32 %v637, %v700
    %v702 = vpop.f32.mrf.mxu0
    %v703 = vadd.f32 %v639, %v702
    %704 = vmatmul.bf16.gmra.mxu0 %v284
    %v705 = vpop.f32.mrf.mxu0
    %v706 = vadd.f32 %v642, %v705
    %v707 = vpop.f32.mrf.mxu0
    %v708 = vadd.f32 %v644, %v707
    %709 = vmatmul.bf16.gmra.mxu0 %v288
    %v710 = vpop.f32.mrf.mxu0
    %v711 = vadd.f32 %v647, %v710
    %v712 = vpop.f32.mrf.mxu0
    %v713 = vadd.f32 %v649, %v712
    %714 = vmatmul.bf16.gmra.mxu0 %v292
    %v715 = vpop.f32.mrf.mxu0
    %v716 = vadd.f32 %v652, %v715
    %v717 = vpop.f32.mrf.mxu0
    %v718 = vadd.f32 %v654, %v717
    %719 = vmatmul.bf16.gmra.mxu0 %v296
    %v720 = vpop.f32.mrf.mxu0
    %v721 = vadd.f32 %v657, %v720
    %v722 = vpop.f32.mrf.mxu0
    %v723 = vadd.f32 %v659, %v722
    %724 = vmatmul.bf16.gmra.mxu0 %v300
    %v725 = vpop.f32.mrf.mxu0
    %v726 = vadd.f32 %v662, %v725
    %v727 = vpop.f32.mrf.mxu0
    %v728 = vadd.f32 %v664, %v727
    %729 = vdwg.mxu0
    %730 = vmatpush.bf16.msra.mxu0 %v505
    %731 = vmatpush.bf16.msra.mxu0 %v504
    %732 = vmatpush.bf16.msra.mxu0 %v503
    %733 = vmatpush.bf16.msra.mxu0 %v502
    %734 = vmatpush.bf16.msra.mxu0 %v501
    %735 = vmatpush.bf16.msra.mxu0 %v500
    %736 = vmatpush.bf16.msra.mxu0 %v499
    %737 = vmatpush.bf16.msra.mxu0 %v498
    %738 = vmatmul.bf16.gmra.mxu0 %v261
    %v739 = vpop.f32.mrf.mxu0
    %v740 = vadd.f32 %v676, %v739
    %v741 = vpop.f32.mrf.mxu0
    %v742 = vadd.f32 %v678, %v741
    %743 = vmatmul.bf16.gmra.mxu0 %v265
    %v744 = vpop.f32.mrf.mxu0
    %v745 = vadd.f32 %v681, %v744
    %v746 = vpop.f32.mrf.mxu0
    %v747 = vadd.f32 %v683, %v746
    %748 = vmatmul.bf16.gmra.mxu0 %v269
    %v749 = vpop.f32.mrf.mxu0
    %v750 = vadd.f32 %v686, %v749
    %v751 = vpop.f32.mrf.mxu0
    %v752 = vadd.f32 %v688, %v751
    %753 = vmatmul.bf16.gmra.mxu0 %v273
    %v754 = vpop.f32.mrf.mxu0
    %v755 = vadd.f32 %v691, %v754
    %v756 = vpop.f32.mrf.mxu0
    %v757 = vadd.f32 %v693, %v756
    %758 = vmatmul.bf16.gmra.mxu0 %v277
    %v759 = vpop.f32.mrf.mxu0
    %v760 = vadd.f32 %v696, %v759
    %v761 = vpop.f32.mrf.mxu0
    %v762 = vadd.f32 %v698, %v761
    %763 = vmatmul.bf16.gmra.mxu0 %v281
    %v764 = vpop.f32.mrf.mxu0
    %v765 = vadd.f32 %v701, %v764
    %v766 = vpop.f32.mrf.mxu0
    %v767 = vadd.f32 %v703, %v766
    %768 = vmatmul.bf16.gmra.mxu0 %v285
    %v769 = vpop.f32.mrf.mxu0
    %v770 = vadd.f32 %v706, %v769
    %v771 = vpop.f32.mrf.mxu0
    %v772 = vadd.f32 %v708, %v771
    %773 = vmatmul.bf16.gmra.mxu0 %v289
    %v774 = vpop.f32.mrf.mxu0
    %v775 = vadd.f32 %v711, %v774
    %v776 = vpop.f32.mrf.mxu0
    %v777 = vadd.f32 %v713, %v776
    %778 = vmatmul.bf16.gmra.mxu0 %v293
    %v779 = vpop.f32.mrf.mxu0
    %v780 = vadd.f32 %v716, %v779
    %v781 = vpop.f32.mrf.mxu0
    %v782 = vadd.f32 %v718, %v781
    %783 = vmatmul.bf16.gmra.mxu0 %v297
    %v784 = vpop.f32.mrf.mxu0
    %v785 = vadd.f32 %v721, %v784
    %v786 = vpop.f32.mrf.mxu0
    %v787 = vadd.f32 %v723, %v786
    %788 = vmatmul.bf16.gmra.mxu0 %v301
    %v789 = vpop.f32.mrf.mxu0
    %v790 = vadd.f32 %v726, %v789
    %v791 = vpop.f32.mrf.mxu0
    %v792 = vadd.f32 %v728, %v791
    %793 = vdwg.mxu0
    %v794 = vmax.f32 %v740, 0.0
    %v795 = vmax.f32 %v742, 0.0
    %v796 = vmax.f32 %v745, 0.0
    %v797 = vmax.f32 %v747, 0.0
    %v798 = vmax.f32 %v750, 0.0
    %v799 = vmax.f32 %v752, 0.0
    %v800 = vmax.f32 %v755, 0.0
    %v801 = vmax.f32 %v757, 0.0
    %v802 = vmax.f32 %v760, 0.0
    %v803 = vmax.f32 %v762, 0.0
    %v804 = vmax.f32 %v765, 0.0
    %v805 = vmax.f32 %v767, 0.0
    %v806 = vmax.f32 %v770, 0.0
    %v807 = vmax.f32 %v772, 0.0
    %v808 = vmax.f32 %v775, 0.0
    %v809 = vmax.f32 %v777, 0.0
    %v810 = vmax.f32 %v780, 0.0
    %v811 = vmax.f32 %v782, 0.0
    %v812 = vmax.f32 %v785, 0.0
    %v813 = vmax.f32 %v787, 0.0
    %v814 = vmax.f32 %v790, 0.0
    %v815 = vmax.f32 %v792, 0.0
    %v816 = vpack.c.bf16 %v794, %v794
    %v817 = vpack.c.bf16 %v795, %v795
    %v818 = vpack.c.bf16 %v796, %v796
    %v819 = vpack.c.bf16 %v797, %v797
    %v820 = vpack.c.bf16 %v798, %v798
    %v821 = vpack.c.bf16 %v799, %v799
    %v822 = vpack.c.bf16 %v800, %v800
    %v823 = vpack.c.bf16 %v801, %v801
    %v824 = vpack.c.bf16 %v802, %v802
    %v825 = vpack.c.bf16 %v803, %v803
    %v826 = vpack.c.bf16 %v804, %v804
    %v827 = vpack.c.bf16 %v805, %v805
    %v828 = vpack.c.bf16 %v806, %v806
    %v829 = vpack.c.bf16 %v807, %v807
    %v830 = vpack.c.bf16 %v808, %v808
    %v831 = vpack.c.bf16 %v809, %v809
    %v832 = vpack.c.bf16 %v810, %v810
    %v833 = vpack.c.bf16 %v811, %v811
    %v834 = vpack.c.bf16 %v812, %v812
    %v835 = vpack.c.bf16 %v813, %v813
    %v836 = vpack.c.bf16 %v814, %v814
    %v837 = vpack.c.bf16 %v815, %v815
    %838 = vst [vmem:[#allocation2] sm:$0xf] %v816
    %839 = vst [vmem:[#allocation2 + $0x4] sm:$0xf] %v817
    %840 = vst [vmem:[#allocation2 + $0x8] sm:$0xf] %v818
    %841 = vst [vmem:[#allocation2 + $0xc] sm:$0xf] %v819
    %842 = vst [vmem:[#allocation2 + $0x10] sm:$0xf] %v820
    %843 = vst [vmem:[#allocation2 + $0x14] sm:$0xf] %v821
    %844 = vst [vmem:[#allocation2 + $0x18] sm:$0xf] %v822
    %845 = vst [vmem:[#allocation2 + $0x1c] sm:$0xf] %v823
    %846 = vst [vmem:[#allocation2 + $0x20] sm:$0xf] %v824
    %847 = vst [vmem:[#allocation2 + $0x24] sm:$0xf] %v825
    %848 = vst [vmem:[#allocation2 + $0x28] sm:$0xf] %v826
    %849 = vst [vmem:[#allocation2 + $0x2c] sm:$0xf] %v827
    %850 = vst [vmem:[#allocation2 + $0x30] sm:$0xf] %v828
    %851 = vst [vmem:[#allocation2 + $0x34] sm:$0xf] %v829
    %852 = vst [vmem:[#allocation2 + $0x38] sm:$0xf] %v830
    %853 = vst [vmem:[#allocation2 + $0x3c] sm:$0xf] %v831
    %854 = vst [vmem:[#allocation2 + $0x40] sm:$0xf] %v832
    %855 = vst [vmem:[#allocation2 + $0x44] sm:$0xf] %v833
    %856 = vst [vmem:[#allocation2 + $0x48] sm:$0xf] %v834
    %857 = vst [vmem:[#allocation2 + $0x4c] sm:$0xf] %v835
    %858 = vst [vmem:[#allocation2 + $0x50] sm:$0xf] %v836
    %859 = vst [vmem:[#allocation2 + $0x54] sm:$0xf] %v837
    // Predicated region
    $region14: #{noisy_duel_forward.4} parent=1 // pred_check
      _
    $region15: #{noisy_duel_forward.4} parent=1 // pred_check_branch
      %861 = sbr.rel (0) target = $region17
    $region16: #{noisy_duel_forward.4} parent=1 // pred_region
      // Predicated region
      $region18: #{noisy_duel_forward.4} parent=16 // pred_check
        _
      $region19: #{noisy_duel_forward.4} parent=16 // pred_check_branch
        %863 = sbr.rel (0) target = $region21
      $region20: #{noisy_duel_forward.4} parent=16 // pred_region
        // Predicated region
        $region22: #{noisy_duel_forward.4} parent=20 // pred_check
          _
        $region23: #{noisy_duel_forward.4} parent=20 // pred_check_branch
          %865 = sbr.rel target = $region25
        $region24: #{noisy_duel_forward.4} parent=20 // pred_region
          // Predicated region
          $region37: #{noisy_duel_forward.4} parent=24 // pred_check
            _
          $region38: #{noisy_duel_forward.4} parent=24 // pred_check_branch
            %921 = sbr.rel (0) target = $region40
          $region39: #{noisy_duel_forward.4} parent=24 // pred_region
            loop: start=0, step=1, limit=1
            $region41: #{noisy_duel_forward.4} parent=39 // loop_pre_header
              _
            $region42: #{noisy_duel_forward.4} parent=39 // loop_header
              %s923 = sphi 0, %s927
              %p924 = scmp.ge.s32.totalorder %s923, 1
              %s928 = sphi [#allocation2], [#allocation2]
              %s929 = sphi %s3, %s3
            $region43: #{noisy_duel_forward.4} parent=39 // loop_header_branch
              %926 = sbr.rel (%p924) target = $region47
            $region44: #{noisy_duel_forward.4} parent=39 // loop_body
              _
            $region45: #{noisy_duel_forward.4} parent=39 // loop_footer
              %s927 = sadd.s32 1, %s923
            $region46: #{noisy_duel_forward.4} parent=39 // loop_footer_branch
              %922 = sbr.rel target = $region42
            $region47: #{noisy_duel_forward.4} parent=39 // loop_exit
              _
            %s931 = ssub.s32 16, 1
            loop: start=0, step=1, limit=1
            $region48: #{noisy_duel_forward.4} parent=39 // loop_pre_header
              _
            $region49: #{noisy_duel_forward.4} parent=39 // loop_header
              %s933 = sphi 0, %s937
              %p934 = scmp.ge.s32.totalorder %s933, 1
              %s938 = sphi [#allocation2], [#allocation2]
              %s939 = sphi %s3, %s3
            $region50: #{noisy_duel_forward.4} parent=39 // loop_header_branch
              %936 = sbr.rel (%p934) target = $region54
            $region51: #{noisy_duel_forward.4} parent=39 // loop_body
              %v940 = vld [vmem:[%s938] sm:%s931]
              %941 = vst [vmem:[%s939] sm:%s931] %v940
              %v942 = vld [vmem:[%s938 + $0x4] sm:%s931]
              %943 = vst [vmem:[%s939 + $0x4] sm:%s931] %v942
              %v944 = vld [vmem:[%s938 + $0x8] sm:%s931]
              %945 = vst [vmem:[%s939 + $0x8] sm:%s931] %v944
              %v946 = vld [vmem:[%s938 + $0xc] sm:%s931]
              %947 = vst [vmem:[%s939 + $0xc] sm:%s931] %v946
              %v948 = vld [vmem:[%s938 + $0x10] sm:%s931]
              %949 = vst [vmem:[%s939 + $0x10] sm:%s931] %v948
              %v950 = vld [vmem:[%s938 + $0x14] sm:%s931]
              %951 = vst [vmem:[%s939 + $0x14] sm:%s931] %v950
              %v952 = vld [vmem:[%s938 + $0x18] sm:%s931]
              %953 = vst [vmem:[%s939 + $0x18] sm:%s931] %v952
              %v954 = vld [vmem:[%s938 + $0x1c] sm:%s931]
              %955 = vst [vmem:[%s939 + $0x1c] sm:%s931] %v954
              %v956 = vld [vmem:[%s938 + $0x20] sm:%s931]
              %957 = vst [vmem:[%s939 + $0x20] sm:%s931] %v956
              %v958 = vld [vmem:[%s938 + $0x24] sm:%s931]
              %959 = vst [vmem:[%s939 + $0x24] sm:%s931] %v958
              %v960 = vld [vmem:[%s938 + $0x28] sm:%s931]
              %961 = vst [vmem:[%s939 + $0x28] sm:%s931] %v960
              %v962 = vld [vmem:[%s938 + $0x2c] sm:%s931]
              %963 = vst [vmem:[%s939 + $0x2c] sm:%s931] %v962
              %v964 = vld [vmem:[%s938 + $0x30] sm:%s931]
              %965 = vst [vmem:[%s939 + $0x30] sm:%s931] %v964
              %v966 = vld [vmem:[%s938 + $0x34] sm:%s931]
              %967 = vst [vmem:[%s939 + $0x34] sm:%s931] %v966
              %v968 = vld [vmem:[%s938 + $0x38] sm:%s931]
              %969 = vst [vmem:[%s939 + $0x38] sm:%s931] %v968
              %v970 = vld [vmem:[%s938 + $0x3c] sm:%s931]
              %971 = vst [vmem:[%s939 + $0x3c] sm:%s931] %v970
              %v972 = vld [vmem:[%s938 + $0x40] sm:%s931]
              %973 = vst [vmem:[%s939 + $0x40] sm:%s931] %v972
              %v974 = vld [vmem:[%s938 + $0x44] sm:%s931]
              %975 = vst [vmem:[%s939 + $0x44] sm:%s931] %v974
              %v976 = vld [vmem:[%s938 + $0x48] sm:%s931]
              %977 = vst [vmem:[%s939 + $0x48] sm:%s931] %v976
              %v978 = vld [vmem:[%s938 + $0x4c] sm:%s931]
              %979 = vst [vmem:[%s939 + $0x4c] sm:%s931] %v978
              %v980 = vld [vmem:[%s938 + $0x50] sm:%s931]
              %981 = vst [vmem:[%s939 + $0x50] sm:%s931] %v980
            $region52: #{noisy_duel_forward.4} parent=39 // loop_footer
              %s937 = sadd.s32 1, %s933
            $region53: #{noisy_duel_forward.4} parent=39 // loop_footer_branch
              %932 = sbr.rel target = $region49
            $region54: #{noisy_duel_forward.4} parent=39 // loop_exit
              _
          $region40: #{noisy_duel_forward.4} parent=24 // pred_fallthru
            _
        $region25: #{noisy_duel_forward.4} parent=20 // pred_fallthru
          _
        // Predicated region
        $region26: #{noisy_duel_forward.4} parent=20 // pred_check
          _
        $region27: #{noisy_duel_forward.4} parent=20 // pred_check_branch
          %867 = sbr.rel (0) target = $region29
        $region28: #{noisy_duel_forward.4} parent=20 // pred_region
          %s869 = ssub.s32 16, 1
          loop: start=0, step=1, limit=1
          $region30: #{noisy_duel_forward.4} parent=28 // loop_pre_header
            _
          $region31: #{noisy_duel_forward.4} parent=28 // loop_header
            %s871 = sphi 0, %s875
            %p872 = scmp.ge.s32.totalorder %s871, 1
            %s876 = sphi [#allocation2], [#allocation2]
            %s877 = sphi %s3, %s3
          $region32: #{noisy_duel_forward.4} parent=28 // loop_header_branch
            %874 = sbr.rel (%p872) target = $region36
          $region33: #{noisy_duel_forward.4} parent=28 // loop_body
            %v878 = vld [vmem:[%s876] sm:%s869]
            %879 = vst [vmem:[%s877] sm:%s869] %v878
            %v880 = vld [vmem:[%s876 + $0x4] sm:%s869]
            %881 = vst [vmem:[%s877 + $0x4] sm:%s869] %v880
            %v882 = vld [vmem:[%s876 + $0x8] sm:%s869]
            %883 = vst [vmem:[%s877 + $0x8] sm:%s869] %v882
            %v884 = vld [vmem:[%s876 + $0xc] sm:%s869]
            %885 = vst [vmem:[%s877 + $0xc] sm:%s869] %v884
            %v886 = vld [vmem:[%s876 + $0x10] sm:%s869]
            %887 = vst [vmem:[%s877 + $0x10] sm:%s869] %v886
            %v888 = vld [vmem:[%s876 + $0x14] sm:%s869]
            %889 = vst [vmem:[%s877 + $0x14] sm:%s869] %v888
            %v890 = vld [vmem:[%s876 + $0x18] sm:%s869]
            %891 = vst [vmem:[%s877 + $0x18] sm:%s869] %v890
            %v892 = vld [vmem:[%s876 + $0x1c] sm:%s869]
            %893 = vst [vmem:[%s877 + $0x1c] sm:%s869] %v892
            %v894 = vld [vmem:[%s876 + $0x20] sm:%s869]
            %895 = vst [vmem:[%s877 + $0x20] sm:%s869] %v894
            %v896 = vld [vmem:[%s876 + $0x24] sm:%s869]
            %897 = vst [vmem:[%s877 + $0x24] sm:%s869] %v896
            %v898 = vld [vmem:[%s876 + $0x28] sm:%s869]
            %899 = vst [vmem:[%s877 + $0x28] sm:%s869] %v898
            %v900 = vld [vmem:[%s876 + $0x2c] sm:%s869]
            %901 = vst [vmem:[%s877 + $0x2c] sm:%s869] %v900
            %v902 = vld [vmem:[%s876 + $0x30] sm:%s869]
            %903 = vst [vmem:[%s877 + $0x30] sm:%s869] %v902
            %v904 = vld [vmem:[%s876 + $0x34] sm:%s869]
            %905 = vst [vmem:[%s877 + $0x34] sm:%s869] %v904
            %v906 = vld [vmem:[%s876 + $0x38] sm:%s869]
            %907 = vst [vmem:[%s877 + $0x38] sm:%s869] %v906
            %v908 = vld [vmem:[%s876 + $0x3c] sm:%s869]
            %909 = vst [vmem:[%s877 + $0x3c] sm:%s869] %v908
            %v910 = vld [vmem:[%s876 + $0x40] sm:%s869]
            %911 = vst [vmem:[%s877 + $0x40] sm:%s869] %v910
            %v912 = vld [vmem:[%s876 + $0x44] sm:%s869]
            %913 = vst [vmem:[%s877 + $0x44] sm:%s869] %v912
            %v914 = vld [vmem:[%s876 + $0x48] sm:%s869]
            %915 = vst [vmem:[%s877 + $0x48] sm:%s869] %v914
            %v916 = vld [vmem:[%s876 + $0x4c] sm:%s869]
            %917 = vst [vmem:[%s877 + $0x4c] sm:%s869] %v916
            %v918 = vld [vmem:[%s876 + $0x50] sm:%s869]
            %919 = vst [vmem:[%s877 + $0x50] sm:%s869] %v918
          $region34: #{noisy_duel_forward.4} parent=28 // loop_footer
            %s875 = sadd.s32 1, %s871
          $region35: #{noisy_duel_forward.4} parent=28 // loop_footer_branch
            %870 = sbr.rel target = $region31
          $region36: #{noisy_duel_forward.4} parent=28 // loop_exit
            _
        $region29: #{noisy_duel_forward.4} parent=20 // pred_fallthru
          _
      $region21: #{noisy_duel_forward.4} parent=16 // pred_fallthru
        _
      %982 = vnop
    $region17: #{noisy_duel_forward.4} parent=1 // pred_fallthru
      _
    // Predicated region
    $region55: #{noisy_duel_forward.4} parent=1 // pred_check
      _
    $region56: #{noisy_duel_forward.4} parent=1 // pred_check_branch
      %984 = sbr.rel (0) target = $region58
    $region57: #{noisy_duel_forward.4} parent=1 // pred_region
      _
    $region58: #{noisy_duel_forward.4} parent=1 // pred_fallthru
      _

// kernel: noisy_duel_forward.5
$region0: #{noisy_duel_forward.5}
  #allocation0 [shape = 'u32[]', space=smem, size = 0x4, offset = 0x4, fixed_abs, tag = 'smem constant byte address 0x4 - core index']
  #allocation1 [shape = 'u32[72,128]{1,0:T(1,128)}', space=vmem, size = 0x9000, scoped, tag = 'internal scratch']
  #allocation2 [shape = 'f32[16,1024]{1,0:T(8,128)}', space=vmem, size = 0x10000, scoped, tag = 'scratch operand']
  %s0 = inlined_call_operand.vmem [shape: bf16[49,2,576], index: 0, kind: input, shape index: {}]
  %s1 = inlined_call_operand.vmem [shape: bf16[576,64], index: 1, kind: input, shape index: {}]
  %s2 = inlined_call_operand.vmem [shape: f32[1,64], index: 2, kind: input, shape index: {}]
  %s3 = inlined_call_operand.vmem [shape: bf16[49,64,1024], index: 3, kind: input, shape index: {}]
  %s4 = inlined_call_operand.vmem [shape: f32[1,1024], index: 4, kind: input, shape index: {}]
  %s5 = inlined_call_operand.vmem [shape: f32[1024,128], index: 5, kind: input, shape index: {}]
  %s6 = inlined_call_operand.vmem [shape: f32[1,128], index: 6, kind: input, shape index: {}]
  %s7 = inlined_call_operand.hbm [shape: f32[2,6], index: 7, kind: output, shape index: {}]
  %s8 = sld [smem:[#allocation0]]
  $region110: #{noisy_duel_forward.5} parent=0
    _
  %s10 = ssub.s32 1, %s8
  %s11 = scalar_select 0, %s10, %s8
  $region1: #{noisy_duel_forward.5} parent=0
    #allocation3 [shape = 'u8[286720]{0}', space=vmem, size = 0x46000, scoped, tag = 'input window, operand 0']
    #allocation4 [shape = 'u8[8192]{0}', space=vmem, size = 0x2000, scoped, tag = 'output window, operand 0, single buffered']
    #allocation5 [shape = 's32[2]{0}', space=sflag, size = 0x8, scoped, tag = 'scoped memory for noisy_duel_forward.5']
    %12 = vsyncpa [#allocation5], 0
    loop: start=0, step=1, limit=9
    $region2: #{noisy_duel_forward.5} parent=1 // loop_pre_header
      _
    $region3: #{noisy_duel_forward.5} parent=1 // loop_header
      %s14 = sphi 0, %s18
      %p15 = scmp.ge.s32.totalorder %s14, 9
      %s21 = sphi 0, %s33
      %s22 = sphi 0, %s29
      %s23 = sphi 0, %s21
      %s24 = sphi 0, %s22
      %s25 = sphi 0, %s23
      %s26 = sphi 0, %s24
      %s38 = sphi 0, %s40
      %s41 = sphi 0, %s38
      %s42 = sphi 0, %s41
      %s58 = sphi 0, %s42
      %s62 = sphi 0, %s62
      %s64 = sphi 0, %s62
      %s65 = sphi 0, %s64
      %s79 = sphi 0, %s65
      %s83 = sphi 0, %s83
      %s85 = sphi 0, %s83
      %s86 = sphi 0, %s85
      %s100 = sphi 0, %s86
      %s106 = sphi 0, %s108
      %s109 = sphi 0, %s106
      %s110 = sphi 0, %s109
      %s126 = sphi 0, %s110
      %s130 = sphi 0, %s130
      %s132 = sphi 0, %s130
      %s133 = sphi 0, %s132
      %s147 = sphi 0, %s133
      %s151 = sphi 0, %s151
      %s153 = sphi 0, %s151
      %s154 = sphi 0, %s153
      %s168 = sphi 0, %s154
      %s172 = sphi 0, %s172
      %s174 = sphi 0, %s172
      %s175 = sphi 0, %s174
      %s189 = sphi 0, %s175
      %s195 = sphi 0, %s197
      %s198 = sphi 0, %s195
      %s199 = sphi 0, %s198
      %s215 = sphi 0, %s199
    $region4: #{noisy_duel_forward.5} parent=1 // loop_header_branch
      %17 = sbr.rel (%p15) target = $region8
    $region5: #{noisy_duel_forward.5} parent=1 // loop_body
      %s19 = ssub.s32 %s14, 1
      %s20 = ssub.s32 %s14, 2
      %s27 = sadd.s32 1, %s22
      %p28 = scmp.ge.s32.totalorder %s27, 7
      %s29 = scalar_select %p28, 0, %s27
      %s30 = sadd.s32 1, %s21
      %s31 = scalar_select %p28, %s30, %s21
      %p32 = scmp.ge.s32.totalorder %s31, 1
      %s33 = scalar_select %p32, 0, %s31
      %s34 = ssub.s32 %s22, %s29
      %s35 = ssub.s32 %s21, %s33
      %s36 = sor.u32 %s34, %s35
      %p37 = scmp.eq.s32.totalorder %s36, 0
      %s39 = sadd.s32 %s38, 1
      %s40 = scalar_select %p37, %s38, %s39
      %p43 = pneg %p37
      %p44 = scmp.eq.s32.totalorder %s14, 6
      %p45 = por %p43, %p44
      %p46 = scmp.ne.s32.totalorder %s38, %s41
      %p47 = scmp.eq.s32.totalorder %s14, 0
      %p48 = por %p46, %p47
      %p49 = scmp.ne.s32.totalorder %s38, %s41
      %p50 = scmp.eq.s32.totalorder %s19, 6
      %p51 = por %p49, %p50
      %p52 = scmp.ne.s32.totalorder %s41, %s42
      %p53 = scmp.eq.s32.totalorder %s19, 0
      %p54 = por %p52, %p53
      %p55 = scmp.ne.s32.totalorder %s41, %s42
      %p56 = scmp.eq.s32.totalorder %s20, 6
      %p57 = por %p55, %p56
      %p59 = scmp.ne.s32.totalorder %s42, %s58
      %p60 = scmp.eq.s32.totalorder %s20, 0
      %p61 = por %p59, %p60
      %s63 = sadd.s32 %s62, 1
      %p66 = scmp.eq.s32.totalorder %s14, 6
      %p67 = scmp.ne.s32.totalorder %s62, %s64
      %p68 = scmp.eq.s32.totalorder %s14, 0
      %p69 = por %p67, %p68
      %p70 = scmp.ne.s32.totalorder %s62, %s64
      %p71 = scmp.eq.s32.totalorder %s19, 6
      %p72 = por %p70, %p71
      %p73 = scmp.ne.s32.totalorder %s64, %s65
      %p74 = scmp.eq.s32.totalorder %s19, 0
      %p75 = por %p73, %p74
      %p76 = scmp.ne.s32.totalorder %s64, %s65
      %p77 = scmp.eq.s32.totalorder %s20, 6
      %p78 = por %p76, %p77
      %p80 = scmp.ne.s32.totalorder %s65, %s79
      %p81 = scmp.eq.s32.totalorder %s20, 0
      %p82 = por %p80, %p81
      %s84 = sadd.s32 %s83, 1
      %p87 = scmp.eq.s32.totalorder %s14, 6
      %p88 = scmp.ne.s32.totalorder %s83, %s85
      %p89 = scmp.eq.s32.totalorder %s14, 0
      %p90 = por %p88, %p89
      %p91 = scmp.ne.s32.totalorder %s83, %s85
      %p92 = scmp.eq.s32.totalorder %s19, 6
      %p93 = por %p91, %p92
      %p94 = scmp.ne.s32.totalorder %s85, %s86
      %p95 = scmp.eq.s32.totalorder %s19, 0
      %p96 = por %p94, %p95
      %p97 = scmp.ne.s32.totalorder %s85, %s86
      %p98 = scmp.eq.s32.totalorder %s20, 6
      %p99 = por %p97, %p98
      %p101 = scmp.ne.s32.totalorder %s86, %s100
      %p102 = scmp.eq.s32.totalorder %s20, 0
      %p103 = por %p101, %p102
      %s104 = ssub.s32 %s22, %s29
      %p105 = scmp.eq.s32.totalorder %s104, 0
      %s107 = sadd.s32 %s106, 1
      %s108 = scalar_select %p105, %s106, %s107
      %p111 = pneg %p105
      %p112 = scmp.eq.s32.totalorder %s14, 6
      %p113 = por %p111, %p112
      %p114 = scmp.ne.s32.totalorder %s106, %s109
      %p115 = scmp.eq.s32.totalorder %s14, 0
      %p116 = por %p114, %p115
      %p117 = scmp.ne.s32.totalorder %s106, %s109
      %p118 = scmp.eq.s32.totalorder %s19, 6
      %p119 = por %p117, %p118
      %p120 = scmp.ne.s32.totalorder %s109, %s110
      %p121 = scmp.eq.s32.totalorder %s19, 0
      %p122 = por %p120, %p121
      %p123 = scmp.ne.s32.totalorder %s109, %s110
      %p124 = scmp.eq.s32.totalorder %s20, 6
      %p125 = por %p123, %p124
      %p127 = scmp.ne.s32.totalorder %s110, %s126
      %p128 = scmp.eq.s32.totalorder %s20, 0
      %p129 = por %p127, %p128
      %s131 = sadd.s32 %s130, 1
      %p134 = scmp.eq.s32.totalorder %s14, 6
      %p135 = scmp.ne.s32.totalorder %s130, %s132
      %p136 = scmp.eq.s32.totalorder %s14, 0
      %p137 = por %p135, %p136
      %p138 = scmp.ne.s32.totalorder %s130, %s132
      %p139 = scmp.eq.s32.totalorder %s19, 6
      %p140 = por %p138, %p139
      %p141 = scmp.ne.s32.totalorder %s132, %s133
      %p142 = scmp.eq.s32.totalorder %s19, 0
      %p143 = por %p141, %p142
      %p144 = scmp.ne.s32.totalorder %s132, %s133
      %p145 = scmp.eq.s32.totalorder %s20, 6
      %p146 = por %p144, %p145
      %p148 = scmp.ne.s32.totalorder %s133, %s147
      %p149 = scmp.eq.s32.totalorder %s20, 0
      %p150 = por %p148, %p149
      %s152 = sadd.s32 %s151, 1
      %p155 = scmp.eq.s32.totalorder %s14, 6
      %p156 = scmp.ne.s32.totalorder %s151, %s153
      %p157 = scmp.eq.s32.totalorder %s14, 0
      %p158 = por %p156, %p157
      %p159 = scmp.ne.s32.totalorder %s151, %s153
      %p160 = scmp.eq.s32.totalorder %s19, 6
      %p161 = por %p159, %p160
      %p162 = scmp.ne.s32.totalorder %s153, %s154
      %p163 = scmp.eq.s32.totalorder %s19, 0
      %p164 = por %p162, %p163
      %p165 = scmp.ne.s32.totalorder %s153, %s154
      %p166 = scmp.eq.s32.totalorder %s20, 6
      %p167 = por %p165, %p166
      %p169 = scmp.ne.s32.totalorder %s154, %s168
      %p170 = scmp.eq.s32.totalorder %s20, 0
      %p171 = por %p169, %p170
      %s173 = sadd.s32 %s172, 1
      %p176 = scmp.eq.s32.totalorder %s14, 6
      %p177 = scmp.ne.s32.totalorder %s172, %s174
      %p178 = scmp.eq.s32.totalorder %s14, 0
      %p179 = por %p177, %p178
      %p180 = scmp.ne.s32.totalorder %s172, %s174
      %p181 = scmp.eq.s32.totalorder %s19, 6
      %p182 = por %p180, %p181
      %p183 = scmp.ne.s32.totalorder %s174, %s175
      %p184 = scmp.eq.s32.totalorder %s19, 0
      %p185 = por %p183, %p184
      %p186 = scmp.ne.s32.totalorder %s174, %s175
      %p187 = scmp.eq.s32.totalorder %s20, 6
      %p188 = por %p186, %p187
      %p190 = scmp.ne.s32.totalorder %s175, %s189
      %p191 = scmp.eq.s32.totalorder %s20, 0
      %p192 = por %p190, %p191
      %s193 = ssub.s32 %s21, %s33
      %p194 = scmp.eq.s32.totalorder %s193, 0
      %s196 = sadd.s32 %s195, 1
      %s197 = scalar_select %p194, %s195, %s196
      %p200 = pneg %p194
      %p201 = scmp.eq.s32.totalorder %s14, 6
      %p202 = por %p200, %p201
      %p203 = scmp.ne.s32.totalorder %s195, %s198
      %p204 = scmp.eq.s32.totalorder %s14, 0
      %p205 = por %p203, %p204
      %p206 = scmp.ne.s32.totalorder %s195, %s198
      %p207 = scmp.eq.s32.totalorder %s19, 6
      %p208 = por %p206, %p207
      %p209 = scmp.ne.s32.totalorder %s198, %s199
      %p210 = scmp.eq.s32.totalorder %s19, 0
      %p211 = por %p209, %p210
      %p212 = scmp.ne.s32.totalorder %s198, %s199
      %p213 = scmp.eq.s32.totalorder %s20, 6
      %p214 = por %p212, %p213
      %p216 = scmp.ne.s32.totalorder %s199, %s215
      %p217 = scmp.eq.s32.totalorder %s20, 0
      %p218 = por %p216, %p217
      %p219 = scmp.le.s32.totalorder 1, %s14
      %p220 = scmp.lt.s32.totalorder %s14, 8
      %p221 = pnand %p219, %p220
      %p222 = pneg %p221
      // Predicated region
      $region9: #{noisy_duel_forward.5} parent=5 // pred_check
        _
      $region10: #{noisy_duel_forward.5} parent=5 // pred_check_branch
        %224 = sbr.rel (%p221) target = $region12
      $region11: #{noisy_duel_forward.5} parent=5 // pred_region
        %s225 = ssub.s32 %s14, 1
        // Predicated region
        $region13: #{noisy_duel_forward.5} parent=11 // pred_check
          %p226 = pneg %p75
        $region14: #{noisy_duel_forward.5} parent=11 // pred_check_branch
          %228 = sbr.rel (%p226) target = $region16
        $region15: #{noisy_duel_forward.5} parent=11 // pred_region
          _
        $region16: #{noisy_duel_forward.5} parent=11 // pred_fallthru
          _
        // Predicated region
        $region17: #{noisy_duel_forward.5} parent=11 // pred_check
          %p229 = pneg %p96
        $region18: #{noisy_duel_forward.5} parent=11 // pred_check_branch
          %231 = sbr.rel (%p229) target = $region20
        $region19: #{noisy_duel_forward.5} parent=11 // pred_region
          _
        $region20: #{noisy_duel_forward.5} parent=11 // pred_fallthru
          _
        // Predicated region
        $region21: #{noisy_duel_forward.5} parent=11 // pred_check
          %p232 = pneg %p143
        $region22: #{noisy_duel_forward.5} parent=11 // pred_check_branch
          %234 = sbr.rel (%p232) target = $region24
        $region23: #{noisy_duel_forward.5} parent=11 // pred_region
          _
        $region24: #{noisy_duel_forward.5} parent=11 // pred_fallthru
          _
        // Predicated region
        $region25: #{noisy_duel_forward.5} parent=11 // pred_check
          %p235 = pneg %p164
        $region26: #{noisy_duel_forward.5} parent=11 // pred_check_branch
          %237 = sbr.rel (%p235) target = $region28
        $region27: #{noisy_duel_forward.5} parent=11 // pred_region
          _
        $region28: #{noisy_duel_forward.5} parent=11 // pred_fallthru
          _
        // Predicated region
        $region29: #{noisy_duel_forward.5} parent=11 // pred_check
          %p238 = pneg %p185
        $region30: #{noisy_duel_forward.5} parent=11 // pred_check_branch
          %240 = sbr.rel (%p238) target = $region32
        $region31: #{noisy_duel_forward.5} parent=11 // pred_region
          _
        $region32: #{noisy_duel_forward.5} parent=11 // pred_fallthru
          _
      $region12: #{noisy_duel_forward.5} parent=5 // pred_fallthru
        _
      %p241 = scmp.lt.s32.totalorder %s14, 7
      // Predicated region
      $region33: #{noisy_duel_forward.5} parent=5 // pred_check
        %p242 = pneg %p241
      $region34: #{noisy_duel_forward.5} parent=5 // pred_check_branch
        %244 = sbr.rel (%p242) target = $region36
      $region35: #{noisy_duel_forward.5} parent=5 // pred_region
        // Predicated region
        $region37: #{noisy_duel_forward.5} parent=35 // pred_check
          %p245 = pneg %p48
        $region38: #{noisy_duel_forward.5} parent=35 // pred_check_branch
          %247 = sbr.rel (%p245) target = $region40
        $region39: #{noisy_duel_forward.5} parent=35 // pred_region
          %s248 = sand.u32 %s38, 1
          %s249 = sand.u32 %s38, 1
          %s250 = smul.addr %s249, 280
          %s251 = scalar_lea.vmem [#allocation3], %s250
          %s252 = smul.u32 7, %s22
          %s253 = smul.u32 8, %s21
          %s254 = ssub.s32 1, %s253
          %s255 = smul.u32 7, %s254
          %s256 = smul.u32 %s255, 5
          %p257 = scmp.ne.s32.totalorder 0, %s256
          %s258 = smul.addr %s253, 5
          %s259 = smul.addr %s252, 5
          %s260 = sadd.s32 %s258, %s259
          %s261 = scalar_lea.vmem %s0, %s260
          // Predicated region
          $region41: #{noisy_duel_forward.5} parent=39 // pred_check
            %p262 = pneg %p257
          $region42: #{noisy_duel_forward.5} parent=39 // pred_check_branch
            %264 = sbr.rel (%p262) target = $region44
          $region43: #{noisy_duel_forward.5} parent=39 // pred_region
            // Predicated region
            $region45: #{noisy_duel_forward.5} parent=43 // pred_check
              _
            $region46: #{noisy_duel_forward.5} parent=43 // pred_check_branch
              %266 = sbr.rel target = $region48
            $region47: #{noisy_duel_forward.5} parent=43 // pred_region
              // Predicated region
              $region60: #{noisy_duel_forward.5} parent=47 // pred_check
                _
              $region61: #{noisy_duel_forward.5} parent=47 // pred_check_branch
                %302 = sbr.rel (0) target = $region63
              $region62: #{noisy_duel_forward.5} parent=47 // pred_region
                // While loop
                $region64: #{noisy_duel_forward.5} parent=62 // loop_pre_header
                  _
                $region65: #{noisy_duel_forward.5} parent=62 // loop_header
                  %s304 = sphi 0, %s306
                  %p305 = scmp.ge.s32.totalorder %s304, %s254
                  %s309 = sphi 0, %s314
                  %s310 = sphi %s261, %s317
                  %s311 = sphi %s251, %s318
                $region66: #{noisy_duel_forward.5} parent=62 // loop_header_branch
                  %308 = sbr.rel (%p305) target = $region70
                $region67: #{noisy_duel_forward.5} parent=62 // loop_body
                  %s312 = sadd.s32 1, %s309
                  %p313 = scmp.ge.s32.totalorder %s312, %s254
                  %s314 = scalar_select %p313, 0, %s312
                  %s315 = smul.u32 %s314, 5
                  %s316 = smul.u32 %s314, 5
                  %s317 = scalar_lea.vmem %s261, %s315
                  %s318 = scalar_lea.vmem %s251, %s316 [#allocation3]
                $region68: #{noisy_duel_forward.5} parent=62 // loop_footer
                  %s306 = sadd.s32 %s304, 1
                $region69: #{noisy_duel_forward.5} parent=62 // loop_footer_branch
                  %303 = sbr.rel target = $region65
                $region70: #{noisy_duel_forward.5} parent=62 // loop_exit
                  _
                %s320 = ssub.s32 32, 1
                // While loop
                $region71: #{noisy_duel_forward.5} parent=62 // loop_pre_header
                  _
                $region72: #{noisy_duel_forward.5} parent=62 // loop_header
                  %s322 = sphi 0, %s324
                  %p323 = scmp.ge.s32.totalorder %s322, %s254
                  %s327 = sphi 0, %s346
                  %s328 = sphi %s261, %s349
                  %s329 = sphi %s251, %s350
                $region73: #{noisy_duel_forward.5} parent=62 // loop_header_branch
                  %326 = sbr.rel (%p323) target = $region77
                $region74: #{noisy_duel_forward.5} parent=62 // loop_body
                  %v330 = vld [vmem:[%s328] sm:%s320]
                  %331 = vst [vmem:[%s329] sm:%s320] %v330
                  %v332 = vld [vmem:[%s328 + $0x5] sm:%s320]
                  %333 = vst [vmem:[%s329 + $0x28] sm:%s320] %v332
                  %v334 = vld [vmem:[%s328 + $0xa] sm:%s320]
                  %335 = vst [vmem:[%s329 + $0x50] sm:%s320] %v334
                  %v336 = vld [vmem:[%s328 + $0xf] sm:%s320]
                  %337 = vst [vmem:[%s329 + $0x78] sm:%s320] %v336
                  %v338 = vld [vmem:[%s328 + $0x14] sm:%s320]
                  %339 = vst [vmem:[%s329 + $0xa0] sm:%s320] %v338
                  %v340 = vld [vmem:[%s328 + $0x19] sm:%s320]
                  %341 = vst [vmem:[%s329 + $0xc8] sm:%s320] %v340
                  %v342 = vld [vmem:[%s328 + $0x1e] sm:%s320]
                  %343 = vst [vmem:[%s329 + $0xf0] sm:%s320] %v342
                  %s344 = sadd.s32 1, %s327
                  %p345 = scmp.ge.s32.totalorder %s344, %s254
                  %s346 = scalar_select %p345, 0, %s344
                  %s347 = smul.u32 %s346, 5
                  %s348 = smul.u32 %s346, 5
                  %s349 = scalar_lea.vmem %s261, %s347
                  %s350 = scalar_lea.vmem %s251, %s348 [#allocation3]
                $region75: #{noisy_duel_forward.5} parent=62 // loop_footer
                  %s324 = sadd.s32 %s322, 1
                $region76: #{noisy_duel_forward.5} parent=62 // loop_footer_branch
                  %321 = sbr.rel target = $region72
                $region77: #{noisy_duel_forward.5} parent=62 // loop_exit
                  _
              $region63: #{noisy_duel_forward.5} parent=47 // pred_fallthru
                _
            $region48: #{noisy_duel_forward.5} parent=43 // pred_fallthru
              _
            // Predicated region
            $region49: #{noisy_duel_forward.5} parent=43 // pred_check
              _
            $region50: #{noisy_duel_forward.5} parent=43 // pred_check_branch
              %268 = sbr.rel (0) target = $region52
            $region51: #{noisy_duel_forward.5} parent=43 // pred_region
              %s270 = ssub.s32 32, 1
              // While loop
              $region53: #{noisy_duel_forward.5} parent=51 // loop_pre_header
                _
              $region54: #{noisy_duel_forward.5} parent=51 // loop_header
                %s272 = sphi 0, %s274
                %p273 = scmp.ge.s32.totalorder %s272, %s254
                %s277 = sphi 0, %s296
                %s278 = sphi %s261, %s299
                %s279 = sphi %s251, %s300
              $region55: #{noisy_duel_forward.5} parent=51 // loop_header_branch
                %276 = sbr.rel (%p273) target = $region59
              $region56: #{noisy_duel_forward.5} parent=51 // loop_body
                %v280 = vld [vmem:[%s278] sm:%s270]
                %281 = vst [vmem:[%s279] sm:%s270] %v280
                %v282 = vld [vmem:[%s278 + $0x5] sm:%s270]
                %283 = vst [vmem:[%s279 + $0x28] sm:%s270] %v282
                %v284 = vld [vmem:[%s278 + $0xa] sm:%s270]
                %285 = vst [vmem:[%s279 + $0x50] sm:%s270] %v284
                %v286 = vld [vmem:[%s278 + $0xf] sm:%s270]
                %287 = vst [vmem:[%s279 + $0x78] sm:%s270] %v286
                %v288 = vld [vmem:[%s278 + $0x14] sm:%s270]
                %289 = vst [vmem:[%s279 + $0xa0] sm:%s270] %v288
                %v290 = vld [vmem:[%s278 + $0x19] sm:%s270]
                %291 = vst [vmem:[%s279 + $0xc8] sm:%s270] %v290
                %v292 = vld [vmem:[%s278 + $0x1e] sm:%s270]
                %293 = vst [vmem:[%s279 + $0xf0] sm:%s270] %v292
                %s294 = sadd.s32 1, %s277
                %p295 = scmp.ge.s32.totalorder %s294, %s254
                %s296 = scalar_select %p295, 0, %s294
                %s297 = smul.u32 %s296, 5
                %s298 = smul.u32 %s296, 5
                %s299 = scalar_lea.vmem %s261, %s297
                %s300 = scalar_lea.vmem %s251, %s298 [#allocation3]
              $region57: #{noisy_duel_forward.5} parent=51 // loop_footer
                %s274 = sadd.s32 %s272, 1
              $region58: #{noisy_duel_forward.5} parent=51 // loop_footer_branch
                %271 = sbr.rel target = $region54
              $region59: #{noisy_duel_forward.5} parent=51 // loop_exit
                _
            $region52: #{noisy_duel_forward.5} parent=43 // pred_fallthru
              _
          $region44: #{noisy_duel_forward.5} parent=39 // pred_fallthru
            _
          %351 = vnop
        $region40: #{noisy_duel_forward.5} parent=35 // pred_fallthru
          _
        // Predicated region
        $region78: #{noisy_duel_forward.5} parent=35 // pred_check
          %p352 = pneg %p116
        $region79: #{noisy_duel_forward.5} parent=35 // pred_check_branch
          %354 = sbr.rel (%p352) target = $region81
        $region80: #{noisy_duel_forward.5} parent=35 // pred_region
          %s355 = smul.u32 7, %s22
          %p356 = scmp.lt.s32.totalorder %s355, 48
          %s357 = scalar_select %p356, %s355, 48
          %s358 = smul.addr %s357, 64
          %s359 = smul.addr %s358, 4
          %s360 = scalar_lea.vmem %s3, %s359
          %s361 = smul.u32 7, %s22
        $region81: #{noisy_duel_forward.5} parent=35 // pred_fallthru
          _
      $region36: #{noisy_duel_forward.5} parent=5 // pred_fallthru
        _
      %p362 = scmp.le.s32.totalorder 1, %s14
      %p363 = scmp.lt.s32.totalorder %s14, 8
      %p364 = pnand %p362, %p363
      %p365 = pneg %p364
      // Predicated region
      $region82: #{noisy_duel_forward.5} parent=5 // pred_check
        _
      $region83: #{noisy_duel_forward.5} parent=5 // pred_check_branch
        %367 = sbr.rel (%p364) target = $region85
      $region84: #{noisy_duel_forward.5} parent=5 // pred_region
        %s368 = ssub.s32 %s14, 1
        %s369 = sand.u32 %s41, 1
        %s370 = sand.u32 %s41, 1
        %s371 = smul.addr %s370, 280
        %s372 = scalar_lea.vmem [#allocation3], %s371
        // Predicated region
        $region86: #{noisy_duel_forward.5} parent=84 // pred_check
          %p373 = pneg %p54
        $region87: #{noisy_duel_forward.5} parent=84 // pred_check_branch
          %375 = sbr.rel (%p373) target = $region89
        $region88: #{noisy_duel_forward.5} parent=84 // pred_region
          _
        $region89: #{noisy_duel_forward.5} parent=84 // pred_fallthru
          _
        %s376 = sand.u32 %s41, 1
        %s377 = sand.u32 %s41, 1
        %s378 = smul.addr %s377, 280
        %s379 = scalar_lea.vmem [#allocation3], %s378
        %p380 = pneg %p54
        %p381 = pneg %p51
        %p382 = pneg %p75
        %p383 = pneg %p72
        %p384 = pneg %p96
        %p385 = pneg %p93
        %s386 = smul.u32 7, %s24
        %p387 = scmp.lt.s32.totalorder %s386, 48
        %s388 = scalar_select %p387, %s386, 48
        %s389 = smul.addr %s388, 64
        %s390 = smul.addr %s389, 4
        %s391 = scalar_lea.vmem %s3, %s390
        %p392 = pneg %p122
        %p393 = pneg %p119
        %p394 = pneg %p143
        %p395 = pneg %p140
        %p396 = pneg %p164
        %p397 = pneg %p161
        %p398 = pneg %p185
        %p399 = pneg %p182
        %p400 = pneg %p211
        %p401 = pneg %p208
        %s402 = smul.u32 7, %s24
        %s403 = smul.u32 8, %s23
        %s404 = ssub.s32 1, %s403
        %s405 = smul.u32 7, %s404
        %s406 = smul.u32 %s405, 5
        %s407 = smul.u32 7, %s24
        %p408 = scmp.lt.s32.totalorder %s407, 48
        %s409 = scalar_select %p408, %s407, 48
        %s410 = smul.addr %s409, 64
        %s411 = smul.addr %s410, 4
        %s412 = scalar_lea.vmem %s3, %s411
        %s413 = smul.u32 7, %s24
        %s414 = smul.u32 8, %s23
        %s415 = ssub.s32 1, %s414
        %s416 = smul.u32 2, %s415
        %p418 = scmp.eq.s32.totalorder %s24, 0
        // Predicated region
        $region90: #{noisy_duel_forward.5} parent=84 // pred_check
          %p419 = pneg %p418
        $region91: #{noisy_duel_forward.5} parent=84 // pred_check_branch
          %421 = sbr.rel (%p419) target = $region93
        $region92: #{noisy_duel_forward.5} parent=84 // pred_region
          %422 = vst [vmem:[#allocation2] sm:$0xff] 0.0
          %423 = vst [vmem:[#allocation2 + $0x8] sm:$0xff] 0.0
          %424 = vst [vmem:[#allocation2 + $0x10] sm:$0xff] 0.0
          %425 = vst [vmem:[#allocation2 + $0x18] sm:$0xff] 0.0
          %426 = vst [vmem:[#allocation2 + $0x20] sm:$0xff] 0.0
          %427 = vst [vmem:[#allocation2 + $0x28] sm:$0xff] 0.0
          %428 = vst [vmem:[#allocation2 + $0x30] sm:$0xff] 0.0
          %429 = vst [vmem:[#allocation2 + $0x38] sm:$0xff] 0.0
          %430 = vst [vmem:[#allocation2 + $0x40] sm:$0xff] 0.0
          %431 = vst [vmem:[#allocation2 + $0x48] sm:$0xff] 0.0
          %432 = vst [vmem:[#allocation2 + $0x50] sm:$0xff] 0.0
          %433 = vst [vmem:[#allocation2 + $0x58] sm:$0xff] 0.0
          %434 = vst [vmem:[#allocation2 + $0x60] sm:$0xff] 0.0
          %435 = vst [vmem:[#allocation2 + $0x68] sm:$0xff] 0.0
          %436 = vst [vmem:[#allocation2 + $0x70] sm:$0xff] 0.0
          %437 = vst [vmem:[#allocation2 + $0x78] sm:$0xff] 0.0
        $region93: #{noisy_duel_forward.5} parent=84 // pred_fallthru
          _
        %v438 = vld [vmem:[%s372] sm:$0x1f]
        %v439 = vld [vmem:[%s372 + $0x5] sm:$0x1f]
        %v440 = vld [vmem:[%s372 + $0xa] sm:$0x1f]
        %v441 = vld [vmem:[%s372 + $0xf] sm:$0x1f]
        %v442 = vld [vmem:[%s372 + $0x14] sm:$0x1f]
        %v443 = vld [vmem:[%s372 + $0x19] sm:$0x1f]
        %v444 = vld [vmem:[%s372 + $0x1e] sm:$0x1f]
        %v445 = vld [vmem:[%s372 + $0x23] sm:$0x1f]
        %v446 = vld [vmem:[%s1] sm:$0xf]
        %v447 = vld [vmem:[%s1 + $0x4] sm:$0xf]
        %v448 = vld [vmem:[%s1 + $0x8] sm:$0xf]
        %v449 = vld [vmem:[%s1 + $0xc] sm:$0xf]
        %v450 = vld [vmem:[%s1 + $0x10] sm:$0xf]
        %v451 = vld [vmem:[%s1 + $0x14] sm:$0xf]
        %v452 = vld [vmem:[%s1 + $0x18] sm:$0xf]
        %v453 = vld [vmem:[%s1 + $0x1c] sm:$0xf]
        %v454 = vld [vmem:[%s1 + $0x20] sm:$0xf]
        %v455 = vld [vmem:[%s1 + $0x24] sm:$0xf]
        %v456 = vld [vmem:[%s1 + $0x28] sm:$0xf]
        %v457 = vld [vmem:[%s1 + $0x2c] sm:$0xf]
        %v458 = vld [vmem:[%s1 + $0x30] sm:$0xf]
        %v459 = vld [vmem:[%s1 + $0x34] sm:$0xf]
        %v460 = vld [vmem:[%s1 + $0x38] sm:$0xf]
        %v461 = vld [vmem:[%s1 + $0x3c] sm:$0xf]
        %v462 = vld [vmem:[%s1 + $0x40] sm:$0xf]
        %v463 = vld [vmem:[%s1 + $0x44] sm:$0xf]
        %v464 = vld [vmem:[%s1 + $0x48] sm:$0xf]
        %v465 = vld [vmem:[%s1 + $0x4c] sm:$0xf]
        %v466 = vld [vmem:[%s1 + $0x50] sm:$0xf]
        %v467 = vld [vmem:[%s1 + $0x54] sm:$0xf]
        %v468 = vld [vmem:[%s1 + $0x58] sm:$0xf]
        %v469 = vld [vmem:[%s1 + $0x5c] sm:$0xf]
        %v470 = vld [vmem:[%s1 + $0x60] sm:$0xf]
        %v471 = vld [vmem:[%s1 + $0x64] sm:$0xf]
        %v472 = vld [vmem:[%s1 + $0x68] sm:$0xf]
        %v473 = vld [vmem:[%s1 + $0x6c] sm:$0xf]
        %v474 = vld [vmem:[%s1 + $0x70] sm:$0xf]
        %v475 = vld [vmem:[%s1 + $0x74] sm:$0xf]
        %v476 = vld [vmem:[%s1 + $0x78] sm:$0xf]
        %v477 = vld [vmem:[%s1 + $0x7c] sm:$0xf]
        %v478 = vld [vmem:[%s1 + $0x80] sm:$0xf]
        %v479 = vld [vmem:[%s1 + $0x84] sm:$0xf]
        %v480 = vld [vmem:[%s1 + $0x88] sm:$0xf]
        %v481 = vld [vmem:[%s1 + $0x8c] sm:$0xf]
        %v482 = vld [vmem:[%s1 + $0x90] sm:$0xf]
        %v483 = vld [vmem:[%s1 + $0x94] sm:$0xf]
        %v484 = vld [vmem:[%s1 + $0x98] sm:$0xf]
        %v485 = vld [vmem:[%s1 + $0x9c] sm:$0xf]
        %v486 = vld [vmem:[%s1 + $0xa0] sm:$0xf]
        %v487 = vld [vmem:[%s1 + $0xa4] sm:$0xf]
        %v488 = vld [vmem:[%s1 + $0xa8] sm:$0xf]
        %v489 = vld [vmem:[%s1 + $0xac] sm:$0xf]
        %v490 = vld [vmem:[%s1 + $0xb0] sm:$0xf]
        %v491 = vld [vmem:[%s1 + $0xb4] sm:$0xf]
        %v492 = vld [vmem:[%s1 + $0xb8] sm:$0xf]
        %v493 = vld [vmem:[%s1 + $0xbc] sm:$0xf]
        %v494 = vld [vmem:[%s1 + $0xc0] sm:$0xf]
        %v495 = vld [vmem:[%s1 + $0xc4] sm:$0xf]
        %v496 = vld [vmem:[%s1 + $0xc8] sm:$0xf]
        %v497 = vld [vmem:[%s1 + $0xcc] sm:$0xf]
        %v498 = vld [vmem:[%s1 + $0xd0] sm:$0xf]
        %v499 = vld [vmem:[%s1 + $0xd4] sm:$0xf]
        %v500 = vld [vmem:[%s1 + $0xd8] sm:$0xf]
        %v501 = vld [vmem:[%s1 + $0xdc] sm:$0xf]
        %v502 = vld [vmem:[%s1 + $0xe0] sm:$0xf]
        %v503 = vld [vmem:[%s1 + $0xe4] sm:$0xf]
        %v504 = vld [vmem:[%s1 + $0xe8] sm:$0xf]
        %v505 = vld [vmem:[%s1 + $0xec] sm:$0xf]
        %v506 = vld [vmem:[%s1 + $0xf0] sm:$0xf]
        %v507 = vld [vmem:[%s1 + $0xf4] sm:$0xf]
        %v508 = vld [vmem:[%s1 + $0xf8] sm:$0xf]
        %v509 = vld [vmem:[%s1 + $0xfc] sm:$0xf]
        %v510 = vld [vmem:[%s1 + $0x100] sm:$0xf]
        %v511 = vld [vmem:[%s1 + $0x104] sm:$0xf]
        %v512 = vld [vmem:[%s1 + $0x108] sm:$0xf]
        %v513 = vld [vmem:[%s1 + $0x10c] sm:$0xf]
        %v514 = vld [vmem:[%s1 + $0x110] sm:$0xf]
        %v515 = vld [vmem:[%s1 + $0x114] sm:$0xf]
        %v516 = vld [vmem:[%s1 + $0x118] sm:$0xf]
        %v517 = vld [vmem:[%s1 + $0x11c] sm:$0xf]
        %v518 = vld [vmem:[%s2] sm:$0x1]
        %v520 = vperm.slane %v518, 0
        %523 = vst [vmem:[#allocation1] ss:$9 sm:$0xff] %v438
        %s525 = scalar_lea.vmem [#allocation1], 1
        %526 = vst [vmem:[%s525] ss:$9 sm:$0xff] %v439
        %s528 = scalar_lea.vmem [#allocation1], 2
        %529 = vst [vmem:[%s528] ss:$9 sm:$0xff] %v440
        %s531 = scalar_lea.vmem [#allocation1], 3
        %532 = vst [vmem:[%s531] ss:$9 sm:$0xff] %v441
        %s534 = scalar_lea.vmem [#allocation1], 4
        %535 = vst [vmem:[%s534] ss:$9 sm:$0xff] %v442
        %s537 = scalar_lea.vmem [#allocation1], 5
        %538 = vst [vmem:[%s537] ss:$9 sm:$0xff] %v443
        %s540 = scalar_lea.vmem [#allocation1], 6
        %541 = vst [vmem:[%s540] ss:$9 sm:$0xff] %v444
        %s543 = scalar_lea.vmem [#allocation1], 7
        %544 = vst [vmem:[%s543] ss:$9 sm:$0xff] %v445
        %v545 = vld [vmem:[#allocation1] sm:$0xff]
        %v546 = vld [vmem:[#allocation1 + $0x9] sm:$0xff]
        %v547 = vld [vmem:[#allocation1 + $0x12] sm:$0xff]
        %v548 = vld [vmem:[#allocation1 + $0x1b] sm:$0xff]
        %v549 = vld [vmem:[#allocation1 + $0x24] sm:$0xff]
        %v626 = vunpack.c.l.b16 %v446
        %v627 = vunpack.c.l.b16 %v447
        %v628 = vunpack.c.l.b16 %v448
        %v629 = vunpack.c.l.b16 %v449
        %v630 = vunpack.c.l.b16 %v450
        %v631 = vunpack.c.l.b16 %v451
        %v632 = vunpack.c.l.b16 %v452
        %v633 = vunpack.c.l.b16 %v453
        %v634 = vunpack.c.l.b16 %v454
        %v635 = vunpack.c.l.b16 %v455
        %v636 = vunpack.c.l.b16 %v456
        %v637 = vunpack.c.l.b16 %v457
        %v638 = vunpack.c.l.b16 %v458
        %v639 = vunpack.c.l.b16 %v459
        %v640 = vunpack.c.l.b16 %v460
        %v641 = vunpack.c.l.b16 %v461
        %v642 = vunpack.c.l.b16 %v462
        %v643 = vunpack.c.l.b16 %v463
        %v644 = vunpack.c.l.b16 %v464
        %v645 = vunpack.c.l.b16 %v465
        %v646 = vunpack.c.l.b16 %v466
        %v647 = vunpack.c.l.b16 %v467
        %v648 = vunpack.c.l.b16 %v468
        %v649 = vunpack.c.l.b16 %v469
        %v650 = vunpack.c.l.b16 %v470
        %v651 = vunpack.c.l.b16 %v471
        %v652 = vunpack.c.l.b16 %v472
        %v653 = vunpack.c.l.b16 %v473
        %v654 = vunpack.c.l.b16 %v474
        %v655 = vunpack.c.l.b16 %v475
        %v656 = vunpack.c.l.b16 %v476
        %v657 = vunpack.c.l.b16 %v477
        %v658 = vunpack.c.l.b16 %v478
        %v659 = vunpack.c.l.b16 %v479
        %v660 = vunpack.c.l.b16 %v480
        %v661 = vunpack.c.l.b16 %v481
        %v662 = vunpack.c.l.b16 %v482
        %v663 = vunpack.c.l.b16 %v483
        %v664 = vunpack.c.l.b16 %v484
        %v665 = vunpack.c.l.b16 %v485
        %v666 = vunpack.c.l.b16 %v486
        %v667 = vunpack.c.l.b16 %v487
        %v668 = vunpack.c.l.b16 %v488
        %v669 = vunpack.c.l.b16 %v489
        %v670 = vunpack.c.l.b16 %v490
        %v671 = vunpack.c.l.b16 %v491
        %v672 = vunpack.c.l.b16 %v492
        %v673 = vunpack.c.l.b16 %v493
        %v674 = vunpack.c.l.b16 %v494
        %v675 = vunpack.c.l.b16 %v495
        %v676 = vunpack.c.l.b16 %v496
        %v677 = vunpack.c.l.b16 %v497
        %v678 = vunpack.c.l.b16 %v498
        %v679 = vunpack.c.l.b16 %v499
        %v680 = vunpack.c.l.b16 %v500
        %v681 = vunpack.c.l.b16 %v501
        %v682 = vunpack.c.l.b16 %v502
        %v683 = vunpack.c.l.b16 %v503
        %v684 = vunpack.c.l.b16 %v504
        %v685 = vunpack.c.l.b16 %v505
        %v686 = vunpack.c.l.b16 %v506
        %v687 = vunpack.c.l.b16 %v507
        %v688 = vunpack.c.l.b16 %v508
        %v689 = vunpack.c.l.b16 %v509
        %v690 = vunpack.c.l.b16 %v510
        %v691 = vunpack.c.l.b16 %v511
        %v692 = vunpack.c.l.b16 %v512
        %v693 = vunpack.c.l.b16 %v513
        %v694 = vunpack.c.l.b16 %v514
        %v695 = vunpack.c.l.b16 %v515
        %v696 = vunpack.c.l.b16 %v516
        %v697 = vunpack.c.l.b16 %v517
        %v698 = vpack.c.b16 %v627, %v626
        %v699 = vpack.c.b16 %v629, %v628
        %v700 = vpack.c.b16 %v631, %v630
        %v701 = vpack.c.b16 %v633, %v632
        %v702 = vpack.c.b16 %v635, %v634
        %v703 = vpack.c.b16 %v637, %v636
        %v704 = vpack.c.b16 %v639, %v638
        %v705 = vpack.c.b16 %v641, %v640
        %v706 = vpack.c.b16 %v643, %v642
        %v707 = vpack.c.b16 %v645, %v644
        %v708 = vpack.c.b16 %v647, %v646
        %v709 = vpack.c.b16 %v649, %v648
        %v710 = vpack.c.b16 %v651, %v650
        %v711 = vpack.c.b16 %v653, %v652
        %v712 = vpack.c.b16 %v655, %v654
        %v713 = vpack.c.b16 %v657, %v656
        %v714 = vpack.c.b16 %v659, %v658
        %v715 = vpack.c.b16 %v661, %v660
        %v716 = vpack.c.b16 %v663, %v662
        %v717 = vpack.c.b16 %v665, %v664
        %v718 = vpack.c.b16 %v667, %v666
        %v719 = vpack.c.b16 %v669, %v668
        %v720 = vpack.c.b16 %v671, %v670
        %v721 = vpack.c.b16 %v673, %v672
        %v722 = vpack.c.b16 %v675, %v674
        %v723 = vpack.c.b16 %v677, %v676
        %v724 = vpack.c.b16 %v679, %v678
        %v725 = vpack.c.b16 %v681, %v680
        %v726 = vpack.c.b16 %v683, %v682
        %v727 = vpack.c.b16 %v685, %v684
        %v728 = vpack.c.b16 %v687, %v686
        %v729 = vpack.c.b16 %v689, %v688
        %v730 = vpack.c.b16 %v691, %v690
        %v731 = vpack.c.b16 %v693, %v692
        %v732 = vpack.c.b16 %v695, %v694
        %v733 = vpack.c.b16 %v697, %v696
        %vm770 = vcmask 523264
        %v771 = vsel %vm770, %v549, 0
        %773 = vmatpush.bf16.msra.mxu0 %v705
        %774 = vmatpush.bf16.msra.mxu0 %v704
        %775 = vmatpush.bf16.msra.mxu0 %v703
        %776 = vmatpush.bf16.msra.mxu0 %v702
        %777 = vmatpush.bf16.msra.mxu0 %v701
        %778 = vmatpush.bf16.msra.mxu0 %v700
        %779 = vmatpush.bf16.msra.mxu0 %v699
        %780 = vmatpush.bf16.msra.mxu0 %v698
        %781 = vmatmul.bf16.gmra.mxu0 %v545
        %v782 = vpop.f32.mrf.mxu0
        %v783 = vadd.f32 %v520, %v782
        %v784 = vpop.f32.mrf.mxu0
        %v785 = vadd.f32 %v520, %v784
        %786 = vdwg.mxu0
        %787 = vmatpush.bf16.msra.mxu0 %v713
        %788 = vmatpush.bf16.msra.mxu0 %v712
        %789 = vmatpush.bf16.msra.mxu0 %v711
        %790 = vmatpush.bf16.msra.mxu0 %v710
        %791 = vmatpush.bf16.msra.mxu0 %v709
        %792 = vmatpush.bf16.msra.mxu0 %v708
        %793 = vmatpush.bf16.msra.mxu0 %v707
        %794 = vmatpush.bf16.msra.mxu0 %v706
        %795 = vmatmul.bf16.gmra.mxu0 %v546
        %v796 = vpop.f32.mrf.mxu0
        %v797 = vadd.f32 %v783, %v796
        %v798 = vpop.f32.mrf.mxu0
        %v799 = vadd.f32 %v785, %v798
        %800 = vdwg.mxu0
        %801 = vmatpush.bf16.msra.mxu0 %v721
        %802 = vmatpush.bf16.msra.mxu0 %v720
        %803 = vmatpush.bf16.msra.mxu0 %v719
        %804 = vmatpush.bf16.msra.mxu0 %v718
        %805 = vmatpush.bf16.msra.mxu0 %v717
        %806 = vmatpush.bf16.msra.mxu0 %v716
        %807 = vmatpush.bf16.msra.mxu0 %v715
        %808 = vmatpush.bf16.msra.mxu0 %v714
        %809 = vmatmul.bf16.gmra.mxu0 %v547
        %v810 = vpop.f32.mrf.mxu0
        %v811 = vadd.f32 %v797, %v810
        %v812 = vpop.f32.mrf.mxu0
        %v813 = vadd.f32 %v799, %v812
        %814 = vdwg.mxu0
        %815 = vmatpush.bf16.msra.mxu0 %v729
        %816 = vmatpush.bf16.msra.mxu0 %v728
        %817 = vmatpush.bf16.msra.mxu0 %v727
        %818 = vmatpush.bf16.msra.mxu0 %v726
        %819 = vmatpush.bf16.msra.mxu0 %v725
        %820 = vmatpush.bf16.msra.mxu0 %v724
        %821 = vmatpush.bf16.msra.mxu0 %v723
        %822 = vmatpush.bf16.msra.mxu0 %v722
        %823 = vmatmul.bf16.gmra.mxu0 %v548
        %v824 = vpop.f32.mrf.mxu0
        %v825 = vadd.f32 %v811, %v824
        %v826 = vpop.f32.mrf.mxu0
        %v827 = vadd.f32 %v813, %v826
        %828 = vdwg.mxu0
        %829 = vmatpush.bf16.msra.mxu0 0
        %830 = vmatpush.bf16.msra.mxu0 0
        %831 = vmatpush.bf16.msra.mxu0 0
        %832 = vmatpush.bf16.msra.mxu0 0
        %833 = vmatpush.bf16.msra.mxu0 %v733
        %834 = vmatpush.bf16.msra.mxu0 %v732
        %835 = vmatpush.bf16.msra.mxu0 %v731
        %836 = vmatpush.bf16.msra.mxu0 %v730
        %837 = vmatmul.bf16.gmra.mxu0 %v771
        %v838 = vpop.f32.mrf.mxu0
        %v839 = vadd.f32 %v825, %v838
        %v840 = vpop.f32.mrf.mxu0
        %v841 = vadd.f32 %v827, %v840
        %842 = vdwg.mxu0
        %v843 = vmax.f32 %v839, 0.0
        %v844 = vmax.f32 %v841, 0.0
        %v845 = vpack.c.bf16 %v844, %v843
        %v846 = vld [vmem:[#allocation2] sm:$0xff]
        %v847 = vld [vmem:[#allocation2 + $0x8] sm:$0xff]
        %v848 = vld [vmem:[#allocation2 + $0x10] sm:$0xff]
        %v849 = vld [vmem:[#allocation2 + $0x18] sm:$0xff]
        %v850 = vld [vmem:[#allocation2 + $0x20] sm:$0xff]
        %v851 = vld [vmem:[#allocation2 + $0x28] sm:$0xff]
        %v852 = vld [vmem:[#allocation2 + $0x30] sm:$0xff]
        %v853 = vld [vmem:[#allocation2 + $0x38] sm:$0xff]
        %v854 = vld [vmem:[#allocation2 + $0x40] sm:$0xff]
        %v855 = vld [vmem:[#allocation2 + $0x48] sm:$0xff]
        %v856 = vld [vmem:[#allocation2 + $0x50] sm:$0xff]
        %v857 = vld [vmem:[#allocation2 + $0x58] sm:$0xff]
        %v858 = vld [vmem:[#allocation2 + $0x60] sm:$0xff]
        %v859 = vld [vmem:[#allocation2 + $0x68] sm:$0xff]
        %v860 = vld [vmem:[#allocation2 + $0x70] sm:$0xff]
        %v861 = vld [vmem:[#allocation2 + $0x78] sm:$0xff]
        %v862 = vld [vmem:[%s412] sm:$0xff]
        %v863 = vld [vmem:[%s412 + $0x8] sm:$0xff]
        %v864 = vld [vmem:[%s412 + $0x10] sm:$0xff]
        %v865 = vld [vmem:[%s412 + $0x18] sm:$0xff]
        %v866 = vld [vmem:[%s412 + $0x20] sm:$0xff]
        %v867 = vld [vmem:[%s412 + $0x28] sm:$0xff]
        %v868 = vld [vmem:[%s412 + $0x30] sm:$0xff]
        %v869 = vld [vmem:[%s412 + $0x38] sm:$0xff]
        %v870 = vld [vmem:[%s412 + $0x40] sm:$0xff]
        %v871 = vld [vmem:[%s412 + $0x48] sm:$0xff]
        %v872 = vld [vmem:[%s412 + $0x50] sm:$0xff]
        %v873 = vld [vmem:[%s412 + $0x58] sm:$0xff]
        %v874 = vld [vmem:[%s412 + $0x60] sm:$0xff]
        %v875 = vld [vmem:[%s412 + $0x68] sm:$0xff]
        %v876 = vld [vmem:[%s412 + $0x70] sm:$0xff]
        %v877 = vld [vmem:[%s412 + $0x78] sm:$0xff]
        %v878 = vld [vmem:[%s412 + $0x80] sm:$0xff]
        %v879 = vld [vmem:[%s412 + $0x88] sm:$0xff]
        %v880 = vld [vmem:[%s412 + $0x90] sm:$0xff]
        %v881 = vld [vmem:[%s412 + $0x98] sm:$0xff]
        %v882 = vld [vmem:[%s412 + $0xa0] sm:$0xff]
        %v883 = vld [vmem:[%s412 + $0xa8] sm:$0xff]
        %v884 = vld [vmem:[%s412 + $0xb0] sm:$0xff]
        %v885 = vld [vmem:[%s412 + $0xb8] sm:$0xff]
        %v886 = vld [vmem:[%s412 + $0xc0] sm:$0xff]
        %v887 = vld [vmem:[%s412 + $0xc8] sm:$0xff]
        %v888 = vld [vmem:[%s412 + $0xd0] sm:$0xff]
        %v889 = vld [vmem:[%s412 + $0xd8] sm:$0xff]
        %v890 = vld [vmem:[%s412 + $0xe0] sm:$0xff]
        %v891 = vld [vmem:[%s412 + $0xe8] sm:$0xff]
        %v892 = vld [vmem:[%s412 + $0xf0] sm:$0xff]
        %v893 = vld [vmem:[%s412 + $0xf8] sm:$0xff]
        %v926 = vunpack.c.l.b16 %v862
        %v927 = vunpack.c.h.b16 %v862
        %v928 = vunpack.c.l.b16 %v863
        %v929 = vunpack.c.h.b16 %v863
        %v930 = vunpack.c.l.b16 %v864
        %v931 = vunpack.c.h.b16 %v864
        %v932 = vunpack.c.l.b16 %v865
        %v933 = vunpack.c.h.b16 %v865
        %v934 = vunpack.c.l.b16 %v866
        %v935 = vunpack.c.h.b16 %v866
        %v936 = vunpack.c.l.b16 %v867
        %v937 = vunpack.c.h.b16 %v867
        %v938 = vunpack.c.l.b16 %v868
        %v939 = vunpack.c.h.b16 %v868
        %v940 = vunpack.c.l.b16 %v869
        %v941 = vunpack.c.h.b16 %v869
        %v942 = vunpack.c.l.b16 %v870
        %v943 = vunpack.c.h.b16 %v870
        %v944 = vunpack.c.l.b16 %v871
        %v945 = vunpack.c.h.b16 %v871
        %v946 = vunpack.c.l.b16 %v872
        %v947 = vunpack.c.h.b16 %v872
        %v948 = vunpack.c.l.b16 %v873
        %v949 = vunpack.c.h.b16 %v873
        %v950 = vunpack.c.l.b16 %v874
        %v951 = vunpack.c.h.b16 %v874
        %v952 = vunpack.c.l.b16 %v875
        %v953 = vunpack.c.h.b16 %v875
        %v954 = vunpack.c.l.b16 %v876
        %v955 = vunpack.c.h.b16 %v876
        %v956 = vunpack.c.l.b16 %v877
        %v957 = vunpack.c.h.b16 %v877
        %v958 = vunpack.c.l.b16 %v878
        %v959 = vunpack.c.h.b16 %v878
        %v960 = vunpack.c.l.b16 %v879
        %v961 = vunpack.c.h.b16 %v879
        %v962 = vunpack.c.l.b16 %v880
        %v963 = vunpack.c.h.b16 %v880
        %v964 = vunpack.c.l.b16 %v881
        %v965 = vunpack.c.h.b16 %v881
        %v966 = vunpack.c.l.b16 %v882
        %v967 = vunpack.c.h.b16 %v882
        %v968 = vunpack.c.l.b16 %v883
        %v969 = vunpack.c.h.b16 %v883
        %v970 = vunpack.c.l.b16 %v884
        %v971 = vunpack.c.h.b16 %v884
        %v972 = vunpack.c.l.b16 %v885
        %v973 = vunpack.c.h.b16 %v885
        %v974 = vunpack.c.l.b16 %v886
        %v975 = vunpack.c.h.b16 %v886
        %v976 = vunpack.c.l.b16 %v887
        %v977 = vunpack.c.h.b16 %v887
        %v978 = vunpack.c.l.b16 %v888
        %v979 = vunpack.c.h.b16 %v888
        %v980 = vunpack.c.l.b16 %v889
        %v981 = vunpack.c.h.b16 %v889
        %v982 = vunpack.c.l.b16 %v890
        %v983 = vunpack.c.h.b16 %v890
        %v984 = vunpack.c.l.b16 %v891
        %v985 = vunpack.c.h.b16 %v891
        %v986 = vunpack.c.l.b16 %v892
        %v987 = vunpack.c.h.b16 %v892
        %v988 = vunpack.c.l.b16 %v893
        %v989 = vunpack.c.h.b16 %v893
        %v990 = vpack.c.b16 %v934, %v926
        %v991 = vpack.c.b16 %v935, %v927
        %v992 = vpack.c.b16 %v936, %v928
        %v993 = vpack.c.b16 %v937, %v929
        %v994 = vpack.c.b16 %v938, %v930
        %v995 = vpack.c.b16 %v939, %v931
        %v996 = vpack.c.b16 %v940, %v932
        %v997 = vpack.c.b16 %v941, %v933
        %v998 = vpack.c.b16 %v950, %v942
        %v999 = vpack.c.b16 %v951, %v943
        %v1000 = vpack.c.b16 %v952, %v944
        %v1001 = vpack.c.b16 %v953, %v945
        %v1002 = vpack.c.b16 %v954, %v946
        %v1003 = vpack.c.b16 %v955, %v947
        %v1004 = vpack.c.b16 %v956, %v948
        %v1005 = vpack.c.b16 %v957, %v949
        %v1006 = vpack.c.b16 %v966, %v958
        %v1007 = vpack.c.b16 %v967, %v959
        %v1008 = vpack.c.b16 %v968, %v960
        %v1009 = vpack.c.b16 %v969, %v961
        %v1010 = vpack.c.b16 %v970, %v962
        %v1011 = vpack.c.b16 %v971, %v963
        %v1012 = vpack.c.b16 %v972, %v964
        %v1013 = vpack.c.b16 %v973, %v965
        %v1014 = vpack.c.b16 %v982, %v974
        %v1015 = vpack.c.b16 %v983, %v975
        %v1016 = vpack.c.b16 %v984, %v976
        %v1017 = vpack.c.b16 %v985, %v977
        %v1018 = vpack.c.b16 %v986, %v978
        %v1019 = vpack.c.b16 %v987, %v979
        %v1020 = vpack.c.b16 %v988, %v980
        %v1021 = vpack.c.b16 %v989, %v981
        %v1055 = vsel %vm770, %v845, 0
        %1057 = vmatpush.bf16.msra.mxu0 0
        %1058 = vmatpush.bf16.msra.mxu0 0
        %1059 = vmatpush.bf16.msra.mxu0 0
        %1060 = vmatpush.bf16.msra.mxu0 0
        %1061 = vmatpush.bf16.msra.mxu0 %v1014
        %1062 = vmatpush.bf16.msra.mxu0 %v1006
        %1063 = vmatpush.bf16.msra.mxu0 %v998
        %1064 = vmatpush.bf16.msra.mxu0 %v990
        %1065 = vmatmul.bf16.gmra.mxu0 %v1055
        %v1066 = vpop.f32.mrf.mxu0
        %v1067 = vadd.f32 0.0, %v1066
        %v1068 = vpop.f32.mrf.mxu0
        %v1069 = vadd.f32 0.0, %v1068
        %1070 = vdwg.mxu0
        %1071 = vmatpush.bf16.msra.mxu0 0
        %1072 = vmatpush.bf16.msra.mxu0 0
        %1073 = vmatpush.bf16.msra.mxu0 0
        %1074 = vmatpush.bf16.msra.mxu0 0
        %1075 = vmatpush.bf16.msra.mxu0 %v1015
        %1076 = vmatpush.bf16.msra.mxu0 %v1007
        %1077 = vmatpush.bf16.msra.mxu0 %v999
        %1078 = vmatpush.bf16.msra.mxu0 %v991
        %1079 = vmatmul.bf16.gmra.mxu0 %v1055
        %v1080 = vpop.f32.mrf.mxu0
        %v1081 = vadd.f32 0.0, %v1080
        %v1082 = vpop.f32.mrf.mxu0
        %v1083 = vadd.f32 0.0, %v1082
        %1084 = vdwg.mxu0
        %1085 = vmatpush.bf16.msra.mxu0 0
        %1086 = vmatpush.bf16.msra.mxu0 0
        %1087 = vmatpush.bf16.msra.mxu0 0
        %1088 = vmatpush.bf16.msra.mxu0 0
        %1089 = vmatpush.bf16.msra.mxu0 %v1016
        %1090 = vmatpush.bf16.msra.mxu0 %v1008
        %1091 = vmatpush.bf16.msra.mxu0 %v1000
        %1092 = vmatpush.bf16.msra.mxu0 %v992
        %1093 = vmatmul.bf16.gmra.mxu0 %v1055
        %v1094 = vpop.f32.mrf.mxu0
        %v1095 = vadd.f32 0.0, %v1094
        %v1096 = vpop.f32.mrf.mxu0
        %v1097 = vadd.f32 0.0, %v1096
        %1098 = vdwg.mxu0
        %1099 = vmatpush.bf16.msra.mxu0 0
        %1100 = vmatpush.bf16.msra.mxu0 0
        %1101 = vmatpush.bf16.msra.mxu0 0
        %1102 = vmatpush.bf16.msra.mxu0 0
        %1103 = vmatpush.bf16.msra.mxu0 %v1017
        %1104 = vmatpush.bf16.msra.mxu0 %v1009
        %1105 = vmatpush.bf16.msra.mxu0 %v1001
        %1106 = vmatpush.bf16.msra.mxu0 %v993
        %1107 = vmatmul.bf16.gmra.mxu0 %v1055
        %v1108 = vpop.f32.mrf.mxu0
        %v1109 = vadd.f32 0.0, %v1108
        %v1110 = vpop.f32.mrf.mxu0
        %v1111 = vadd.f32 0.0, %v1110
        %1112 = vdwg.mxu0
        %1113 = vmatpush.bf16.msra.mxu0 0
        %1114 = vmatpush.bf16.msra.mxu0 0
        %1115 = vmatpush.bf16.msra.mxu0 0
        %1116 = vmatpush.bf16.msra.mxu0 0
        %1117 = vmatpush.bf16.msra.mxu0 %v1018
        %1118 = vmatpush.bf16.msra.mxu0 %v1010
        %1119 = vmatpush.bf16.msra.mxu0 %v1002
        %1120 = vmatpush.bf16.msra.mxu0 %v994
        %1121 = vmatmul.bf16.gmra.mxu0 %v1055
        %v1122 = vpop.f32.mrf.mxu0
        %v1123 = vadd.f32 0.0, %v1122
        %v1124 = vpop.f32.mrf.mxu0
        %v1125 = vadd.f32 0.0, %v1124
        %1126 = vdwg.mxu0
        %1127 = vmatpush.bf16.msra.mxu0 0
        %1128 = vmatpush.bf16.msra.mxu0 0
        %1129 = vmatpush.bf16.msra.mxu0 0
        %1130 = vmatpush.bf16.msra.mxu0 0
        %1131 = vmatpush.bf16.msra.mxu0 %v1019
        %1132 = vmatpush.bf16.msra.mxu0 %v1011
        %1133 = vmatpush.bf16.msra.mxu0 %v1003
        %1134 = vmatpush.bf16.msra.mxu0 %v995
        %1135 = vmatmul.bf16.gmra.mxu0 %v1055
        %v1136 = vpop.f32.mrf.mxu0
        %v1137 = vadd.f32 0.0, %v1136
        %v1138 = vpop.f32.mrf.mxu0
        %v1139 = vadd.f32 0.0, %v1138
        %1140 = vdwg.mxu0
        %1141 = vmatpush.bf16.msra.mxu0 0
        %1142 = vmatpush.bf16.msra.mxu0 0
        %1143 = vmatpush.bf16.msra.mxu0 0
        %1144 = vmatpush.bf16.msra.mxu0 0
        %1145 = vmatpush.bf16.msra.mxu0 %v1020
        %1146 = vmatpush.bf16.msra.mxu0 %v1012
        %1147 = vmatpush.bf16.msra.mxu0 %v1004
        %1148 = vmatpush.bf16.msra.mxu0 %v996
        %1149 = vmatmul.bf16.gmra.mxu0 %v1055
        %v1150 = vpop.f32.mrf.mxu0
        %v1151 = vadd.f32 0.0, %v1150
        %v1152 = vpop.f32.mrf.mxu0
        %v1153 = vadd.f32 0.0, %v1152
        %1154 = vdwg.mxu0
        %1155 = vmatpush.bf16.msra.mxu0 0
        %1156 = vmatpush.bf16.msra.mxu0 0
        %1157 = vmatpush.bf16.msra.mxu0 0
        %1158 = vmatpush.bf16.msra.mxu0 0
        %1159 = vmatpush.bf16.msra.mxu0 %v1021
        %1160 = vmatpush.bf16.msra.mxu0 %v1013
        %1161 = vmatpush.bf16.msra.mxu0 %v1005
        %1162 = vmatpush.bf16.msra.mxu0 %v997
        %1163 = vmatmul.bf16.gmra.mxu0 %v1055
        %v1164 = vpop.f32.mrf.mxu0
        %v1165 = vadd.f32 0.0, %v1164
        %v1166 = vpop.f32.mrf.mxu0
        %v1167 = vadd.f32 0.0, %v1166
        %1168 = vdwg.mxu0
        %v1169 = vadd.f32 %v846, %v1067
        %v1170 = vadd.f32 %v847, %v1081
        %v1171 = vadd.f32 %v848, %v1095
        %v1172 = vadd.f32 %v849, %v1109
        %v1173 = vadd.f32 %v850, %v1123
        %v1174 = vadd.f32 %v851, %v1137
        %v1175 = vadd.f32 %v852, %v1151
        %v1176 = vadd.f32 %v853, %v1165
        %v1177 = vadd.f32 %v854, %v1069
        %v1178 = vadd.f32 %v855, %v1083
        %v1179 = vadd.f32 %v856, %v1097
        %v1180 = vadd.f32 %v857, %v1111
        %v1181 = vadd.f32 %v858, %v1125
        %v1182 = vadd.f32 %v859, %v1139
        %v1183 = vadd.f32 %v860, %v1153
        %v1184 = vadd.f32 %v861, %v1167
        %1185 = vst [vmem:[#allocation2] sm:$0xff] %v1169
        %1186 = vst [vmem:[#allocation2 + $0x8] sm:$0xff] %v1170
        %1187 = vst [vmem:[#allocation2 + $0x10] sm:$0xff] %v1171
        %1188 = vst [vmem:[#allocation2 + $0x18] sm:$0xff] %v1172
        %1189 = vst [vmem:[#allocation2 + $0x20] sm:$0xff] %v1173
        %1190 = vst [vmem:[#allocation2 + $0x28] sm:$0xff] %v1174
        %1191 = vst [vmem:[#allocation2 + $0x30] sm:$0xff] %v1175
        %1192 = vst [vmem:[#allocation2 + $0x38] sm:$0xff] %v1176
        %1193 = vst [vmem:[#allocation2 + $0x40] sm:$0xff] %v1177
        %1194 = vst [vmem:[#allocation2 + $0x48] sm:$0xff] %v1178
        %1195 = vst [vmem:[#allocation2 + $0x50] sm:$0xff] %v1179
        %1196 = vst [vmem:[#allocation2 + $0x58] sm:$0xff] %v1180
        %1197 = vst [vmem:[#allocation2 + $0x60] sm:$0xff] %v1181
        %1198 = vst [vmem:[#allocation2 + $0x68] sm:$0xff] %v1182
        %1199 = vst [vmem:[#allocation2 + $0x70] sm:$0xff] %v1183
        %1200 = vst [vmem:[#allocation2 + $0x78] sm:$0xff] %v1184
        %s1201 = scalar_lea.vmem %s372, 40 [#allocation3]
        %v1202 = vld [vmem:[%s1201] sm:$0x1f]
        %v1203 = vld [vmem:[%s1201 + $0x5] sm:$0x1f]
        %v1204 = vld [vmem:[%s1201 + $0xa] sm:$0x1f]
        %v1205 = vld [vmem:[%s1201 + $0xf] sm:$0x1f]
        %v1206 = vld [vmem:[%s1201 + $0x14] sm:$0x1f]
        %v1207 = vld [vmem:[%s1201 + $0x19] sm:$0x1f]
        %v1208 = vld [vmem:[%s1201 + $0x1e] sm:$0x1f]
        %v1209 = vld [vmem:[%s1201 + $0x23] sm:$0x1f]
        %v1210 = vld [vmem:[%s1] sm:$0xf]
        %v1211 = vld [vmem:[%s1 + $0x4] sm:$0xf]
        %v1212 = vld [vmem:[%s1 + $0x8] sm:$0xf]
        %v1213 = vld [vmem:[%s1 + $0xc] sm:$0xf]
        %v1214 = vld [vmem:[%s1 + $0x10] sm:$0xf]
        %v1215 = vld [vmem:[%s1 + $0x14] sm:$0xf]
        %v1216 = vld [vmem:[%s1 + $0x18] sm:$0xf]
        %v1217 = vld [vmem:[%s1 + $0x1c] sm:$0xf]
        %v1218 = vld [vmem:[%s1 + $0x20] sm:$0xf]
        %v1219 = vld [vmem:[%s1 + $0x24] sm:$0xf]
        %v1220 = vld [vmem:[%s1 + $0x28] sm:$0xf]
        %v1221 = vld [vmem:[%s1 + $0x2c] sm:$0xf]
        %v1222 = vld [vmem:[%s1 + $0x30] sm:$0xf]
        %v1223 = vld [vmem:[%s1 + $0x34] sm:$0xf]
        %v1224 = vld [vmem:[%s1 + $0x38] sm:$0xf]
        %v1225 = vld [vmem:[%s1 + $0x3c] sm:$0xf]
        %v1226 = vld [vmem:[%s1 + $0x40] sm:$0xf]
        %v1227 = vld [vmem:[%s1 + $0x44] sm:$0xf]
        %v1228 = vld [vmem:[%s1 + $0x48] sm:$0xf]
        %v1229 = vld [vmem:[%s1 + $0x4c] sm:$0xf]
        %v1230 = vld [vmem:[%s1 + $0x50] sm:$0xf]
        %v1231 = vld [vmem:[%s1 + $0x54] sm:$0xf]
        %v1232 = vld [vmem:[%s1 + $0x58] sm:$0xf]
        %v1233 = vld [vmem:[%s1 + $0x5c] sm:$0xf]
        %v1234 = vld [vmem:[%s1 + $0x60] sm:$0xf]
        %v1235 = vld [vmem:[%s1 + $0x64] sm:$0xf]
        %v1236 = vld [vmem:[%s1 + $0x68] sm:$0xf]
        %v1237 = vld [vmem:[%s1 + $0x6c] sm:$0xf]
        %v1238 = vld [vmem:[%s1 + $0x70] sm:$0xf]
        %v1239 = vld [vmem:[%s1 + $0x74] sm:$0xf]
        %v1240 = vld [vmem:[%s1 + $0x78] sm:$0xf]
        %v1241 = vld [vmem:[%s1 + $0x7c] sm:$0xf]
        %v1242 = vld [vmem:[%s1 + $0x80] sm:$0xf]
        %v1243 = vld [vmem:[%s1 + $0x84] sm:$0xf]
        %v1244 = vld [vmem:[%s1 + $0x88] sm:$0xf]
        %v1245 = vld [vmem:[%s1 + $0x8c] sm:$0xf]
        %v1246 = vld [vmem:[%s1 + $0x90] sm:$0xf]
        %v1247 = vld [vmem:[%s1 + $0x94] sm:$0xf]
        %v1248 = vld [vmem:[%s1 + $0x98] sm:$0xf]
        %v1249 = vld [vmem:[%s1 + $0x9c] sm:$0xf]
        %v1250 = vld [vmem:[%s1 + $0xa0] sm:$0xf]
        %v1251 = vld [vmem:[%s1 + $0xa4] sm:$0xf]
        %v1252 = vld [vmem:[%s1 + $0xa8] sm:$0xf]
        %v1253 = vld [vmem:[%s1 + $0xac] sm:$0xf]
        %v1254 = vld [vmem:[%s1 + $0xb0] sm:$0xf]
        %v1255 = vld [vmem:[%s1 + $0xb4] sm:$0xf]
        %v1256 = vld [vmem:[%s1 + $0xb8] sm:$0xf]
        %v1257 = vld [vmem:[%s1 + $0xbc] sm:$0xf]
        %v1258 = vld [vmem:[%s1 + $0xc0] sm:$0xf]
        %v1259 = vld [vmem:[%s1 + $0xc4] sm:$0xf]
        %v1260 = vld [vmem:[%s1 + $0xc8] sm:$0xf]
        %v1261 = vld [vmem:[%s1 + $0xcc] sm:$0xf]
        %v1262 = vld [vmem:[%s1 + $0xd0] sm:$0xf]
        %v1263 = vld [vmem:[%s1 + $0xd4] sm:$0xf]
        %v1264 = vld [vmem:[%s1 + $0xd8] sm:$0xf]
        %v1265 = vld [vmem:[%s1 + $0xdc] sm:$0xf]
        %v1266 = vld [vmem:[%s1 + $0xe0] sm:$0xf]
        %v1267 = vld [vmem:[%s1 + $0xe4] sm:$0xf]
        %v1268 = vld [vmem:[%s1 + $0xe8] sm:$0xf]
        %v1269 = vld [vmem:[%s1 + $0xec] sm:$0xf]
        %v1270 = vld [vmem:[%s1 + $0xf0] sm:$0xf]
        %v1271 = vld [vmem:[%s1 + $0xf4] sm:$0xf]
        %v1272 = vld [vmem:[%s1 + $0xf8] sm:$0xf]
        %v1273 = vld [vmem:[%s1 + $0xfc] sm:$0xf]
        %v1274 = vld [vmem:[%s1 + $0x100] sm:$0xf]
        %v1275 = vld [vmem:[%s1 + $0x104] sm:$0xf]
        %v1276 = vld [vmem:[%s1 + $0x108] sm:$0xf]
        %v1277 = vld [vmem:[%s1 + $0x10c] sm:$0xf]
        %v1278 = vld [vmem:[%s1 + $0x110] sm:$0xf]
        %v1279 = vld [vmem:[%s1 + $0x114] sm:$0xf]
        %v1280 = vld [vmem:[%s1 + $0x118] sm:$0xf]
        %v1281 = vld [vmem:[%s1 + $0x11c] sm:$0xf]
        %v1282 = vld [vmem:[%s2] sm:$0x1]
        %v1284 = vperm.slane %v1282, 0
        %1287 = vst [vmem:[#allocation1] ss:$9 sm:$0xff] %v1202
        %s1289 = scalar_lea.vmem [#allocation1], 1
        %1290 = vst [vmem:[%s1289] ss:$9 sm:$0xff] %v1203
        %s1292 = scalar_lea.vmem [#allocation1], 2
        %1293 = vst [vmem:[%s1292] ss:$9 sm:$0xff] %v1204
        %s1295 = scalar_lea.vmem [#allocation1], 3
        %1296 = vst [vmem:[%s1295] ss:$9 sm:$0xff] %v1205
        %s1298 = scalar_lea.vmem [#allocation1], 4
        %1299 = vst [vmem:[%s1298] ss:$9 sm:$0xff] %v1206
        %s1301 = scalar_lea.vmem [#allocation1], 5
        %1302 = vst [vmem:[%s1301] ss:$9 sm:$0xff] %v1207
        %s1304 = scalar_lea.vmem [#allocation1], 6
        %1305 = vst [vmem:[%s1304] ss:$9 sm:$0xff] %v1208
        %s1307 = scalar_lea.vmem [#allocation1], 7
        %1308 = vst [vmem:[%s1307] ss:$9 sm:$0xff] %v1209
        %v1309 = vld [vmem:[#allocation1] sm:$0xff]
        %v1310 = vld [vmem:[#allocation1 + $0x9] sm:$0xff]
        %v1311 = vld [vmem:[#allocation1 + $0x12] sm:$0xff]
        %v1312 = vld [vmem:[#allocation1 + $0x1b] sm:$0xff]
        %v1313 = vld [vmem:[#allocation1 + $0x24] sm:$0xff]
        %v1390 = vunpack.c.l.b16 %v1210
        %v1391 = vunpack.c.l.b16 %v1211
        %v1392 = vunpack.c.l.b16 %v1212
        %v1393 = vunpack.c.l.b16 %v1213
        %v1394 = vunpack.c.l.b16 %v1214
        %v1395 = vunpack.c.l.b16 %v1215
        %v1396 = vunpack.c.l.b16 %v1216
        %v1397 = vunpack.c.l.b16 %v1217
        %v1398 = vunpack.c.l.b16 %v1218
        %v1399 = vunpack.c.l.b16 %v1219
        %v1400 = vunpack.c.l.b16 %v1220
        %v1401 = vunpack.c.l.b16 %v1221
        %v1402 = vunpack.c.l.b16 %v1222
        %v1403 = vunpack.c.l.b16 %v1223
        %v1404 = vunpack.c.l.b16 %v1224
        %v1405 = vunpack.c.l.b16 %v1225
        %v1406 = vunpack.c.l.b16 %v1226
        %v1407 = vunpack.c.l.b16 %v1227
        %v1408 = vunpack.c.l.b16 %v1228
        %v1409 = vunpack.c.l.b16 %v1229
        %v1410 = vunpack.c.l.b16 %v1230
        %v1411 = vunpack.c.l.b16 %v1231
        %v1412 = vunpack.c.l.b16 %v1232
        %v1413 = vunpack.c.l.b16 %v1233
        %v1414 = vunpack.c.l.b16 %v1234
        %v1415 = vunpack.c.l.b16 %v1235
        %v1416 = vunpack.c.l.b16 %v1236
        %v1417 = vunpack.c.l.b16 %v1237
        %v1418 = vunpack.c.l.b16 %v1238
        %v1419 = vunpack.c.l.b16 %v1239
        %v1420 = vunpack.c.l.b16 %v1240
        %v1421 = vunpack.c.l.b16 %v1241
        %v1422 = vunpack.c.l.b16 %v1242
        %v1423 = vunpack.c.l.b16 %v1243
        %v1424 = vunpack.c.l.b16 %v1244
        %v1425 = vunpack.c.l.b16 %v1245
        %v1426 = vunpack.c.l.b16 %v1246
        %v1427 = vunpack.c.l.b16 %v1247
        %v1428 = vunpack.c.l.b16 %v1248
        %v1429 = vunpack.c.l.b16 %v1249
        %v1430 = vunpack.c.l.b16 %v1250
        %v1431 = vunpack.c.l.b16 %v1251
        %v1432 = vunpack.c.l.b16 %v1252
        %v1433 = vunpack.c.l.b16 %v1253
        %v1434 = vunpack.c.l.b16 %v1254
        %v1435 = vunpack.c.l.b16 %v1255
        %v1436 = vunpack.c.l.b16 %v1256
        %v1437 = vunpack.c.l.b16 %v1257
        %v1438 = vunpack.c.l.b16 %v1258
        %v1439 = vunpack.c.l.b16 %v1259
        %v1440 = vunpack.c.l.b16 %v1260
        %v1441 = vunpack.c.l.b16 %v1261
        %v1442 = vunpack.c.l.b16 %v1262
        %v1443 = vunpack.c.l.b16 %v1263
        %v1444 = vunpack.c.l.b16 %v1264
        %v1445 = vunpack.c.l.b16 %v1265
        %v1446 = vunpack.c.l.b16 %v1266
        %v1447 = vunpack.c.l.b16 %v1267
        %v1448 = vunpack.c.l.b16 %v1268
        %v1449 = vunpack.c.l.b16 %v1269
        %v1450 = vunpack.c.l.b16 %v1270
        %v1451 = vunpack.c.l.b16 %v1271
        %v1452 = vunpack.c.l.b16 %v1272
        %v1453 = vunpack.c.l.b16 %v1273
        %v1454 = vunpack.c.l.b16 %v1274
        %v1455 = vunpack.c.l.b16 %v1275
        %v1456 = vunpack.c.l.b16 %v1276
        %v1457 = vunpack.c.l.b16 %v1277
        %v1458 = vunpack.c.l.b16 %v1278
        %v1459 = vunpack.c.l.b16 %v1279
        %v1460 = vunpack.c.l.b16 %v1280
        %v1461 = vunpack.c.l.b16 %v1281
        %v1462 = vpack.c.b16 %v1391, %v1390
        %v1463 = vpack.c.b16 %v1393, %v1392
        %v1464 = vpack.c.b16 %v1395, %v1394
        %v1465 = vpack.c.b16 %v1397, %v1396
        %v1466 = vpack.c.b16 %v1399, %v1398
        %v1467 = vpack.c.b16 %v1401, %v1400
        %v1468 = vpack.c.b16 %v1403, %v1402
        %v1469 = vpack.c.b16 %v1405, %v1404
        %v1470 = vpack.c.b16 %v1407, %v1406
        %v1471 = vpack.c.b16 %v1409, %v1408
        %v1472 = vpack.c.b16 %v1411, %v1410
        %v1473 = vpack.c.b16 %v1413, %v1412
        %v1474 = vpack.c.b16 %v1415, %v1414
        %v1475 = vpack.c.b16 %v1417, %v1416
        %v1476 = vpack.c.b16 %v1419, %v1418
        %v1477 = vpack.c.b16 %v1421, %v1420
        %v1478 = vpack.c.b16 %v1423, %v1422
        %v1479 = vpack.c.b16 %v1425, %v1424
        %v1480 = vpack.c.b16 %v1427, %v1426
        %v1481 = vpack.c.b16 %v1429, %v1428
        %v1482 = vpack.c.b16 %v1431, %v1430
        %v1483 = vpack.c.b16 %v1433, %v1432
        %v1484 = vpack.c.b16 %v1435, %v1434
        %v1485 = vpack.c.b16 %v1437, %v1436
        %v1486 = vpack.c.b16 %v1439, %v1438
        %v1487 = vpack.c.b16 %v1441, %v1440
        %v1488 = vpack.c.b16 %v1443, %v1442
        %v1489 = vpack.c.b16 %v1445, %v1444
        %v1490 = vpack.c.b16 %v1447, %v1446
        %v1491 = vpack.c.b16 %v1449, %v1448
        %v1492 = vpack.c.b16 %v1451, %v1450
        %v1493 = vpack.c.b16 %v1453, %v1452
        %v1494 = vpack.c.b16 %v1455, %v1454
        %v1495 = vpack.c.b16 %v1457, %v1456
        %v1496 = vpack.c.b16 %v1459, %v1458
        %v1497 = vpack.c.b16 %v1461, %v1460
        %v1534 = vsel %vm770, %v1313, 0
        %1536 = vmatpush.bf16.msra.mxu0 %v1469
        %1537 = vmatpush.bf16.msra.mxu0 %v1468
        %1538 = vmatpush.bf16.msra.mxu0 %v1467
        %1539 = vmatpush.bf16.msra.mxu0 %v1466
        %1540 = vmatpush.bf16.msra.mxu0 %v1465
        %1541 = vmatpush.bf16.msra.mxu0 %v1464
        %1542 = vmatpush.bf16.msra.mxu0 %v1463
        %1543 = vmatpush.bf16.msra.mxu0 %v1462
        %1544 = vmatmul.bf16.gmra.mxu0 %v1309
        %v1545 = vpop.f32.mrf.mxu0
        %v1546 = vadd.f32 %v1284, %v1545
        %v1547 = vpop.f32.mrf.mxu0
        %v1548 = vadd.f32 %v1284, %v1547
        %1549 = vdwg.mxu0
        %1550 = vmatpush.bf16.msra.mxu0 %v1477
        %1551 = vmatpush.bf16.msra.mxu0 %v1476
        %1552 = vmatpush.bf16.msra.mxu0 %v1475
        %1553 = vmatpush.bf16.msra.mxu0 %v1474
        %1554 = vmatpush.bf16.msra.mxu0 %v1473
        %1555 = vmatpush.bf16.msra.mxu0 %v1472
        %1556 = vmatpush.bf16.msra.mxu0 %v1471
        %1557 = vmatpush.bf16.msra.mxu0 %v1470
        %1558 = vmatmul.bf16.gmra.mxu0 %v1310
        %v1559 = vpop.f32.mrf.mxu0
        %v1560 = vadd.f32 %v1546, %v1559
        %v1561 = vpop.f32.mrf.mxu0
        %v1562 = vadd.f32 %v1548, %v1561
        %1563 = vdwg.mxu0
        %1564 = vmatpush.bf16.msra.mxu0 %v1485
        %1565 = vmatpush.bf16.msra.mxu0 %v1484
        %1566 = vmatpush.bf16.msra.mxu0 %v1483
        %1567 = vmatpush.bf16.msra.mxu0 %v1482
        %1568 = vmatpush.bf16.msra.mxu0 %v1481
        %1569 = vmatpush.bf16.msra.mxu0 %v1480
        %1570 = vmatpush.bf16.msra.mxu0 %v1479
        %1571 = vmatpush.bf16.msra.mxu0 %v1478
        %1572 = vmatmul.bf16.gmra.mxu0 %v1311
        %v1573 = vpop.f32.mrf.mxu0
        %v1574 = vadd.f32 %v1560, %v1573
        %v1575 = vpop.f32.mrf.mxu0
        %v1576 = vadd.f32 %v1562, %v1575
        %1577 = vdwg.mxu0
        %1578 = vmatpush.bf16.msra.mxu0 %v1493
        %1579 = vmatpush.bf16.msra.mxu0 %v1492
        %1580 = vmatpush.bf16.msra.mxu0 %v1491
        %1581 = vmatpush.bf16.msra.mxu0 %v1490
        %1582 = vmatpush.bf16.msra.mxu0 %v1489
        %1583 = vmatpush.bf16.msra.mxu0 %v1488
        %1584 = vmatpush.bf16.msra.mxu0 %v1487
        %1585 = vmatpush.bf16.msra.mxu0 %v1486
        %1586 = vmatmul.bf16.gmra.mxu0 %v1312
        %v1587 = vpop.f32.mrf.mxu0
        %v1588 = vadd.f32 %v1574, %v1587
        %v1589 = vpop.f32.mrf.mxu0
        %v1590 = vadd.f32 %v1576, %v1589
        %1591 = vdwg.mxu0
        %1592 = vmatpush.bf16.msra.mxu0 0
        %1593 = vmatpush.bf16.msra.mxu0 0
        %1594 = vmatpush.bf16.msra.mxu0 0
        %1595 = vmatpush.bf16.msra.mxu0 0
        %1596 = vmatpush.bf16.msra.mxu0 %v1497
        %1597 = vmatpush.bf16.msra.mxu0 %v1496
        %1598 = vmatpush.bf16.msra.mxu0 %v1495
        %1599 = vmatpush.bf16.msra.mxu0 %v1494
        %1600 = vmatmul.bf16.gmra.mxu0 %v1534
        %v1601 = vpop.f32.mrf.mxu0
        %v1602 = vadd.f32 %v1588, %v1601
        %v1603 = vpop.f32.mrf.mxu0
        %v1604 = vadd.f32 %v1590, %v1603
        %1605 = vdwg.mxu0
        %v1606 = vmax.f32 %v1602, 0.0
        %v1607 = vmax.f32 %v1604, 0.0
        %v1608 = vpack.c.bf16 %v1607, %v1606
        %v1609 = vld [vmem:[#allocation2] sm:$0xff]
        %v1610 = vld [vmem:[#allocation2 + $0x8] sm:$0xff]
        %v1611 = vld [vmem:[#allocation2 + $0x10] sm:$0xff]
        %v1612 = vld [vmem:[#allocation2 + $0x18] sm:$0xff]
        %v1613 = vld [vmem:[#allocation2 + $0x20] sm:$0xff]
        %v1614 = vld [vmem:[#allocation2 + $0x28] sm:$0xff]
        %v1615 = vld [vmem:[#allocation2 + $0x30] sm:$0xff]
        %v1616 = vld [vmem:[#allocation2 + $0x38] sm:$0xff]
        %v1617 = vld [vmem:[#allocation2 + $0x40] sm:$0xff]
        %v1618 = vld [vmem:[#allocation2 + $0x48] sm:$0xff]
        %v1619 = vld [vmem:[#allocation2 + $0x50] sm:$0xff]
        %v1620 = vld [vmem:[#allocation2 + $0x58] sm:$0xff]
        %v1621 = vld [vmem:[#allocation2 + $0x60] sm:$0xff]
        %v1622 = vld [vmem:[#allocation2 + $0x68] sm:$0xff]
        %v1623 = vld [vmem:[#allocation2 + $0x70] sm:$0xff]
        %v1624 = vld [vmem:[#allocation2 + $0x78] sm:$0xff]
        %s1625 = scalar_lea.vmem %s412, 256
        %v1626 = vld [vmem:[%s1625] sm:$0xff]
        %v1627 = vld [vmem:[%s1625 + $0x8] sm:$0xff]
        %v1628 = vld [vmem:[%s1625 + $0x10] sm:$0xff]
        %v1629 = vld [vmem:[%s1625 + $0x18] sm:$0xff]
        %v1630 = vld [vmem:[%s1625 + $0x20] sm:$0xff]
        %v1631 = vld [vmem:[%s1625 + $0x28] sm:$0xff]
        %v1632 = vld [vmem:[%s1625 + $0x30] sm:$0xff]
        %v1633 = vld [vmem:[%s1625 + $0x38] sm:$0xff]
        %v1634 = vld [vmem:[%s1625 + $0x40] sm:$0xff]
        %v1635 = vld [vmem:[%s1625 + $0x48] sm:$0xff]
        %v1636 = vld [vmem:[%s1625 + $0x50] sm:$0xff]
        %v1637 = vld [vmem:[%s1625 + $0x58] sm:$0xff]
        %v1638 = vld [vmem:[%s1625 + $0x60] sm:$0xff]
        %v1639 = vld [vmem:[%s1625 + $0x68] sm:$0xff]
        %v1640 = vld [vmem:[%s1625 + $0x70] sm:$0xff]
        %v1641 = vld [vmem:[%s1625 + $0x78] sm:$0xff]
        %v1642 = vld [vmem:[%s1625 + $0x80] sm:$0xff]
        %v1643 = vld [vmem:[%s1625 + $0x88] sm:$0xff]
        %v1644 = vld [vmem:[%s1625 + $0x90] sm:$0xff]
        %v1645 = vld [vmem:[%s1625 + $0x98] sm:$0xff]
        %v1646 = vld [vmem:[%s1625 + $0xa0] sm:$0xff]
        %v1647 = vld [vmem:[%s1625 + $0xa8] sm:$0xff]
        %v1648 = vld [vmem:[%s1625 + $0xb0] sm:$0xff]
        %v1649 = vld [vmem:[%s1625 + $0xb8] sm:$0xff]
        %v1650 = vld [vmem:[%s1625 + $0xc0] sm:$0xff]
        %v1651 = vld [vmem:[%s1625 + $0xc8] sm:$0xff]
        %v1652 = vld [vmem:[%s1625 + $0xd0] sm:$0xff]
        %v1653 = vld [vmem:[%s1625 + $0xd8] sm:$0xff]
        %v1654 = vld [vmem:[%s1625 + $0xe0] sm:$0xff]
        %v1655 = vld [vmem:[%s1625 + $0xe8] sm:$0xff]
        %v1656 = vld [vmem:[%s1625 + $0xf0] sm:$0xff]
        %v1657 = vld [vmem:[%s1625 + $0xf8] sm:$0xff]
        %v1690 = vunpack.c.l.b16 %v1626
        %v1691 = vunpack.c.h.b16 %v1626
        %v1692 = vunpack.c.l.b16 %v1627
        %v1693 = vunpack.c.h.b16 %v1627
        %v1694 = vunpack.c.l.b16 %v1628
        %v1695 = vunpack.c.h.b16 %v1628
        %v1696 = vunpack.c.l.b16 %v1629
        %v1697 = vunpack.c.h.b16 %v1629
        %v1698 = vunpack.c.l.b16 %v1630
        %v1699 = vunpack.c.h.b16 %v1630
        %v1700 = vunpack.c.l.b16 %v1631
        %v1701 = vunpack.c.h.b16 %v1631
        %v1702 = vunpack.c.l.b16 %v1632
        %v1703 = vunpack.c.h.b16 %v1632
        %v1704 = vunpack.c.l.b16 %v1633
        %v1705 = vunpack.c.h.b16 %v1633
        %v1706 = vunpack.c.l.b16 %v1634
        %v1707 = vunpack.c.h.b16 %v1634
        %v1708 = vunpack.c.l.b16 %v1635
        %v1709 = vunpack.c.h.b16 %v1635
        %v1710 = vunpack.c.l.b16 %v1636
        %v1711 = vunpack.c.h.b16 %v1636
        %v1712 = vunpack.c.l.b16 %v1637
        %v1713 = vunpack.c.h.b16 %v1637
        %v1714 = vunpack.c.l.b16 %v1638
        %v1715 = vunpack.c.h.b16 %v1638
        %v1716 = vunpack.c.l.b16 %v1639
        %v1717 = vunpack.c.h.b16 %v1639
        %v1718 = vunpack.c.l.b16 %v1640
        %v1719 = vunpack.c.h.b16 %v1640
        %v1720 = vunpack.c.l.b16 %v1641
        %v1721 = vunpack.c.h.b16 %v1641
        %v1722 = vunpack.c.l.b16 %v1642
        %v1723 = vunpack.c.h.b16 %v1642
        %v1724 = vunpack.c.l.b16 %v1643
        %v1725 = vunpack.c.h.b16 %v1643
        %v1726 = vunpack.c.l.b16 %v1644
        %v1727 = vunpack.c.h.b16 %v1644
        %v1728 = vunpack.c.l.b16 %v1645
        %v1729 = vunpack.c.h.b16 %v1645
        %v1730 = vunpack.c.l.b16 %v1646
        %v1731 = vunpack.c.h.b16 %v1646
        %v1732 = vunpack.c.l.b16 %v1647
        %v1733 = vunpack.c.h.b16 %v1647
        %v1734 = vunpack.c.l.b16 %v1648
        %v1735 = vunpack.c.h.b16 %v1648
        %v1736 = vunpack.c.l.b16 %v1649
        %v1737 = vunpack.c.h.b16 %v1649
        %v1738 = vunpack.c.l.b16 %v1650
        %v1739 = vunpack.c.h.b16 %v1650
        %v1740 = vunpack.c.l.b16 %v1651
        %v1741 = vunpack.c.h.b16 %v1651
        %v1742 = vunpack.c.l.b16 %v1652
        %v1743 = vunpack.c.h.b16 %v1652
        %v1744 = vunpack.c.l.b16 %v1653
        %v1745 = vunpack.c.h.b16 %v1653
        %v1746 = vunpack.c.l.b16 %v1654
        %v1747 = vunpack.c.h.b16 %v1654
        %v1748 = vunpack.c.l.b16 %v1655
        %v1749 = vunpack.c.h.b16 %v1655
        %v1750 = vunpack.c.l.b16 %v1656
        %v1751 = vunpack.c.h.b16 %v1656
        %v1752 = vunpack.c.l.b16 %v1657
        %v1753 = vunpack.c.h.b16 %v1657
        %v1754 = vpack.c.b16 %v1698, %v1690
        %v1755 = vpack.c.b16 %v1699, %v1691
        %v1756 = vpack.c.b16 %v1700, %v1692
        %v1757 = vpack.c.b16 %v1701, %v1693
        %v1758 = vpack.c.b16 %v1702, %v1694
        %v1759 = vpack.c.b16 %v1703, %v1695
        %v1760 = vpack.c.b16 %v1704, %v1696
        %v1761 = vpack.c.b16 %v1705, %v1697
        %v1762 = vpack.c.b16 %v1714, %v1706
        %v1763 = vpack.c.b16 %v1715, %v1707
        %v1764 = vpack.c.b16 %v1716, %v1708
        %v1765 = vpack.c.b16 %v1717, %v1709
        %v1766 = vpack.c.b16 %v1718, %v1710
        %v1767 = vpack.c.b16 %v1719, %v1711
        %v1768 = vpack.c.b16 %v1720, %v1712
        %v1769 = vpack.c.b16 %v1721, %v1713
        %v1770 = vpack.c.b16 %v1730, %v1722
        %v1771 = vpack.c.b16 %v1731, %v1723
        %v1772 = vpack.c.b16 %v1732, %v1724
        %v1773 = vpack.c.b16 %v1733, %v1725
        %v1774 = vpack.c.b16 %v1734, %v1726
        %v1775 = vpack.c.b16 %v1735, %v1727
        %v1776 = vpack.c.b16 %v1736, %v1728
        %v1777 = vpack.c.b16 %v1737, %v1729
        %v1778 = vpack.c.b16 %v1746, %v1738
        %v1779 = vpack.c.b16 %v1747, %v1739
        %v1780 = vpack.c.b16 %v1748, %v1740
        %v1781 = vpack.c.b16 %v1749, %v1741
        %v1782 = vpack.c.b16 %v1750, %v1742
        %v1783 = vpack.c.b16 %v1751, %v1743
        %v1784 = vpack.c.b16 %v1752, %v1744
        %v1785 = vpack.c.b16 %v1753, %v1745
        %v1819 = vsel %vm770, %v1608, 0
        %1821 = vmatpush.bf16.msra.mxu0 0
        %1822 = vmatpush.bf16.msra.mxu0 0
        %1823 = vmatpush.bf16.msra.mxu0 0
        %1824 = vmatpush.bf16.msra.mxu0 0
        %1825 = vmatpush.bf16.msra.mxu0 %v1778
        %1826 = vmatpush.bf16.msra.mxu0 %v1770
        %1827 = vmatpush.bf16.msra.mxu0 %v1762
        %1828 = vmatpush.bf16.msra.mxu0 %v1754
        %1829 = vmatmul.bf16.gmra.mxu0 %v1819
        %v1830 = vpop.f32.mrf.mxu0
        %v1831 = vadd.f32 0.0, %v1830
        %v1832 = vpop.f32.mrf.mxu0
        %v1833 = vadd.f32 0.0, %v1832
        %1834 = vdwg.mxu0
        %1835 = vmatpush.bf16.msra.mxu0 0
        %1836 = vmatpush.bf16.msra.mxu0 0
        %1837 = vmatpush.bf16.msra.mxu0 0
        %1838 = vmatpush.bf16.msra.mxu0 0
        %1839 = vmatpush.bf16.msra.mxu0 %v1779
        %1840 = vmatpush.bf16.msra.mxu0 %v1771
        %1841 = vmatpush.bf16.msra.mxu0 %v1763
        %1842 = vmatpush.bf16.msra.mxu0 %v1755
        %1843 = vmatmul.bf16.gmra.mxu0 %v1819
        %v1844 = vpop.f32.mrf.mxu0
        %v1845 = vadd.f32 0.0, %v1844
        %v1846 = vpop.f32.mrf.mxu0
        %v1847 = vadd.f32 0.0, %v1846
        %1848 = vdwg.mxu0
        %1849 = vmatpush.bf16.msra.mxu0 0
        %1850 = vmatpush.bf16.msra.mxu0 0
        %1851 = vmatpush.bf16.msra.mxu0 0
        %1852 = vmatpush.bf16.msra.mxu0 0
        %1853 = vmatpush.bf16.msra.mxu0 %v1780
        %1854 = vmatpush.bf16.msra.mxu0 %v1772
        %1855 = vmatpush.bf16.msra.mxu0 %v1764
        %1856 = vmatpush.bf16.msra.mxu0 %v1756
        %1857 = vmatmul.bf16.gmra.mxu0 %v1819
        %v1858 = vpop.f32.mrf.mxu0
        %v1859 = vadd.f32 0.0, %v1858
        %v1860 = vpop.f32.mrf.mxu0
        %v1861 = vadd.f32 0.0, %v1860
        %1862 = vdwg.mxu0
        %1863 = vmatpush.bf16.msra.mxu0 0
        %1864 = vmatpush.bf16.msra.mxu0 0
        %1865 = vmatpush.bf16.msra.mxu0 0
        %1866 = vmatpush.bf16.msra.mxu0 0
        %1867 = vmatpush.bf16.msra.mxu0 %v1781
        %1868 = vmatpush.bf16.msra.mxu0 %v1773
        %1869 = vmatpush.bf16.msra.mxu0 %v1765
        %1870 = vmatpush.bf16.msra.mxu0 %v1757
        %1871 = vmatmul.bf16.gmra.mxu0 %v1819
        %v1872 = vpop.f32.mrf.mxu0
        %v1873 = vadd.f32 0.0, %v1872
        %v1874 = vpop.f32.mrf.mxu0
        %v1875 = vadd.f32 0.0, %v1874
        %1876 = vdwg.mxu0
        %1877 = vmatpush.bf16.msra.mxu0 0
        %1878 = vmatpush.bf16.msra.mxu0 0
        %1879 = vmatpush.bf16.msra.mxu0 0
        %1880 = vmatpush.bf16.msra.mxu0 0
        %1881 = vmatpush.bf16.msra.mxu0 %v1782
        %1882 = vmatpush.bf16.msra.mxu0 %v1774
        %1883 = vmatpush.bf16.msra.mxu0 %v1766
        %1884 = vmatpush.bf16.msra.mxu0 %v1758
        %1885 = vmatmul.bf16.gmra.mxu0 %v1819
        %v1886 = vpop.f32.mrf.mxu0
        %v1887 = vadd.f32 0.0, %v1886
        %v1888 = vpop.f32.mrf.mxu0
        %v1889 = vadd.f32 0.0, %v1888
        %1890 = vdwg.mxu0
        %1891 = vmatpush.bf16.msra.mxu0 0
        %1892 = vmatpush.bf16.msra.mxu0 0
        %1893 = vmatpush.bf16.msra.mxu0 0
        %1894 = vmatpush.bf16.msra.mxu0 0
        %1895 = vmatpush.bf16.msra.mxu0 %v1783
        %1896 = vmatpush.bf16.msra.mxu0 %v1775
        %1897 = vmatpush.bf16.msra.mxu0 %v1767
        %1898 = vmatpush.bf16.msra.mxu0 %v1759
        %1899 = vmatmul.bf16.gmra.mxu0 %v1819
        %v1900 = vpop.f32.mrf.mxu0
        %v1901 = vadd.f32 0.0, %v1900
        %v1902 = vpop.f32.mrf.mxu0
        %v1903 = vadd.f32 0.0, %v1902
        %1904 = vdwg.mxu0
        %1905 = vmatpush.bf16.msra.mxu0 0
        %1906 = vmatpush.bf16.msra.mxu0 0
        %1907 = vmatpush.bf16.msra.mxu0 0
        %1908 = vmatpush.bf16.msra.mxu0 0
        %1909 = vmatpush.bf16.msra.mxu0 %v1784
        %1910 = vmatpush.bf16.msra.mxu0 %v1776
        %1911 = vmatpush.bf16.msra.mxu0 %v1768
        %1912 = vmatpush.bf16.msra.mxu0 %v1760
        %1913 = vmatmul.bf16.gmra.mxu0 %v1819
        %v1914 = vpop.f32.mrf.mxu0
        %v1915 = vadd.f32 0.0, %v1914
        %v1916 = vpop.f32.mrf.mxu0
        %v1917 = vadd.f32 0.0, %v1916
        %1918 = vdwg.mxu0
        %1919 = vmatpush.bf16.msra.mxu0 0
        %1920 = vmatpush.bf16.msra.mxu0 0
        %1921 = vmatpush.bf16.msra.mxu0 0
        %1922 = vmatpush.bf16.msra.mxu0 0
        %1923 = vmatpush.bf16.msra.mxu0 %v1785
        %1924 = vmatpush.bf16.msra.mxu0 %v1777
        %1925 = vmatpush.bf16.msra.mxu0 %v1769
        %1926 = vmatpush.bf16.msra.mxu0 %v1761
        %1927 = vmatmul.bf16.gmra.mxu0 %v1819
        %v1928 = vpop.f32.mrf.mxu0
        %v1929 = vadd.f32 0.0, %v1928
        %v1930 = vpop.f32.mrf.mxu0
        %v1931 = vadd.f32 0.0, %v1930
        %1932 = vdwg.mxu0
        %v1933 = vadd.f32 %v1609, %v1831
        %v1934 = vadd.f32 %v1610, %v1845
        %v1935 = vadd.f32 %v1611, %v1859
        %v1936 = vadd.f32 %v1612, %v1873
        %v1937 = vadd.f32 %v1613, %v1887
        %v1938 = vadd.f32 %v1614, %v1901
        %v1939 = vadd.f32 %v1615, %v1915
        %v1940 = vadd.f32 %v1616, %v1929
        %v1941 = vadd.f32 %v1617, %v1833
        %v1942 = vadd.f32 %v1618, %v1847
        %v1943 = vadd.f32 %v1619, %v1861
        %v1944 = vadd.f32 %v1620, %v1875
        %v1945 = vadd.f32 %v1621, %v1889
        %v1946 = vadd.f32 %v1622, %v1903
        %v1947 = vadd.f32 %v1623, %v1917
        %v1948 = vadd.f32 %v1624, %v1931
        %1949 = vst [vmem:[#allocation2] sm:$0xff] %v1933
        %1950 = vst [vmem:[#allocation2 + $0x8] sm:$0xff] %v1934
        %1951 = vst [vmem:[#allocation2 + $0x10] sm:$0xff] %v1935
        %1952 = vst [vmem:[#allocation2 + $0x18] sm:$0xff] %v1936
        %1953 = vst [vmem:[#allocation2 + $0x20] sm:$0xff] %v1937
        %1954 = vst [vmem:[#allocation2 + $0x28] sm:$0xff] %v1938
        %1955 = vst [vmem:[#allocation2 + $0x30] sm:$0xff] %v1939
        %1956 = vst [vmem:[#allocation2 + $0x38] sm:$0xff] %v1940
        %1957 = vst [vmem:[#allocation2 + $0x40] sm:$0xff] %v1941
        %1958 = vst [vmem:[#allocation2 + $0x48] sm:$0xff] %v1942
        %1959 = vst [vmem:[#allocation2 + $0x50] sm:$0xff] %v1943
        %1960 = vst [vmem:[#allocation2 + $0x58] sm:$0xff] %v1944
        %1961 = vst [vmem:[#allocation2 + $0x60] sm:$0xff] %v1945
        %1962 = vst [vmem:[#allocation2 + $0x68] sm:$0xff] %v1946
        %1963 = vst [vmem:[#allocation2 + $0x70] sm:$0xff] %v1947
        %1964 = vst [vmem:[#allocation2 + $0x78] sm:$0xff] %v1948
        %s1965 = scalar_lea.vmem %s372, 80 [#allocation3]
        %v1966 = vld [vmem:[%s1965] sm:$0x1f]
        %v1967 = vld [vmem:[%s1965 + $0x5] sm:$0x1f]
        %v1968 = vld [vmem:[%s1965 + $0xa] sm:$0x1f]
        %v1969 = vld [vmem:[%s1965 + $0xf] sm:$0x1f]
        %v1970 = vld [vmem:[%s1965 + $0x14] sm:$0x1f]
        %v1971 = vld [vmem:[%s1965 + $0x19] sm:$0x1f]
        %v1972 = vld [vmem:[%s1965 + $0x1e] sm:$0x1f]
        %v1973 = vld [vmem:[%s1965 + $0x23] sm:$0x1f]
        %v1974 = vld [vmem:[%s1] sm:$0xf]
        %v1975 = vld [vmem:[%s1 + $0x4] sm:$0xf]
        %v1976 = vld [vmem:[%s1 + $0x8] sm:$0xf]
        %v1977 = vld [vmem:[%s1 + $0xc] sm:$0xf]
        %v1978 = vld [vmem:[%s1 + $0x10] sm:$0xf]
        %v1979 = vld [vmem:[%s1 + $0x14] sm:$0xf]
        %v1980 = vld [vmem:[%s1 + $0x18] sm:$0xf]
        %v1981 = vld [vmem:[%s1 + $0x1c] sm:$0xf]
        %v1982 = vld [vmem:[%s1 + $0x20] sm:$0xf]
        %v1983 = vld [vmem:[%s1 + $0x24] sm:$0xf]
        %v1984 = vld [vmem:[%s1 + $0x28] sm:$0xf]
        %v1985 = vld [vmem:[%s1 + $0x2c] sm:$0xf]
        %v1986 = vld [vmem:[%s1 + $0x30] sm:$0xf]
        %v1987 = vld [vmem:[%s1 + $0x34] sm:$0xf]
        %v1988 = vld [vmem:[%s1 + $0x38] sm:$0xf]
        %v1989 = vld [vmem:[%s1 + $0x3c] sm:$0xf]
        %v1990 = vld [vmem:[%s1 + $0x40] sm:$0xf]
        %v1991 = vld [vmem:[%s1 + $0x44] sm:$0xf]
        %v1992 = vld [vmem:[%s1 + $0x48] sm:$0xf]
        %v1993 = vld [vmem:[%s1 + $0x4c] sm:$0xf]
        %v1994 = vld [vmem:[%s1 + $0x50] sm:$0xf]
        %v1995 = vld [vmem:[%s1 + $0x54] sm:$0xf]
        %v1996 = vld [vmem:[%s1 + $0x58] sm:$0xf]
        %v1997 = vld [vmem:[%s1 + $0x5c] sm:$0xf]
        %v1998 = vld [vmem:[%s1 + $0x60] sm:$0xf]
        %v1999 = vld [vmem:[%s1 + $0x64] sm:$0xf]
        %v2000 = vld [vmem:[%s1 + $0x68] sm:$0xf]
        %v2001 = vld [vmem:[%s1 + $0x6c] sm:$0xf]
        %v2002 = vld [vmem:[%s1 + $0x70] sm:$0xf]
        %v2003 = vld [vmem:[%s1 + $0x74] sm:$0xf]
        %v2004 = vld [vmem:[%s1 + $0x78] sm:$0xf]
        %v2005 = vld [vmem:[%s1 + $0x7c] sm:$0xf]
        %v2006 = vld [vmem:[%s1 + $0x80] sm:$0xf]
        %v2007 = vld [vmem:[%s1 + $0x84] sm:$0xf]
        %v2008 = vld [vmem:[%s1 + $0x88] sm:$0xf]
        %v2009 = vld [vmem:[%s1 + $0x8c] sm:$0xf]
        %v2010 = vld [vmem:[%s1 + $0x90] sm:$0xf]
        %v2011 = vld [vmem:[%s1 + $0x94] sm:$0xf]
        %v2012 = vld [vmem:[%s1 + $0x98] sm:$0xf]
        %v2013 = vld [vmem:[%s1 + $0x9c] sm:$0xf]
        %v2014 = vld [vmem:[%s1 + $0xa0] sm:$0xf]
        %v2015 = vld [vmem:[%s1 + $0xa4] sm:$0xf]
        %v2016 = vld [vmem:[%s1 + $0xa8] sm:$0xf]
        %v2017 = vld [vmem:[%s1 + $0xac] sm:$0xf]
        %v2018 = vld [vmem:[%s1 + $0xb0] sm:$0xf]
        %v2019 = vld [vmem:[%s1 + $0xb4] sm:$0xf]
        %v2020 = vld [vmem:[%s1 + $0xb8] sm:$0xf]
        %v2021 = vld [vmem:[%s1 + $0xbc] sm:$0xf]
        %v2022 = vld [vmem:[%s1 + $0xc0] sm:$0xf]
        %v2023 = vld [vmem:[%s1 + $0xc4] sm:$0xf]
        %v2024 = vld [vmem:[%s1 + $0xc8] sm:$0xf]
        %v2025 = vld [vmem:[%s1 + $0xcc] sm:$0xf]
        %v2026 = vld [vmem:[%s1 + $0xd0] sm:$0xf]
        %v2027 = vld [vmem:[%s1 + $0xd4] sm:$0xf]
        %v2028 = vld [vmem:[%s1 + $0xd8] sm:$0xf]
        %v2029 = vld [vmem:[%s1 + $0xdc] sm:$0xf]
        %v2030 = vld [vmem:[%s1 + $0xe0] sm:$0xf]
        %v2031 = vld [vmem:[%s1 + $0xe4] sm:$0xf]
        %v2032 = vld [vmem:[%s1 + $0xe8] sm:$0xf]
        %v2033 = vld [vmem:[%s1 + $0xec] sm:$0xf]
        %v2034 = vld [vmem:[%s1 + $0xf0] sm:$0xf]
        %v2035 = vld [vmem:[%s1 + $0xf4] sm:$0xf]
        %v2036 = vld [vmem:[%s1 + $0xf8] sm:$0xf]
        %v2037 = vld [vmem:[%s1 + $0xfc] sm:$0xf]
        %v2038 = vld [vmem:[%s1 + $0x100] sm:$0xf]
        %v2039 = vld [vmem:[%s1 + $0x104] sm:$0xf]
        %v2040 = vld [vmem:[%s1 + $0x108] sm:$0xf]
        %v2041 = vld [vmem:[%s1 + $0x10c] sm:$0xf]
        %v2042 = vld [vmem:[%s1 + $0x110] sm:$0xf]
        %v2043 = vld [vmem:[%s1 + $0x114] sm:$0xf]
        %v2044 = vld [vmem:[%s1 + $0x118] sm:$0xf]
        %v2045 = vld [vmem:[%s1 + $0x11c] sm:$0xf]
        %v2046 = vld [vmem:[%s2] sm:$0x1]
        %v2048 = vperm.slane %v2046, 0
        %2051 = vst [vmem:[#allocation1] ss:$9 sm:$0xff] %v1966
        %s2053 = scalar_lea.vmem [#allocation1], 1
        %2054 = vst [vmem:[%s2053] ss:$9 sm:$0xff] %v1967
        %s2056 = scalar_lea.vmem [#allocation1], 2
        %2057 = vst [vmem:[%s2056] ss:$9 sm:$0xff] %v1968
        %s2059 = scalar_lea.vmem [#allocation1], 3
        %2060 = vst [vmem:[%s2059] ss:$9 sm:$0xff] %v1969
        %s2062 = scalar_lea.vmem [#allocation1], 4
        %2063 = vst [vmem:[%s2062] ss:$9 sm:$0xff] %v1970
        %s2065 = scalar_lea.vmem [#allocation1], 5
        %2066 = vst [vmem:[%s2065] ss:$9 sm:$0xff] %v1971
        %s2068 = scalar_lea.vmem [#allocation1], 6
        %2069 = vst [vmem:[%s2068] ss:$9 sm:$0xff] %v1972
        %s2071 = scalar_lea.vmem [#allocation1], 7
        %2072 = vst [vmem:[%s2071] ss:$9 sm:$0xff] %v1973
        %v2073 = vld [vmem:[#allocation1] sm:$0xff]
        %v2074 = vld [vmem:[#allocation1 + $0x9] sm:$0xff]
        %v2075 = vld [vmem:[#allocation1 + $0x12] sm:$0xff]
        %v2076 = vld [vmem:[#allocation1 + $0x1b] sm:$0xff]
        %v2077 = vld [vmem:[#allocation1 + $0x24] sm:$0xff]
        %v2154 = vunpack.c.l.b16 %v1974
        %v2155 = vunpack.c.l.b16 %v1975
        %v2156 = vunpack.c.l.b16 %v1976
        %v2157 = vunpack.c.l.b16 %v1977
        %v2158 = vunpack.c.l.b16 %v1978
        %v2159 = vunpack.c.l.b16 %v1979
        %v2160 = vunpack.c.l.b16 %v1980
        %v2161 = vunpack.c.l.b16 %v1981
        %v2162 = vunpack.c.l.b16 %v1982
        %v2163 = vunpack.c.l.b16 %v1983
        %v2164 = vunpack.c.l.b16 %v1984
        %v2165 = vunpack.c.l.b16 %v1985
        %v2166 = vunpack.c.l.b16 %v1986
        %v2167 = vunpack.c.l.b16 %v1987
        %v2168 = vunpack.c.l.b16 %v1988
        %v2169 = vunpack.c.l.b16 %v1989
        %v2170 = vunpack.c.l.b16 %v1990
        %v2171 = vunpack.c.l.b16 %v1991
        %v2172 = vunpack.c.l.b16 %v1992
        %v2173 = vunpack.c.l.b16 %v1993
        %v2174 = vunpack.c.l.b16 %v1994
        %v2175 = vunpack.c.l.b16 %v1995
        %v2176 = vunpack.c.l.b16 %v1996
        %v2177 = vunpack.c.l.b16 %v1997
        %v2178 = vunpack.c.l.b16 %v1998
        %v2179 = vunpack.c.l.b16 %v1999
        %v2180 = vunpack.c.l.b16 %v2000
        %v2181 = vunpack.c.l.b16 %v2001
        %v2182 = vunpack.c.l.b16 %v2002
        %v2183 = vunpack.c.l.b16 %v2003
        %v2184 = vunpack.c.l.b16 %v2004
        %v2185 = vunpack.c.l.b16 %v2005
        %v2186 = vunpack.c.l.b16 %v2006
        %v2187 = vunpack.c.l.b16 %v2007
        %v2188 = vunpack.c.l.b16 %v2008
        %v2189 = vunpack.c.l.b16 %v2009
        %v2190 = vunpack.c.l.b16 %v2010
        %v2191 = vunpack.c.l.b16 %v2011
        %v2192 = vunpack.c.l.b16 %v2012
        %v2193 = vunpack.c.l.b16 %v2013
        %v2194 = vunpack.c.l.b16 %v2014
        %v2195 = vunpack.c.l.b16 %v2015
        %v2196 = vunpack.c.l.b16 %v2016
        %v2197 = vunpack.c.l.b16 %v2017
        %v2198 = vunpack.c.l.b16 %v2018
        %v2199 = vunpack.c.l.b16 %v2019
        %v2200 = vunpack.c.l.b16 %v2020
        %v2201 = vunpack.c.l.b16 %v2021
        %v2202 = vunpack.c.l.b16 %v2022
        %v2203 = vunpack.c.l.b16 %v2023
        %v2204 = vunpack.c.l.b16 %v2024
        %v2205 = vunpack.c.l.b16 %v2025
        %v2206 = vunpack.c.l.b16 %v2026
        %v2207 = vunpack.c.l.b16 %v2027
        %v2208 = vunpack.c.l.b16 %v2028
        %v2209 = vunpack.c.l.b16 %v2029
        %v2210 = vunpack.c.l.b16 %v2030
        %v2211 = vunpack.c.l.b16 %v2031
        %v2212 = vunpack.c.l.b16 %v2032
        %v2213 = vunpack.c.l.b16 %v2033
        %v2214 = vunpack.c.l.b16 %v2034
        %v2215 = vunpack.c.l.b16 %v2035
        %v2216 = vunpack.c.l.b16 %v2036
        %v2217 = vunpack.c.l.b16 %v2037
        %v2218 = vunpack.c.l.b16 %v2038
        %v2219 = vunpack.c.l.b16 %v2039
        %v2220 = vunpack.c.l.b16 %v2040
        %v2221 = vunpack.c.l.b16 %v2041
        %v2222 = vunpack.c.l.b16 %v2042
        %v2223 = vunpack.c.l.b16 %v2043
        %v2224 = vunpack.c.l.b16 %v2044
        %v2225 = vunpack.c.l.b16 %v2045
        %v2226 = vpack.c.b16 %v2155, %v2154
        %v2227 = vpack.c.b16 %v2157, %v2156
        %v2228 = vpack.c.b16 %v2159, %v2158
        %v2229 = vpack.c.b16 %v2161, %v2160
        %v2230 = vpack.c.b16 %v2163, %v2162
        %v2231 = vpack.c.b16 %v2165, %v2164
        %v2232 = vpack.c.b16 %v2167, %v2166
        %v2233 = vpack.c.b16 %v2169, %v2168
        %v2234 = vpack.c.b16 %v2171, %v2170
        %v2235 = vpack.c.b16 %v2173, %v2172
        %v2236 = vpack.c.b16 %v2175, %v2174
        %v2237 = vpack.c.b16 %v2177, %v2176
        %v2238 = vpack.c.b16 %v2179, %v2178
        %v2239 = vpack.c.b16 %v2181, %v2180
        %v2240 = vpack.c.b16 %v2183, %v2182
        %v2241 = vpack.c.b16 %v2185, %v2184
        %v2242 = vpack.c.b16 %v2187, %v2186
        %v2243 = vpack.c.b16 %v2189, %v2188
        %v2244 = vpack.c.b16 %v2191, %v2190
        %v2245 = vpack.c.b16 %v2193, %v2192
        %v2246 = vpack.c.b16 %v2195, %v2194
        %v2247 = vpack.c.b16 %v2197, %v2196
        %v2248 = vpack.c.b16 %v2199, %v2198
        %v2249 = vpack.c.b16 %v2201, %v2200
        %v2250 = vpack.c.b16 %v2203, %v2202
        %v2251 = vpack.c.b16 %v2205, %v2204
        %v2252 = vpack.c.b16 %v2207, %v2206
        %v2253 = vpack.c.b16 %v2209, %v2208
        %v2254 = vpack.c.b16 %v2211, %v2210
        %v2255 = vpack.c.b16 %v2213, %v2212
        %v2256 = vpack.c.b16 %v2215, %v2214
        %v2257 = vpack.c.b16 %v2217, %v2216
        %v2258 = vpack.c.b16 %v2219, %v2218
        %v2259 = vpack.c.b16 %v2221, %v2220
        %v2260 = vpack.c.b16 %v2223, %v2222
        %v2261 = vpack.c.b16 %v2225, %v2224
        %v2298 = vsel %vm770, %v2077, 0
        %2300 = vmatpush.bf16.msra.mxu0 %v2233
        %2301 = vmatpush.bf16.msra.mxu0 %v2232
        %2302 = vmatpush.bf16.msra.mxu0 %v2231
        %2303 = vmatpush.bf16.msra.mxu0 %v2230
        %2304 = vmatpush.bf16.msra.mxu0 %v2229
        %2305 = vmatpush.bf16.msra.mxu0 %v2228
        %2306 = vmatpush.bf16.msra.mxu0 %v2227
        %2307 = vmatpush.bf16.msra.mxu0 %v2226
        %2308 = vmatmul.bf16.gmra.mxu0 %v2073
        %v2309 = vpop.f32.mrf.mxu0
        %v2310 = vadd.f32 %v2048, %v2309
        %v2311 = vpop.f32.mrf.mxu0
        %v2312 = vadd.f32 %v2048, %v2311
        %2313 = vdwg.mxu0
        %2314 = vmatpush.bf16.msra.mxu0 %v2241
        %2315 = vmatpush.bf16.msra.mxu0 %v2240
        %2316 = vmatpush.bf16.msra.mxu0 %v2239
        %2317 = vmatpush.bf16.msra.mxu0 %v2238
        %2318 = vmatpush.bf16.msra.mxu0 %v2237
        %2319 = vmatpush.bf16.msra.mxu0 %v2236
        %2320 = vmatpush.bf16.msra.mxu0 %v2235
        %2321 = vmatpush.bf16.msra.mxu0 %v2234
        %2322 = vmatmul.bf16.gmra.mxu0 %v2074
        %v2323 = vpop.f32.mrf.mxu0
        %v2324 = vadd.f32 %v2310, %v2323
        %v2325 = vpop.f32.mrf.mxu0
        %v2326 = vadd.f32 %v2312, %v2325
        %2327 = vdwg.mxu0
        %2328 = vmatpush.bf16.msra.mxu0 %v2249
        %2329 = vmatpush.bf16.msra.mxu0 %v2248
        %2330 = vmatpush.bf16.msra.mxu0 %v2247
        %2331 = vmatpush.bf16.msra.mxu0 %v2246
        %2332 = vmatpush.bf16.msra.mxu0 %v2245
        %2333 = vmatpush.bf16.msra.mxu0 %v2244
        %2334 = vmatpush.bf16.msra.mxu0 %v2243
        %2335 = vmatpush.bf16.msra.mxu0 %v2242
        %2336 = vmatmul.bf16.gmra.mxu0 %v2075
        %v2337 = vpop.f32.mrf.mxu0
        %v2338 = vadd.f32 %v2324, %v2337
        %v2339 = vpop.f32.mrf.mxu0
        %v2340 = vadd.f32 %v2326, %v2339
        %2341 = vdwg.mxu0
        %2342 = vmatpush.bf16.msra.mxu0 %v2257
        %2343 = vmatpush.bf16.msra.mxu0 %v2256
        %2344 = vmatpush.bf16.msra.mxu0 %v2255
        %2345 = vmatpush.bf16.msra.mxu0 %v2254
        %2346 = vmatpush.bf16.msra.mxu0 %v2253
        %2347 = vmatpush.bf16.msra.mxu0 %v2252
        %2348 = vmatpush.bf16.msra.mxu0 %v2251
        %2349 = vmatpush.bf16.msra.mxu0 %v2250
        %2350 = vmatmul.bf16.gmra.mxu0 %v2076
        %v2351 = vpop.f32.mrf.mxu0
        %v2352 = vadd.f32 %v2338, %v2351
        %v2353 = vpop.f32.mrf.mxu0
        %v2354 = vadd.f32 %v2340, %v2353
        %2355 = vdwg.mxu0
        %2356 = vmatpush.bf16.msra.mxu0 0
        %2357 = vmatpush.bf16.msra.mxu0 0
        %2358 = vmatpush.bf16.msra.mxu0 0
        %2359 = vmatpush.bf16.msra.mxu0 0
        %2360 = vmatpush.bf16.msra.mxu0 %v2261
        %2361 = vmatpush.bf16.msra.mxu0 %v2260
        %2362 = vmatpush.bf16.msra.mxu0 %v2259
        %2363 = vmatpush.bf16.msra.mxu0 %v2258
        %2364 = vmatmul.bf16.gmra.mxu0 %v2298
        %v2365 = vpop.f32.mrf.mxu0
        %v2366 = vadd.f32 %v2352, %v2365
        %v2367 = vpop.f32.mrf.mxu0
        %v2368 = vadd.f32 %v2354, %v2367
        %2369 = vdwg.mxu0
        %v2370 = vmax.f32 %v2366, 0.0
        %v2371 = vmax.f32 %v2368, 0.0
        %v2372 = vpack.c.bf16 %v2371, %v2370
        %v2373 = vld [vmem:[#allocation2] sm:$0xff]
        %v2374 = vld [vmem:[#allocation2 + $0x8] sm:$0xff]
        %v2375 = vld [vmem:[#allocation2 + $0x10] sm:$0xff]
        %v2376 = vld [vmem:[#allocation2 + $0x18] sm:$0xff]
        %v2377 = vld [vmem:[#allocation2 + $0x20] sm:$0xff]
        %v2378 = vld [vmem:[#allocation2 + $0x28] sm:$0xff]
        %v2379 = vld [vmem:[#allocation2 + $0x30] sm:$0xff]
        %v2380 = vld [vmem:[#allocation2 + $0x38] sm:$0xff]
        %v2381 = vld [vmem:[#allocation2 + $0x40] sm:$0xff]
        %v2382 = vld [vmem:[#allocation2 + $0x48] sm:$0xff]
        %v2383 = vld [vmem:[#allocation2 + $0x50] sm:$0xff]
        %v2384 = vld [vmem:[#allocation2 + $0x58] sm:$0xff]
        %v2385 = vld [vmem:[#allocation2 + $0x60] sm:$0xff]
        %v2386 = vld [vmem:[#allocation2 + $0x68] sm:$0xff]
        %v2387 = vld [vmem:[#allocation2 + $0x70] sm:$0xff]
        %v2388 = vld [vmem:[#allocation2 + $0x78] sm:$0xff]
        %s2389 = scalar_lea.vmem %s412, 512
        %v2390 = vld [vmem:[%s2389] sm:$0xff]
        %v2391 = vld [vmem:[%s2389 + $0x8] sm:$0xff]
        %v2392 = vld [vmem:[%s2389 + $0x10] sm:$0xff]
        %v2393 = vld [vmem:[%s2389 + $0x18] sm:$0xff]
        %v2394 = vld [vmem:[%s2389 + $0x20] sm:$0xff]
        %v2395 = vld [vmem:[%s2389 + $0x28] sm:$0xff]
        %v2396 = vld [vmem:[%s2389 + $0x30] sm:$0xff]
        %v2397 = vld [vmem:[%s2389 + $0x38] sm:$0xff]
        %v2398 = vld [vmem:[%s2389 + $0x40] sm:$0xff]
        %v2399 = vld [vmem:[%s2389 + $0x48] sm:$0xff]
        %v2400 = vld [vmem:[%s2389 + $0x50] sm:$0xff]
        %v2401 = vld [vmem:[%s2389 + $0x58] sm:$0xff]
        %v2402 = vld [vmem:[%s2389 + $0x60] sm:$0xff]
        %v2403 = vld [vmem:[%s2389 + $0x68] sm:$0xff]
        %v2404 = vld [vmem:[%s2389 + $0x70] sm:$0xff]
        %v2405 = vld [vmem:[%s2389 + $0x78] sm:$0xff]
        %v2406 = vld [vmem:[%s2389 + $0x80] sm:$0xff]
        %v2407 = vld [vmem:[%s2389 + $0x88] sm:$0xff]
        %v2408 = vld [vmem:[%s2389 + $0x90] sm:$0xff]
        %v2409 = vld [vmem:[%s2389 + $0x98] sm:$0xff]
        %v2410 = vld [vmem:[%s2389 + $0xa0] sm:$0xff]
        %v2411 = vld [vmem:[%s2389 + $0xa8] sm:$0xff]
        %v2412 = vld [vmem:[%s2389 + $0xb0] sm:$0xff]
        %v2413 = vld [vmem:[%s2389 + $0xb8] sm:$0xff]
        %v2414 = vld [vmem:[%s2389 + $0xc0] sm:$0xff]
        %v2415 = vld [vmem:[%s2389 + $0xc8] sm:$0xff]
        %v2416 = vld [vmem:[%s2389 + $0xd0] sm:$0xff]
        %v2417 = vld [vmem:[%s2389 + $0xd8] sm:$0xff]
        %v2418 = vld [vmem:[%s2389 + $0xe0] sm:$0xff]
        %v2419 = vld [vmem:[%s2389 + $0xe8] sm:$0xff]
        %v2420 = vld [vmem:[%s2389 + $0xf0] sm:$0xff]
        %v2421 = vld [vmem:[%s2389 + $0xf8] sm:$0xff]
        %v2454 = vunpack.c.l.b16 %v2390
        %v2455 = vunpack.c.h.b16 %v2390
        %v2456 = vunpack.c.l.b16 %v2391
        %v2457 = vunpack.c.h.b16 %v2391
        %v2458 = vunpack.c.l.b16 %v2392
        %v2459 = vunpack.c.h.b16 %v2392
        %v2460 = vunpack.c.l.b16 %v2393
        %v2461 = vunpack.c.h.b16 %v2393
        %v2462 = vunpack.c.l.b16 %v2394
        %v2463 = vunpack.c.h.b16 %v2394
        %v2464 = vunpack.c.l.b16 %v2395
        %v2465 = vunpack.c.h.b16 %v2395
        %v2466 = vunpack.c.l.b16 %v2396
        %v2467 = vunpack.c.h.b16 %v2396
        %v2468 = vunpack.c.l.b16 %v2397
        %v2469 = vunpack.c.h.b16 %v2397
        %v2470 = vunpack.c.l.b16 %v2398
        %v2471 = vunpack.c.h.b16 %v2398
        %v2472 = vunpack.c.l.b16 %v2399
        %v2473 = vunpack.c.h.b16 %v2399
        %v2474 = vunpack.c.l.b16 %v2400
        %v2475 = vunpack.c.h.b16 %v2400
        %v2476 = vunpack.c.l.b16 %v2401
        %v2477 = vunpack.c.h.b16 %v2401
        %v2478 = vunpack.c.l.b16 %v2402
        %v2479 = vunpack.c.h.b16 %v2402
        %v2480 = vunpack.c.l.b16 %v2403
        %v2481 = vunpack.c.h.b16 %v2403
        %v2482 = vunpack.c.l.b16 %v2404
        %v2483 = vunpack.c.h.b16 %v2404
        %v2484 = vunpack.c.l.b16 %v2405
        %v2485 = vunpack.c.h.b16 %v2405
        %v2486 = vunpack.c.l.b16 %v2406
        %v2487 = vunpack.c.h.b16 %v2406
        %v2488 = vunpack.c.l.b16 %v2407
        %v2489 = vunpack.c.h.b16 %v2407
        %v2490 = vunpack.c.l.b16 %v2408
        %v2491 = vunpack.c.h.b16 %v2408
        %v2492 = vunpack.c.l.b16 %v2409
        %v2493 = vunpack.c.h.b16 %v2409
        %v2494 = vunpack.c.l.b16 %v2410
        %v2495 = vunpack.c.h.b16 %v2410
        %v2496 = vunpack.c.l.b16 %v2411
        %v2497 = vunpack.c.h.b16 %v2411
        %v2498 = vunpack.c.l.b16 %v2412
        %v2499 = vunpack.c.h.b16 %v2412
        %v2500 = vunpack.c.l.b16 %v2413
        %v2501 = vunpack.c.h.b16 %v2413
        %v2502 = vunpack.c.l.b16 %v2414
        %v2503 = vunpack.c.h.b16 %v2414
        %v2504 = vunpack.c.l.b16 %v2415
        %v2505 = vunpack.c.h.b16 %v2415
        %v2506 = vunpack.c.l.b16 %v2416
        %v2507 = vunpack.c.h.b16 %v2416
        %v2508 = vunpack.c.l.b16 %v2417
        %v2509 = vunpack.c.h.b16 %v2417
        %v2510 = vunpack.c.l.b16 %v2418
        %v2511 = vunpack.c.h.b16 %v2418
        %v2512 = vunpack.c.l.b16 %v2419
        %v2513 = vunpack.c.h.b16 %v2419
        %v2514 = vunpack.c.l.b16 %v2420
        %v2515 = vunpack.c.h.b16 %v2420
        %v2516 = vunpack.c.l.b16 %v2421
        %v2517 = vunpack.c.h.b16 %v2421
        %v2518 = vpack.c.b16 %v2462, %v2454
        %v2519 = vpack.c.b16 %v2463, %v2455
        %v2520 = vpack.c.b16 %v2464, %v2456
        %v2521 = vpack.c.b16 %v2465, %v2457
        %v2522 = vpack.c.b16 %v2466, %v2458
        %v2523 = vpack.c.b16 %v2467, %v2459
        %v2524 = vpack.c.b16 %v2468, %v2460
        %v2525 = vpack.c.b16 %v2469, %v2461
        %v2526 = vpack.c.b16 %v2478, %v2470
        %v2527 = vpack.c.b16 %v2479, %v2471
        %v2528 = vpack.c.b16 %v2480, %v2472
        %v2529 = vpack.c.b16 %v2481, %v2473
        %v2530 = vpack.c.b16 %v2482, %v2474
        %v2531 = vpack.c.b16 %v2483, %v2475
        %v2532 = vpack.c.b16 %v2484, %v2476
        %v2533 = vpack.c.b16 %v2485, %v2477
        %v2534 = vpack.c.b16 %v2494, %v2486
        %v2535 = vpack.c.b16 %v2495, %v2487
        %v2536 = vpack.c.b16 %v2496, %v2488
        %v2537 = vpack.c.b16 %v2497, %v2489
        %v2538 = vpack.c.b16 %v2498, %v2490
        %v2539 = vpack.c.b16 %v2499, %v2491
        %v2540 = vpack.c.b16 %v2500, %v2492
        %v2541 = vpack.c.b16 %v2501, %v2493
        %v2542 = vpack.c.b16 %v2510, %v2502
        %v2543 = vpack.c.b16 %v2511, %v2503
        %v2544 = vpack.c.b16 %v2512, %v2504
        %v2545 = vpack.c.b16 %v2513, %v2505
        %v2546 = vpack.c.b16 %v2514, %v2506
        %v2547 = vpack.c.b16 %v2515, %v2507
        %v2548 = vpack.c.b16 %v2516, %v2508
        %v2549 = vpack.c.b16 %v2517, %v2509
        %v2583 = vsel %vm770, %v2372, 0
        %2585 = vmatpush.bf16.msra.mxu0 0
        %2586 = vmatpush.bf16.msra.mxu0 0
        %2587 = vmatpush.bf16.msra.mxu0 0
        %2588 = vmatpush.bf16.msra.mxu0 0
        %2589 = vmatpush.bf16.msra.mxu0 %v2542
        %2590 = vmatpush.bf16.msra.mxu0 %v2534
        %2591 = vmatpush.bf16.msra.mxu0 %v2526
        %2592 = vmatpush.bf16.msra.mxu0 %v2518
        %2593 = vmatmul.bf16.gmra.mxu0 %v2583
        %v2594 = vpop.f32.mrf.mxu0
        %v2595 = vadd.f32 0.0, %v2594
        %v2596 = vpop.f32.mrf.mxu0
        %v2597 = vadd.f32 0.0, %v2596
        %2598 = vdwg.mxu0
        %2599 = vmatpush.bf16.msra.mxu0 0
        %2600 = vmatpush.bf16.msra.mxu0 0
        %2601 = vmatpush.bf16.msra.mxu0 0
        %2602 = vmatpush.bf16.msra.mxu0 0
        %2603 = vmatpush.bf16.msra.mxu0 %v2543
        %2604 = vmatpush.bf16.msra.mxu0 %v2535
        %2605 = vmatpush.bf16.msra.mxu0 %v2527
        %2606 = vmatpush.bf16.msra.mxu0 %v2519
        %2607 = vmatmul.bf16.gmra.mxu0 %v2583
        %v2608 = vpop.f32.mrf.mxu0
        %v2609 = vadd.f32 0.0, %v2608
        %v2610 = vpop.f32.mrf.mxu0
        %v2611 = vadd.f32 0.0, %v2610
        %2612 = vdwg.mxu0
        %2613 = vmatpush.bf16.msra.mxu0 0
        %2614 = vmatpush.bf16.msra.mxu0 0
        %2615 = vmatpush.bf16.msra.mxu0 0
        %2616 = vmatpush.bf16.msra.mxu0 0
        %2617 = vmatpush.bf16.msra.mxu0 %v2544
        %2618 = vmatpush.bf16.msra.mxu0 %v2536
        %2619 = vmatpush.bf16.msra.mxu0 %v2528
        %2620 = vmatpush.bf16.msra.mxu0 %v2520
        %2621 = vmatmul.bf16.gmra.mxu0 %v2583
        %v2622 = vpop.f32.mrf.mxu0
        %v2623 = vadd.f32 0.0, %v2622
        %v2624 = vpop.f32.mrf.mxu0
        %v2625 = vadd.f32 0.0, %v2624
        %2626 = vdwg.mxu0
        %2627 = vmatpush.bf16.msra.mxu0 0
        %2628 = vmatpush.bf16.msra.mxu0 0
        %2629 = vmatpush.bf16.msra.mxu0 0
        %2630 = vmatpush.bf16.msra.mxu0 0
        %2631 = vmatpush.bf16.msra.mxu0 %v2545
        %2632 = vmatpush.bf16.msra.mxu0 %v2537
        %2633 = vmatpush.bf16.msra.mxu0 %v2529
        %2634 = vmatpush.bf16.msra.mxu0 %v2521
        %2635 = vmatmul.bf16.gmra.mxu0 %v2583
        %v2636 = vpop.f32.mrf.mxu0
        %v2637 = vadd.f32 0.0, %v2636
        %v2638 = vpop.f32.mrf.mxu0
        %v2639 = vadd.f32 0.0, %v2638
        %2640 = vdwg.mxu0
        %2641 = vmatpush.bf16.msra.mxu0 0
        %2642 = vmatpush.bf16.msra.mxu0 0
        %2643 = vmatpush.bf16.msra.mxu0 0
        %2644 = vmatpush.bf16.msra.mxu0 0
        %2645 = vmatpush.bf16.msra.mxu0 %v2546
        %2646 = vmatpush.bf16.msra.mxu0 %v2538
        %2647 = vmatpush.bf16.msra.mxu0 %v2530
        %2648 = vmatpush.bf16.msra.mxu0 %v2522
        %2649 = vmatmul.bf16.gmra.mxu0 %v2583
        %v2650 = vpop.f32.mrf.mxu0
        %v2651 = vadd.f32 0.0, %v2650
        %v2652 = vpop.f32.mrf.mxu0
        %v2653 = vadd.f32 0.0, %v2652
        %2654 = vdwg.mxu0
        %2655 = vmatpush.bf16.msra.mxu0 0
        %2656 = vmatpush.bf16.msra.mxu0 0
        %2657 = vmatpush.bf16.msra.mxu0 0
        %2658 = vmatpush.bf16.msra.mxu0 0
        %2659 = vmatpush.bf16.msra.mxu0 %v2547
        %2660 = vmatpush.bf16.msra.mxu0 %v2539
        %2661 = vmatpush.bf16.msra.mxu0 %v2531
        %2662 = vmatpush.bf16.msra.mxu0 %v2523
        %2663 = vmatmul.bf16.gmra.mxu0 %v2583
        %v2664 = vpop.f32.mrf.mxu0
        %v2665 = vadd.f32 0.0, %v2664
        %v2666 = vpop.f32.mrf.mxu0
        %v2667 = vadd.f32 0.0, %v2666
        %2668 = vdwg.mxu0
        %2669 = vmatpush.bf16.msra.mxu0 0
        %2670 = vmatpush.bf16.msra.mxu0 0
        %2671 = vmatpush.bf16.msra.mxu0 0
        %2672 = vmatpush.bf16.msra.mxu0 0
        %2673 = vmatpush.bf16.msra.mxu0 %v2548
        %2674 = vmatpush.bf16.msra.mxu0 %v2540
        %2675 = vmatpush.bf16.msra.mxu0 %v2532
        %2676 = vmatpush.bf16.msra.mxu0 %v2524
        %2677 = vmatmul.bf16.gmra.mxu0 %v2583
        %v2678 = vpop.f32.mrf.mxu0
        %v2679 = vadd.f32 0.0, %v2678
        %v2680 = vpop.f32.mrf.mxu0
        %v2681 = vadd.f32 0.0, %v2680
        %2682 = vdwg.mxu0
        %2683 = vmatpush.bf16.msra.mxu0 0
        %2684 = vmatpush.bf16.msra.mxu0 0
        %2685 = vmatpush.bf16.msra.mxu0 0
        %2686 = vmatpush.bf16.msra.mxu0 0
        %2687 = vmatpush.bf16.msra.mxu0 %v2549
        %2688 = vmatpush.bf16.msra.mxu0 %v2541
        %2689 = vmatpush.bf16.msra.mxu0 %v2533
        %2690 = vmatpush.bf16.msra.mxu0 %v2525
        %2691 = vmatmul.bf16.gmra.mxu0 %v2583
        %v2692 = vpop.f32.mrf.mxu0
        %v2693 = vadd.f32 0.0, %v2692
        %v2694 = vpop.f32.mrf.mxu0
        %v2695 = vadd.f32 0.0, %v2694
        %2696 = vdwg.mxu0
        %v2697 = vadd.f32 %v2373, %v2595
        %v2698 = vadd.f32 %v2374, %v2609
        %v2699 = vadd.f32 %v2375, %v2623
        %v2700 = vadd.f32 %v2376, %v2637
        %v2701 = vadd.f32 %v2377, %v2651
        %v2702 = vadd.f32 %v2378, %v2665
        %v2703 = vadd.f32 %v2379, %v2679
        %v2704 = vadd.f32 %v2380, %v2693
        %v2705 = vadd.f32 %v2381, %v2597
        %v2706 = vadd.f32 %v2382, %v2611
        %v2707 = vadd.f32 %v2383, %v2625
        %v2708 = vadd.f32 %v2384, %v2639
        %v2709 = vadd.f32 %v2385, %v2653
        %v2710 = vadd.f32 %v2386, %v2667
        %v2711 = vadd.f32 %v2387, %v2681
        %v2712 = vadd.f32 %v2388, %v2695
        %2713 = vst [vmem:[#allocation2] sm:$0xff] %v2697
        %2714 = vst [vmem:[#allocation2 + $0x8] sm:$0xff] %v2698
        %2715 = vst [vmem:[#allocation2 + $0x10] sm:$0xff] %v2699
        %2716 = vst [vmem:[#allocation2 + $0x18] sm:$0xff] %v2700
        %2717 = vst [vmem:[#allocation2 + $0x20] sm:$0xff] %v2701
        %2718 = vst [vmem:[#allocation2 + $0x28] sm:$0xff] %v2702
        %2719 = vst [vmem:[#allocation2 + $0x30] sm:$0xff] %v2703
        %2720 = vst [vmem:[#allocation2 + $0x38] sm:$0xff] %v2704
        %2721 = vst [vmem:[#allocation2 + $0x40] sm:$0xff] %v2705
        %2722 = vst [vmem:[#allocation2 + $0x48] sm:$0xff] %v2706
        %2723 = vst [vmem:[#allocation2 + $0x50] sm:$0xff] %v2707
        %2724 = vst [vmem:[#allocation2 + $0x58] sm:$0xff] %v2708
        %2725 = vst [vmem:[#allocation2 + $0x60] sm:$0xff] %v2709
        %2726 = vst [vmem:[#allocation2 + $0x68] sm:$0xff] %v2710
        %2727 = vst [vmem:[#allocation2 + $0x70] sm:$0xff] %v2711
        %2728 = vst [vmem:[#allocation2 + $0x78] sm:$0xff] %v2712
        %s2729 = scalar_lea.vmem %s372, 120 [#allocation3]
        %v2730 = vld [vmem:[%s2729] sm:$0x1f]
        %v2731 = vld [vmem:[%s2729 + $0x5] sm:$0x1f]
        %v2732 = vld [vmem:[%s2729 + $0xa] sm:$0x1f]
        %v2733 = vld [vmem:[%s2729 + $0xf] sm:$0x1f]
        %v2734 = vld [vmem:[%s2729 + $0x14] sm:$0x1f]
        %v2735 = vld [vmem:[%s2729 + $0x19] sm:$0x1f]
        %v2736 = vld [vmem:[%s2729 + $0x1e] sm:$0x1f]
        %v2737 = vld [vmem:[%s2729 + $0x23] sm:$0x1f]
        %v2738 = vld [vmem:[%s1] sm:$0xf]
        %v2739 = vld [vmem:[%s1 + $0x4] sm:$0xf]
        %v2740 = vld [vmem:[%s1 + $0x8] sm:$0xf]
        %v2741 = vld [vmem:[%s1 + $0xc] sm:$0xf]
        %v2742 = vld [vmem:[%s1 + $0x10] sm:$0xf]
        %v2743 = vld [vmem:[%s1 + $0x14] sm:$0xf]
        %v2744 = vld [vmem:[%s1 + $0x18] sm:$0xf]
        %v2745 = vld [vmem:[%s1 + $0x1c] sm:$0xf]
        %v2746 = vld [vmem:[%s1 + $0x20] sm:$0xf]
        %v2747 = vld [vmem:[%s1 + $0x24] sm:$0xf]
        %v2748 = vld [vmem:[%s1 + $0x28] sm:$0xf]
        %v2749 = vld [vmem:[%s1 + $0x2c] sm:$0xf]
        %v2750 = vld [vmem:[%s1 + $0x30] sm:$0xf]
        %v2751 = vld [vmem:[%s1 + $0x34] sm:$0xf]
        %v2752 = vld [vmem:[%s1 + $0x38] sm:$0xf]
        %v2753 = vld [vmem:[%s1 + $0x3c] sm:$0xf]
        %v2754 = vld [vmem:[%s1 + $0x40] sm:$0xf]
        %v2755 = vld [vmem:[%s1 + $0x44] sm:$0xf]
        %v2756 = vld [vmem:[%s1 + $0x48] sm:$0xf]
        %v2757 = vld [vmem:[%s1 + $0x4c] sm:$0xf]
        %v2758 = vld [vmem:[%s1 + $0x50] sm:$0xf]
        %v2759 = vld [vmem:[%s1 + $0x54] sm:$0xf]
        %v2760 = vld [vmem:[%s1 + $0x58] sm:$0xf]
        %v2761 = vld [vmem:[%s1 + $0x5c] sm:$0xf]
        %v2762 = vld [vmem:[%s1 + $0x60] sm:$0xf]
        %v2763 = vld [vmem:[%s1 + $0x64] sm:$0xf]
        %v2764 = vld [vmem:[%s1 + $0x68] sm:$0xf]
        %v2765 = vld [vmem:[%s1 + $0x6c] sm:$0xf]
        %v2766 = vld [vmem:[%s1 + $0x70] sm:$0xf]
        %v2767 = vld [vmem:[%s1 + $0x74] sm:$0xf]
        %v2768 = vld [vmem:[%s1 + $0x78] sm:$0xf]
        %v2769 = vld [vmem:[%s1 + $0x7c] sm:$0xf]
        %v2770 = vld [vmem:[%s1 + $0x80] sm:$0xf]
        %v2771 = vld [vmem:[%s1 + $0x84] sm:$0xf]
        %v2772 = vld [vmem:[%s1 + $0x88] sm:$0xf]
        %v2773 = vld [vmem:[%s1 + $0x8c] sm:$0xf]
        %v2774 = vld [vmem:[%s1 + $0x90] sm:$0xf]
        %v2775 = vld [vmem:[%s1 + $0x94] sm:$0xf]
        %v2776 = vld [vmem:[%s1 + $0x98] sm:$0xf]
        %v2777 = vld [vmem:[%s1 + $0x9c] sm:$0xf]
        %v2778 = vld [vmem:[%s1 + $0xa0] sm:$0xf]
        %v2779 = vld [vmem:[%s1 + $0xa4] sm:$0xf]
        %v2780 = vld [vmem:[%s1 + $0xa8] sm:$0xf]
        %v2781 = vld [vmem:[%s1 + $0xac] sm:$0xf]
        %v2782 = vld [vmem:[%s1 + $0xb0] sm:$0xf]
        %v2783 = vld [vmem:[%s1 + $0xb4] sm:$0xf]
        %v2784 = vld [vmem:[%s1 + $0xb8] sm:$0xf]
        %v2785 = vld [vmem:[%s1 + $0xbc] sm:$0xf]
        %v2786 = vld [vmem:[%s1 + $0xc0] sm:$0xf]
        %v2787 = vld [vmem:[%s1 + $0xc4] sm:$0xf]
        %v2788 = vld [vmem:[%s1 + $0xc8] sm:$0xf]
        %v2789 = vld [vmem:[%s1 + $0xcc] sm:$0xf]
        %v2790 = vld [vmem:[%s1 + $0xd0] sm:$0xf]
        %v2791 = vld [vmem:[%s1 + $0xd4] sm:$0xf]
        %v2792 = vld [vmem:[%s1 + $0xd8] sm:$0xf]
        %v2793 = vld [vmem:[%s1 + $0xdc] sm:$0xf]
        %v2794 = vld [vmem:[%s1 + $0xe0] sm:$0xf]
        %v2795 = vld [vmem:[%s1 + $0xe4] sm:$0xf]
        %v2796 = vld [vmem:[%s1 + $0xe8] sm:$0xf]
        %v2797 = vld [vmem:[%s1 + $0xec] sm:$0xf]
        %v2798 = vld [vmem:[%s1 + $0xf0] sm:$0xf]
        %v2799 = vld [vmem:[%s1 + $0xf4] sm:$0xf]
        %v2800 = vld [vmem:[%s1 + $0xf8] sm:$0xf]
        %v2801 = vld [vmem:[%s1 + $0xfc] sm:$0xf]
        %v2802 = vld [vmem:[%s1 + $0x100] sm:$0xf]
        %v2803 = vld [vmem:[%s1 + $0x104] sm:$0xf]
        %v2804 = vld [vmem:[%s1 + $0x108] sm:$0xf]
        %v2805 = vld [vmem:[%s1 + $0x10c] sm:$0xf]
        %v2806 = vld [vmem:[%s1 + $0x110] sm:$0xf]
        %v2807 = vld [vmem:[%s1 + $0x114] sm:$0xf]
        %v2808 = vld [vmem:[%s1 + $0x118] sm:$0xf]
        %v2809 = vld [vmem:[%s1 + $0x11c] sm:$0xf]
        %v2810 = vld [vmem:[%s2] sm:$0x1]
        %v2812 = vperm.slane %v2810, 0
        %2815 = vst [vmem:[#allocation1] ss:$9 sm:$0xff] %v2730
        %s2817 = scalar_lea.vmem [#allocation1], 1
        %2818 = vst [vmem:[%s2817] ss:$9 sm:$0xff] %v2731
        %s2820 = scalar_lea.vmem [#allocation1], 2
        %2821 = vst [vmem:[%s2820] ss:$9 sm:$0xff] %v2732
        %s2823 = scalar_lea.vmem [#allocation1], 3
        %2824 = vst [vmem:[%s2823] ss:$9 sm:$0xff] %v2733
        %s2826 = scalar_lea.vmem [#allocation1], 4
        %2827 = vst [vmem:[%s2826] ss:$9 sm:$0xff] %v2734
        %s2829 = scalar_lea.vmem [#allocation1], 5
        %2830 = vst [vmem:[%s2829] ss:$9 sm:$0xff] %v2735
        %s2832 = scalar_lea.vmem [#allocation1], 6
        %2833 = vst [vmem:[%s2832] ss:$9 sm:$0xff] %v2736
        %s2835 = scalar_lea.vmem [#allocation1], 7
        %2836 = vst [vmem:[%s2835] ss:$9 sm:$0xff] %v2737
        %v2837 = vld [vmem:[#allocation1] sm:$0xff]
        %v2838 = vld [vmem:[#allocation1 + $0x9] sm:$0xff]
        %v2839 = vld [vmem:[#allocation1 + $0x12] sm:$0xff]
        %v2840 = vld [vmem:[#allocation1 + $0x1b] sm:$0xff]
        %v2841 = vld [vmem:[#allocation1 + $0x24] sm:$0xff]
        %v2918 = vunpack.c.l.b16 %v2738
        %v2919 = vunpack.c.l.b16 %v2739
        %v2920 = vunpack.c.l.b16 %v2740
        %v2921 = vunpack.c.l.b16 %v2741
        %v2922 = vunpack.c.l.b16 %v2742
        %v2923 = vunpack.c.l.b16 %v2743
        %v2924 = vunpack.c.l.b16 %v2744
        %v2925 = vunpack.c.l.b16 %v2745
        %v2926 = vunpack.c.l.b16 %v2746
        %v2927 = vunpack.c.l.b16 %v2747
        %v2928 = vunpack.c.l.b16 %v2748
        %v2929 = vunpack.c.l.b16 %v2749
        %v2930 = vunpack.c.l.b16 %v2750
        %v2931 = vunpack.c.l.b16 %v2751
        %v2932 = vunpack.c.l.b16 %v2752
        %v2933 = vunpack.c.l.b16 %v2753
        %v2934 = vunpack.c.l.b16 %v2754
        %v2935 = vunpack.c.l.b16 %v2755
        %v2936 = vunpack.c.l.b16 %v2756
        %v2937 = vunpack.c.l.b16 %v2757
        %v2938 = vunpack.c.l.b16 %v2758
        %v2939 = vunpack.c.l.b16 %v2759
        %v2940 = vunpack.c.l.b16 %v2760
        %v2941 = vunpack.c.l.b16 %v2761
        %v2942 = vunpack.c.l.b16 %v2762
        %v2943 = vunpack.c.l.b16 %v2763
        %v2944 = vunpack.c.l.b16 %v2764
        %v2945 = vunpack.c.l.b16 %v2765
        %v2946 = vunpack.c.l.b16 %v2766
        %v2947 = vunpack.c.l.b16 %v2767
        %v2948 = vunpack.c.l.b16 %v2768
        %v2949 = vunpack.c.l.b16 %v2769
        %v2950 = vunpack.c.l.b16 %v2770
        %v2951 = vunpack.c.l.b16 %v2771
        %v2952 = vunpack.c.l.b16 %v2772
        %v2953 = vunpack.c.l.b16 %v2773
        %v2954 = vunpack.c.l.b16 %v2774
        %v2955 = vunpack.c.l.b16 %v2775
        %v2956 = vunpack.c.l.b16 %v2776
        %v2957 = vunpack.c.l.b16 %v2777
        %v2958 = vunpack.c.l.b16 %v2778
        %v2959 = vunpack.c.l.b16 %v2779
        %v2960 = vunpack.c.l.b16 %v2780
        %v2961 = vunpack.c.l.b16 %v2781
        %v2962 = vunpack.c.l.b16 %v2782
        %v2963 = vunpack.c.l.b16 %v2783
        %v2964 = vunpack.c.l.b16 %v2784
        %v2965 = vunpack.c.l.b16 %v2785
        %v2966 = vunpack.c.l.b16 %v2786
        %v2967 = vunpack.c.l.b16 %v2787
        %v2968 = vunpack.c.l.b16 %v2788
        %v2969 = vunpack.c.l.b16 %v2789
        %v2970 = vunpack.c.l.b16 %v2790
        %v2971 = vunpack.c.l.b16 %v2791
        %v2972 = vunpack.c.l.b16 %v2792
        %v2973 = vunpack.c.l.b16 %v2793
        %v2974 = vunpack.c.l.b16 %v2794
        %v2975 = vunpack.c.l.b16 %v2795
        %v2976 = vunpack.c.l.b16 %v2796
        %v2977 = vunpack.c.l.b16 %v2797
        %v2978 = vunpack.c.l.b16 %v2798
        %v2979 = vunpack.c.l.b16 %v2799
        %v2980 = vunpack.c.l.b16 %v2800
        %v2981 = vunpack.c.l.b16 %v2801
        %v2982 = vunpack.c.l.b16 %v2802
        %v2983 = vunpack.c.l.b16 %v2803
        %v2984 = vunpack.c.l.b16 %v2804
        %v2985 = vunpack.c.l.b16 %v2805
        %v2986 = vunpack.c.l.b16 %v2806
        %v2987 = vunpack.c.l.b16 %v2807
        %v2988 = vunpack.c.l.b16 %v2808
        %v2989 = vunpack.c.l.b16 %v2809
        %v2990 = vpack.c.b16 %v2919, %v2918
        %v2991 = vpack.c.b16 %v2921, %v2920
        %v2992 = vpack.c.b16 %v2923, %v2922
        %v2993 = vpack.c.b16 %v2925, %v2924
        %v2994 = vpack.c.b16 %v2927, %v2926
        %v2995 = vpack.c.b16 %v2929, %v2928
        %v2996 = vpack.c.b16 %v2931, %v2930
        %v2997 = vpack.c.b16 %v2933, %v2932
        %v2998 = vpack.c.b16 %v2935, %v2934
        %v2999 = vpack.c.b16 %v2937, %v2936
        %v3000 = vpack.c.b16 %v2939, %v2938
        %v3001 = vpack.c.b16 %v2941, %v2940
        %v3002 = vpack.c.b16 %v2943, %v2942
        %v3003 = vpack.c.b16 %v2945, %v2944
        %v3004 = vpack.c.b16 %v2947, %v2946
        %v3005 = vpack.c.b16 %v2949, %v2948
        %v3006 = vpack.c.b16 %v2951, %v2950
        %v3007 = vpack.c.b16 %v2953, %v2952
        %v3008 = vpack.c.b16 %v2955, %v2954
        %v3009 = vpack.c.b16 %v2957, %v2956
        %v3010 = vpack.c.b16 %v2959, %v2958
        %v3011 = vpack.c.b16 %v2961, %v2960
        %v3012 = vpack.c.b16 %v2963, %v2962
        %v3013 = vpack.c.b16 %v2965, %v2964
        %v3014 = vpack.c.b16 %v2967, %v2966
        %v3015 = vpack.c.b16 %v2969, %v2968
        %v3016 = vpack.c.b16 %v2971, %v2970
        %v3017 = vpack.c.b16 %v2973, %v2972
        %v3018 = vpack.c.b16 %v2975, %v2974
        %v3019 = vpack.c.b16 %v2977, %v2976
        %v3020 = vpack.c.b16 %v2979, %v2978
        %v3021 = vpack.c.b16 %v2981, %v2980
        %v3022 = vpack.c.b16 %v2983, %v2982
        %v3023 = vpack.c.b16 %v2985, %v2984
        %v3024 = vpack.c.b16 %v2987, %v2986
        %v3025 = vpack.c.b16 %v2989, %v2988
        %v3062 = vsel %vm770, %v2841, 0
        %3064 = vmatpush.bf16.msra.mxu0 %v2997
        %3065 = vmatpush.bf16.msra.mxu0 %v2996
        %3066 = vmatpush.bf16.msra.mxu0 %v2995
        %3067 = vmatpush.bf16.msra.mxu0 %v2994
        %3068 = vmatpush.bf16.msra.mxu0 %v2993
        %3069 = vmatpush.bf16.msra.mxu0 %v2992
        %3070 = vmatpush.bf16.msra.mxu0 %v2991
        %3071 = vmatpush.bf16.msra.mxu0 %v2990
        %3072 = vmatmul.bf16.gmra.mxu0 %v2837
        %v3073 = vpop.f32.mrf.mxu0
        %v3074 = vadd.f32 %v2812, %v3073
        %v3075 = vpop.f32.mrf.mxu0
        %v3076 = vadd.f32 %v2812, %v3075
        %3077 = vdwg.mxu0
        %3078 = vmatpush.bf16.msra.mxu0 %v3005
        %3079 = vmatpush.bf16.msra.mxu0 %v3004
        %3080 = vmatpush.bf16.msra.mxu0 %v3003
        %3081 = vmatpush.bf16.msra.mxu0 %v3002
        %3082 = vmatpush.bf16.msra.mxu0 %v3001
        %3083 = vmatpush.bf16.msra.mxu0 %v3000
        %3084 = vmatpush.bf16.msra.mxu0 %v2999
        %3085 = vmatpush.bf16.msra.mxu0 %v2998
        %3086 = vmatmul.bf16.gmra.mxu0 %v2838
        %v3087 = vpop.f32.mrf.mxu0
        %v3088 = vadd.f32 %v3074, %v3087
        %v3089 = vpop.f32.mrf.mxu0
        %v3090 = vadd.f32 %v3076, %v3089
        %3091 = vdwg.mxu0
        %3092 = vmatpush.bf16.msra.mxu0 %v3013
        %3093 = vmatpush.bf16.msra.mxu0 %v3012
        %3094 = vmatpush.bf16.msra.mxu0 %v3011
        %3095 = vmatpush.bf16.msra.mxu0 %v3010
        %3096 = vmatpush.bf16.msra.mxu0 %v3009
        %3097 = vmatpush.bf16.msra.mxu0 %v3008
        %3098 = vmatpush.bf16.msra.mxu0 %v3007
        %3099 = vmatpush.bf16.msra.mxu0 %v3006
        %3100 = vmatmul.bf16.gmra.mxu0 %v2839
        %v3101 = vpop.f32.mrf.mxu0
        %v3102 = vadd.f32 %v3088, %v3101
        %v3103 = vpop.f32.mrf.mxu0
        %v3104 = vadd.f32 %v3090, %v3103
        %3105 = vdwg.mxu0
        %3106 = vmatpush.bf16.msra.mxu0 %v3021
        %3107 = vmatpush.bf16.msra.mxu0 %v3020
        %3108 = vmatpush.bf16.msra.mxu0 %v3019
        %3109 = vmatpush.bf16.msra.mxu0 %v3018
        %3110 = vmatpush.bf16.msra.mxu0 %v3017
        %3111 = vmatpush.bf16.msra.mxu0 %v3016
        %3112 = vmatpush.bf16.msra.mxu0 %v3015
        %3113 = vmatpush.bf16.msra.mxu0 %v3014
        %3114 = vmatmul.bf16.gmra.mxu0 %v2840
        %v3115 = vpop.f32.mrf.mxu0
        %v3116 = vadd.f32 %v3102, %v3115
        %v3117 = vpop.f32.mrf.mxu0
        %v3118 = vadd.f32 %v3104, %v3117
        %3119 = vdwg.mxu0
        %3120 = vmatpush.bf16.msra.mxu0 0
        %3121 = vmatpush.bf16.msra.mxu0 0
        %3122 = vmatpush.bf16.msra.mxu0 0
        %3123 = vmatpush.bf16.msra.mxu0 0
        %3124 = vmatpush.bf16.msra.mxu0 %v3025
        %3125 = vmatpush.bf16.msra.mxu0 %v3024
        %3126 = vmatpush.bf16.msra.mxu0 %v3023
        %3127 = vmatpush.bf16.msra.mxu0 %v3022
        %3128 = vmatmul.bf16.gmra.mxu0 %v3062
        %v3129 = vpop.f32.mrf.mxu0
        %v3130 = vadd.f32 %v3116, %v3129
        %v3131 = vpop.f32.mrf.mxu0
        %v3132 = vadd.f32 %v3118, %v3131
        %3133 = vdwg.mxu0
        %v3134 = vmax.f32 %v3130, 0.0
        %v3135 = vmax.f32 %v3132, 0.0
        %v3136 = vpack.c.bf16 %v3135, %v3134
        %v3137 = vld [vmem:[#allocation2] sm:$0xff]
        %v3138 = vld [vmem:[#allocation2 + $0x8] sm:$0xff]
        %v3139 = vld [vmem:[#allocation2 + $0x10] sm:$0xff]
        %v3140 = vld [vmem:[#allocation2 + $0x18] sm:$0xff]
        %v3141 = vld [vmem:[#allocation2 + $0x20] sm:$0xff]
        %v3142 = vld [vmem:[#allocation2 + $0x28] sm:$0xff]
        %v3143 = vld [vmem:[#allocation2 + $0x30] sm:$0xff]
        %v3144 = vld [vmem:[#allocation2 + $0x38] sm:$0xff]
        %v3145 = vld [vmem:[#allocation2 + $0x40] sm:$0xff]
        %v3146 = vld [vmem:[#allocation2 + $0x48] sm:$0xff]
        %v3147 = vld [vmem:[#allocation2 + $0x50] sm:$0xff]
        %v3148 = vld [vmem:[#allocation2 + $0x58] sm:$0xff]
        %v3149 = vld [vmem:[#allocation2 + $0x60] sm:$0xff]
        %v3150 = vld [vmem:[#allocation2 + $0x68] sm:$0xff]
        %v3151 = vld [vmem:[#allocation2 + $0x70] sm:$0xff]
        %v3152 = vld [vmem:[#allocation2 + $0x78] sm:$0xff]
        %s3153 = scalar_lea.vmem %s412, 768
        %v3154 = vld [vmem:[%s3153] sm:$0xff]
        %v3155 = vld [vmem:[%s3153 + $0x8] sm:$0xff]
        %v3156 = vld [vmem:[%s3153 + $0x10] sm:$0xff]
        %v3157 = vld [vmem:[%s3153 + $0x18] sm:$0xff]
        %v3158 = vld [vmem:[%s3153 + $0x20] sm:$0xff]
        %v3159 = vld [vmem:[%s3153 + $0x28] sm:$0xff]
        %v3160 = vld [vmem:[%s3153 + $0x30] sm:$0xff]
        %v3161 = vld [vmem:[%s3153 + $0x38] sm:$0xff]
        %v3162 = vld [vmem:[%s3153 + $0x40] sm:$0xff]
        %v3163 = vld [vmem:[%s3153 + $0x48] sm:$0xff]
        %v3164 = vld [vmem:[%s3153 + $0x50] sm:$0xff]
        %v3165 = vld [vmem:[%s3153 + $0x58] sm:$0xff]
        %v3166 = vld [vmem:[%s3153 + $0x60] sm:$0xff]
        %v3167 = vld [vmem:[%s3153 + $0x68] sm:$0xff]
        %v3168 = vld [vmem:[%s3153 + $0x70] sm:$0xff]
        %v3169 = vld [vmem:[%s3153 + $0x78] sm:$0xff]
        %v3170 = vld [vmem:[%s3153 + $0x80] sm:$0xff]
        %v3171 = vld [vmem:[%s3153 + $0x88] sm:$0xff]
        %v3172 = vld [vmem:[%s3153 + $0x90] sm:$0xff]
        %v3173 = vld [vmem:[%s3153 + $0x98] sm:$0xff]
        %v3174 = vld [vmem:[%s3153 + $0xa0] sm:$0xff]
        %v3175 = vld [vmem:[%s3153 + $0xa8] sm:$0xff]
        %v3176 = vld [vmem:[%s3153 + $0xb0] sm:$0xff]
        %v3177 = vld [vmem:[%s3153 + $0xb8] sm:$0xff]
        %v3178 = vld [vmem:[%s3153 + $0xc0] sm:$0xff]
        %v3179 = vld [vmem:[%s3153 + $0xc8] sm:$0xff]
        %v3180 = vld [vmem:[%s3153 + $0xd0] sm:$0xff]
        %v3181 = vld [vmem:[%s3153 + $0xd8] sm:$0xff]
        %v3182 = vld [vmem:[%s3153 + $0xe0] sm:$0xff]
        %v3183 = vld [vmem:[%s3153 + $0xe8] sm:$0xff]
        %v3184 = vld [vmem:[%s3153 + $0xf0] sm:$0xff]
        %v3185 = vld [vmem:[%s3153 + $0xf8] sm:$0xff]
        %v3218 = vunpack.c.l.b16 %v3154
        %v3219 = vunpack.c.h.b16 %v3154
        %v3220 = vunpack.c.l.b16 %v3155
        %v3221 = vunpack.c.h.b16 %v3155
        %v3222 = vunpack.c.l.b16 %v3156
        %v3223 = vunpack.c.h.b16 %v3156
        %v3224 = vunpack.c.l.b16 %v3157
        %v3225 = vunpack.c.h.b16 %v3157
        %v3226 = vunpack.c.l.b16 %v3158
        %v3227 = vunpack.c.h.b16 %v3158
        %v3228 = vunpack.c.l.b16 %v3159
        %v3229 = vunpack.c.h.b16 %v3159
        %v3230 = vunpack.c.l.b16 %v3160
        %v3231 = vunpack.c.h.b16 %v3160
        %v3232 = vunpack.c.l.b16 %v3161
        %v3233 = vunpack.c.h.b16 %v3161
        %v3234 = vunpack.c.l.b16 %v3162
        %v3235 = vunpack.c.h.b16 %v3162
        %v3236 = vunpack.c.l.b16 %v3163
        %v3237 = vunpack.c.h.b16 %v3163
        %v3238 = vunpack.c.l.b16 %v3164
        %v3239 = vunpack.c.h.b16 %v3164
        %v3240 = vunpack.c.l.b16 %v3165
        %v3241 = vunpack.c.h.b16 %v3165
        %v3242 = vunpack.c.l.b16 %v3166
        %v3243 = vunpack.c.h.b16 %v3166
        %v3244 = vunpack.c.l.b16 %v3167
        %v3245 = vunpack.c.h.b16 %v3167
        %v3246 = vunpack.c.l.b16 %v3168
        %v3247 = vunpack.c.h.b16 %v3168
        %v3248 = vunpack.c.l.b16 %v3169
        %v3249 = vunpack.c.h.b16 %v3169
        %v3250 = vunpack.c.l.b16 %v3170
        %v3251 = vunpack.c.h.b16 %v3170
        %v3252 = vunpack.c.l.b16 %v3171
        %v3253 = vunpack.c.h.b16 %v3171
        %v3254 = vunpack.c.l.b16 %v3172
        %v3255 = vunpack.c.h.b16 %v3172
        %v3256 = vunpack.c.l.b16 %v3173
        %v3257 = vunpack.c.h.b16 %v3173
        %v3258 = vunpack.c.l.b16 %v3174
        %v3259 = vunpack.c.h.b16 %v3174
        %v3260 = vunpack.c.l.b16 %v3175
        %v3261 = vunpack.c.h.b16 %v3175
        %v3262 = vunpack.c.l.b16 %v3176
        %v3263 = vunpack.c.h.b16 %v3176
        %v3264 = vunpack.c.l.b16 %v3177
        %v3265 = vunpack.c.h.b16 %v3177
        %v3266 = vunpack.c.l.b16 %v3178
        %v3267 = vunpack.c.h.b16 %v3178
        %v3268 = vunpack.c.l.b16 %v3179
        %v3269 = vunpack.c.h.b16 %v3179
        %v3270 = vunpack.c.l.b16 %v3180
        %v3271 = vunpack.c.h.b16 %v3180
        %v3272 = vunpack.c.l.b16 %v3181
        %v3273 = vunpack.c.h.b16 %v3181
        %v3274 = vunpack.c.l.b16 %v3182
        %v3275 = vunpack.c.h.b16 %v3182
        %v3276 = vunpack.c.l.b16 %v3183
        %v3277 = vunpack.c.h.b16 %v3183
        %v3278 = vunpack.c.l.b16 %v3184
        %v3279 = vunpack.c.h.b16 %v3184
        %v3280 = vunpack.c.l.b16 %v3185
        %v3281 = vunpack.c.h.b16 %v3185
        %v3282 = vpack.c.b16 %v3226, %v3218
        %v3283 = vpack.c.b16 %v3227, %v3219
        %v3284 = vpack.c.b16 %v3228, %v3220
        %v3285 = vpack.c.b16 %v3229, %v3221
        %v3286 = vpack.c.b16 %v3230, %v3222
        %v3287 = vpack.c.b16 %v3231, %v3223
        %v3288 = vpack.c.b16 %v3232, %v3224
        %v3289 = vpack.c.b16 %v3233, %v3225
        %v3290 = vpack.c.b16 %v3242, %v3234
        %v3291 = vpack.c.b16 %v3243, %v3235
        %v3292 = vpack.c.b16 %v3244, %v3236
        %v3293 = vpack.c.b16 %v3245, %v3237
        %v3294 = vpack.c.b16 %v3246, %v3238
        %v3295 = vpack.c.b16 %v3247, %v3239
        %v3296 = vpack.c.b16 %v3248, %v3240
        %v3297 = vpack.c.b16 %v3249, %v3241
        %v3298 = vpack.c.b16 %v3258, %v3250
        %v3299 = vpack.c.b16 %v3259, %v3251
        %v3300 = vpack.c.b16 %v3260, %v3252
        %v3301 = vpack.c.b16 %v3261, %v3253
        %v3302 = vpack.c.b16 %v3262, %v3254
        %v3303 = vpack.c.b16 %v3263, %v3255
        %v3304 = vpack.c.b16 %v3264, %v3256
        %v3305 = vpack.c.b16 %v3265, %v3257
        %v3306 = vpack.c.b16 %v3274, %v3266
        %v3307 = vpack.c.b16 %v3275, %v3267
        %v3308 = vpack.c.b16 %v3276, %v3268
        %v3309 = vpack.c.b16 %v3277, %v3269
        %v3310 = vpack.c.b16 %v3278, %v3270
        %v3311 = vpack.c.b16 %v3279, %v3271
        %v3312 = vpack.c.b16 %v3280, %v3272
        %v3313 = vpack.c.b16 %v3281, %v3273
        %v3347 = vsel %vm770, %v3136, 0
        %3349 = vmatpush.bf16.msra.mxu0 0
        %3350 = vmatpush.bf16.msra.mxu0 0
        %3351 = vmatpush.bf16.msra.mxu0 0
        %3352 = vmatpush.bf16.msra.mxu0 0
        %3353 = vmatpush.bf16.msra.mxu0 %v3306
        %3354 = vmatpush.bf16.msra.mxu0 %v3298
        %3355 = vmatpush.bf16.msra.mxu0 %v3290
        %3356 = vmatpush.bf16.msra.mxu0 %v3282
        %3357 = vmatmul.bf16.gmra.mxu0 %v3347
        %v3358 = vpop.f32.mrf.mxu0
        %v3359 = vadd.f32 0.0, %v3358
        %v3360 = vpop.f32.mrf.mxu0
        %v3361 = vadd.f32 0.0, %v3360
        %3362 = vdwg.mxu0
        %3363 = vmatpush.bf16.msra.mxu0 0
        %3364 = vmatpush.bf16.msra.mxu0 0
        %3365 = vmatpush.bf16.msra.mxu0 0
        %3366 = vmatpush.bf16.msra.mxu0 0
        %3367 = vmatpush.bf16.msra.mxu0 %v3307
        %3368 = vmatpush.bf16.msra.mxu0 %v3299
        %3369 = vmatpush.bf16.msra.mxu0 %v3291
        %3370 = vmatpush.bf16.msra.mxu0 %v3283
        %3371 = vmatmul.bf16.gmra.mxu0 %v3347
        %v3372 = vpop.f32.mrf.mxu0
        %v3373 = vadd.f32 0.0, %v3372
        %v3374 = vpop.f32.mrf.mxu0
        %v3375 = vadd.f32 0.0, %v3374
        %3376 = vdwg.mxu0
        %3377 = vmatpush.bf16.msra.mxu0 0
        %3378 = vmatpush.bf16.msra.mxu0 0
        %3379 = vmatpush.bf16.msra.mxu0 0
        %3380 = vmatpush.bf16.msra.mxu0 0
        %3381 = vmatpush.bf16.msra.mxu0 %v3308
        %3382 = vmatpush.bf16.msra.mxu0 %v3300
        %3383 = vmatpush.bf16.msra.mxu0 %v3292
        %3384 = vmatpush.bf16.msra.mxu0 %v3284
        %3385 = vmatmul.bf16.gmra.mxu0 %v3347
        %v3386 = vpop.f32.mrf.mxu0
        %v3387 = vadd.f32 0.0, %v3386
        %v3388 = vpop.f32.mrf.mxu0
        %v3389 = vadd.f32 0.0, %v3388
        %3390 = vdwg.mxu0
        %3391 = vmatpush.bf16.msra.mxu0 0
        %3392 = vmatpush.bf16.msra.mxu0 0
        %3393 = vmatpush.bf16.msra.mxu0 0
        %3394 = vmatpush.bf16.msra.mxu0 0
        %3395 = vmatpush.bf16.msra.mxu0 %v3309
        %3396 = vmatpush.bf16.msra.mxu0 %v3301
        %3397 = vmatpush.bf16.msra.mxu0 %v3293
        %3398 = vmatpush.bf16.msra.mxu0 %v3285
        %3399 = vmatmul.bf16.gmra.mxu0 %v3347
        %v3400 = vpop.f32.mrf.mxu0
        %v3401 = vadd.f32 0.0, %v3400
        %v3402 = vpop.f32.mrf.mxu0
        %v3403 = vadd.f32 0.0, %v3402
        %3404 = vdwg.mxu0
        %3405 = vmatpush.bf16.msra.mxu0 0
        %3406 = vmatpush.bf16.msra.mxu0 0
        %3407 = vmatpush.bf16.msra.mxu0 0
        %3408 = vmatpush.bf16.msra.mxu0 0
        %3409 = vmatpush.bf16.msra.mxu0 %v3310
        %3410 = vmatpush.bf16.msra.mxu0 %v3302
        %3411 = vmatpush.bf16.msra.mxu0 %v3294
        %3412 = vmatpush.bf16.msra.mxu0 %v3286
        %3413 = vmatmul.bf16.gmra.mxu0 %v3347
        %v3414 = vpop.f32.mrf.mxu0
        %v3415 = vadd.f32 0.0, %v3414
        %v3416 = vpop.f32.mrf.mxu0
        %v3417 = vadd.f32 0.0, %v3416
        %3418 = vdwg.mxu0
        %3419 = vmatpush.bf16.msra.mxu0 0
        %3420 = vmatpush.bf16.msra.mxu0 0
        %3421 = vmatpush.bf16.msra.mxu0 0
        %3422 = vmatpush.bf16.msra.mxu0 0
        %3423 = vmatpush.bf16.msra.mxu0 %v3311
        %3424 = vmatpush.bf16.msra.mxu0 %v3303
        %3425 = vmatpush.bf16.msra.mxu0 %v3295
        %3426 = vmatpush.bf16.msra.mxu0 %v3287
        %3427 = vmatmul.bf16.gmra.mxu0 %v3347
        %v3428 = vpop.f32.mrf.mxu0
        %v3429 = vadd.f32 0.0, %v3428
        %v3430 = vpop.f32.mrf.mxu0
        %v3431 = vadd.f32 0.0, %v3430
        %3432 = vdwg.mxu0
        %3433 = vmatpush.bf16.msra.mxu0 0
        %3434 = vmatpush.bf16.msra.mxu0 0
        %3435 = vmatpush.bf16.msra.mxu0 0
        %3436 = vmatpush.bf16.msra.mxu0 0
        %3437 = vmatpush.bf16.msra.mxu0 %v3312
        %3438 = vmatpush.bf16.msra.mxu0 %v3304
        %3439 = vmatpush.bf16.msra.mxu0 %v3296
        %3440 = vmatpush.bf16.msra.mxu0 %v3288
        %3441 = vmatmul.bf16.gmra.mxu0 %v3347
        %v3442 = vpop.f32.mrf.mxu0
        %v3443 = vadd.f32 0.0, %v3442
        %v3444 = vpop.f32.mrf.mxu0
        %v3445 = vadd.f32 0.0, %v3444
        %3446 = vdwg.mxu0
        %3447 = vmatpush.bf16.msra.mxu0 0
        %3448 = vmatpush.bf16.msra.mxu0 0
        %3449 = vmatpush.bf16.msra.mxu0 0
        %3450 = vmatpush.bf16.msra.mxu0 0
        %3451 = vmatpush.bf16.msra.mxu0 %v3313
        %3452 = vmatpush.bf16.msra.mxu0 %v3305
        %3453 = vmatpush.bf16.msra.mxu0 %v3297
        %3454 = vmatpush.bf16.msra.mxu0 %v3289
        %3455 = vmatmul.bf16.gmra.mxu0 %v3347
        %v3456 = vpop.f32.mrf.mxu0
        %v3457 = vadd.f32 0.0, %v3456
        %v3458 = vpop.f32.mrf.mxu0
        %v3459 = vadd.f32 0.0, %v3458
        %3460 = vdwg.mxu0
        %v3461 = vadd.f32 %v3137, %v3359
        %v3462 = vadd.f32 %v3138, %v3373
        %v3463 = vadd.f32 %v3139, %v3387
        %v3464 = vadd.f32 %v3140, %v3401
        %v3465 = vadd.f32 %v3141, %v3415
        %v3466 = vadd.f32 %v3142, %v3429
        %v3467 = vadd.f32 %v3143, %v3443
        %v3468 = vadd.f32 %v3144, %v3457
        %v3469 = vadd.f32 %v3145, %v3361
        %v3470 = vadd.f32 %v3146, %v3375
        %v3471 = vadd.f32 %v3147, %v3389
        %v3472 = vadd.f32 %v3148, %v3403
        %v3473 = vadd.f32 %v3149, %v3417
        %v3474 = vadd.f32 %v3150, %v3431
        %v3475 = vadd.f32 %v3151, %v3445
        %v3476 = vadd.f32 %v3152, %v3459
        %3477 = vst [vmem:[#allocation2] sm:$0xff] %v3461
        %3478 = vst [vmem:[#allocation2 + $0x8] sm:$0xff] %v3462
        %3479 = vst [vmem:[#allocation2 + $0x10] sm:$0xff] %v3463
        %3480 = vst [vmem:[#allocation2 + $0x18] sm:$0xff] %v3464
        %3481 = vst [vmem:[#allocation2 + $0x20] sm:$0xff] %v3465
        %3482 = vst [vmem:[#allocation2 + $0x28] sm:$0xff] %v3466
        %3483 = vst [vmem:[#allocation2 + $0x30] sm:$0xff] %v3467
        %3484 = vst [vmem:[#allocation2 + $0x38] sm:$0xff] %v3468
        %3485 = vst [vmem:[#allocation2 + $0x40] sm:$0xff] %v3469
        %3486 = vst [vmem:[#allocation2 + $0x48] sm:$0xff] %v3470
        %3487 = vst [vmem:[#allocation2 + $0x50] sm:$0xff] %v3471
        %3488 = vst [vmem:[#allocation2 + $0x58] sm:$0xff] %v3472
        %3489 = vst [vmem:[#allocation2 + $0x60] sm:$0xff] %v3473
        %3490 = vst [vmem:[#allocation2 + $0x68] sm:$0xff] %v3474
        %3491 = vst [vmem:[#allocation2 + $0x70] sm:$0xff] %v3475
        %3492 = vst [vmem:[#allocation2 + $0x78] sm:$0xff] %v3476
        %s3493 = scalar_lea.vmem %s372, 160 [#allocation3]
        %v3494 = vld [vmem:[%s3493] sm:$0x1f]
        %v3495 = vld [vmem:[%s3493 + $0x5] sm:$0x1f]
        %v3496 = vld [vmem:[%s3493 + $0xa] sm:$0x1f]
        %v3497 = vld [vmem:[%s3493 + $0xf] sm:$0x1f]
        %v3498 = vld [vmem:[%s3493 + $0x14] sm:$0x1f]
        %v3499 = vld [vmem:[%s3493 + $0x19] sm:$0x1f]
        %v3500 = vld [vmem:[%s3493 + $0x1e] sm:$0x1f]
        %v3501 = vld [vmem:[%s3493 + $0x23] sm:$0x1f]
        %v3502 = vld [vmem:[%s1] sm:$0xf]
        %v3503 = vld [vmem:[%s1 + $0x4] sm:$0xf]
        %v3504 = vld [vmem:[%s1 + $0x8] sm:$0xf]
        %v3505 = vld [vmem:[%s1 + $0xc] sm:$0xf]
        %v3506 = vld [vmem:[%s1 + $0x10] sm:$0xf]
        %v3507 = vld [vmem:[%s1 + $0x14] sm:$0xf]
        %v3508 = vld [vmem:[%s1 + $0x18] sm:$0xf]
        %v3509 = vld [vmem:[%s1 + $0x1c] sm:$0xf]
        %v3510 = vld [vmem:[%s1 + $0x20] sm:$0xf]
        %v3511 = vld [vmem:[%s1 + $0x24] sm:$0xf]
        %v3512 = vld [vmem:[%s1 + $0x28] sm:$0xf]
        %v3513 = vld [vmem:[%s1 + $0x2c] sm:$0xf]
        %v3514 = vld [vmem:[%s1 + $0x30] sm:$0xf]
        %v3515 = vld [vmem:[%s1 + $0x34] sm:$0xf]
        %v3516 = vld [vmem:[%s1 + $0x38] sm:$0xf]
        %v3517 = vld [vmem:[%s1 + $0x3c] sm:$0xf]
        %v3518 = vld [vmem:[%s1 + $0x40] sm:$0xf]
        %v3519 = vld [vmem:[%s1 + $0x44] sm:$0xf]
        %v3520 = vld [vmem:[%s1 + $0x48] sm:$0xf]
        %v3521 = vld [vmem:[%s1 + $0x4c] sm:$0xf]
        %v3522 = vld [vmem:[%s1 + $0x50] sm:$0xf]
        %v3523 = vld [vmem:[%s1 + $0x54] sm:$0xf]
        %v3524 = vld [vmem:[%s1 + $0x58] sm:$0xf]
        %v3525 = vld [vmem:[%s1 + $0x5c] sm:$0xf]
        %v3526 = vld [vmem:[%s1 + $0x60] sm:$0xf]
        %v3527 = vld [vmem:[%s1 + $0x64] sm:$0xf]
        %v3528 = vld [vmem:[%s1 + $0x68] sm:$0xf]
        %v3529 = vld [vmem:[%s1 + $0x6c] sm:$0xf]
        %v3530 = vld [vmem:[%s1 + $0x70] sm:$0xf]
        %v3531 = vld [vmem:[%s1 + $0x74] sm:$0xf]
        %v3532 = vld [vmem:[%s1 + $0x78] sm:$0xf]
        %v3533 = vld [vmem:[%s1 + $0x7c] sm:$0xf]
        %v3534 = vld [vmem:[%s1 + $0x80] sm:$0xf]
        %v3535 = vld [vmem:[%s1 + $0x84] sm:$0xf]
        %v3536 = vld [vmem:[%s1 + $0x88] sm:$0xf]
        %v3537 = vld [vmem:[%s1 + $0x8c] sm:$0xf]
        %v3538 = vld [vmem:[%s1 + $0x90] sm:$0xf]
        %v3539 = vld [vmem:[%s1 + $0x94] sm:$0xf]
        %v3540 = vld [vmem:[%s1 + $0x98] sm:$0xf]
        %v3541 = vld [vmem:[%s1 + $0x9c] sm:$0xf]
        %v3542 = vld [vmem:[%s1 + $0xa0] sm:$0xf]
        %v3543 = vld [vmem:[%s1 + $0xa4] sm:$0xf]
        %v3544 = vld [vmem:[%s1 + $0xa8] sm:$0xf]
        %v3545 = vld [vmem:[%s1 + $0xac] sm:$0xf]
        %v3546 = vld [vmem:[%s1 + $0xb0] sm:$0xf]
        %v3547 = vld [vmem:[%s1 + $0xb4] sm:$0xf]
        %v3548 = vld [vmem:[%s1 + $0xb8] sm:$0xf]
        %v3549 = vld [vmem:[%s1 + $0xbc] sm:$0xf]
        %v3550 = vld [vmem:[%s1 + $0xc0] sm:$0xf]
        %v3551 = vld [vmem:[%s1 + $0xc4] sm:$0xf]
        %v3552 = vld [vmem:[%s1 + $0xc8] sm:$0xf]
        %v3553 = vld [vmem:[%s1 + $0xcc] sm:$0xf]
        %v3554 = vld [vmem:[%s1 + $0xd0] sm:$0xf]
        %v3555 = vld [vmem:[%s1 + $0xd4] sm:$0xf]
        %v3556 = vld [vmem:[%s1 + $0xd8] sm:$0xf]
        %v3557 = vld [vmem:[%s1 + $0xdc] sm:$0xf]
        %v3558 = vld [vmem:[%s1 + $0xe0] sm:$0xf]
        %v3559 = vld [vmem:[%s1 + $0xe4] sm:$0xf]
        %v3560 = vld [vmem:[%s1 + $0xe8] sm:$0xf]
        %v3561 = vld [vmem:[%s1 + $0xec] sm:$0xf]
        %v3562 = vld [vmem:[%s1 + $0xf0] sm:$0xf]
        %v3563 = vld [vmem:[%s1 + $0xf4] sm:$0xf]
        %v3564 = vld [vmem:[%s1 + $0xf8] sm:$0xf]
        %v3565 = vld [vmem:[%s1 + $0xfc] sm:$0xf]
        %v3566 = vld [vmem:[%s1 + $0x100] sm:$0xf]
        %v3567 = vld [vmem:[%s1 + $0x104] sm:$0xf]
        %v3568 = vld [vmem:[%s1 + $0x108] sm:$0xf]
        %v3569 = vld [vmem:[%s1 + $0x10c] sm:$0xf]
        %v3570 = vld [vmem:[%s1 + $0x110] sm:$0xf]
        %v3571 = vld [vmem:[%s1 + $0x114] sm:$0xf]
        %v3572 = vld [vmem:[%s1 + $0x118] sm:$0xf]
        %v3573 = vld [vmem:[%s1 + $0x11c] sm:$0xf]
        %v3574 = vld [vmem:[%s2] sm:$0x1]
        %v3576 = vperm.slane %v3574, 0
        %3579 = vst [vmem:[#allocation1] ss:$9 sm:$0xff] %v3494
        %s3581 = scalar_lea.vmem [#allocation1], 1
        %3582 = vst [vmem:[%s3581] ss:$9 sm:$0xff] %v3495
        %s3584 = scalar_lea.vmem [#allocation1], 2
        %3585 = vst [vmem:[%s3584] ss:$9 sm:$0xff] %v3496
        %s3587 = scalar_lea.vmem [#allocation1], 3
        %3588 = vst [vmem:[%s3587] ss:$9 sm:$0xff] %v3497
        %s3590 = scalar_lea.vmem [#allocation1], 4
        %3591 = vst [vmem:[%s3590] ss:$9 sm:$0xff] %v3498
        %s3593 = scalar_lea.vmem [#allocation1], 5
        %3594 = vst [vmem:[%s3593] ss:$9 sm:$0xff] %v3499
        %s3596 = scalar_lea.vmem [#allocation1], 6
        %3597 = vst [vmem:[%s3596] ss:$9 sm:$0xff] %v3500
        %s3599 = scalar_lea.vmem [#allocation1], 7
        %3600 = vst [vmem:[%s3599] ss:$9 sm:$0xff] %v3501
        %v3601 = vld [vmem:[#allocation1] sm:$0xff]
        %v3602 = vld [vmem:[#allocation1 + $0x9] sm:$0xff]
        %v3603 = vld [vmem:[#allocation1 + $0x12] sm:$0xff]
        %v3604 = vld [vmem:[#allocation1 + $0x1b] sm:$0xff]
        %v3605 = vld [vmem:[#allocation1 + $0x24] sm:$0xff]
        %v3682 = vunpack.c.l.b16 %v3502
        %v3683 = vunpack.c.l.b16 %v3503
        %v3684 = vunpack.c.l.b16 %v3504
        %v3685 = vunpack.c.l.b16 %v3505
        %v3686 = vunpack.c.l.b16 %v3506
        %v3687 = vunpack.c.l.b16 %v3507
        %v3688 = vunpack.c.l.b16 %v3508
        %v3689 = vunpack.c.l.b16 %v3509
        %v3690 = vunpack.c.l.b16 %v3510
        %v3691 = vunpack.c.l.b16 %v3511
        %v3692 = vunpack.c.l.b16 %v3512
        %v3693 = vunpack.c.l.b16 %v3513
        %v3694 = vunpack.c.l.b16 %v3514
        %v3695 = vunpack.c.l.b16 %v3515
        %v3696 = vunpack.c.l.b16 %v3516
        %v3697 = vunpack.c.l.b16 %v3517
        %v3698 = vunpack.c.l.b16 %v3518
        %v3699 = vunpack.c.l.b16 %v3519
        %v3700 = vunpack.c.l.b16 %v3520
        %v3701 = vunpack.c.l.b16 %v3521
        %v3702 = vunpack.c.l.b16 %v3522
        %v3703 = vunpack.c.l.b16 %v3523
        %v3704 = vunpack.c.l.b16 %v3524
        %v3705 = vunpack.c.l.b16 %v3525
        %v3706 = vunpack.c.l.b16 %v3526
        %v3707 = vunpack.c.l.b16 %v3527
        %v3708 = vunpack.c.l.b16 %v3528
        %v3709 = vunpack.c.l.b16 %v3529
        %v3710 = vunpack.c.l.b16 %v3530
        %v3711 = vunpack.c.l.b16 %v3531
        %v3712 = vunpack.c.l.b16 %v3532
        %v3713 = vunpack.c.l.b16 %v3533
        %v3714 = vunpack.c.l.b16 %v3534
        %v3715 = vunpack.c.l.b16 %v3535
        %v3716 = vunpack.c.l.b16 %v3536
        %v3717 = vunpack.c.l.b16 %v3537
        %v3718 = vunpack.c.l.b16 %v3538
        %v3719 = vunpack.c.l.b16 %v3539
        %v3720 = vunpack.c.l.b16 %v3540
        %v3721 = vunpack.c.l.b16 %v3541
        %v3722 = vunpack.c.l.b16 %v3542
        %v3723 = vunpack.c.l.b16 %v3543
        %v3724 = vunpack.c.l.b16 %v3544
        %v3725 = vunpack.c.l.b16 %v3545
        %v3726 = vunpack.c.l.b16 %v3546
        %v3727 = vunpack.c.l.b16 %v3547
        %v3728 = vunpack.c.l.b16 %v3548
        %v3729 = vunpack.c.l.b16 %v3549
        %v3730 = vunpack.c.l.b16 %v3550
        %v3731 = vunpack.c.l.b16 %v3551
        %v3732 = vunpack.c.l.b16 %v3552
        %v3733 = vunpack.c.l.b16 %v3553
        %v3734 = vunpack.c.l.b16 %v3554
        %v3735 = vunpack.c.l.b16 %v3555
        %v3736 = vunpack.c.l.b16 %v3556
        %v3737 = vunpack.c.l.b16 %v3557
        %v3738 = vunpack.c.l.b16 %v3558
        %v3739 = vunpack.c.l.b16 %v3559
        %v3740 = vunpack.c.l.b16 %v3560
        %v3741 = vunpack.c.l.b16 %v3561
        %v3742 = vunpack.c.l.b16 %v3562
        %v3743 = vunpack.c.l.b16 %v3563
        %v3744 = vunpack.c.l.b16 %v3564
        %v3745 = vunpack.c.l.b16 %v3565
        %v3746 = vunpack.c.l.b16 %v3566
        %v3747 = vunpack.c.l.b16 %v3567
        %v3748 = vunpack.c.l.b16 %v3568
        %v3749 = vunpack.c.l.b16 %v3569
        %v3750 = vunpack.c.l.b16 %v3570
        %v3751 = vunpack.c.l.b16 %v3571
        %v3752 = vunpack.c.l.b16 %v3572
        %v3753 = vunpack.c.l.b16 %v3573
        %v3754 = vpack.c.b16 %v3683, %v3682
        %v3755 = vpack.c.b16 %v3685, %v3684
        %v3756 = vpack.c.b16 %v3687, %v3686
        %v3757 = vpack.c.b16 %v3689, %v3688
        %v3758 = vpack.c.b16 %v3691, %v3690
        %v3759 = vpack.c.b16 %v3693, %v3692
        %v3760 = vpack.c.b16 %v3695, %v3694
        %v3761 = vpack.c.b16 %v3697, %v3696
        %v3762 = vpack.c.b16 %v3699, %v3698
        %v3763 = vpack.c.b16 %v3701, %v3700
        %v3764 = vpack.c.b16 %v3703, %v3702
        %v3765 = vpack.c.b16 %v3705, %v3704
        %v3766 = vpack.c.b16 %v3707, %v3706
        %v3767 = vpack.c.b16 %v3709, %v3708
        %v3768 = vpack.c.b16 %v3711, %v3710
        %v3769 = vpack.c.b16 %v3713, %v3712
        %v3770 = vpack.c.b16 %v3715, %v3714
        %v3771 = vpack.c.b16 %v3717, %v3716
        %v3772 = vpack.c.b16 %v3719, %v3718
        %v3773 = vpack.c.b16 %v3721, %v3720
        %v3774 = vpack.c.b16 %v3723, %v3722
        %v3775 = vpack.c.b16 %v3725, %v3724
        %v3776 = vpack.c.b16 %v3727, %v3726
        %v3777 = vpack.c.b16 %v3729, %v3728
        %v3778 = vpack.c.b16 %v3731, %v3730
        %v3779 = vpack.c.b16 %v3733, %v3732
        %v3780 = vpack.c.b16 %v3735, %v3734
        %v3781 = vpack.c.b16 %v3737, %v3736
        %v3782 = vpack.c.b16 %v3739, %v3738
        %v3783 = vpack.c.b16 %v3741, %v3740
        %v3784 = vpack.c.b16 %v3743, %v3742
        %v3785 = vpack.c.b16 %v3745, %v3744
        %v3786 = vpack.c.b16 %v3747, %v3746
        %v3787 = vpack.c.b16 %v3749, %v3748
        %v3788 = vpack.c.b16 %v3751, %v3750
        %v3789 = vpack.c.b16 %v3753, %v3752
        %v3826 = vsel %vm770, %v3605, 0
        %3828 = vmatpush.bf16.msra.mxu0 %v3761
        %3829 = vmatpush.bf16.msra.mxu0 %v3760
        %3830 = vmatpush.bf16.msra.mxu0 %v3759
        %3831 = vmatpush.bf16.msra.mxu0 %v3758
        %3832 = vmatpush.bf16.msra.mxu0 %v3757
        %3833 = vmatpush.bf16.msra.mxu0 %v3756
        %3834 = vmatpush.bf16.msra.mxu0 %v3755
        %3835 = vmatpush.bf16.msra.mxu0 %v3754
        %3836 = vmatmul.bf16.gmra.mxu0 %v3601
        %v3837 = vpop.f32.mrf.mxu0
        %v3838 = vadd.f32 %v3576, %v3837
        %v3839 = vpop.f32.mrf.mxu0
        %v3840 = vadd.f32 %v3576, %v3839
        %3841 = vdwg.mxu0
        %3842 = vmatpush.bf16.msra.mxu0 %v3769
        %3843 = vmatpush.bf16.msra.mxu0 %v3768
        %3844 = vmatpush.bf16.msra.mxu0 %v3767
        %3845 = vmatpush.bf16.msra.mxu0 %v3766
        %3846 = vmatpush.bf16.msra.mxu0 %v3765
        %3847 = vmatpush.bf16.msra.mxu0 %v3764
        %3848 = vmatpush.bf16.msra.mxu0 %v3763
        %3849 = vmatpush.bf16.msra.mxu0 %v3762
        %3850 = vmatmul.bf16.gmra.mxu0 %v3602
        %v3851 = vpop.f32.mrf.mxu0
        %v3852 = vadd.f32 %v3838, %v3851
        %v3853 = vpop.f32.mrf.mxu0
        %v3854 = vadd.f32 %v3840, %v3853
        %3855 = vdwg.mxu0
        %3856 = vmatpush.bf16.msra.mxu0 %v3777
        %3857 = vmatpush.bf16.msra.mxu0 %v3776
        %3858 = vmatpush.bf16.msra.mxu0 %v3775
        %3859 = vmatpush.bf16.msra.mxu0 %v3774
        %3860 = vmatpush.bf16.msra.mxu0 %v3773
        %3861 = vmatpush.bf16.msra.mxu0 %v3772
        %3862 = vmatpush.bf16.msra.mxu0 %v3771
        %3863 = vmatpush.bf16.msra.mxu0 %v3770
        %3864 = vmatmul.bf16.gmra.mxu0 %v3603
        %v3865 = vpop.f32.mrf.mxu0
        %v3866 = vadd.f32 %v3852, %v3865
        %v3867 = vpop.f32.mrf.mxu0
        %v3868 = vadd.f32 %v3854, %v3867
        %3869 = vdwg.mxu0
        %3870 = vmatpush.bf16.msra.mxu0 %v3785
        %3871 = vmatpush.bf16.msra.mxu0 %v3784
        %3872 = vmatpush.bf16.msra.mxu0 %v3783
        %3873 = vmatpush.bf16.msra.mxu0 %v3782
        %3874 = vmatpush.bf16.msra.mxu0 %v3781
        %3875 = vmatpush.bf16.msra.mxu0 %v3780
        %3876 = vmatpush.bf16.msra.mxu0 %v3779
        %3877 = vmatpush.bf16.msra.mxu0 %v3778
        %3878 = vmatmul.bf16.gmra.mxu0 %v3604
        %v3879 = vpop.f32.mrf.mxu0
        %v3880 = vadd.f32 %v3866, %v3879
        %v3881 = vpop.f32.mrf.mxu0
        %v3882 = vadd.f32 %v3868, %v3881
        %3883 = vdwg.mxu0
        %3884 = vmatpush.bf16.msra.mxu0 0
        %3885 = vmatpush.bf16.msra.mxu0 0
        %3886 = vmatpush.bf16.msra.mxu0 0
        %3887 = vmatpush.bf16.msra.mxu0 0
        %3888 = vmatpush.bf16.msra.mxu0 %v3789
        %3889 = vmatpush.bf16.msra.mxu0 %v3788
        %3890 = vmatpush.bf16.msra.mxu0 %v3787
        %3891 = vmatpush.bf16.msra.mxu0 %v3786
        %3892 = vmatmul.bf16.gmra.mxu0 %v3826
        %v3893 = vpop.f32.mrf.mxu0
        %v3894 = vadd.f32 %v3880, %v3893
        %v3895 = vpop.f32.mrf.mxu0
        %v3896 = vadd.f32 %v3882, %v3895
        %3897 = vdwg.mxu0
        %v3898 = vmax.f32 %v3894, 0.0
        %v3899 = vmax.f32 %v3896, 0.0
        %v3900 = vpack.c.bf16 %v3899, %v3898
        %v3901 = vld [vmem:[#allocation2] sm:$0xff]
        %v3902 = vld [vmem:[#allocation2 + $0x8] sm:$0xff]
        %v3903 = vld [vmem:[#allocation2 + $0x10] sm:$0xff]
        %v3904 = vld [vmem:[#allocation2 + $0x18] sm:$0xff]
        %v3905 = vld [vmem:[#allocation2 + $0x20] sm:$0xff]
        %v3906 = vld [vmem:[#allocation2 + $0x28] sm:$0xff]
        %v3907 = vld [vmem:[#allocation2 + $0x30] sm:$0xff]
        %v3908 = vld [vmem:[#allocation2 + $0x38] sm:$0xff]
        %v3909 = vld [vmem:[#allocation2 + $0x40] sm:$0xff]
        %v3910 = vld [vmem:[#allocation2 + $0x48] sm:$0xff]
        %v3911 = vld [vmem:[#allocation2 + $0x50] sm:$0xff]
        %v3912 = vld [vmem:[#allocation2 + $0x58] sm:$0xff]
        %v3913 = vld [vmem:[#allocation2 + $0x60] sm:$0xff]
        %v3914 = vld [vmem:[#allocation2 + $0x68] sm:$0xff]
        %v3915 = vld [vmem:[#allocation2 + $0x70] sm:$0xff]
        %v3916 = vld [vmem:[#allocation2 + $0x78] sm:$0xff]
        %s3917 = scalar_lea.vmem %s412, 1024
        %v3918 = vld [vmem:[%s3917] sm:$0xff]
        %v3919 = vld [vmem:[%s3917 + $0x8] sm:$0xff]
        %v3920 = vld [vmem:[%s3917 + $0x10] sm:$0xff]
        %v3921 = vld [vmem:[%s3917 + $0x18] sm:$0xff]
        %v3922 = vld [vmem:[%s3917 + $0x20] sm:$0xff]
        %v3923 = vld [vmem:[%s3917 + $0x28] sm:$0xff]
        %v3924 = vld [vmem:[%s3917 + $0x30] sm:$0xff]
        %v3925 = vld [vmem:[%s3917 + $0x38] sm:$0xff]
        %v3926 = vld [vmem:[%s3917 + $0x40] sm:$0xff]
        %v3927 = vld [vmem:[%s3917 + $0x48] sm:$0xff]
        %v3928 = vld [vmem:[%s3917 + $0x50] sm:$0xff]
        %v3929 = vld [vmem:[%s3917 + $0x58] sm:$0xff]
        %v3930 = vld [vmem:[%s3917 + $0x60] sm:$0xff]
        %v3931 = vld [vmem:[%s3917 + $0x68] sm:$0xff]
        %v3932 = vld [vmem:[%s3917 + $0x70] sm:$0xff]
        %v3933 = vld [vmem:[%s3917 + $0x78] sm:$0xff]
        %v3934 = vld [vmem:[%s3917 + $0x80] sm:$0xff]
        %v3935 = vld [vmem:[%s3917 + $0x88] sm:$0xff]
        %v3936 = vld [vmem:[%s3917 + $0x90] sm:$0xff]
        %v3937 = vld [vmem:[%s3917 + $0x98] sm:$0xff]
        %v3938 = vld [vmem:[%s3917 + $0xa0] sm:$0xff]
        %v3939 = vld [vmem:[%s3917 + $0xa8] sm:$0xff]
        %v3940 = vld [vmem:[%s3917 + $0xb0] sm:$0xff]
        %v3941 = vld [vmem:[%s3917 + $0xb8] sm:$0xff]
        %v3942 = vld [vmem:[%s3917 + $0xc0] sm:$0xff]
        %v3943 = vld [vmem:[%s3917 + $0xc8] sm:$0xff]
        %v3944 = vld [vmem:[%s3917 + $0xd0] sm:$0xff]
        %v3945 = vld [vmem:[%s3917 + $0xd8] sm:$0xff]
        %v3946 = vld [vmem:[%s3917 + $0xe0] sm:$0xff]
        %v3947 = vld [vmem:[%s3917 + $0xe8] sm:$0xff]
        %v3948 = vld [vmem:[%s3917 + $0xf0] sm:$0xff]
        %v3949 = vld [vmem:[%s3917 + $0xf8] sm:$0xff]
        %v3982 = vunpack.c.l.b16 %v3918
        %v3983 = vunpack.c.h.b16 %v3918
        %v3984 = vunpack.c.l.b16 %v3919
        %v3985 = vunpack.c.h.b16 %v3919
        %v3986 = vunpack.c.l.b16 %v3920
        %v3987 = vunpack.c.h.b16 %v3920
        %v3988 = vunpack.c.l.b16 %v3921
        %v3989 = vunpack.c.h.b16 %v3921
        %v3990 = vunpack.c.l.b16 %v3922
        %v3991 = vunpack.c.h.b16 %v3922
        %v3992 = vunpack.c.l.b16 %v3923
        %v3993 = vunpack.c.h.b16 %v3923
        %v3994 = vunpack.c.l.b16 %v3924
        %v3995 = vunpack.c.h.b16 %v3924
        %v3996 = vunpack.c.l.b16 %v3925
        %v3997 = vunpack.c.h.b16 %v3925
        %v3998 = vunpack.c.l.b16 %v3926
        %v3999 = vunpack.c.h.b16 %v3926
        %v4000 = vunpack.c.l.b16 %v3927
        %v4001 = vunpack.c.h.b16 %v3927
        %v4002 = vunpack.c.l.b16 %v3928
        %v4003 = vunpack.c.h.b16 %v3928
        %v4004 = vunpack.c.l.b16 %v3929
        %v4005 = vunpack.c.h.b16 %v3929
        %v4006 = vunpack.c.l.b16 %v3930
        %v4007 = vunpack.c.h.b16 %v3930
        %v4008 = vunpack.c.l.b16 %v3931
        %v4009 = vunpack.c.h.b16 %v3931
        %v4010 = vunpack.c.l.b16 %v3932
        %v4011 = vunpack.c.h.b16 %v3932
        %v4012 = vunpack.c.l.b16 %v3933
        %v4013 = vunpack.c.h.b16 %v3933
        %v4014 = vunpack.c.l.b16 %v3934
        %v4015 = vunpack.c.h.b16 %v3934
        %v4016 = vunpack.c.l.b16 %v3935
        %v4017 = vunpack.c.h.b16 %v3935
        %v4018 = vunpack.c.l.b16 %v3936
        %v4019 = vunpack.c.h.b16 %v3936
        %v4020 = vunpack.c.l.b16 %v3937
        %v4021 = vunpack.c.h.b16 %v3937
        %v4022 = vunpack.c.l.b16 %v3938
        %v4023 = vunpack.c.h.b16 %v3938
        %v4024 = vunpack.c.l.b16 %v3939
        %v4025 = vunpack.c.h.b16 %v3939
        %v4026 = vunpack.c.l.b16 %v3940
        %v4027 = vunpack.c.h.b16 %v3940
        %v4028 = vunpack.c.l.b16 %v3941
        %v4029 = vunpack.c.h.b16 %v3941
        %v4030 = vunpack.c.l.b16 %v3942
        %v4031 = vunpack.c.h.b16 %v3942
        %v4032 = vunpack.c.l.b16 %v3943
        %v4033 = vunpack.c.h.b16 %v3943
        %v4034 = vunpack.c.l.b16 %v3944
        %v4035 = vunpack.c.h.b16 %v3944
        %v4036 = vunpack.c.l.b16 %v3945
        %v4037 = vunpack.c.h.b16 %v3945
        %v4038 = vunpack.c.l.b16 %v3946
        %v4039 = vunpack.c.h.b16 %v3946
        %v4040 = vunpack.c.l.b16 %v3947
        %v4041 = vunpack.c.h.b16 %v3947
        %v4042 = vunpack.c.l.b16 %v3948
        %v4043 = vunpack.c.h.b16 %v3948
        %v4044 = vunpack.c.l.b16 %v3949
        %v4045 = vunpack.c.h.b16 %v3949
        %v4046 = vpack.c.b16 %v3990, %v3982
        %v4047 = vpack.c.b16 %v3991, %v3983
        %v4048 = vpack.c.b16 %v3992, %v3984
        %v4049 = vpack.c.b16 %v3993, %v3985
        %v4050 = vpack.c.b16 %v3994, %v3986
        %v4051 = vpack.c.b16 %v3995, %v3987
        %v4052 = vpack.c.b16 %v3996, %v3988
        %v4053 = vpack.c.b16 %v3997, %v3989
        %v4054 = vpack.c.b16 %v4006, %v3998
        %v4055 = vpack.c.b16 %v4007, %v3999
        %v4056 = vpack.c.b16 %v4008, %v4000
        %v4057 = vpack.c.b16 %v4009, %v4001
        %v4058 = vpack.c.b16 %v4010, %v4002
        %v4059 = vpack.c.b16 %v4011, %v4003
        %v4060 = vpack.c.b16 %v4012, %v4004
        %v4061 = vpack.c.b16 %v4013, %v4005
        %v4062 = vpack.c.b16 %v4022, %v4014
        %v4063 = vpack.c.b16 %v4023, %v4015
        %v4064 = vpack.c.b16 %v4024, %v4016
        %v4065 = vpack.c.b16 %v4025, %v4017
        %v4066 = vpack.c.b16 %v4026, %v4018
        %v4067 = vpack.c.b16 %v4027, %v4019
        %v4068 = vpack.c.b16 %v4028, %v4020
        %v4069 = vpack.c.b16 %v4029, %v4021
        %v4070 = vpack.c.b16 %v4038, %v4030
        %v4071 = vpack.c.b16 %v4039, %v4031
        %v4072 = vpack.c.b16 %v4040, %v4032
        %v4073 = vpack.c.b16 %v4041, %v4033
        %v4074 = vpack.c.b16 %v4042, %v4034
        %v4075 = vpack.c.b16 %v4043, %v4035
        %v4076 = vpack.c.b16 %v4044, %v4036
        %v4077 = vpack.c.b16 %v4045, %v4037
        %v4111 = vsel %vm770, %v3900, 0
        %4113 = vmatpush.bf16.msra.mxu0 0
        %4114 = vmatpush.bf16.msra.mxu0 0
        %4115 = vmatpush.bf16.msra.mxu0 0
        %4116 = vmatpush.bf16.msra.mxu0 0
        %4117 = vmatpush.bf16.msra.mxu0 %v4070
        %4118 = vmatpush.bf16.msra.mxu0 %v4062
        %4119 = vmatpush.bf16.msra.mxu0 %v4054
        %4120 = vmatpush.bf16.msra.mxu0 %v4046
        %4121 = vmatmul.bf16.gmra.mxu0 %v4111
        %v4122 = vpop.f32.mrf.mxu0
        %v4123 = vadd.f32 0.0, %v4122
        %v4124 = vpop.f32.mrf.mxu0
        %v4125 = vadd.f32 0.0, %v4124
        %4126 = vdwg.mxu0
        %4127 = vmatpush.bf16.msra.mxu0 0
        %4128 = vmatpush.bf16.msra.mxu0 0
        %4129 = vmatpush.bf16.msra.mxu0 0
        %4130 = vmatpush.bf16.msra.mxu0 0
        %4131 = vmatpush.bf16.msra.mxu0 %v4071
        %4132 = vmatpush.bf16.msra.mxu0 %v4063
        %4133 = vmatpush.bf16.msra.mxu0 %v4055
        %4134 = vmatpush.bf16.msra.mxu0 %v4047
        %4135 = vmatmul.bf16.gmra.mxu0 %v4111
        %v4136 = vpop.f32.mrf.mxu0
        %v4137 = vadd.f32 0.0, %v4136
        %v4138 = vpop.f32.mrf.mxu0
        %v4139 = vadd.f32 0.0, %v4138
        %4140 = vdwg.mxu0
        %4141 = vmatpush.bf16.msra.mxu0 0
        %4142 = vmatpush.bf16.msra.mxu0 0
        %4143 = vmatpush.bf16.msra.mxu0 0
        %4144 = vmatpush.bf16.msra.mxu0 0
        %4145 = vmatpush.bf16.msra.mxu0 %v4072
        %4146 = vmatpush.bf16.msra.mxu0 %v4064
        %4147 = vmatpush.bf16.msra.mxu0 %v4056
        %4148 = vmatpush.bf16.msra.mxu0 %v4048
        %4149 = vmatmul.bf16.gmra.mxu0 %v4111
        %v4150 = vpop.f32.mrf.mxu0
        %v4151 = vadd.f32 0.0, %v4150
        %v4152 = vpop.f32.mrf.mxu0
        %v4153 = vadd.f32 0.0, %v4152
        %4154 = vdwg.mxu0
        %4155 = vmatpush.bf16.msra.mxu0 0
        %4156 = vmatpush.bf16.msra.mxu0 0
        %4157 = vmatpush.bf16.msra.mxu0 0
        %4158 = vmatpush.bf16.msra.mxu0 0
        %4159 = vmatpush.bf16.msra.mxu0 %v4073
        %4160 = vmatpush.bf16.msra.mxu0 %v4065
        %4161 = vmatpush.bf16.msra.mxu0 %v4057
        %4162 = vmatpush.bf16.msra.mxu0 %v4049
        %4163 = vmatmul.bf16.gmra.mxu0 %v4111
        %v4164 = vpop.f32.mrf.mxu0
        %v4165 = vadd.f32 0.0, %v4164
        %v4166 = vpop.f32.mrf.mxu0
        %v4167 = vadd.f32 0.0, %v4166
        %4168 = vdwg.mxu0
        %4169 = vmatpush.bf16.msra.mxu0 0
        %4170 = vmatpush.bf16.msra.mxu0 0
        %4171 = vmatpush.bf16.msra.mxu0 0
        %4172 = vmatpush.bf16.msra.mxu0 0
        %4173 = vmatpush.bf16.msra.mxu0 %v4074
        %4174 = vmatpush.bf16.msra.mxu0 %v4066
        %4175 = vmatpush.bf16.msra.mxu0 %v4058
        %4176 = vmatpush.bf16.msra.mxu0 %v4050
        %4177 = vmatmul.bf16.gmra.mxu0 %v4111
        %v4178 = vpop.f32.mrf.mxu0
        %v4179 = vadd.f32 0.0, %v4178
        %v4180 = vpop.f32.mrf.mxu0
        %v4181 = vadd.f32 0.0, %v4180
        %4182 = vdwg.mxu0
        %4183 = vmatpush.bf16.msra.mxu0 0
        %4184 = vmatpush.bf16.msra.mxu0 0
        %4185 = vmatpush.bf16.msra.mxu0 0
        %4186 = vmatpush.bf16.msra.mxu0 0
        %4187 = vmatpush.bf16.msra.mxu0 %v4075
        %4188 = vmatpush.bf16.msra.mxu0 %v4067
        %4189 = vmatpush.bf16.msra.mxu0 %v4059
        %4190 = vmatpush.bf16.msra.mxu0 %v4051
        %4191 = vmatmul.bf16.gmra.mxu0 %v4111
        %v4192 = vpop.f32.mrf.mxu0
        %v4193 = vadd.f32 0.0, %v4192
        %v4194 = vpop.f32.mrf.mxu0
        %v4195 = vadd.f32 0.0, %v4194
        %4196 = vdwg.mxu0
        %4197 = vmatpush.bf16.msra.mxu0 0
        %4198 = vmatpush.bf16.msra.mxu0 0
        %4199 = vmatpush.bf16.msra.mxu0 0
        %4200 = vmatpush.bf16.msra.mxu0 0
        %4201 = vmatpush.bf16.msra.mxu0 %v4076
        %4202 = vmatpush.bf16.msra.mxu0 %v4068
        %4203 = vmatpush.bf16.msra.mxu0 %v4060
        %4204 = vmatpush.bf16.msra.mxu0 %v4052
        %4205 = vmatmul.bf16.gmra.mxu0 %v4111
        %v4206 = vpop.f32.mrf.mxu0
        %v4207 = vadd.f32 0.0, %v4206
        %v4208 = vpop.f32.mrf.mxu0
        %v4209 = vadd.f32 0.0, %v4208
        %4210 = vdwg.mxu0
        %4211 = vmatpush.bf16.msra.mxu0 0
        %4212 = vmatpush.bf16.msra.mxu0 0
        %4213 = vmatpush.bf16.msra.mxu0 0
        %4214 = vmatpush.bf16.msra.mxu0 0
        %4215 = vmatpush.bf16.msra.mxu0 %v4077
        %4216 = vmatpush.bf16.msra.mxu0 %v4069
        %4217 = vmatpush.bf16.msra.mxu0 %v4061
        %4218 = vmatpush.bf16.msra.mxu0 %v4053
        %4219 = vmatmul.bf16.gmra.mxu0 %v4111
        %v4220 = vpop.f32.mrf.mxu0
        %v4221 = vadd.f32 0.0, %v4220
        %v4222 = vpop.f32.mrf.mxu0
        %v4223 = vadd.f32 0.0, %v4222
        %4224 = vdwg.mxu0
        %v4225 = vadd.f32 %v3901, %v4123
        %v4226 = vadd.f32 %v3902, %v4137
        %v4227 = vadd.f32 %v3903, %v4151
        %v4228 = vadd.f32 %v3904, %v4165
        %v4229 = vadd.f32 %v3905, %v4179
        %v4230 = vadd.f32 %v3906, %v4193
        %v4231 = vadd.f32 %v3907, %v4207
        %v4232 = vadd.f32 %v3908, %v4221
        %v4233 = vadd.f32 %v3909, %v4125
        %v4234 = vadd.f32 %v3910, %v4139
        %v4235 = vadd.f32 %v3911, %v4153
        %v4236 = vadd.f32 %v3912, %v4167
        %v4237 = vadd.f32 %v3913, %v4181
        %v4238 = vadd.f32 %v3914, %v4195
        %v4239 = vadd.f32 %v3915, %v4209
        %v4240 = vadd.f32 %v3916, %v4223
        %4241 = vst [vmem:[#allocation2] sm:$0xff] %v4225
        %4242 = vst [vmem:[#allocation2 + $0x8] sm:$0xff] %v4226
        %4243 = vst [vmem:[#allocation2 + $0x10] sm:$0xff] %v4227
        %4244 = vst [vmem:[#allocation2 + $0x18] sm:$0xff] %v4228
        %4245 = vst [vmem:[#allocation2 + $0x20] sm:$0xff] %v4229
        %4246 = vst [vmem:[#allocation2 + $0x28] sm:$0xff] %v4230
        %4247 = vst [vmem:[#allocation2 + $0x30] sm:$0xff] %v4231
        %4248 = vst [vmem:[#allocation2 + $0x38] sm:$0xff] %v4232
        %4249 = vst [vmem:[#allocation2 + $0x40] sm:$0xff] %v4233
        %4250 = vst [vmem:[#allocation2 + $0x48] sm:$0xff] %v4234
        %4251 = vst [vmem:[#allocation2 + $0x50] sm:$0xff] %v4235
        %4252 = vst [vmem:[#allocation2 + $0x58] sm:$0xff] %v4236
        %4253 = vst [vmem:[#allocation2 + $0x60] sm:$0xff] %v4237
        %4254 = vst [vmem:[#allocation2 + $0x68] sm:$0xff] %v4238
        %4255 = vst [vmem:[#allocation2 + $0x70] sm:$0xff] %v4239
        %4256 = vst [vmem:[#allocation2 + $0x78] sm:$0xff] %v4240
        %s4257 = scalar_lea.vmem %s372, 200 [#allocation3]
        %v4258 = vld [vmem:[%s4257] sm:$0x1f]
        %v4259 = vld [vmem:[%s4257 + $0x5] sm:$0x1f]
        %v4260 = vld [vmem:[%s4257 + $0xa] sm:$0x1f]
        %v4261 = vld [vmem:[%s4257 + $0xf] sm:$0x1f]
        %v4262 = vld [vmem:[%s4257 + $0x14] sm:$0x1f]
        %v4263 = vld [vmem:[%s4257 + $0x19] sm:$0x1f]
        %v4264 = vld [vmem:[%s4257 + $0x1e] sm:$0x1f]
        %v4265 = vld [vmem:[%s4257 + $0x23] sm:$0x1f]
        %v4266 = vld [vmem:[%s1] sm:$0xf]
        %v4267 = vld [vmem:[%s1 + $0x4] sm:$0xf]
        %v4268 = vld [vmem:[%s1 + $0x8] sm:$0xf]
        %v4269 = vld [vmem:[%s1 + $0xc] sm:$0xf]
        %v4270 = vld [vmem:[%s1 + $0x10] sm:$0xf]
        %v4271 = vld [vmem:[%s1 + $0x14] sm:$0xf]
        %v4272 = vld [vmem:[%s1 + $0x18] sm:$0xf]
        %v4273 = vld [vmem:[%s1 + $0x1c] sm:$0xf]
        %v4274 = vld [vmem:[%s1 + $0x20] sm:$0xf]
        %v4275 = vld [vmem:[%s1 + $0x24] sm:$0xf]
        %v4276 = vld [vmem:[%s1 + $0x28] sm:$0xf]
        %v4277 = vld [vmem:[%s1 + $0x2c] sm:$0xf]
        %v4278 = vld [vmem:[%s1 + $0x30] sm:$0xf]
        %v4279 = vld [vmem:[%s1 + $0x34] sm:$0xf]
        %v4280 = vld [vmem:[%s1 + $0x38] sm:$0xf]
        %v4281 = vld [vmem:[%s1 + $0x3c] sm:$0xf]
        %v4282 = vld [vmem:[%s1 + $0x40] sm:$0xf]
        %v4283 = vld [vmem:[%s1 + $0x44] sm:$0xf]
        %v4284 = vld [vmem:[%s1 + $0x48] sm:$0xf]
        %v4285 = vld [vmem:[%s1 + $0x4c] sm:$0xf]
        %v4286 = vld [vmem:[%s1 + $0x50] sm:$0xf]
        %v4287 = vld [vmem:[%s1 + $0x54] sm:$0xf]
        %v4288 = vld [vmem:[%s1 + $0x58] sm:$0xf]
        %v4289 = vld [vmem:[%s1 + $0x5c] sm:$0xf]
        %v4290 = vld [vmem:[%s1 + $0x60] sm:$0xf]
        %v4291 = vld [vmem:[%s1 + $0x64] sm:$0xf]
        %v4292 = vld [vmem:[%s1 + $0x68] sm:$0xf]
        %v4293 = vld [vmem:[%s1 + $0x6c] sm:$0xf]
        %v4294 = vld [vmem:[%s1 + $0x70] sm:$0xf]
        %v4295 = vld [vmem:[%s1 + $0x74] sm:$0xf]
        %v4296 = vld [vmem:[%s1 + $0x78] sm:$0xf]
        %v4297 = vld [vmem:[%s1 + $0x7c] sm:$0xf]
        %v4298 = vld [vmem:[%s1 + $0x80] sm:$0xf]
        %v4299 = vld [vmem:[%s1 + $0x84] sm:$0xf]
        %v4300 = vld [vmem:[%s1 + $0x88] sm:$0xf]
        %v4301 = vld [vmem:[%s1 + $0x8c] sm:$0xf]
        %v4302 = vld [vmem:[%s1 + $0x90] sm:$0xf]
        %v4303 = vld [vmem:[%s1 + $0x94] sm:$0xf]
        %v4304 = vld [vmem:[%s1 + $0x98] sm:$0xf]
        %v4305 = vld [vmem:[%s1 + $0x9c] sm:$0xf]
        %v4306 = vld [vmem:[%s1 + $0xa0] sm:$0xf]
        %v4307 = vld [vmem:[%s1 + $0xa4] sm:$0xf]
        %v4308 = vld [vmem:[%s1 + $0xa8] sm:$0xf]
        %v4309 = vld [vmem:[%s1 + $0xac] sm:$0xf]
        %v4310 = vld [vmem:[%s1 + $0xb0] sm:$0xf]
        %v4311 = vld [vmem:[%s1 + $0xb4] sm:$0xf]
        %v4312 = vld [vmem:[%s1 + $0xb8] sm:$0xf]
        %v4313 = vld [vmem:[%s1 + $0xbc] sm:$0xf]
        %v4314 = vld [vmem:[%s1 + $0xc0] sm:$0xf]
        %v4315 = vld [vmem:[%s1 + $0xc4] sm:$0xf]
        %v4316 = vld [vmem:[%s1 + $0xc8] sm:$0xf]
        %v4317 = vld [vmem:[%s1 + $0xcc] sm:$0xf]
        %v4318 = vld [vmem:[%s1 + $0xd0] sm:$0xf]
        %v4319 = vld [vmem:[%s1 + $0xd4] sm:$0xf]
        %v4320 = vld [vmem:[%s1 + $0xd8] sm:$0xf]
        %v4321 = vld [vmem:[%s1 + $0xdc] sm:$0xf]
        %v4322 = vld [vmem:[%s1 + $0xe0] sm:$0xf]
        %v4323 = vld [vmem:[%s1 + $0xe4] sm:$0xf]
        %v4324 = vld [vmem:[%s1 + $0xe8] sm:$0xf]
        %v4325 = vld [vmem:[%s1 + $0xec] sm:$0xf]
        %v4326 = vld [vmem:[%s1 + $0xf0] sm:$0xf]
        %v4327 = vld [vmem:[%s1 + $0xf4] sm:$0xf]
        %v4328 = vld [vmem:[%s1 + $0xf8] sm:$0xf]
        %v4329 = vld [vmem:[%s1 + $0xfc] sm:$0xf]
        %v4330 = vld [vmem:[%s1 + $0x100] sm:$0xf]
        %v4331 = vld [vmem:[%s1 + $0x104] sm:$0xf]
        %v4332 = vld [vmem:[%s1 + $0x108] sm:$0xf]
        %v4333 = vld [vmem:[%s1 + $0x10c] sm:$0xf]
        %v4334 = vld [vmem:[%s1 + $0x110] sm:$0xf]
        %v4335 = vld [vmem:[%s1 + $0x114] sm:$0xf]
        %v4336 = vld [vmem:[%s1 + $0x118] sm:$0xf]
        %v4337 = vld [vmem:[%s1 + $0x11c] sm:$0xf]
        %v4338 = vld [vmem:[%s2] sm:$0x1]
        %v4340 = vperm.slane %v4338, 0
        %4343 = vst [vmem:[#allocation1] ss:$9 sm:$0xff] %v4258
        %s4345 = scalar_lea.vmem [#allocation1], 1
        %4346 = vst [vmem:[%s4345] ss:$9 sm:$0xff] %v4259
        %s4348 = scalar_lea.vmem [#allocation1], 2
        %4349 = vst [vmem:[%s4348] ss:$9 sm:$0xff] %v4260
        %s4351 = scalar_lea.vmem [#allocation1], 3
        %4352 = vst [vmem:[%s4351] ss:$9 sm:$0xff] %v4261
        %s4354 = scalar_lea.vmem [#allocation1], 4
        %4355 = vst [vmem:[%s4354] ss:$9 sm:$0xff] %v4262
        %s4357 = scalar_lea.vmem [#allocation1], 5
        %4358 = vst [vmem:[%s4357] ss:$9 sm:$0xff] %v4263
        %s4360 = scalar_lea.vmem [#allocation1], 6
        %4361 = vst [vmem:[%s4360] ss:$9 sm:$0xff] %v4264
        %s4363 = scalar_lea.vmem [#allocation1], 7
        %4364 = vst [vmem:[%s4363] ss:$9 sm:$0xff] %v4265
        %v4365 = vld [vmem:[#allocation1] sm:$0xff]
        %v4366 = vld [vmem:[#allocation1 + $0x9] sm:$0xff]
        %v4367 = vld [vmem:[#allocation1 + $0x12] sm:$0xff]
        %v4368 = vld [vmem:[#allocation1 + $0x1b] sm:$0xff]
        %v4369 = vld [vmem:[#allocation1 + $0x24] sm:$0xff]
        %v4446 = vunpack.c.l.b16 %v4266
        %v4447 = vunpack.c.l.b16 %v4267
        %v4448 = vunpack.c.l.b16 %v4268
        %v4449 = vunpack.c.l.b16 %v4269
        %v4450 = vunpack.c.l.b16 %v4270
        %v4451 = vunpack.c.l.b16 %v4271
        %v4452 = vunpack.c.l.b16 %v4272
        %v4453 = vunpack.c.l.b16 %v4273
        %v4454 = vunpack.c.l.b16 %v4274
        %v4455 = vunpack.c.l.b16 %v4275
        %v4456 = vunpack.c.l.b16 %v4276
        %v4457 = vunpack.c.l.b16 %v4277
        %v4458 = vunpack.c.l.b16 %v4278
        %v4459 = vunpack.c.l.b16 %v4279
        %v4460 = vunpack.c.l.b16 %v4280
        %v4461 = vunpack.c.l.b16 %v4281
        %v4462 = vunpack.c.l.b16 %v4282
        %v4463 = vunpack.c.l.b16 %v4283
        %v4464 = vunpack.c.l.b16 %v4284
        %v4465 = vunpack.c.l.b16 %v4285
        %v4466 = vunpack.c.l.b16 %v4286
        %v4467 = vunpack.c.l.b16 %v4287
        %v4468 = vunpack.c.l.b16 %v4288
        %v4469 = vunpack.c.l.b16 %v4289
        %v4470 = vunpack.c.l.b16 %v4290
        %v4471 = vunpack.c.l.b16 %v4291
        %v4472 = vunpack.c.l.b16 %v4292
        %v4473 = vunpack.c.l.b16 %v4293
        %v4474 = vunpack.c.l.b16 %v4294
        %v4475 = vunpack.c.l.b16 %v4295
        %v4476 = vunpack.c.l.b16 %v4296
        %v4477 = vunpack.c.l.b16 %v4297
        %v4478 = vunpack.c.l.b16 %v4298
        %v4479 = vunpack.c.l.b16 %v4299
        %v4480 = vunpack.c.l.b16 %v4300
        %v4481 = vunpack.c.l.b16 %v4301
        %v4482 = vunpack.c.l.b16 %v4302
        %v4483 = vunpack.c.l.b16 %v4303
        %v4484 = vunpack.c.l.b16 %v4304
        %v4485 = vunpack.c.l.b16 %v4305
        %v4486 = vunpack.c.l.b16 %v4306
        %v4487 = vunpack.c.l.b16 %v4307
        %v4488 = vunpack.c.l.b16 %v4308
        %v4489 = vunpack.c.l.b16 %v4309
        %v4490 = vunpack.c.l.b16 %v4310
        %v4491 = vunpack.c.l.b16 %v4311
        %v4492 = vunpack.c.l.b16 %v4312
        %v4493 = vunpack.c.l.b16 %v4313
        %v4494 = vunpack.c.l.b16 %v4314
        %v4495 = vunpack.c.l.b16 %v4315
        %v4496 = vunpack.c.l.b16 %v4316
        %v4497 = vunpack.c.l.b16 %v4317
        %v4498 = vunpack.c.l.b16 %v4318
        %v4499 = vunpack.c.l.b16 %v4319
        %v4500 = vunpack.c.l.b16 %v4320
        %v4501 = vunpack.c.l.b16 %v4321
        %v4502 = vunpack.c.l.b16 %v4322
        %v4503 = vunpack.c.l.b16 %v4323
        %v4504 = vunpack.c.l.b16 %v4324
        %v4505 = vunpack.c.l.b16 %v4325
        %v4506 = vunpack.c.l.b16 %v4326
        %v4507 = vunpack.c.l.b16 %v4327
        %v4508 = vunpack.c.l.b16 %v4328
        %v4509 = vunpack.c.l.b16 %v4329
        %v4510 = vunpack.c.l.b16 %v4330
        %v4511 = vunpack.c.l.b16 %v4331
        %v4512 = vunpack.c.l.b16 %v4332
        %v4513 = vunpack.c.l.b16 %v4333
        %v4514 = vunpack.c.l.b16 %v4334
        %v4515 = vunpack.c.l.b16 %v4335
        %v4516 = vunpack.c.l.b16 %v4336
        %v4517 = vunpack.c.l.b16 %v4337
        %v4518 = vpack.c.b16 %v4447, %v4446
        %v4519 = vpack.c.b16 %v4449, %v4448
        %v4520 = vpack.c.b16 %v4451, %v4450
        %v4521 = vpack.c.b16 %v4453, %v4452
        %v4522 = vpack.c.b16 %v4455, %v4454
        %v4523 = vpack.c.b16 %v4457, %v4456
        %v4524 = vpack.c.b16 %v4459, %v4458
        %v4525 = vpack.c.b16 %v4461, %v4460
        %v4526 = vpack.c.b16 %v4463, %v4462
        %v4527 = vpack.c.b16 %v4465, %v4464
        %v4528 = vpack.c.b16 %v4467, %v4466
        %v4529 = vpack.c.b16 %v4469, %v4468
        %v4530 = vpack.c.b16 %v4471, %v4470
        %v4531 = vpack.c.b16 %v4473, %v4472
        %v4532 = vpack.c.b16 %v4475, %v4474
        %v4533 = vpack.c.b16 %v4477, %v4476
        %v4534 = vpack.c.b16 %v4479, %v4478
        %v4535 = vpack.c.b16 %v4481, %v4480
        %v4536 = vpack.c.b16 %v4483, %v4482
        %v4537 = vpack.c.b16 %v4485, %v4484
        %v4538 = vpack.c.b16 %v4487, %v4486
        %v4539 = vpack.c.b16 %v4489, %v4488
        %v4540 = vpack.c.b16 %v4491, %v4490
        %v4541 = vpack.c.b16 %v4493, %v4492
        %v4542 = vpack.c.b16 %v4495, %v4494
        %v4543 = vpack.c.b16 %v4497, %v4496
        %v4544 = vpack.c.b16 %v4499, %v4498
        %v4545 = vpack.c.b16 %v4501, %v4500
        %v4546 = vpack.c.b16 %v4503, %v4502
        %v4547 = vpack.c.b16 %v4505, %v4504
        %v4548 = vpack.c.b16 %v4507, %v4506
        %v4549 = vpack.c.b16 %v4509, %v4508
        %v4550 = vpack.c.b16 %v4511, %v4510
        %v4551 = vpack.c.b16 %v4513, %v4512
        %v4552 = vpack.c.b16 %v4515, %v4514
        %v4553 = vpack.c.b16 %v4517, %v4516
        %v4590 = vsel %vm770, %v4369, 0
        %4592 = vmatpush.bf16.msra.mxu0 %v4525
        %4593 = vmatpush.bf16.msra.mxu0 %v4524
        %4594 = vmatpush.bf16.msra.mxu0 %v4523
        %4595 = vmatpush.bf16.msra.mxu0 %v4522
        %4596 = vmatpush.bf16.msra.mxu0 %v4521
        %4597 = vmatpush.bf16.msra.mxu0 %v4520
        %4598 = vmatpush.bf16.msra.mxu0 %v4519
        %4599 = vmatpush.bf16.msra.mxu0 %v4518
        %4600 = vmatmul.bf16.gmra.mxu0 %v4365
        %v4601 = vpop.f32.mrf.mxu0
        %v4602 = vadd.f32 %v4340, %v4601
        %v4603 = vpop.f32.mrf.mxu0
        %v4604 = vadd.f32 %v4340, %v4603
        %4605 = vdwg.mxu0
        %4606 = vmatpush.bf16.msra.mxu0 %v4533
        %4607 = vmatpush.bf16.msra.mxu0 %v4532
        %4608 = vmatpush.bf16.msra.mxu0 %v4531
        %4609 = vmatpush.bf16.msra.mxu0 %v4530
        %4610 = vmatpush.bf16.msra.mxu0 %v4529
        %4611 = vmatpush.bf16.msra.mxu0 %v4528
        %4612 = vmatpush.bf16.msra.mxu0 %v4527
        %4613 = vmatpush.bf16.msra.mxu0 %v4526
        %4614 = vmatmul.bf16.gmra.mxu0 %v4366
        %v4615 = vpop.f32.mrf.mxu0
        %v4616 = vadd.f32 %v4602, %v4615
        %v4617 = vpop.f32.mrf.mxu0
        %v4618 = vadd.f32 %v4604, %v4617
        %4619 = vdwg.mxu0
        %4620 = vmatpush.bf16.msra.mxu0 %v4541
        %4621 = vmatpush.bf16.msra.mxu0 %v4540
        %4622 = vmatpush.bf16.msra.mxu0 %v4539
        %4623 = vmatpush.bf16.msra.mxu0 %v4538
        %4624 = vmatpush.bf16.msra.mxu0 %v4537
        %4625 = vmatpush.bf16.msra.mxu0 %v4536
        %4626 = vmatpush.bf16.msra.mxu0 %v4535
        %4627 = vmatpush.bf16.msra.mxu0 %v4534
        %4628 = vmatmul.bf16.gmra.mxu0 %v4367
        %v4629 = vpop.f32.mrf.mxu0
        %v4630 = vadd.f32 %v4616, %v4629
        %v4631 = vpop.f32.mrf.mxu0
        %v4632 = vadd.f32 %v4618, %v4631
        %4633 = vdwg.mxu0
        %4634 = vmatpush.bf16.msra.mxu0 %v4549
        %4635 = vmatpush.bf16.msra.mxu0 %v4548
        %4636 = vmatpush.bf16.msra.mxu0 %v4547
        %4637 = vmatpush.bf16.msra.mxu0 %v4546
        %4638 = vmatpush.bf16.msra.mxu0 %v4545
        %4639 = vmatpush.bf16.msra.mxu0 %v4544
        %4640 = vmatpush.bf16.msra.mxu0 %v4543
        %4641 = vmatpush.bf16.msra.mxu0 %v4542
        %4642 = vmatmul.bf16.gmra.mxu0 %v4368
        %v4643 = vpop.f32.mrf.mxu0
        %v4644 = vadd.f32 %v4630, %v4643
        %v4645 = vpop.f32.mrf.mxu0
        %v4646 = vadd.f32 %v4632, %v4645
        %4647 = vdwg.mxu0
        %4648 = vmatpush.bf16.msra.mxu0 0
        %4649 = vmatpush.bf16.msra.mxu0 0
        %4650 = vmatpush.bf16.msra.mxu0 0
        %4651 = vmatpush.bf16.msra.mxu0 0
        %4652 = vmatpush.bf16.msra.mxu0 %v4553
        %4653 = vmatpush.bf16.msra.mxu0 %v4552
        %4654 = vmatpush.bf16.msra.mxu0 %v4551
        %4655 = vmatpush.bf16.msra.mxu0 %v4550
        %4656 = vmatmul.bf16.gmra.mxu0 %v4590
        %v4657 = vpop.f32.mrf.mxu0
        %v4658 = vadd.f32 %v4644, %v4657
        %v4659 = vpop.f32.mrf.mxu0
        %v4660 = vadd.f32 %v4646, %v4659
        %4661 = vdwg.mxu0
        %v4662 = vmax.f32 %v4658, 0.0
        %v4663 = vmax.f32 %v4660, 0.0
        %v4664 = vpack.c.bf16 %v4663, %v4662
        %v4665 = vld [vmem:[#allocation2] sm:$0xff]
        %v4666 = vld [vmem:[#allocation2 + $0x8] sm:$0xff]
        %v4667 = vld [vmem:[#allocation2 + $0x10] sm:$0xff]
        %v4668 = vld [vmem:[#allocation2 + $0x18] sm:$0xff]
        %v4669 = vld [vmem:[#allocation2 + $0x20] sm:$0xff]
        %v4670 = vld [vmem:[#allocation2 + $0x28] sm:$0xff]
        %v4671 = vld [vmem:[#allocation2 + $0x30] sm:$0xff]
        %v4672 = vld [vmem:[#allocation2 + $0x38] sm:$0xff]
        %v4673 = vld [vmem:[#allocation2 + $0x40] sm:$0xff]
        %v4674 = vld [vmem:[#allocation2 + $0x48] sm:$0xff]
        %v4675 = vld [vmem:[#allocation2 + $0x50] sm:$0xff]
        %v4676 = vld [vmem:[#allocation2 + $0x58] sm:$0xff]
        %v4677 = vld [vmem:[#allocation2 + $0x60] sm:$0xff]
        %v4678 = vld [vmem:[#allocation2 + $0x68] sm:$0xff]
        %v4679 = vld [vmem:[#allocation2 + $0x70] sm:$0xff]
        %v4680 = vld [vmem:[#allocation2 + $0x78] sm:$0xff]
        %s4681 = scalar_lea.vmem %s412, 1280
        %v4682 = vld [vmem:[%s4681] sm:$0xff]
        %v4683 = vld [vmem:[%s4681 + $0x8] sm:$0xff]
        %v4684 = vld [vmem:[%s4681 + $0x10] sm:$0xff]
        %v4685 = vld [vmem:[%s4681 + $0x18] sm:$0xff]
        %v4686 = vld [vmem:[%s4681 + $0x20] sm:$0xff]
        %v4687 = vld [vmem:[%s4681 + $0x28] sm:$0xff]
        %v4688 = vld [vmem:[%s4681 + $0x30] sm:$0xff]
        %v4689 = vld [vmem:[%s4681 + $0x38] sm:$0xff]
        %v4690 = vld [vmem:[%s4681 + $0x40] sm:$0xff]
        %v4691 = vld [vmem:[%s4681 + $0x48] sm:$0xff]
        %v4692 = vld [vmem:[%s4681 + $0x50] sm:$0xff]
        %v4693 = vld [vmem:[%s4681 + $0x58] sm:$0xff]
        %v4694 = vld [vmem:[%s4681 + $0x60] sm:$0xff]
        %v4695 = vld [vmem:[%s4681 + $0x68] sm:$0xff]
        %v4696 = vld [vmem:[%s4681 + $0x70] sm:$0xff]
        %v4697 = vld [vmem:[%s4681 + $0x78] sm:$0xff]
        %v4698 = vld [vmem:[%s4681 + $0x80] sm:$0xff]
        %v4699 = vld [vmem:[%s4681 + $0x88] sm:$0xff]
        %v4700 = vld [vmem:[%s4681 + $0x90] sm:$0xff]
        %v4701 = vld [vmem:[%s4681 + $0x98] sm:$0xff]
        %v4702 = vld [vmem:[%s4681 + $0xa0] sm:$0xff]
        %v4703 = vld [vmem:[%s4681 + $0xa8] sm:$0xff]
        %v4704 = vld [vmem:[%s4681 + $0xb0] sm:$0xff]
        %v4705 = vld [vmem:[%s4681 + $0xb8] sm:$0xff]
        %v4706 = vld [vmem:[%s4681 + $0xc0] sm:$0xff]
        %v4707 = vld [vmem:[%s4681 + $0xc8] sm:$0xff]
        %v4708 = vld [vmem:[%s4681 + $0xd0] sm:$0xff]
        %v4709 = vld [vmem:[%s4681 + $0xd8] sm:$0xff]
        %v4710 = vld [vmem:[%s4681 + $0xe0] sm:$0xff]
        %v4711 = vld [vmem:[%s4681 + $0xe8] sm:$0xff]
        %v4712 = vld [vmem:[%s4681 + $0xf0] sm:$0xff]
        %v4713 = vld [vmem:[%s4681 + $0xf8] sm:$0xff]
        %v4746 = vunpack.c.l.b16 %v4682
        %v4747 = vunpack.c.h.b16 %v4682
        %v4748 = vunpack.c.l.b16 %v4683
        %v4749 = vunpack.c.h.b16 %v4683
        %v4750 = vunpack.c.l.b16 %v4684
        %v4751 = vunpack.c.h.b16 %v4684
        %v4752 = vunpack.c.l.b16 %v4685
        %v4753 = vunpack.c.h.b16 %v4685
        %v4754 = vunpack.c.l.b16 %v4686
        %v4755 = vunpack.c.h.b16 %v4686
        %v4756 = vunpack.c.l.b16 %v4687
        %v4757 = vunpack.c.h.b16 %v4687
        %v4758 = vunpack.c.l.b16 %v4688
        %v4759 = vunpack.c.h.b16 %v4688
        %v4760 = vunpack.c.l.b16 %v4689
        %v4761 = vunpack.c.h.b16 %v4689
        %v4762 = vunpack.c.l.b16 %v4690
        %v4763 = vunpack.c.h.b16 %v4690
        %v4764 = vunpack.c.l.b16 %v4691
        %v4765 = vunpack.c.h.b16 %v4691
        %v4766 = vunpack.c.l.b16 %v4692
        %v4767 = vunpack.c.h.b16 %v4692
        %v4768 = vunpack.c.l.b16 %v4693
        %v4769 = vunpack.c.h.b16 %v4693
        %v4770 = vunpack.c.l.b16 %v4694
        %v4771 = vunpack.c.h.b16 %v4694
        %v4772 = vunpack.c.l.b16 %v4695
        %v4773 = vunpack.c.h.b16 %v4695
        %v4774 = vunpack.c.l.b16 %v4696
        %v4775 = vunpack.c.h.b16 %v4696
        %v4776 = vunpack.c.l.b16 %v4697
        %v4777 = vunpack.c.h.b16 %v4697
        %v4778 = vunpack.c.l.b16 %v4698
        %v4779 = vunpack.c.h.b16 %v4698
        %v4780 = vunpack.c.l.b16 %v4699
        %v4781 = vunpack.c.h.b16 %v4699
        %v4782 = vunpack.c.l.b16 %v4700
        %v4783 = vunpack.c.h.b16 %v4700
        %v4784 = vunpack.c.l.b16 %v4701
        %v4785 = vunpack.c.h.b16 %v4701
        %v4786 = vunpack.c.l.b16 %v4702
        %v4787 = vunpack.c.h.b16 %v4702
        %v4788 = vunpack.c.l.b16 %v4703
        %v4789 = vunpack.c.h.b16 %v4703
        %v4790 = vunpack.c.l.b16 %v4704
        %v4791 = vunpack.c.h.b16 %v4704
        %v4792 = vunpack.c.l.b16 %v4705
        %v4793 = vunpack.c.h.b16 %v4705
        %v4794 = vunpack.c.l.b16 %v4706
        %v4795 = vunpack.c.h.b16 %v4706
        %v4796 = vunpack.c.l.b16 %v4707
        %v4797 = vunpack.c.h.b16 %v4707
        %v4798 = vunpack.c.l.b16 %v4708
        %v4799 = vunpack.c.h.b16 %v4708
        %v4800 = vunpack.c.l.b16 %v4709
        %v4801 = vunpack.c.h.b16 %v4709
        %v4802 = vunpack.c.l.b16 %v4710
        %v4803 = vunpack.c.h.b16 %v4710
        %v4804 = vunpack.c.l.b16 %v4711
        %v4805 = vunpack.c.h.b16 %v4711
        %v4806 = vunpack.c.l.b16 %v4712
        %v4807 = vunpack.c.h.b16 %v4712
        %v4808 = vunpack.c.l.b16 %v4713
        %v4809 = vunpack.c.h.b16 %v4713
        %v4810 = vpack.c.b16 %v4754, %v4746
        %v4811 = vpack.c.b16 %v4755, %v4747
        %v4812 = vpack.c.b16 %v4756, %v4748
        %v4813 = vpack.c.b16 %v4757, %v4749
        %v4814 = vpack.c.b16 %v4758, %v4750
        %v4815 = vpack.c.b16 %v4759, %v4751
        %v4816 = vpack.c.b16 %v4760, %v4752
        %v4817 = vpack.c.b16 %v4761, %v4753
        %v4818 = vpack.c.b16 %v4770, %v4762
        %v4819 = vpack.c.b16 %v4771, %v4763
        %v4820 = vpack.c.b16 %v4772, %v4764
        %v4821 = vpack.c.b16 %v4773, %v4765
        %v4822 = vpack.c.b16 %v4774, %v4766
        %v4823 = vpack.c.b16 %v4775, %v4767
        %v4824 = vpack.c.b16 %v4776, %v4768
        %v4825 = vpack.c.b16 %v4777, %v4769
        %v4826 = vpack.c.b16 %v4786, %v4778
        %v4827 = vpack.c.b16 %v4787, %v4779
        %v4828 = vpack.c.b16 %v4788, %v4780
        %v4829 = vpack.c.b16 %v4789, %v4781
        %v4830 = vpack.c.b16 %v4790, %v4782
        %v4831 = vpack.c.b16 %v4791, %v4783
        %v4832 = vpack.c.b16 %v4792, %v4784
        %v4833 = vpack.c.b16 %v4793, %v4785
        %v4834 = vpack.c.b16 %v4802, %v4794
        %v4835 = vpack.c.b16 %v4803, %v4795
        %v4836 = vpack.c.b16 %v4804, %v4796
        %v4837 = vpack.c.b16 %v4805, %v4797
        %v4838 = vpack.c.b16 %v4806, %v4798
        %v4839 = vpack.c.b16 %v4807, %v4799
        %v4840 = vpack.c.b16 %v4808, %v4800
        %v4841 = vpack.c.b16 %v4809, %v4801
        %v4875 = vsel %vm770, %v4664, 0
        %4877 = vmatpush.bf16.msra.mxu0 0
        %4878 = vmatpush.bf16.msra.mxu0 0
        %4879 = vmatpush.bf16.msra.mxu0 0
        %4880 = vmatpush.bf16.msra.mxu0 0
        %4881 = vmatpush.bf16.msra.mxu0 %v4834
        %4882 = vmatpush.bf16.msra.mxu0 %v4826
        %4883 = vmatpush.bf16.msra.mxu0 %v4818
        %4884 = vmatpush.bf16.msra.mxu0 %v4810
        %4885 = vmatmul.bf16.gmra.mxu0 %v4875
        %v4886 = vpop.f32.mrf.mxu0
        %v4887 = vadd.f32 0.0, %v4886
        %v4888 = vpop.f32.mrf.mxu0
        %v4889 = vadd.f32 0.0, %v4888
        %4890 = vdwg.mxu0
        %4891 = vmatpush.bf16.msra.mxu0 0
        %4892 = vmatpush.bf16.msra.mxu0 0
        %4893 = vmatpush.bf16.msra.mxu0 0
        %4894 = vmatpush.bf16.msra.mxu0 0
        %4895 = vmatpush.bf16.msra.mxu0 %v4835
        %4896 = vmatpush.bf16.msra.mxu0 %v4827
        %4897 = vmatpush.bf16.msra.mxu0 %v4819
        %4898 = vmatpush.bf16.msra.mxu0 %v4811
        %4899 = vmatmul.bf16.gmra.mxu0 %v4875
        %v4900 = vpop.f32.mrf.mxu0
        %v4901 = vadd.f32 0.0, %v4900
        %v4902 = vpop.f32.mrf.mxu0
        %v4903 = vadd.f32 0.0, %v4902
        %4904 = vdwg.mxu0
        %4905 = vmatpush.bf16.msra.mxu0 0
        %4906 = vmatpush.bf16.msra.mxu0 0
        %4907 = vmatpush.bf16.msra.mxu0 0
        %4908 = vmatpush.bf16.msra.mxu0 0
        %4909 = vmatpush.bf16.msra.mxu0 %v4836
        %4910 = vmatpush.bf16.msra.mxu0 %v4828
        %4911 = vmatpush.bf16.msra.mxu0 %v4820
        %4912 = vmatpush.bf16.msra.mxu0 %v4812
        %4913 = vmatmul.bf16.gmra.mxu0 %v4875
        %v4914 = vpop.f32.mrf.mxu0
        %v4915 = vadd.f32 0.0, %v4914
        %v4916 = vpop.f32.mrf.mxu0
        %v4917 = vadd.f32 0.0, %v4916
        %4918 = vdwg.mxu0
        %4919 = vmatpush.bf16.msra.mxu0 0
        %4920 = vmatpush.bf16.msra.mxu0 0
        %4921 = vmatpush.bf16.msra.mxu0 0
        %4922 = vmatpush.bf16.msra.mxu0 0
        %4923 = vmatpush.bf16.msra.mxu0 %v4837
        %4924 = vmatpush.bf16.msra.mxu0 %v4829
        %4925 = vmatpush.bf16.msra.mxu0 %v4821
        %4926 = vmatpush.bf16.msra.mxu0 %v4813
        %4927 = vmatmul.bf16.gmra.mxu0 %v4875
        %v4928 = vpop.f32.mrf.mxu0
        %v4929 = vadd.f32 0.0, %v4928
        %v4930 = vpop.f32.mrf.mxu0
        %v4931 = vadd.f32 0.0, %v4930
        %4932 = vdwg.mxu0
        %4933 = vmatpush.bf16.msra.mxu0 0
        %4934 = vmatpush.bf16.msra.mxu0 0
        %4935 = vmatpush.bf16.msra.mxu0 0
        %4936 = vmatpush.bf16.msra.mxu0 0
        %4937 = vmatpush.bf16.msra.mxu0 %v4838
        %4938 = vmatpush.bf16.msra.mxu0 %v4830
        %4939 = vmatpush.bf16.msra.mxu0 %v4822
        %4940 = vmatpush.bf16.msra.mxu0 %v4814
        %4941 = vmatmul.bf16.gmra.mxu0 %v4875
        %v4942 = vpop.f32.mrf.mxu0
        %v4943 = vadd.f32 0.0, %v4942
        %v4944 = vpop.f32.mrf.mxu0
        %v4945 = vadd.f32 0.0, %v4944
        %4946 = vdwg.mxu0
        %4947 = vmatpush.bf16.msra.mxu0 0
        %4948 = vmatpush.bf16.msra.mxu0 0
        %4949 = vmatpush.bf16.msra.mxu0 0
        %4950 = vmatpush.bf16.msra.mxu0 0
        %4951 = vmatpush.bf16.msra.mxu0 %v4839
        %4952 = vmatpush.bf16.msra.mxu0 %v4831
        %4953 = vmatpush.bf16.msra.mxu0 %v4823
        %4954 = vmatpush.bf16.msra.mxu0 %v4815
        %4955 = vmatmul.bf16.gmra.mxu0 %v4875
        %v4956 = vpop.f32.mrf.mxu0
        %v4957 = vadd.f32 0.0, %v4956
        %v4958 = vpop.f32.mrf.mxu0
        %v4959 = vadd.f32 0.0, %v4958
        %4960 = vdwg.mxu0
        %4961 = vmatpush.bf16.msra.mxu0 0
        %4962 = vmatpush.bf16.msra.mxu0 0
        %4963 = vmatpush.bf16.msra.mxu0 0
        %4964 = vmatpush.bf16.msra.mxu0 0
        %4965 = vmatpush.bf16.msra.mxu0 %v4840
        %4966 = vmatpush.bf16.msra.mxu0 %v4832
        %4967 = vmatpush.bf16.msra.mxu0 %v4824
        %4968 = vmatpush.bf16.msra.mxu0 %v4816
        %4969 = vmatmul.bf16.gmra.mxu0 %v4875
        %v4970 = vpop.f32.mrf.mxu0
        %v4971 = vadd.f32 0.0, %v4970
        %v4972 = vpop.f32.mrf.mxu0
        %v4973 = vadd.f32 0.0, %v4972
        %4974 = vdwg.mxu0
        %4975 = vmatpush.bf16.msra.mxu0 0
        %4976 = vmatpush.bf16.msra.mxu0 0
        %4977 = vmatpush.bf16.msra.mxu0 0
        %4978 = vmatpush.bf16.msra.mxu0 0
        %4979 = vmatpush.bf16.msra.mxu0 %v4841
        %4980 = vmatpush.bf16.msra.mxu0 %v4833
        %4981 = vmatpush.bf16.msra.mxu0 %v4825
        %4982 = vmatpush.bf16.msra.mxu0 %v4817
        %4983 = vmatmul.bf16.gmra.mxu0 %v4875
        %v4984 = vpop.f32.mrf.mxu0
        %v4985 = vadd.f32 0.0, %v4984
        %v4986 = vpop.f32.mrf.mxu0
        %v4987 = vadd.f32 0.0, %v4986
        %4988 = vdwg.mxu0
        %v4989 = vadd.f32 %v4665, %v4887
        %v4990 = vadd.f32 %v4666, %v4901
        %v4991 = vadd.f32 %v4667, %v4915
        %v4992 = vadd.f32 %v4668, %v4929
        %v4993 = vadd.f32 %v4669, %v4943
        %v4994 = vadd.f32 %v4670, %v4957
        %v4995 = vadd.f32 %v4671, %v4971
        %v4996 = vadd.f32 %v4672, %v4985
        %v4997 = vadd.f32 %v4673, %v4889
        %v4998 = vadd.f32 %v4674, %v4903
        %v4999 = vadd.f32 %v4675, %v4917
        %v5000 = vadd.f32 %v4676, %v4931
        %v5001 = vadd.f32 %v4677, %v4945
        %v5002 = vadd.f32 %v4678, %v4959
        %v5003 = vadd.f32 %v4679, %v4973
        %v5004 = vadd.f32 %v4680, %v4987
        %5005 = vst [vmem:[#allocation2] sm:$0xff] %v4989
        %5006 = vst [vmem:[#allocation2 + $0x8] sm:$0xff] %v4990
        %5007 = vst [vmem:[#allocation2 + $0x10] sm:$0xff] %v4991
        %5008 = vst [vmem:[#allocation2 + $0x18] sm:$0xff] %v4992
        %5009 = vst [vmem:[#allocation2 + $0x20] sm:$0xff] %v4993
        %5010 = vst [vmem:[#allocation2 + $0x28] sm:$0xff] %v4994
        %5011 = vst [vmem:[#allocation2 + $0x30] sm:$0xff] %v4995
        %5012 = vst [vmem:[#allocation2 + $0x38] sm:$0xff] %v4996
        %5013 = vst [vmem:[#allocation2 + $0x40] sm:$0xff] %v4997
        %5014 = vst [vmem:[#allocation2 + $0x48] sm:$0xff] %v4998
        %5015 = vst [vmem:[#allocation2 + $0x50] sm:$0xff] %v4999
        %5016 = vst [vmem:[#allocation2 + $0x58] sm:$0xff] %v5000
        %5017 = vst [vmem:[#allocation2 + $0x60] sm:$0xff] %v5001
        %5018 = vst [vmem:[#allocation2 + $0x68] sm:$0xff] %v5002
        %5019 = vst [vmem:[#allocation2 + $0x70] sm:$0xff] %v5003
        %5020 = vst [vmem:[#allocation2 + $0x78] sm:$0xff] %v5004
        %s5021 = scalar_lea.vmem %s372, 240 [#allocation3]
        %v5022 = vld [vmem:[%s5021] sm:$0x1f]
        %v5023 = vld [vmem:[%s5021 + $0x5] sm:$0x1f]
        %v5024 = vld [vmem:[%s5021 + $0xa] sm:$0x1f]
        %v5025 = vld [vmem:[%s5021 + $0xf] sm:$0x1f]
        %v5026 = vld [vmem:[%s5021 + $0x14] sm:$0x1f]
        %v5027 = vld [vmem:[%s5021 + $0x19] sm:$0x1f]
        %v5028 = vld [vmem:[%s5021 + $0x1e] sm:$0x1f]
        %v5029 = vld [vmem:[%s5021 + $0x23] sm:$0x1f]
        %v5030 = vld [vmem:[%s1] sm:$0xf]
        %v5031 = vld [vmem:[%s1 + $0x4] sm:$0xf]
        %v5032 = vld [vmem:[%s1 + $0x8] sm:$0xf]
        %v5033 = vld [vmem:[%s1 + $0xc] sm:$0xf]
        %v5034 = vld [vmem:[%s1 + $0x10] sm:$0xf]
        %v5035 = vld [vmem:[%s1 + $0x14] sm:$0xf]
        %v5036 = vld [vmem:[%s1 + $0x18] sm:$0xf]
        %v5037 = vld [vmem:[%s1 + $0x1c] sm:$0xf]
        %v5038 = vld [vmem:[%s1 + $0x20] sm:$0xf]
        %v5039 = vld [vmem:[%s1 + $0x24] sm:$0xf]
        %v5040 = vld [vmem:[%s1 + $0x28] sm:$0xf]
        %v5041 = vld [vmem:[%s1 + $0x2c] sm:$0xf]
        %v5042 = vld [vmem:[%s1 + $0x30] sm:$0xf]
        %v5043 = vld [vmem:[%s1 + $0x34] sm:$0xf]
        %v5044 = vld [vmem:[%s1 + $0x38] sm:$0xf]
        %v5045 = vld [vmem:[%s1 + $0x3c] sm:$0xf]
        %v5046 = vld [vmem:[%s1 + $0x40] sm:$0xf]
        %v5047 = vld [vmem:[%s1 + $0x44] sm:$0xf]
        %v5048 = vld [vmem:[%s1 + $0x48] sm:$0xf]
        %v5049 = vld [vmem:[%s1 + $0x4c] sm:$0xf]
        %v5050 = vld [vmem:[%s1 + $0x50] sm:$0xf]
        %v5051 = vld [vmem:[%s1 + $0x54] sm:$0xf]
        %v5052 = vld [vmem:[%s1 + $0x58] sm:$0xf]
        %v5053 = vld [vmem:[%s1 + $0x5c] sm:$0xf]
        %v5054 = vld [vmem:[%s1 + $0x60] sm:$0xf]
        %v5055 = vld [vmem:[%s1 + $0x64] sm:$0xf]
        %v5056 = vld [vmem:[%s1 + $0x68] sm:$0xf]
        %v5057 = vld [vmem:[%s1 + $0x6c] sm:$0xf]
        %v5058 = vld [vmem:[%s1 + $0x70] sm:$0xf]
        %v5059 = vld [vmem:[%s1 + $0x74] sm:$0xf]
        %v5060 = vld [vmem:[%s1 + $0x78] sm:$0xf]
        %v5061 = vld [vmem:[%s1 + $0x7c] sm:$0xf]
        %v5062 = vld [vmem:[%s1 + $0x80] sm:$0xf]
        %v5063 = vld [vmem:[%s1 + $0x84] sm:$0xf]
        %v5064 = vld [vmem:[%s1 + $0x88] sm:$0xf]
        %v5065 = vld [vmem:[%s1 + $0x8c] sm:$0xf]
        %v5066 = vld [vmem:[%s1 + $0x90] sm:$0xf]
        %v5067 = vld [vmem:[%s1 + $0x94] sm:$0xf]
        %v5068 = vld [vmem:[%s1 + $0x98] sm:$0xf]
        %v5069 = vld [vmem:[%s1 + $0x9c] sm:$0xf]
        %v5070 = vld [vmem:[%s1 + $0xa0] sm:$0xf]
        %v5071 = vld [vmem:[%s1 + $0xa4] sm:$0xf]
        %v5072 = vld [vmem:[%s1 + $0xa8] sm:$0xf]
        %v5073 = vld [vmem:[%s1 + $0xac] sm:$0xf]
        %v5074 = vld [vmem:[%s1 + $0xb0] sm:$0xf]
        %v5075 = vld [vmem:[%s1 + $0xb4] sm:$0xf]
        %v5076 = vld [vmem:[%s1 + $0xb8] sm:$0xf]
        %v5077 = vld [vmem:[%s1 + $0xbc] sm:$0xf]
        %v5078 = vld [vmem:[%s1 + $0xc0] sm:$0xf]
        %v5079 = vld [vmem:[%s1 + $0xc4] sm:$0xf]
        %v5080 = vld [vmem:[%s1 + $0xc8] sm:$0xf]
        %v5081 = vld [vmem:[%s1 + $0xcc] sm:$0xf]
        %v5082 = vld [vmem:[%s1 + $0xd0] sm:$0xf]
        %v5083 = vld [vmem:[%s1 + $0xd4] sm:$0xf]
        %v5084 = vld [vmem:[%s1 + $0xd8] sm:$0xf]
        %v5085 = vld [vmem:[%s1 + $0xdc] sm:$0xf]
        %v5086 = vld [vmem:[%s1 + $0xe0] sm:$0xf]
        %v5087 = vld [vmem:[%s1 + $0xe4] sm:$0xf]
        %v5088 = vld [vmem:[%s1 + $0xe8] sm:$0xf]
        %v5089 = vld [vmem:[%s1 + $0xec] sm:$0xf]
        %v5090 = vld [vmem:[%s1 + $0xf0] sm:$0xf]
        %v5091 = vld [vmem:[%s1 + $0xf4] sm:$0xf]
        %v5092 = vld [vmem:[%s1 + $0xf8] sm:$0xf]
        %v5093 = vld [vmem:[%s1 + $0xfc] sm:$0xf]
        %v5094 = vld [vmem:[%s1 + $0x100] sm:$0xf]
        %v5095 = vld [vmem:[%s1 + $0x104] sm:$0xf]
        %v5096 = vld [vmem:[%s1 + $0x108] sm:$0xf]
        %v5097 = vld [vmem:[%s1 + $0x10c] sm:$0xf]
        %v5098 = vld [vmem:[%s1 + $0x110] sm:$0xf]
        %v5099 = vld [vmem:[%s1 + $0x114] sm:$0xf]
        %v5100 = vld [vmem:[%s1 + $0x118] sm:$0xf]
        %v5101 = vld [vmem:[%s1 + $0x11c] sm:$0xf]
        %v5102 = vld [vmem:[%s2] sm:$0x1]
        %v5104 = vperm.slane %v5102, 0
        %5107 = vst [vmem:[#allocation1] ss:$9 sm:$0xff] %v5022
        %s5109 = scalar_lea.vmem [#allocation1], 1
        %5110 = vst [vmem:[%s5109] ss:$9 sm:$0xff] %v5023
        %s5112 = scalar_lea.vmem [#allocation1], 2
        %5113 = vst [vmem:[%s5112] ss:$9 sm:$0xff] %v5024
        %s5115 = scalar_lea.vmem [#allocation1], 3
        %5116 = vst [vmem:[%s5115] ss:$9 sm:$0xff] %v5025
        %s5118 = scalar_lea.vmem [#allocation1], 4
        %5119 = vst [vmem:[%s5118] ss:$9 sm:$0xff] %v5026
        %s5121 = scalar_lea.vmem [#allocation1], 5
        %5122 = vst [vmem:[%s5121] ss:$9 sm:$0xff] %v5027
        %s5124 = scalar_lea.vmem [#allocation1], 6
        %5125 = vst [vmem:[%s5124] ss:$9 sm:$0xff] %v5028
        %s5127 = scalar_lea.vmem [#allocation1], 7
        %5128 = vst [vmem:[%s5127] ss:$9 sm:$0xff] %v5029
        %v5129 = vld [vmem:[#allocation1] sm:$0xff]
        %v5130 = vld [vmem:[#allocation1 + $0x9] sm:$0xff]
        %v5131 = vld [vmem:[#allocation1 + $0x12] sm:$0xff]
        %v5132 = vld [vmem:[#allocation1 + $0x1b] sm:$0xff]
        %v5133 = vld [vmem:[#allocation1 + $0x24] sm:$0xff]
        %v5210 = vunpack.c.l.b16 %v5030
        %v5211 = vunpack.c.l.b16 %v5031
        %v5212 = vunpack.c.l.b16 %v5032
        %v5213 = vunpack.c.l.b16 %v5033
        %v5214 = vunpack.c.l.b16 %v5034
        %v5215 = vunpack.c.l.b16 %v5035
        %v5216 = vunpack.c.l.b16 %v5036
        %v5217 = vunpack.c.l.b16 %v5037
        %v5218 = vunpack.c.l.b16 %v5038
        %v5219 = vunpack.c.l.b16 %v5039
        %v5220 = vunpack.c.l.b16 %v5040
        %v5221 = vunpack.c.l.b16 %v5041
        %v5222 = vunpack.c.l.b16 %v5042
        %v5223 = vunpack.c.l.b16 %v5043
        %v5224 = vunpack.c.l.b16 %v5044
        %v5225 = vunpack.c.l.b16 %v5045
        %v5226 = vunpack.c.l.b16 %v5046
        %v5227 = vunpack.c.l.b16 %v5047
        %v5228 = vunpack.c.l.b16 %v5048
        %v5229 = vunpack.c.l.b16 %v5049
        %v5230 = vunpack.c.l.b16 %v5050
        %v5231 = vunpack.c.l.b16 %v5051
        %v5232 = vunpack.c.l.b16 %v5052
        %v5233 = vunpack.c.l.b16 %v5053
        %v5234 = vunpack.c.l.b16 %v5054
        %v5235 = vunpack.c.l.b16 %v5055
        %v5236 = vunpack.c.l.b16 %v5056
        %v5237 = vunpack.c.l.b16 %v5057
        %v5238 = vunpack.c.l.b16 %v5058
        %v5239 = vunpack.c.l.b16 %v5059
        %v5240 = vunpack.c.l.b16 %v5060
        %v5241 = vunpack.c.l.b16 %v5061
        %v5242 = vunpack.c.l.b16 %v5062
        %v5243 = vunpack.c.l.b16 %v5063
        %v5244 = vunpack.c.l.b16 %v5064
        %v5245 = vunpack.c.l.b16 %v5065
        %v5246 = vunpack.c.l.b16 %v5066
        %v5247 = vunpack.c.l.b16 %v5067
        %v5248 = vunpack.c.l.b16 %v5068
        %v5249 = vunpack.c.l.b16 %v5069
        %v5250 = vunpack.c.l.b16 %v5070
        %v5251 = vunpack.c.l.b16 %v5071
        %v5252 = vunpack.c.l.b16 %v5072
        %v5253 = vunpack.c.l.b16 %v5073
        %v5254 = vunpack.c.l.b16 %v5074
        %v5255 = vunpack.c.l.b16 %v5075
        %v5256 = vunpack.c.l.b16 %v5076
        %v5257 = vunpack.c.l.b16 %v5077
        %v5258 = vunpack.c.l.b16 %v5078
        %v5259 = vunpack.c.l.b16 %v5079
        %v5260 = vunpack.c.l.b16 %v5080
        %v5261 = vunpack.c.l.b16 %v5081
        %v5262 = vunpack.c.l.b16 %v5082
        %v5263 = vunpack.c.l.b16 %v5083
        %v5264 = vunpack.c.l.b16 %v5084
        %v5265 = vunpack.c.l.b16 %v5085
        %v5266 = vunpack.c.l.b16 %v5086
        %v5267 = vunpack.c.l.b16 %v5087
        %v5268 = vunpack.c.l.b16 %v5088
        %v5269 = vunpack.c.l.b16 %v5089
        %v5270 = vunpack.c.l.b16 %v5090
        %v5271 = vunpack.c.l.b16 %v5091
        %v5272 = vunpack.c.l.b16 %v5092
        %v5273 = vunpack.c.l.b16 %v5093
        %v5274 = vunpack.c.l.b16 %v5094
        %v5275 = vunpack.c.l.b16 %v5095
        %v5276 = vunpack.c.l.b16 %v5096
        %v5277 = vunpack.c.l.b16 %v5097
        %v5278 = vunpack.c.l.b16 %v5098
        %v5279 = vunpack.c.l.b16 %v5099
        %v5280 = vunpack.c.l.b16 %v5100
        %v5281 = vunpack.c.l.b16 %v5101
        %v5282 = vpack.c.b16 %v5211, %v5210
        %v5283 = vpack.c.b16 %v5213, %v5212
        %v5284 = vpack.c.b16 %v5215, %v5214
        %v5285 = vpack.c.b16 %v5217, %v5216
        %v5286 = vpack.c.b16 %v5219, %v5218
        %v5287 = vpack.c.b16 %v5221, %v5220
        %v5288 = vpack.c.b16 %v5223, %v5222
        %v5289 = vpack.c.b16 %v5225, %v5224
        %v5290 = vpack.c.b16 %v5227, %v5226
        %v5291 = vpack.c.b16 %v5229, %v5228
        %v5292 = vpack.c.b16 %v5231, %v5230
        %v5293 = vpack.c.b16 %v5233, %v5232
        %v5294 = vpack.c.b16 %v5235, %v5234
        %v5295 = vpack.c.b16 %v5237, %v5236
        %v5296 = vpack.c.b16 %v5239, %v5238
        %v5297 = vpack.c.b16 %v5241, %v5240
        %v5298 = vpack.c.b16 %v5243, %v5242
        %v5299 = vpack.c.b16 %v5245, %v5244
        %v5300 = vpack.c.b16 %v5247, %v5246
        %v5301 = vpack.c.b16 %v5249, %v5248
        %v5302 = vpack.c.b16 %v5251, %v5250
        %v5303 = vpack.c.b16 %v5253, %v5252
        %v5304 = vpack.c.b16 %v5255, %v5254
        %v5305 = vpack.c.b16 %v5257, %v5256
        %v5306 = vpack.c.b16 %v5259, %v5258
        %v5307 = vpack.c.b16 %v5261, %v5260
        %v5308 = vpack.c.b16 %v5263, %v5262
        %v5309 = vpack.c.b16 %v5265, %v5264
        %v5310 = vpack.c.b16 %v5267, %v5266
        %v5311 = vpack.c.b16 %v5269, %v5268
        %v5312 = vpack.c.b16 %v5271, %v5270
        %v5313 = vpack.c.b16 %v5273, %v5272
        %v5314 = vpack.c.b16 %v5275, %v5274
        %v5315 = vpack.c.b16 %v5277, %v5276
        %v5316 = vpack.c.b16 %v5279, %v5278
        %v5317 = vpack.c.b16 %v5281, %v5280
        %v5354 = vsel %vm770, %v5133, 0
        %5356 = vmatpush.bf16.msra.mxu0 %v5289
        %5357 = vmatpush.bf16.msra.mxu0 %v5288
        %5358 = vmatpush.bf16.msra.mxu0 %v5287
        %5359 = vmatpush.bf16.msra.mxu0 %v5286
        %5360 = vmatpush.bf16.msra.mxu0 %v5285
        %5361 = vmatpush.bf16.msra.mxu0 %v5284
        %5362 = vmatpush.bf16.msra.mxu0 %v5283
        %5363 = vmatpush.bf16.msra.mxu0 %v5282
        %5364 = vmatmul.bf16.gmra.mxu0 %v5129
        %v5365 = vpop.f32.mrf.mxu0
        %v5366 = vadd.f32 %v5104, %v5365
        %v5367 = vpop.f32.mrf.mxu0
        %v5368 = vadd.f32 %v5104, %v5367
        %5369 = vdwg.mxu0
        %5370 = vmatpush.bf16.msra.mxu0 %v5297
        %5371 = vmatpush.bf16.msra.mxu0 %v5296
        %5372 = vmatpush.bf16.msra.mxu0 %v5295
        %5373 = vmatpush.bf16.msra.mxu0 %v5294
        %5374 = vmatpush.bf16.msra.mxu0 %v5293
        %5375 = vmatpush.bf16.msra.mxu0 %v5292
        %5376 = vmatpush.bf16.msra.mxu0 %v5291
        %5377 = vmatpush.bf16.msra.mxu0 %v5290
        %5378 = vmatmul.bf16.gmra.mxu0 %v5130
        %v5379 = vpop.f32.mrf.mxu0
        %v5380 = vadd.f32 %v5366, %v5379
        %v5381 = vpop.f32.mrf.mxu0
        %v5382 = vadd.f32 %v5368, %v5381
        %5383 = vdwg.mxu0
        %5384 = vmatpush.bf16.msra.mxu0 %v5305
        %5385 = vmatpush.bf16.msra.mxu0 %v5304
        %5386 = vmatpush.bf16.msra.mxu0 %v5303
        %5387 = vmatpush.bf16.msra.mxu0 %v5302
        %5388 = vmatpush.bf16.msra.mxu0 %v5301
        %5389 = vmatpush.bf16.msra.mxu0 %v5300
        %5390 = vmatpush.bf16.msra.mxu0 %v5299
        %5391 = vmatpush.bf16.msra.mxu0 %v5298
        %5392 = vmatmul.bf16.gmra.mxu0 %v5131
        %v5393 = vpop.f32.mrf.mxu0
        %v5394 = vadd.f32 %v5380, %v5393
        %v5395 = vpop.f32.mrf.mxu0
        %v5396 = vadd.f32 %v5382, %v5395
        %5397 = vdwg.mxu0
        %5398 = vmatpush.bf16.msra.mxu0 %v5313
        %5399 = vmatpush.bf16.msra.mxu0 %v5312
        %5400 = vmatpush.bf16.msra.mxu0 %v5311
        %5401 = vmatpush.bf16.msra.mxu0 %v5310
        %5402 = vmatpush.bf16.msra.mxu0 %v5309
        %5403 = vmatpush.bf16.msra.mxu0 %v5308
        %5404 = vmatpush.bf16.msra.mxu0 %v5307
        %5405 = vmatpush.bf16.msra.mxu0 %v5306
        %5406 = vmatmul.bf16.gmra.mxu0 %v5132
        %v5407 = vpop.f32.mrf.mxu0
        %v5408 = vadd.f32 %v5394, %v5407
        %v5409 = vpop.f32.mrf.mxu0
        %v5410 = vadd.f32 %v5396, %v5409
        %5411 = vdwg.mxu0
        %5412 = vmatpush.bf16.msra.mxu0 0
        %5413 = vmatpush.bf16.msra.mxu0 0
        %5414 = vmatpush.bf16.msra.mxu0 0
        %5415 = vmatpush.bf16.msra.mxu0 0
        %5416 = vmatpush.bf16.msra.mxu0 %v5317
        %5417 = vmatpush.bf16.msra.mxu0 %v5316
        %5418 = vmatpush.bf16.msra.mxu0 %v5315
        %5419 = vmatpush.bf16.msra.mxu0 %v5314
        %5420 = vmatmul.bf16.gmra.mxu0 %v5354
        %v5421 = vpop.f32.mrf.mxu0
        %v5422 = vadd.f32 %v5408, %v5421
        %v5423 = vpop.f32.mrf.mxu0
        %v5424 = vadd.f32 %v5410, %v5423
        %5425 = vdwg.mxu0
        %v5426 = vmax.f32 %v5422, 0.0
        %v5427 = vmax.f32 %v5424, 0.0
        %v5428 = vpack.c.bf16 %v5427, %v5426
        %v5429 = vld [vmem:[#allocation2] sm:$0xff]
        %v5430 = vld [vmem:[#allocation2 + $0x8] sm:$0xff]
        %v5431 = vld [vmem:[#allocation2 + $0x10] sm:$0xff]
        %v5432 = vld [vmem:[#allocation2 + $0x18] sm:$0xff]
        %v5433 = vld [vmem:[#allocation2 + $0x20] sm:$0xff]
        %v5434 = vld [vmem:[#allocation2 + $0x28] sm:$0xff]
        %v5435 = vld [vmem:[#allocation2 + $0x30] sm:$0xff]
        %v5436 = vld [vmem:[#allocation2 + $0x38] sm:$0xff]
        %v5437 = vld [vmem:[#allocation2 + $0x40] sm:$0xff]
        %v5438 = vld [vmem:[#allocation2 + $0x48] sm:$0xff]
        %v5439 = vld [vmem:[#allocation2 + $0x50] sm:$0xff]
        %v5440 = vld [vmem:[#allocation2 + $0x58] sm:$0xff]
        %v5441 = vld [vmem:[#allocation2 + $0x60] sm:$0xff]
        %v5442 = vld [vmem:[#allocation2 + $0x68] sm:$0xff]
        %v5443 = vld [vmem:[#allocation2 + $0x70] sm:$0xff]
        %v5444 = vld [vmem:[#allocation2 + $0x78] sm:$0xff]
        %s5445 = scalar_lea.vmem %s412, 1536
        %v5446 = vld [vmem:[%s5445] sm:$0xff]
        %v5447 = vld [vmem:[%s5445 + $0x8] sm:$0xff]
        %v5448 = vld [vmem:[%s5445 + $0x10] sm:$0xff]
        %v5449 = vld [vmem:[%s5445 + $0x18] sm:$0xff]
        %v5450 = vld [vmem:[%s5445 + $0x20] sm:$0xff]
        %v5451 = vld [vmem:[%s5445 + $0x28] sm:$0xff]
        %v5452 = vld [vmem:[%s5445 + $0x30] sm:$0xff]
        %v5453 = vld [vmem:[%s5445 + $0x38] sm:$0xff]
        %v5454 = vld [vmem:[%s5445 + $0x40] sm:$0xff]
        %v5455 = vld [vmem:[%s5445 + $0x48] sm:$0xff]
        %v5456 = vld [vmem:[%s5445 + $0x50] sm:$0xff]
        %v5457 = vld [vmem:[%s5445 + $0x58] sm:$0xff]
        %v5458 = vld [vmem:[%s5445 + $0x60] sm:$0xff]
        %v5459 = vld [vmem:[%s5445 + $0x68] sm:$0xff]
        %v5460 = vld [vmem:[%s5445 + $0x70] sm:$0xff]
        %v5461 = vld [vmem:[%s5445 + $0x78] sm:$0xff]
        %v5462 = vld [vmem:[%s5445 + $0x80] sm:$0xff]
        %v5463 = vld [vmem:[%s5445 + $0x88] sm:$0xff]
        %v5464 = vld [vmem:[%s5445 + $0x90] sm:$0xff]
        %v5465 = vld [vmem:[%s5445 + $0x98] sm:$0xff]
        %v5466 = vld [vmem:[%s5445 + $0xa0] sm:$0xff]
        %v5467 = vld [vmem:[%s5445 + $0xa8] sm:$0xff]
        %v5468 = vld [vmem:[%s5445 + $0xb0] sm:$0xff]
        %v5469 = vld [vmem:[%s5445 + $0xb8] sm:$0xff]
        %v5470 = vld [vmem:[%s5445 + $0xc0] sm:$0xff]
        %v5471 = vld [vmem:[%s5445 + $0xc8] sm:$0xff]
        %v5472 = vld [vmem:[%s5445 + $0xd0] sm:$0xff]
        %v5473 = vld [vmem:[%s5445 + $0xd8] sm:$0xff]
        %v5474 = vld [vmem:[%s5445 + $0xe0] sm:$0xff]
        %v5475 = vld [vmem:[%s5445 + $0xe8] sm:$0xff]
        %v5476 = vld [vmem:[%s5445 + $0xf0] sm:$0xff]
        %v5477 = vld [vmem:[%s5445 + $0xf8] sm:$0xff]
        %v5510 = vunpack.c.l.b16 %v5446
        %v5511 = vunpack.c.h.b16 %v5446
        %v5512 = vunpack.c.l.b16 %v5447
        %v5513 = vunpack.c.h.b16 %v5447
        %v5514 = vunpack.c.l.b16 %v5448
        %v5515 = vunpack.c.h.b16 %v5448
        %v5516 = vunpack.c.l.b16 %v5449
        %v5517 = vunpack.c.h.b16 %v5449
        %v5518 = vunpack.c.l.b16 %v5450
        %v5519 = vunpack.c.h.b16 %v5450
        %v5520 = vunpack.c.l.b16 %v5451
        %v5521 = vunpack.c.h.b16 %v5451
        %v5522 = vunpack.c.l.b16 %v5452
        %v5523 = vunpack.c.h.b16 %v5452
        %v5524 = vunpack.c.l.b16 %v5453
        %v5525 = vunpack.c.h.b16 %v5453
        %v5526 = vunpack.c.l.b16 %v5454
        %v5527 = vunpack.c.h.b16 %v5454
        %v5528 = vunpack.c.l.b16 %v5455
        %v5529 = vunpack.c.h.b16 %v5455
        %v5530 = vunpack.c.l.b16 %v5456
        %v5531 = vunpack.c.h.b16 %v5456
        %v5532 = vunpack.c.l.b16 %v5457
        %v5533 = vunpack.c.h.b16 %v5457
        %v5534 = vunpack.c.l.b16 %v5458
        %v5535 = vunpack.c.h.b16 %v5458
        %v5536 = vunpack.c.l.b16 %v5459
        %v5537 = vunpack.c.h.b16 %v5459
        %v5538 = vunpack.c.l.b16 %v5460
        %v5539 = vunpack.c.h.b16 %v5460
        %v5540 = vunpack.c.l.b16 %v5461
        %v5541 = vunpack.c.h.b16 %v5461
        %v5542 = vunpack.c.l.b16 %v5462
        %v5543 = vunpack.c.h.b16 %v5462
        %v5544 = vunpack.c.l.b16 %v5463
        %v5545 = vunpack.c.h.b16 %v5463
        %v5546 = vunpack.c.l.b16 %v5464
        %v5547 = vunpack.c.h.b16 %v5464
        %v5548 = vunpack.c.l.b16 %v5465
        %v5549 = vunpack.c.h.b16 %v5465
        %v5550 = vunpack.c.l.b16 %v5466
        %v5551 = vunpack.c.h.b16 %v5466
        %v5552 = vunpack.c.l.b16 %v5467
        %v5553 = vunpack.c.h.b16 %v5467
        %v5554 = vunpack.c.l.b16 %v5468
        %v5555 = vunpack.c.h.b16 %v5468
        %v5556 = vunpack.c.l.b16 %v5469
        %v5557 = vunpack.c.h.b16 %v5469
        %v5558 = vunpack.c.l.b16 %v5470
        %v5559 = vunpack.c.h.b16 %v5470
        %v5560 = vunpack.c.l.b16 %v5471
        %v5561 = vunpack.c.h.b16 %v5471
        %v5562 = vunpack.c.l.b16 %v5472
        %v5563 = vunpack.c.h.b16 %v5472
        %v5564 = vunpack.c.l.b16 %v5473
        %v5565 = vunpack.c.h.b16 %v5473
        %v5566 = vunpack.c.l.b16 %v5474
        %v5567 = vunpack.c.h.b16 %v5474
        %v5568 = vunpack.c.l.b16 %v5475
        %v5569 = vunpack.c.h.b16 %v5475
        %v5570 = vunpack.c.l.b16 %v5476
        %v5571 = vunpack.c.h.b16 %v5476
        %v5572 = vunpack.c.l.b16 %v5477
        %v5573 = vunpack.c.h.b16 %v5477
        %v5574 = vpack.c.b16 %v5518, %v5510
        %v5575 = vpack.c.b16 %v5519, %v5511
        %v5576 = vpack.c.b16 %v5520, %v5512
        %v5577 = vpack.c.b16 %v5521, %v5513
        %v5578 = vpack.c.b16 %v5522, %v5514
        %v5579 = vpack.c.b16 %v5523, %v5515
        %v5580 = vpack.c.b16 %v5524, %v5516
        %v5581 = vpack.c.b16 %v5525, %v5517
        %v5582 = vpack.c.b16 %v5534, %v5526
        %v5583 = vpack.c.b16 %v5535, %v5527
        %v5584 = vpack.c.b16 %v5536, %v5528
        %v5585 = vpack.c.b16 %v5537, %v5529
        %v5586 = vpack.c.b16 %v5538, %v5530
        %v5587 = vpack.c.b16 %v5539, %v5531
        %v5588 = vpack.c.b16 %v5540, %v5532
        %v5589 = vpack.c.b16 %v5541, %v5533
        %v5590 = vpack.c.b16 %v5550, %v5542
        %v5591 = vpack.c.b16 %v5551, %v5543
        %v5592 = vpack.c.b16 %v5552, %v5544
        %v5593 = vpack.c.b16 %v5553, %v5545
        %v5594 = vpack.c.b16 %v5554, %v5546
        %v5595 = vpack.c.b16 %v5555, %v5547
        %v5596 = vpack.c.b16 %v5556, %v5548
        %v5597 = vpack.c.b16 %v5557, %v5549
        %v5598 = vpack.c.b16 %v5566, %v5558
        %v5599 = vpack.c.b16 %v5567, %v5559
        %v5600 = vpack.c.b16 %v5568, %v5560
        %v5601 = vpack.c.b16 %v5569, %v5561
        %v5602 = vpack.c.b16 %v5570, %v5562
        %v5603 = vpack.c.b16 %v5571, %v5563
        %v5604 = vpack.c.b16 %v5572, %v5564
        %v5605 = vpack.c.b16 %v5573, %v5565
        %v5639 = vsel %vm770, %v5428, 0
        %5641 = vmatpush.bf16.msra.mxu0 0
        %5642 = vmatpush.bf16.msra.mxu0 0
        %5643 = vmatpush.bf16.msra.mxu0 0
        %5644 = vmatpush.bf16.msra.mxu0 0
        %5645 = vmatpush.bf16.msra.mxu0 %v5598
        %5646 = vmatpush.bf16.msra.mxu0 %v5590
        %5647 = vmatpush.bf16.msra.mxu0 %v5582
        %5648 = vmatpush.bf16.msra.mxu0 %v5574
        %5649 = vmatmul.bf16.gmra.mxu0 %v5639
        %v5650 = vpop.f32.mrf.mxu0
        %v5651 = vadd.f32 0.0, %v5650
        %v5652 = vpop.f32.mrf.mxu0
        %v5653 = vadd.f32 0.0, %v5652
        %5654 = vdwg.mxu0
        %5655 = vmatpush.bf16.msra.mxu0 0
        %5656 = vmatpush.bf16.msra.mxu0 0
        %5657 = vmatpush.bf16.msra.mxu0 0
        %5658 = vmatpush.bf16.msra.mxu0 0
        %5659 = vmatpush.bf16.msra.mxu0 %v5599
        %5660 = vmatpush.bf16.msra.mxu0 %v5591
        %5661 = vmatpush.bf16.msra.mxu0 %v5583
        %5662 = vmatpush.bf16.msra.mxu0 %v5575
        %5663 = vmatmul.bf16.gmra.mxu0 %v5639
        %v5664 = vpop.f32.mrf.mxu0
        %v5665 = vadd.f32 0.0, %v5664
        %v5666 = vpop.f32.mrf.mxu0
        %v5667 = vadd.f32 0.0, %v5666
        %5668 = vdwg.mxu0
        %5669 = vmatpush.bf16.msra.mxu0 0
        %5670 = vmatpush.bf16.msra.mxu0 0
        %5671 = vmatpush.bf16.msra.mxu0 0
        %5672 = vmatpush.bf16.msra.mxu0 0
        %5673 = vmatpush.bf16.msra.mxu0 %v5600
        %5674 = vmatpush.bf16.msra.mxu0 %v5592
        %5675 = vmatpush.bf16.msra.mxu0 %v5584
        %5676 = vmatpush.bf16.msra.mxu0 %v5576
        %5677 = vmatmul.bf16.gmra.mxu0 %v5639
        %v5678 = vpop.f32.mrf.mxu0
        %v5679 = vadd.f32 0.0, %v5678
        %v5680 = vpop.f32.mrf.mxu0
        %v5681 = vadd.f32 0.0, %v5680
        %5682 = vdwg.mxu0
        %5683 = vmatpush.bf16.msra.mxu0 0
        %5684 = vmatpush.bf16.msra.mxu0 0
        %5685 = vmatpush.bf16.msra.mxu0 0
        %5686 = vmatpush.bf16.msra.mxu0 0
        %5687 = vmatpush.bf16.msra.mxu0 %v5601
        %5688 = vmatpush.bf16.msra.mxu0 %v5593
        %5689 = vmatpush.bf16.msra.mxu0 %v5585
        %5690 = vmatpush.bf16.msra.mxu0 %v5577
        %5691 = vmatmul.bf16.gmra.mxu0 %v5639
        %v5692 = vpop.f32.mrf.mxu0
        %v5693 = vadd.f32 0.0, %v5692
        %v5694 = vpop.f32.mrf.mxu0
        %v5695 = vadd.f32 0.0, %v5694
        %5696 = vdwg.mxu0
        %5697 = vmatpush.bf16.msra.mxu0 0
        %5698 = vmatpush.bf16.msra.mxu0 0
        %5699 = vmatpush.bf16.msra.mxu0 0
        %5700 = vmatpush.bf16.msra.mxu0 0
        %5701 = vmatpush.bf16.msra.mxu0 %v5602
        %5702 = vmatpush.bf16.msra.mxu0 %v5594
        %5703 = vmatpush.bf16.msra.mxu0 %v5586
        %5704 = vmatpush.bf16.msra.mxu0 %v5578
        %5705 = vmatmul.bf16.gmra.mxu0 %v5639
        %v5706 = vpop.f32.mrf.mxu0
        %v5707 = vadd.f32 0.0, %v5706
        %v5708 = vpop.f32.mrf.mxu0
        %v5709 = vadd.f32 0.0, %v5708
        %5710 = vdwg.mxu0
        %5711 = vmatpush.bf16.msra.mxu0 0
        %5712 = vmatpush.bf16.msra.mxu0 0
        %5713 = vmatpush.bf16.msra.mxu0 0
        %5714 = vmatpush.bf16.msra.mxu0 0
        %5715 = vmatpush.bf16.msra.mxu0 %v5603
        %5716 = vmatpush.bf16.msra.mxu0 %v5595
        %5717 = vmatpush.bf16.msra.mxu0 %v5587
        %5718 = vmatpush.bf16.msra.mxu0 %v5579
        %5719 = vmatmul.bf16.gmra.mxu0 %v5639
        %v5720 = vpop.f32.mrf.mxu0
        %v5721 = vadd.f32 0.0, %v5720
        %v5722 = vpop.f32.mrf.mxu0
        %v5723 = vadd.f32 0.0, %v5722
        %5724 = vdwg.mxu0
        %5725 = vmatpush.bf16.msra.mxu0 0
        %5726 = vmatpush.bf16.msra.mxu0 0
        %5727 = vmatpush.bf16.msra.mxu0 0
        %5728 = vmatpush.bf16.msra.mxu0 0
        %5729 = vmatpush.bf16.msra.mxu0 %v5604
        %5730 = vmatpush.bf16.msra.mxu0 %v5596
        %5731 = vmatpush.bf16.msra.mxu0 %v5588
        %5732 = vmatpush.bf16.msra.mxu0 %v5580
        %5733 = vmatmul.bf16.gmra.mxu0 %v5639
        %v5734 = vpop.f32.mrf.mxu0
        %v5735 = vadd.f32 0.0, %v5734
        %v5736 = vpop.f32.mrf.mxu0
        %v5737 = vadd.f32 0.0, %v5736
        %5738 = vdwg.mxu0
        %5739 = vmatpush.bf16.msra.mxu0 0
        %5740 = vmatpush.bf16.msra.mxu0 0
        %5741 = vmatpush.bf16.msra.mxu0 0
        %5742 = vmatpush.bf16.msra.mxu0 0
        %5743 = vmatpush.bf16.msra.mxu0 %v5605
        %5744 = vmatpush.bf16.msra.mxu0 %v5597
        %5745 = vmatpush.bf16.msra.mxu0 %v5589
        %5746 = vmatpush.bf16.msra.mxu0 %v5581
        %5747 = vmatmul.bf16.gmra.mxu0 %v5639
        %v5748 = vpop.f32.mrf.mxu0
        %v5749 = vadd.f32 0.0, %v5748
        %v5750 = vpop.f32.mrf.mxu0
        %v5751 = vadd.f32 0.0, %v5750
        %5752 = vdwg.mxu0
        %v5753 = vadd.f32 %v5429, %v5651
        %v5754 = vadd.f32 %v5430, %v5665
        %v5755 = vadd.f32 %v5431, %v5679
        %v5756 = vadd.f32 %v5432, %v5693
        %v5757 = vadd.f32 %v5433, %v5707
        %v5758 = vadd.f32 %v5434, %v5721
        %v5759 = vadd.f32 %v5435, %v5735
        %v5760 = vadd.f32 %v5436, %v5749
        %v5761 = vadd.f32 %v5437, %v5653
        %v5762 = vadd.f32 %v5438, %v5667
        %v5763 = vadd.f32 %v5439, %v5681
        %v5764 = vadd.f32 %v5440, %v5695
        %v5765 = vadd.f32 %v5441, %v5709
        %v5766 = vadd.f32 %v5442, %v5723
        %v5767 = vadd.f32 %v5443, %v5737
        %v5768 = vadd.f32 %v5444, %v5751
        %5769 = vst [vmem:[#allocation2] sm:$0xff] %v5753
        %5770 = vst [vmem:[#allocation2 + $0x8] sm:$0xff] %v5754
        %5771 = vst [vmem:[#allocation2 + $0x10] sm:$0xff] %v5755
        %5772 = vst [vmem:[#allocation2 + $0x18] sm:$0xff] %v5756
        %5773 = vst [vmem:[#allocation2 + $0x20] sm:$0xff] %v5757
        %5774 = vst [vmem:[#allocation2 + $0x28] sm:$0xff] %v5758
        %5775 = vst [vmem:[#allocation2 + $0x30] sm:$0xff] %v5759
        %5776 = vst [vmem:[#allocation2 + $0x38] sm:$0xff] %v5760
        %5777 = vst [vmem:[#allocation2 + $0x40] sm:$0xff] %v5761
        %5778 = vst [vmem:[#allocation2 + $0x48] sm:$0xff] %v5762
        %5779 = vst [vmem:[#allocation2 + $0x50] sm:$0xff] %v5763
        %5780 = vst [vmem:[#allocation2 + $0x58] sm:$0xff] %v5764
        %5781 = vst [vmem:[#allocation2 + $0x60] sm:$0xff] %v5765
        %5782 = vst [vmem:[#allocation2 + $0x68] sm:$0xff] %v5766
        %5783 = vst [vmem:[#allocation2 + $0x70] sm:$0xff] %v5767
        %5784 = vst [vmem:[#allocation2 + $0x78] sm:$0xff] %v5768
        %p5785 = scmp.eq.s32.totalorder %s24, 6
        // Predicated region
        $region94: #{noisy_duel_forward.5} parent=84 // pred_check
          %p5786 = pneg %p5785
        $region95: #{noisy_duel_forward.5} parent=84 // pred_check_branch
          %5788 = sbr.rel (%p5786) target = $region97
        $region96: #{noisy_duel_forward.5} parent=84 // pred_region
          %v5789 = vld [vmem:[#allocation2] sm:$0xff]
          %v5790 = vld [vmem:[#allocation2 + $0x8] sm:$0xff]
          %v5791 = vld [vmem:[#allocation2 + $0x10] sm:$0xff]
          %v5792 = vld [vmem:[#allocation2 + $0x18] sm:$0xff]
          %v5793 = vld [vmem:[#allocation2 + $0x20] sm:$0xff]
          %v5794 = vld [vmem:[#allocation2 + $0x28] sm:$0xff]
          %v5795 = vld [vmem:[#allocation2 + $0x30] sm:$0xff]
          %v5796 = vld [vmem:[#allocation2 + $0x38] sm:$0xff]
          %v5797 = vld [vmem:[#allocation2 + $0x40] sm:$0xff]
          %v5798 = vld [vmem:[#allocation2 + $0x48] sm:$0xff]
          %v5799 = vld [vmem:[#allocation2 + $0x50] sm:$0xff]
          %v5800 = vld [vmem:[#allocation2 + $0x58] sm:$0xff]
          %v5801 = vld [vmem:[#allocation2 + $0x60] sm:$0xff]
          %v5802 = vld [vmem:[#allocation2 + $0x68] sm:$0xff]
          %v5803 = vld [vmem:[#allocation2 + $0x70] sm:$0xff]
          %v5804 = vld [vmem:[#allocation2 + $0x78] sm:$0xff]
          %v5805 = vld [vmem:[%s4] sm:$0xff]
          %v5807 = vperm.slane %v5805, 0
          %v5808 = vperm.slane %v5805, 1
          %v5809 = vperm.slane %v5805, 2
          %v5810 = vperm.slane %v5805, 3
          %v5811 = vperm.slane %v5805, 4
          %v5812 = vperm.slane %v5805, 5
          %v5813 = vperm.slane %v5805, 6
          %v5814 = vperm.slane %v5805, 7
          %v5823 = vadd.f32 %v5789, %v5807
          %v5824 = vadd.f32 %v5790, %v5808
          %v5825 = vadd.f32 %v5791, %v5809
          %v5826 = vadd.f32 %v5792, %v5810
          %v5827 = vadd.f32 %v5793, %v5811
          %v5828 = vadd.f32 %v5794, %v5812
          %v5829 = vadd.f32 %v5795, %v5813
          %v5830 = vadd.f32 %v5796, %v5814
          %v5831 = vadd.f32 %v5797, %v5807
          %v5832 = vadd.f32 %v5798, %v5808
          %v5833 = vadd.f32 %v5799, %v5809
          %v5834 = vadd.f32 %v5800, %v5810
          %v5835 = vadd.f32 %v5801, %v5811
          %v5836 = vadd.f32 %v5802, %v5812
          %v5837 = vadd.f32 %v5803, %v5813
          %v5838 = vadd.f32 %v5804, %v5814
          %v5839 = vmax.f32 %v5823, 0.0
          %v5840 = vmax.f32 %v5824, 0.0
          %v5841 = vmax.f32 %v5825, 0.0
          %v5842 = vmax.f32 %v5826, 0.0
          %v5843 = vmax.f32 %v5827, 0.0
          %v5844 = vmax.f32 %v5828, 0.0
          %v5845 = vmax.f32 %v5829, 0.0
          %v5846 = vmax.f32 %v5830, 0.0
          %v5847 = vmax.f32 %v5831, 0.0
          %v5848 = vmax.f32 %v5832, 0.0
          %v5849 = vmax.f32 %v5833, 0.0
          %v5850 = vmax.f32 %v5834, 0.0
          %v5851 = vmax.f32 %v5835, 0.0
          %v5852 = vmax.f32 %v5836, 0.0
          %v5853 = vmax.f32 %v5837, 0.0
          %v5854 = vmax.f32 %v5838, 0.0
          %v5855 = vld [vmem:[%s5] sm:$0xff]
          %v5856 = vld [vmem:[%s5 + $0x8] sm:$0xff]
          %v5857 = vld [vmem:[%s5 + $0x10] sm:$0xff]
          %v5858 = vld [vmem:[%s5 + $0x18] sm:$0xff]
          %v5859 = vld [vmem:[%s5 + $0x20] sm:$0xff]
          %v5860 = vld [vmem:[%s5 + $0x28] sm:$0xff]
          %v5861 = vld [vmem:[%s5 + $0x30] sm:$0xff]
          %v5862 = vld [vmem:[%s5 + $0x38] sm:$0xff]
          %v5863 = vld [vmem:[%s5 + $0x40] sm:$0xff]
          %v5864 = vld [vmem:[%s5 + $0x48] sm:$0xff]
          %v5865 = vld [vmem:[%s5 + $0x50] sm:$0xff]
          %v5866 = vld [vmem:[%s5 + $0x58] sm:$0xff]
          %v5867 = vld [vmem:[%s5 + $0x60] sm:$0xff]
          %v5868 = vld [vmem:[%s5 + $0x68] sm:$0xff]
          %v5869 = vld [vmem:[%s5 + $0x70] sm:$0xff]
          %v5870 = vld [vmem:[%s5 + $0x78] sm:$0xff]
          %v5871 = vld [vmem:[%s5 + $0x80] sm:$0xff]
          %v5872 = vld [vmem:[%s5 + $0x88] sm:$0xff]
          %v5873 = vld [vmem:[%s5 + $0x90] sm:$0xff]
          %v5874 = vld [vmem:[%s5 + $0x98] sm:$0xff]
          %v5875 = vld [vmem:[%s5 + $0xa0] sm:$0xff]
          %v5876 = vld [vmem:[%s5 + $0xa8] sm:$0xff]
          %v5877 = vld [vmem:[%s5 + $0xb0] sm:$0xff]
          %v5878 = vld [vmem:[%s5 + $0xb8] sm:$0xff]
          %v5879 = vld [vmem:[%s5 + $0xc0] sm:$0xff]
          %v5880 = vld [vmem:[%s5 + $0xc8] sm:$0xff]
          %v5881 = vld [vmem:[%s5 + $0xd0] sm:$0xff]
          %v5882 = vld [vmem:[%s5 + $0xd8] sm:$0xff]
          %v5883 = vld [vmem:[%s5 + $0xe0] sm:$0xff]
          %v5884 = vld [vmem:[%s5 + $0xe8] sm:$0xff]
          %v5885 = vld [vmem:[%s5 + $0xf0] sm:$0xff]
          %v5886 = vld [vmem:[%s5 + $0xf8] sm:$0xff]
          %v5887 = vld [vmem:[%s5 + $0x100] sm:$0xff]
          %v5888 = vld [vmem:[%s5 + $0x108] sm:$0xff]
          %v5889 = vld [vmem:[%s5 + $0x110] sm:$0xff]
          %v5890 = vld [vmem:[%s5 + $0x118] sm:$0xff]
          %v5891 = vld [vmem:[%s5 + $0x120] sm:$0xff]
          %v5892 = vld [vmem:[%s5 + $0x128] sm:$0xff]
          %v5893 = vld [vmem:[%s5 + $0x130] sm:$0xff]
          %v5894 = vld [vmem:[%s5 + $0x138] sm:$0xff]
          %v5895 = vld [vmem:[%s5 + $0x140] sm:$0xff]
          %v5896 = vld [vmem:[%s5 + $0x148] sm:$0xff]
          %v5897 = vld [vmem:[%s5 + $0x150] sm:$0xff]
          %v5898 = vld [vmem:[%s5 + $0x158] sm:$0xff]
          %v5899 = vld [vmem:[%s5 + $0x160] sm:$0xff]
          %v5900 = vld [vmem:[%s5 + $0x168] sm:$0xff]
          %v5901 = vld [vmem:[%s5 + $0x170] sm:$0xff]
          %v5902 = vld [vmem:[%s5 + $0x178] sm:$0xff]
          %v5903 = vld [vmem:[%s5 + $0x180] sm:$0xff]
          %v5904 = vld [vmem:[%s5 + $0x188] sm:$0xff]
          %v5905 = vld [vmem:[%s5 + $0x190] sm:$0xff]
          %v5906 = vld [vmem:[%s5 + $0x198] sm:$0xff]
          %v5907 = vld [vmem:[%s5 + $0x1a0] sm:$0xff]
          %v5908 = vld [vmem:[%s5 + $0x1a8] sm:$0xff]
          %v5909 = vld [vmem:[%s5 + $0x1b0] sm:$0xff]
          %v5910 = vld [vmem:[%s5 + $0x1b8] sm:$0xff]
          %v5911 = vld [vmem:[%s5 + $0x1c0] sm:$0xff]
          %v5912 = vld [vmem:[%s5 + $0x1c8] sm:$0xff]
          %v5913 = vld [vmem:[%s5 + $0x1d0] sm:$0xff]
          %v5914 = vld [vmem:[%s5 + $0x1d8] sm:$0xff]
          %v5915 = vld [vmem:[%s5 + $0x1e0] sm:$0xff]
          %v5916 = vld [vmem:[%s5 + $0x1e8] sm:$0xff]
          %v5917 = vld [vmem:[%s5 + $0x1f0] sm:$0xff]
          %v5918 = vld [vmem:[%s5 + $0x1f8] sm:$0xff]
          %v5919 = vld [vmem:[%s5 + $0x200] sm:$0xff]
          %v5920 = vld [vmem:[%s5 + $0x208] sm:$0xff]
          %v5921 = vld [vmem:[%s5 + $0x210] sm:$0xff]
          %v5922 = vld [vmem:[%s5 + $0x218] sm:$0xff]
          %v5923 = vld [vmem:[%s5 + $0x220] sm:$0xff]
          %v5924 = vld [vmem:[%s5 + $0x228] sm:$0xff]
          %v5925 = vld [vmem:[%s5 + $0x230] sm:$0xff]
          %v5926 = vld [vmem:[%s5 + $0x238] sm:$0xff]
          %v5927 = vld [vmem:[%s5 + $0x240] sm:$0xff]
          %v5928 = vld [vmem:[%s5 + $0x248] sm:$0xff]
          %v5929 = vld [vmem:[%s5 + $0x250] sm:$0xff]
          %v5930 = vld [vmem:[%s5 + $0x258] sm:$0xff]
          %v5931 = vld [vmem:[%s5 + $0x260] sm:$0xff]
          %v5932 = vld [vmem:[%s5 + $0x268] sm:$0xff]
          %v5933 = vld [vmem:[%s5 + $0x270] sm:$0xff]
          %v5934 = vld [vmem:[%s5 + $0x278] sm:$0xff]
          %v5935 = vld [vmem:[%s5 + $0x280] sm:$0xff]
          %v5936 = vld [vmem:[%s5 + $0x288] sm:$0xff]
          %v5937 = vld [vmem:[%s5 + $0x290] sm:$0xff]
          %v5938 = vld [vmem:[%s5 + $0x298] sm:$0xff]
          %v5939 = vld [vmem:[%s5 + $0x2a0] sm:$0xff]
          %v5940 = vld [vmem:[%s5 + $0x2a8] sm:$0xff]
          %v5941 = vld [vmem:[%s5 + $0x2b0] sm:$0xff]
          %v5942 = vld [vmem:[%s5 + $0x2b8] sm:$0xff]
          %v5943 = vld [vmem:[%s5 + $0x2c0] sm:$0xff]
          %v5944 = vld [vmem:[%s5 + $0x2c8] sm:$0xff]
          %v5945 = vld [vmem:[%s5 + $0x2d0] sm:$0xff]
          %v5946 = vld [vmem:[%s5 + $0x2d8] sm:$0xff]
          %v5947 = vld [vmem:[%s5 + $0x2e0] sm:$0xff]
          %v5948 = vld [vmem:[%s5 + $0x2e8] sm:$0xff]
          %v5949 = vld [vmem:[%s5 + $0x2f0] sm:$0xff]
          %v5950 = vld [vmem:[%s5 + $0x2f8] sm:$0xff]
          %v5951 = vld [vmem:[%s5 + $0x300] sm:$0xff]
          %v5952 = vld [vmem:[%s5 + $0x308] sm:$0xff]
          %v5953 = vld [vmem:[%s5 + $0x310] sm:$0xff]
          %v5954 = vld [vmem:[%s5 + $0x318] sm:$0xff]
          %v5955 = vld [vmem:[%s5 + $0x320] sm:$0xff]
          %v5956 = vld [vmem:[%s5 + $0x328] sm:$0xff]
          %v5957 = vld [vmem:[%s5 + $0x330] sm:$0xff]
          %v5958 = vld [vmem:[%s5 + $0x338] sm:$0xff]
          %v5959 = vld [vmem:[%s5 + $0x340] sm:$0xff]
          %v5960 = vld [vmem:[%s5 + $0x348] sm:$0xff]
          %v5961 = vld [vmem:[%s5 + $0x350] sm:$0xff]
          %v5962 = vld [vmem:[%s5 + $0x358] sm:$0xff]
          %v5963 = vld [vmem:[%s5 + $0x360] sm:$0xff]
          %v5964 = vld [vmem:[%s5 + $0x368] sm:$0xff]
          %v5965 = vld [vmem:[%s5 + $0x370] sm:$0xff]
          %v5966 = vld [vmem:[%s5 + $0x378] sm:$0xff]
          %v5967 = vld [vmem:[%s5 + $0x380] sm:$0xff]
          %v5968 = vld [vmem:[%s5 + $0x388] sm:$0xff]
          %v5969 = vld [vmem:[%s5 + $0x390] sm:$0xff]
          %v5970 = vld [vmem:[%s5 + $0x398] sm:$0xff]
          %v5971 = vld [vmem:[%s5 + $0x3a0] sm:$0xff]
          %v5972 = vld [vmem:[%s5 + $0x3a8] sm:$0xff]
          %v5973 = vld [vmem:[%s5 + $0x3b0] sm:$0xff]
          %v5974 = vld [vmem:[%s5 + $0x3b8] sm:$0xff]
          %v5975 = vld [vmem:[%s5 + $0x3c0] sm:$0xff]
          %v5976 = vld [vmem:[%s5 + $0x3c8] sm:$0xff]
          %v5977 = vld [vmem:[%s5 + $0x3d0] sm:$0xff]
          %v5978 = vld [vmem:[%s5 + $0x3d8] sm:$0xff]
          %v5979 = vld [vmem:[%s5 + $0x3e0] sm:$0xff]
          %v5980 = vld [vmem:[%s5 + $0x3e8] sm:$0xff]
          %v5981 = vld [vmem:[%s5 + $0x3f0] sm:$0xff]
          %v5982 = vld [vmem:[%s5 + $0x3f8] sm:$0xff]
          %v5983 = vld [vmem:[%s6] sm:$0x1]
          %v5985 = vperm.slane %v5983, 0
          %5987 = vmatpush.msra.mxu0 %v5870
          %5988 = vmatpush.msra.mxu0 %v5869
          %5989 = vmatpush.msra.mxu0 %v5868
          %5990 = vmatpush.msra.mxu0 %v5867
          %5991 = vmatpush.msra.mxu0 %v5866
          %5992 = vmatpush.msra.mxu0 %v5865
          %5993 = vmatpush.msra.mxu0 %v5864
          %5994 = vmatpush.msra.mxu0 %v5863
          %5995 = vmatpush.msra.mxu0 %v5862
          %5996 = vmatpush.msra.mxu0 %v5861
          %5997 = vmatpush.msra.mxu0 %v5860
          %5998 = vmatpush.msra.mxu0 %v5859
          %5999 = vmatpush.msra.mxu0 %v5858
          %6000 = vmatpush.msra.mxu0 %v5857
          %6001 = vmatpush.msra.mxu0 %v5856
          %6002 = vmatpush.msra.mxu0 %v5855
          %6003 = vmatmul.f32.gmra.mxu0 %v5839
          %v6004 = vpop.f32.mrf.mxu0
          %v6005 = vadd.f32 %v5985, %v6004
          %6006 = vmatmul.f32.gmra.mxu0 %v5847
          %v6007 = vpop.f32.mrf.mxu0
          %v6008 = vadd.f32 %v5985, %v6007
          %6009 = vdwg.mxu0
          %6010 = vmatpush.msra.mxu0 %v5886
          %6011 = vmatpush.msra.mxu0 %v5885
          %6012 = vmatpush.msra.mxu0 %v5884
          %6013 = vmatpush.msra.mxu0 %v5883
          %6014 = vmatpush.msra.mxu0 %v5882
          %6015 = vmatpush.msra.mxu0 %v5881
          %6016 = vmatpush.msra.mxu0 %v5880
          %6017 = vmatpush.msra.mxu0 %v5879
          %6018 = vmatpush.msra.mxu0 %v5878
          %6019 = vmatpush.msra.mxu0 %v5877
          %6020 = vmatpush.msra.mxu0 %v5876
          %6021 = vmatpush.msra.mxu0 %v5875
          %6022 = vmatpush.msra.mxu0 %v5874
          %6023 = vmatpush.msra.mxu0 %v5873
          %6024 = vmatpush.msra.mxu0 %v5872
          %6025 = vmatpush.msra.mxu0 %v5871
          %6026 = vmatmul.f32.gmra.mxu0 %v5840
          %v6027 = vpop.f32.mrf.mxu0
          %v6028 = vadd.f32 %v6005, %v6027
          %6029 = vmatmul.f32.gmra.mxu0 %v5848
          %v6030 = vpop.f32.mrf.mxu0
          %v6031 = vadd.f32 %v6008, %v6030
          %6032 = vdwg.mxu0
          %6033 = vmatpush.msra.mxu0 %v5902
          %6034 = vmatpush.msra.mxu0 %v5901
          %6035 = vmatpush.msra.mxu0 %v5900
          %6036 = vmatpush.msra.mxu0 %v5899
          %6037 = vmatpush.msra.mxu0 %v5898
          %6038 = vmatpush.msra.mxu0 %v5897
          %6039 = vmatpush.msra.mxu0 %v5896
          %6040 = vmatpush.msra.mxu0 %v5895
          %6041 = vmatpush.msra.mxu0 %v5894
          %6042 = vmatpush.msra.mxu0 %v5893
          %6043 = vmatpush.msra.mxu0 %v5892
          %6044 = vmatpush.msra.mxu0 %v5891
          %6045 = vmatpush.msra.mxu0 %v5890
          %6046 = vmatpush.msra.mxu0 %v5889
          %6047 = vmatpush.msra.mxu0 %v5888
          %6048 = vmatpush.msra.mxu0 %v5887
          %6049 = vmatmul.f32.gmra.mxu0 %v5841
          %v6050 = vpop.f32.mrf.mxu0
          %v6051 = vadd.f32 %v6028, %v6050
          %6052 = vmatmul.f32.gmra.mxu0 %v5849
          %v6053 = vpop.f32.mrf.mxu0
          %v6054 = vadd.f32 %v6031, %v6053
          %6055 = vdwg.mxu0
          %6056 = vmatpush.msra.mxu0 %v5918
          %6057 = vmatpush.msra.mxu0 %v5917
          %6058 = vmatpush.msra.mxu0 %v5916
          %6059 = vmatpush.msra.mxu0 %v5915
          %6060 = vmatpush.msra.mxu0 %v5914
          %6061 = vmatpush.msra.mxu0 %v5913
          %6062 = vmatpush.msra.mxu0 %v5912
          %6063 = vmatpush.msra.mxu0 %v5911
          %6064 = vmatpush.msra.mxu0 %v5910
          %6065 = vmatpush.msra.mxu0 %v5909
          %6066 = vmatpush.msra.mxu0 %v5908
          %6067 = vmatpush.msra.mxu0 %v5907
          %6068 = vmatpush.msra.mxu0 %v5906
          %6069 = vmatpush.msra.mxu0 %v5905
          %6070 = vmatpush.msra.mxu0 %v5904
          %6071 = vmatpush.msra.mxu0 %v5903
          %6072 = vmatmul.f32.gmra.mxu0 %v5842
          %v6073 = vpop.f32.mrf.mxu0
          %v6074 = vadd.f32 %v6051, %v6073
          %6075 = vmatmul.f32.gmra.mxu0 %v5850
          %v6076 = vpop.f32.mrf.mxu0
          %v6077 = vadd.f32 %v6054, %v6076
          %6078 = vdwg.mxu0
          %6079 = vmatpush.msra.mxu0 %v5934
          %6080 = vmatpush.msra.mxu0 %v5933
          %6081 = vmatpush.msra.mxu0 %v5932
          %6082 = vmatpush.msra.mxu0 %v5931
          %6083 = vmatpush.msra.mxu0 %v5930
          %6084 = vmatpush.msra.mxu0 %v5929
          %6085 = vmatpush.msra.mxu0 %v5928
          %6086 = vmatpush.msra.mxu0 %v5927
          %6087 = vmatpush.msra.mxu0 %v5926
          %6088 = vmatpush.msra.mxu0 %v5925
          %6089 = vmatpush.msra.mxu0 %v5924
          %6090 = vmatpush.msra.mxu0 %v5923
          %6091 = vmatpush.msra.mxu0 %v5922
          %6092 = vmatpush.msra.mxu0 %v5921
          %6093 = vmatpush.msra.mxu0 %v5920
          %6094 = vmatpush.msra.mxu0 %v5919
          %6095 = vmatmul.f32.gmra.mxu0 %v5843
          %v6096 = vpop.f32.mrf.mxu0
          %v6097 = vadd.f32 %v6074, %v6096
          %6098 = vmatmul.f32.gmra.mxu0 %v5851
          %v6099 = vpop.f32.mrf.mxu0
          %v6100 = vadd.f32 %v6077, %v6099
          %6101 = vdwg.mxu0
          %6102 = vmatpush.msra.mxu0 %v5950
          %6103 = vmatpush.msra.mxu0 %v5949
          %6104 = vmatpush.msra.mxu0 %v5948
          %6105 = vmatpush.msra.mxu0 %v5947
          %6106 = vmatpush.msra.mxu0 %v5946
          %6107 = vmatpush.msra.mxu0 %v5945
          %6108 = vmatpush.msra.mxu0 %v5944
          %6109 = vmatpush.msra.mxu0 %v5943
          %6110 = vmatpush.msra.mxu0 %v5942
          %6111 = vmatpush.msra.mxu0 %v5941
          %6112 = vmatpush.msra.mxu0 %v5940
          %6113 = vmatpush.msra.mxu0 %v5939
          %6114 = vmatpush.msra.mxu0 %v5938
          %6115 = vmatpush.msra.mxu0 %v5937
          %6116 = vmatpush.msra.mxu0 %v5936
          %6117 = vmatpush.msra.mxu0 %v5935
          %6118 = vmatmul.f32.gmra.mxu0 %v5844
          %v6119 = vpop.f32.mrf.mxu0
          %v6120 = vadd.f32 %v6097, %v6119
          %6121 = vmatmul.f32.gmra.mxu0 %v5852
          %v6122 = vpop.f32.mrf.mxu0
          %v6123 = vadd.f32 %v6100, %v6122
          %6124 = vdwg.mxu0
          %6125 = vmatpush.msra.mxu0 %v5966
          %6126 = vmatpush.msra.mxu0 %v5965
          %6127 = vmatpush.msra.mxu0 %v5964
          %6128 = vmatpush.msra.mxu0 %v5963
          %6129 = vmatpush.msra.mxu0 %v5962
          %6130 = vmatpush.msra.mxu0 %v5961
          %6131 = vmatpush.msra.mxu0 %v5960
          %6132 = vmatpush.msra.mxu0 %v5959
          %6133 = vmatpush.msra.mxu0 %v5958
          %6134 = vmatpush.msra.mxu0 %v5957
          %6135 = vmatpush.msra.mxu0 %v5956
          %6136 = vmatpush.msra.mxu0 %v5955
          %6137 = vmatpush.msra.mxu0 %v5954
          %6138 = vmatpush.msra.mxu0 %v5953
          %6139 = vmatpush.msra.mxu0 %v5952
          %6140 = vmatpush.msra.mxu0 %v5951
          %6141 = vmatmul.f32.gmra.mxu0 %v5845
          %v6142 = vpop.f32.mrf.mxu0
          %v6143 = vadd.f32 %v6120, %v6142
          %6144 = vmatmul.f32.gmra.mxu0 %v5853
          %v6145 = vpop.f32.mrf.mxu0
          %v6146 = vadd.f32 %v6123, %v6145
          %6147 = vdwg.mxu0
          %6148 = vmatpush.msra.mxu0 %v5982
          %6149 = vmatpush.msra.mxu0 %v5981
          %6150 = vmatpush.msra.mxu0 %v5980
          %6151 = vmatpush.msra.mxu0 %v5979
          %6152 = vmatpush.msra.mxu0 %v5978
          %6153 = vmatpush.msra.mxu0 %v5977
          %6154 = vmatpush.msra.mxu0 %v5976
          %6155 = vmatpush.msra.mxu0 %v5975
          %6156 = vmatpush.msra.mxu0 %v5974
          %6157 = vmatpush.msra.mxu0 %v5973
          %6158 = vmatpush.msra.mxu0 %v5972
          %6159 = vmatpush.msra.mxu0 %v5971
          %6160 = vmatpush.msra.mxu0 %v5970
          %6161 = vmatpush.msra.mxu0 %v5969
          %6162 = vmatpush.msra.mxu0 %v5968
          %6163 = vmatpush.msra.mxu0 %v5967
          %6164 = vmatmul.f32.gmra.mxu0 %v5846
          %v6165 = vpop.f32.mrf.mxu0
          %v6166 = vadd.f32 %v6143, %v6165
          %6167 = vmatmul.f32.gmra.mxu0 %v5854
          %v6168 = vpop.f32.mrf.mxu0
          %v6169 = vadd.f32 %v6146, %v6168
          %6170 = vdwg.mxu0
          %6171 = vadd.xlane.f32.xlu0 %v6166
          %v6172 = vpop.xlane.xlu0 %6171
          %6173 = vadd.xlane.f32.xlu0 %v6169
          %v6174 = vpop.xlane.xlu0 %6173
          %v6175 = vsub.f32 %v6172, %v6166
          %v6176 = vsub.f32 %v6174, %v6169
          %6178 = vset.pattern.permute.xlu0 6
          %6179 = vperm.xlu0 %6178, %v6166
          %v6180 = vpop.permute.xlu0 %6179
          %6183 = vset.pattern.permute.xlu0 6
          %6184 = vperm.xlu0 %6183, %v6169
          %v6185 = vpop.permute.xlu0 %6184
          %v6187 = vadd.f32 %v6166, %v6180
          %v6188 = vadd.f32 %v6169, %v6185
          %v6189 = vmul.f32 %v6175, 0.16666667
          %v6190 = vmul.f32 %v6176, 0.16666667
          %6192 = vset.pattern.permute.xlu0 6
          %6193 = vperm.xlu0 %6192, %v6189
          %v6194 = vpop.permute.xlu0 %6193
          %6197 = vset.pattern.permute.xlu0 6
          %6198 = vperm.xlu0 %6197, %v6190
          %v6199 = vpop.permute.xlu0 %6198
          %v6201 = vsub.f32 %v6187, %v6194
          %v6202 = vsub.f32 %v6188, %v6199
          %vm6203 = vcmask 48128
          %6204 = vst.msk [vmem:[#allocation4] sm:$0xff] %vm6203, %v6201
          %6205 = vst.msk [vmem:[#allocation4 + $0x8] sm:$0xff] %vm6203, %v6202
        $region97: #{noisy_duel_forward.5} parent=84 // pred_fallthru
          _
        // Predicated region
        $region98: #{noisy_duel_forward.5} parent=84 // pred_check
          %p6206 = pneg %p208
        $region99: #{noisy_duel_forward.5} parent=84 // pred_check_branch
          %6208 = sbr.rel (%p6206) target = $region101
        $region100: #{noisy_duel_forward.5} parent=84 // pred_region
          %s6209 = smul.u32 8, %s23
          %s6210 = ssub.s32 1, %s6209
          %s6211 = smul.u32 2, %s6210
          %s6212 = ssub.s32 16, %s6211
          %s6213 = sshll.u32 %s6212, 4
          %6214 = vsyncadd [#allocation5], %s6213
          %p6215 = scmp.ne.s32.totalorder 0, %s6211
          %s6216 = smul.addr %s6209, 2
          %s6217 = scalar_lea.hbm %s7, %s6216
          %s6218 = smul.u32 2, %s6210
          %s6219 = sshll.u32 [#allocation4], 4
          %s6220 = int_to_ptr.vmem [resolvable:$true] %s6219
          %s6221 = sshll.u32 %s6217, 4
          %s6222 = int_to_ptr.hbm [resolvable:$true] %s6221
          %s6223 = sshll.u32 %s6218, 4
          %6227 = dma.vmem_to_hbm [thread:$0]  (%p6215), %s6220, %s6223, %s6222, [#allocation5], 32, 32, 2
        $region101: #{noisy_duel_forward.5} parent=84 // pred_fallthru
          _
        // Predicated region
        $region102: #{noisy_duel_forward.5} parent=84 // pred_check
          %p6228 = pneg %p208
        $region103: #{noisy_duel_forward.5} parent=84 // pred_check_branch
          %6230 = sbr.rel (%p6228) target = $region105
        $region104: #{noisy_duel_forward.5} parent=84 // pred_region
          %6232 = dma.done [#allocation5], 256
        $region105: #{noisy_duel_forward.5} parent=84 // pred_fallthru
          _
      $region85: #{noisy_duel_forward.5} parent=5 // pred_fallthru
        _
      %p6233 = scmp.le.s32.totalorder 2, %s14
      // Predicated region
      $region106: #{noisy_duel_forward.5} parent=5 // pred_check
        %p6234 = pneg %p6233
      $region107: #{noisy_duel_forward.5} parent=5 // pred_check_branch
        %6236 = sbr.rel (%p6234) target = $region109
      $region108: #{noisy_duel_forward.5} parent=5 // pred_region
        %s6237 = ssub.s32 %s14, 2
      $region109: #{noisy_duel_forward.5} parent=5 // pred_fallthru
        _
    $region6: #{noisy_duel_forward.5} parent=1 // loop_footer
      %s18 = sadd.s32 1, %s14
    $region7: #{noisy_duel_forward.5} parent=1 // loop_footer_branch
      %13 = sbr.rel target = $region3
    $region8: #{noisy_duel_forward.5} parent=1 // loop_exit
      _
    %6238 = vsyncpa [#allocation5], 1
    %s6239 = scalar_lea.sflag [#allocation5], 1
    %6240 = vsyncpa %s6239, 1

</llo_original>
